<compile_context>
chip_gen: v7x
topology: tpu7x:2x2x1
jax: 0.10.0
libtpu: 0.0.40
codegen_flags: <defaults>
</compile_context>

<pallas_src>
import jax
import jax.numpy as jnp
from jax.experimental import pallas as pl
from jax.experimental.pallas import tpu as pltpu

# ----------------------------- config consistent with the module -------------------
B = 2               # batch
K = 17              # num_joints
H = 32              # enc/dec hidden_dim
HI = 64             # hidden_inter_dim
KT = 64             # token_inter_dim
L = 16              # latent_dim
NBLK_ENC = 2
NBLK_DEC = 2
NBLK = NBLK_ENC + NBLK_DEC
DROP_RATE = 0.2
LN_EPS = 1e-5       # PyTorch nn.LayerNorm default

assert 2 * L == H   # lets fc_mu/fc_var and decoder_start share the same mask / gather matrices

# ---- packed "lane slab" row layout (each row holds one small per-lane vector) ------
ROW_START_B = 0
ROW_INV_TOK = 1
ROW_ENC_LN_G = 2
ROW_ENC_LN_B = 3
ROW_MV_B = 4        # [fc_mu bias | fc_var bias]  (32 lanes)
ROW_DEC_LN_G = 5
ROW_DEC_LN_B = 6
ROW_REC_B = 7
ROW_BLK_BASE = 8    # then 6 rows per mixer block: ln1_g, ln1_b, ln2_g, ln2_b, cb1, cb2
SLAB_ROWS = ROW_BLK_BASE + 6 * NBLK      # = 32


def _gelu(x):
    # TODO(synk): PyTorch nn.GELU() defaults to the exact erf form; the tanh
    # approximation is used for Mosaic-safe lowering (max abs diff ~1e-3).
    return jax.nn.gelu(x, approximate=True)


# ===================================== kernel ======================================
def _pct_vae_kernel(coords_ref, wmask_ref, eps_ref,
                    slab_ref, colb_ref,
                    start_wt_ref, tW1_ref, tW2_ref, cW1_ref, cW2_ref,
                    wmv_ref, wds_ref, dsb_ref, rec_wt_ref,
                    S_ref, ST_ref, M_ref, T_ref,
                    rec_ref, lat_ref):
    n = coords_ref.shape[0]          # B*K rows
    sp = slab_ref[...]               # (SLAB_ROWS, 128) packed per-lane params
    cb = colb_ref[...]               # (B*KT, 2*NBLK)  packed token-mix column biases

    def vec(row, width):             # (1, width) lane-slice of the packed slab
        return sp[row:row + 1, :width]

    def layernorm(x, g, b):
        # single-pass (biased) variance: E[x^2] - mean^2, matches nn.LayerNorm
        m = jnp.mean(x, axis=-1, keepdims=True)
        msq = jnp.mean(x * x, axis=-1, keepdims=True)
        inv = jax.lax.rsqrt(msq - m * m + LN_EPS)
        return (x - m) * inv * g + b

    def mixer(x, blk):
        base = ROW_BLK_BASE + 6 * blk
        y = layernorm(x, vec(base + 0, H), vec(base + 1, H))
        # token mixing across joints; block-diagonal weights keep batches independent
        t = jnp.dot(tW1_ref[blk], y, preferred_element_type=jnp.float32)     # (B*KT, H)
        t = _gelu(t + cb[:, 2 * blk:2 * blk + 1])
        y = jnp.dot(tW2_ref[blk], t, preferred_element_type=jnp.float32)     # (B*K, H)
        y = y + cb[:n, 2 * blk + 1:2 * blk + 2]
        u = x + y
        zz = layernorm(u, vec(base + 2, H), vec(base + 3, H))
        c = _gelu(jnp.dot(zz, cW1_ref[blk], preferred_element_type=jnp.float32)
                  + vec(base + 4, HI))                                       # (B*K, HI)
        c = jnp.dot(c, cW2_ref[blk], preferred_element_type=jnp.float32) + vec(base + 5, H)
        return u + c                                                         # x + y + c

    mask = M_ref[...]                # (n, K*H)   [bk, k'*H + c] = (k == k')
    gat = T_ref[...]                 # (K*H, H)   stacked identities

    # ---- start_embed + invisible-token masking (all batch rows at once) -----------
    x = jnp.dot(coords_ref[...], start_wt_ref[...], preferred_element_type=jnp.float32)
    x = x + vec(ROW_START_B, H)
    w = wmask_ref[...]                                            # (n, 1)
    x = x * w + vec(ROW_INV_TOK, H) * (1.0 - w)

    # ---- encoder MixerLayers + LN ---------------------------------------------------
    for blk in range(NBLK_ENC):
        x = mixer(x, blk)
    x = layernorm(x, vec(ROW_ENC_LN_G, H), vec(ROW_ENC_LN_B, H))

    # ---- fc_mu / fc_var: flatten(K,H) contraction as one masked-matmul chain --------
    y = jnp.dot(x, wmv_ref[...], preferred_element_type=jnp.float32)          # (n, K*2L)
    mv = jnp.dot(ST_ref[...], y * mask, preferred_element_type=jnp.float32)   # (B, K*2L)
    mv = jnp.dot(mv, gat, preferred_element_type=jnp.float32) + vec(ROW_MV_B, 2 * L)  # (B, 2L)
    mu = mv[:, :L]
    log_var = mv[:, L:]

    # ---- reparameterization ---------------------------------------------------------
    std = jnp.exp(0.5 * log_var)
    z = eps_ref[...] * std + mu                                               # (B, L)
    lat_ref[...] = jnp.concatenate([mv, z], axis=1)                           # (B, 3L)

    # ---- decoder_start (mirror masked-matmul chain, no per-joint loop/scratch) ------
    zr = jnp.dot(S_ref[...], z, preferred_element_type=jnp.float32)           # (n, L)
    big = jnp.dot(zr, wds_ref[...], preferred_element_type=jnp.float32)       # (n, K*H)
    df = jnp.dot(big * mask, gat, preferred_element_type=jnp.float32) + dsb_ref[...]  # (n, H)

    # ---- decoder MixerLayers + LN + recover_embed ------------------------------------
    for blk in range(NBLK_DEC):
        df = mixer(df, NBLK_ENC + blk)
    df = layernorm(df, vec(ROW_DEC_LN_G, H), vec(ROW_DEC_LN_B, H))
    rec_ref[...] = (jnp.dot(df, rec_wt_ref[...], preferred_element_type=jnp.float32)
                    + vec(ROW_REC_B, 2))                                      # (n, 2)


# ========================== parameters (natural PyTorch layout) =====================
def init_params(key):
    std = 0.02

    def nrm(k, shape):
        return std * jax.random.normal(k, shape, jnp.float32)

    keys = iter(jax.random.split(key, 32))

    def blk(prefix):
        return {
            f"{prefix}.ln1_g": jnp.ones((H,), jnp.float32),
            f"{prefix}.ln1_b": jnp.zeros((H,), jnp.float32),
            f"{prefix}.tW1": nrm(next(keys), (KT, K)),       # Linear(K, KT).weight
            f"{prefix}.tb1": jnp.zeros((KT,), jnp.float32),
            f"{prefix}.tW2": nrm(next(keys), (K, KT)),       # Linear(KT, K).weight
            f"{prefix}.tb2": jnp.zeros((K,), jnp.float32),
            f"{prefix}.ln2_g": jnp.ones((H,), jnp.float32),
            f"{prefix}.ln2_b": jnp.zeros((H,), jnp.float32),
            f"{prefix}.cW1": nrm(next(keys), (HI, H)),       # Linear(H, HI).weight
            f"{prefix}.cb1": jnp.zeros((HI,), jnp.float32),
            f"{prefix}.cW2": nrm(next(keys), (H, HI)),       # Linear(HI, H).weight
            f"{prefix}.cb2": jnp.zeros((H,), jnp.float32),
        }

    p = {}
    p["start_w"] = nrm(next(keys), (H, 2))                   # Linear(2, H).weight
    p["start_b"] = jnp.zeros((H,), jnp.float32)
    p["inv_tok"] = std * jax.random.truncated_normal(next(keys), -1.0, 1.0, (H,), jnp.float32)
    for i in range(NBLK_ENC):
        p.update(blk(f"enc{i}"))
    p["enc_ln_g"] = jnp.ones((H,), jnp.float32)
    p["enc_ln_b"] = jnp.zeros((H,), jnp.float32)
    p["fc_mu_w"] = nrm(next(keys), (L, K * H))               # Linear(K*H, L).weight
    p["fc_mu_b"] = jnp.zeros((L,), jnp.float32)
    p["fc_var_w"] = nrm(next(keys), (L, K * H))
    p["fc_var_b"] = jnp.zeros((L,), jnp.float32)
    p["ds_w"] = nrm(next(keys), (K * H, L))                  # Linear(L, K*H).weight
    p["ds_b"] = jnp.zeros((K * H,), jnp.float32)
    for i in range(NBLK_DEC):
        p.update(blk(f"dec{i}"))
    p["dec_ln_g"] = jnp.ones((H,), jnp.float32)
    p["dec_ln_b"] = jnp.zeros((H,), jnp.float32)
    p["rec_w"] = nrm(next(keys), (2, H))                     # Linear(H, 2).weight
    p["rec_b"] = jnp.zeros((2,), jnp.float32)
    return p


def pack_operands(p, bs):
    """Host-side re-layout of the natural parameters into the kernel operand set."""
    n = bs * K

    slab = jnp.zeros((SLAB_ROWS, 128), jnp.float32)

    def put(s, row, v):
        return s.at[row, :v.shape[0]].set(v)

    slab = put(slab, ROW_START_B, p["start_b"])
    slab = put(slab, ROW_INV_TOK, p["inv_tok"])
    slab = put(slab, ROW_ENC_LN_G, p["enc_ln_g"])
    slab = put(slab, ROW_ENC_LN_B, p["enc_ln_b"])
    slab = put(slab, ROW_MV_B, jnp.concatenate([p["fc_mu_b"], p["fc_var_b"]]))
    slab = put(slab, ROW_DEC_LN_G, p["dec_ln_g"])
    slab = put(slab, ROW_DEC_LN_B, p["dec_ln_b"])
    slab = put(slab, ROW_REC_B, p["rec_b"])

    blk_names = [f"enc{i}" for i in range(NBLK_ENC)] + [f"dec{i}" for i in range(NBLK_DEC)]
    colb = jnp.zeros((bs * KT, 2 * NBLK), jnp.float32)
    eye_b = jnp.eye(bs, dtype=jnp.float32)
    tW1_l, tW2_l, cW1_l, cW2_l = [], [], [], []
    for bi, name in enumerate(blk_names):
        base = ROW_BLK_BASE + 6 * bi
        slab = put(slab, base + 0, p[f"{name}.ln1_g"])
        slab = put(slab, base + 1, p[f"{name}.ln1_b"])
        slab = put(slab, base + 2, p[f"{name}.ln2_g"])
        slab = put(slab, base + 3, p[f"{name}.ln2_b"])
        slab = put(slab, base + 4, p[f"{name}.cb1"])
        slab = put(slab, base + 5, p[f"{name}.cb2"])
        colb = colb.at[:, 2 * bi].set(jnp.tile(p[f"{name}.tb1"], bs))
        colb = colb.at[:n, 2 * bi + 1].set(jnp.tile(p[f"{name}.tb2"], bs))
        tW1_l.append(jnp.kron(eye_b, p[f"{name}.tW1"]))      # block-diag (bs*KT, bs*K)
        tW2_l.append(jnp.kron(eye_b, p[f"{name}.tW2"]))      # block-diag (bs*K, bs*KT)
        cW1_l.append(p[f"{name}.cW1"].T)                     # (H, HI)
        cW2_l.append(p[f"{name}.cW2"].T)                     # (HI, H)
    tW1 = jnp.stack(tW1_l)
    tW2 = jnp.stack(tW2_l)
    cW1 = jnp.stack(cW1_l)
    cW2 = jnp.stack(cW2_l)

    # fc_mu/fc_var concatenated weight, laid out as (H, K*2L): [h, k*2L + j]
    amu = jnp.transpose(p["fc_mu_w"].reshape(L, K, H), (2, 1, 0))   # (H, K, L)
    avar = jnp.transpose(p["fc_var_w"].reshape(L, K, H), (2, 1, 0))
    wmv = jnp.concatenate([amu, avar], axis=2).reshape(H, K * 2 * L)

    # decoder_start weight laid out as (L, K*H): [l, k*H + h]
    wds = jnp.transpose(p["ds_w"].reshape(K, H, L), (2, 0, 1)).reshape(L, K * H)
    dsb = jnp.tile(p["ds_b"].reshape(K, H), (bs, 1))                # (n, H)

    start_wt = p["start_w"].T                                       # (2, H)
    rec_wt = p["rec_w"].T                                           # (H, 2)

    # constant selector / mask / gather matrices for the flatten-via-matmul chains
    S = jnp.repeat(eye_b, K, axis=0)                                # (n, bs)
    ST = S.T                                                        # (bs, n)
    M = jnp.tile(jnp.repeat(jnp.eye(K, dtype=jnp.float32), H, axis=1), (bs, 1))  # (n, K*H)
    T = jnp.tile(jnp.eye(H, dtype=jnp.float32), (K, 1))             # (K*H, H)

    return (slab, colb, start_wt, tW1, tW2, cW1, cW2,
            wmv, wds, dsb, rec_wt, S, ST, M, T)


# ================================== wrapper =========================================
def pct_tokenizer_vae_forward(joints, joints_feature, params, key, drop_rate=DROP_RATE):
    """joints: (bs, K, 3) float32 [x, y, visible]; joints_feature unused (guide_ratio=0)."""
    del joints_feature
    bs = joints.shape[0]
    n = bs * K
    coords = joints[..., :2].reshape(n, 2).astype(jnp.float32)
    visible = joints[..., 2] != 0                                   # (bs, K)

    k_mask, k_eps = jax.random.split(key)
    rand_keep = jax.random.uniform(k_mask, visible.shape) > drop_rate
    w = jnp.logical_and(rand_keep, visible).astype(jnp.float32).reshape(n, 1)
    eps = jax.random.normal(k_eps, (bs, L), jnp.float32)

    operands = (coords, w, eps) + pack_operands(params, bs)

    def full_spec(a):
        nd = a.ndim
        return pl.BlockSpec(a.shape, lambda i, nd=nd: (0,) * nd)

    rec, lat = pl.pallas_call(
        _pct_vae_kernel,
        out_shape=(jax.ShapeDtypeStruct((n, 2), jnp.float32),
                   jax.ShapeDtypeStruct((bs, 3 * L), jnp.float32)),
        grid_spec=pltpu.PrefetchScalarGridSpec(
            num_scalar_prefetch=0,
            grid=(1,),                                   # batch folded into the kernel
            in_specs=[full_spec(a) for a in operands],
            out_specs=[pl.BlockSpec((n, 2), lambda i: (0, 0)),
                       pl.BlockSpec((bs, 3 * L), lambda i: (0, 0))],
        ),
        compiler_params=pltpu.CompilerParams(dimension_semantics=("arbitrary",)),
    )(*operands)

    rec = rec.reshape(bs, K, 2)
    mu = lat[:, :L]
    log_var = lat[:, L:2 * L]
    z = lat[:, 2 * L:]
    return rec, mu, log_var, z


# ============================ pure-JAX reference (natural layout) ====================
def _reference_forward(joints, params, key, drop_rate=DROP_RATE):
    bs = joints.shape[0]
    coords = joints[..., :2]
    visible = joints[..., 2] != 0
    k_mask, k_eps = jax.random.split(key)
    keep = jax.random.uniform(k_mask, visible.shape) > drop_rate
    w = jnp.logical_and(keep, visible).astype(jnp.float32)[..., None]
    eps = jax.random.normal(k_eps, (bs, L), jnp.float32)

    def ln(x, g, b):
        m = x.mean(-1, keepdims=True)
        v = ((x - m) ** 2).mean(-1, keepdims=True)
        return (x - m) / jnp.sqrt(v + LN_EPS) * g + b

    def mixer(x, name):
        y = ln(x, params[f"{name}.ln1_g"], params[f"{name}.ln1_b"])
        yt = jnp.swapaxes(y, 1, 2)
        t = _gelu(yt @ params[f"{name}.tW1"].T + params[f"{name}.tb1"])
        yt = t @ params[f"{name}.tW2"].T + params[f"{name}.tb2"]
        y = jnp.swapaxes(yt, 1, 2)
        u = x + y
        zz = ln(u, params[f"{name}.ln2_g"], params[f"{name}.ln2_b"])
        c = _gelu(zz @ params[f"{name}.cW1"].T + params[f"{name}.cb1"])
        c = c @ params[f"{name}.cW2"].T + params[f"{name}.cb2"]
        return u + c

    x = coords @ params["start_w"].T + params["start_b"]
    x = x * w + params["inv_tok"][None, None, :] * (1.0 - w)
    for i in range(NBLK_ENC):
        x = mixer(x, f"enc{i}")
    x = ln(x, params["enc_ln_g"], params["enc_ln_b"])
    xf = x.reshape(bs, K * H)
    mu = xf @ params["fc_mu_w"].T + params["fc_mu_b"]
    log_var = xf @ params["fc_var_w"].T + params["fc_var_b"]
    z = eps * jnp.exp(0.5 * log_var) + mu
    d = (z @ params["ds_w"].T + params["ds_b"]).reshape(bs, K, H)
    for i in range(NBLK_DEC):
        d = mixer(d, f"dec{i}")
    d = ln(d, params["dec_ln_g"], params["dec_ln_b"])
    rec = d @ params["rec_w"].T + params["rec_b"]
    return rec, mu, log_var, z


if __name__ == "__main__":
    root = jax.random.PRNGKey(0)
    k_par, k_coord, k_vis, k_fwd = jax.random.split(root, 4)

    params = init_params(k_par)
    coords = jax.random.normal(k_coord, (B, K, 2), jnp.float32)
    vis = (jax.random.uniform(k_vis, (B, K, 1)) > 0.2).astype(jnp.float32)
    joints = jnp.concatenate([coords, vis], axis=-1)                 # (B, K, 3)
    joints_feature = None                                            # guide_ratio == 0

    rec, mu, log_var, z = pct_tokenizer_vae_forward(joints, joints_feature, params, k_fwd)
    rec, mu, log_var, z = jax.block_until_ready((rec, mu, log_var, z))

    assert rec.shape == (B, K, 2)
    assert mu.shape == (B, L) and log_var.shape == (B, L) and z.shape == (B, L)
    assert bool(jnp.all(jnp.isfinite(rec))) and bool(jnp.all(jnp.isfinite(z)))

    with jax.default_matmul_precision("highest"):
        rec_r, mu_r, lv_r, z_r = _reference_forward(joints, params, k_fwd)
    assert bool(jnp.allclose(rec, rec_r, rtol=2e-2, atol=2e-3))
    assert bool(jnp.allclose(mu, mu_r, rtol=2e-2, atol=2e-3))
    assert bool(jnp.allclose(log_var, lv_r, rtol=2e-2, atol=2e-3))
    assert bool(jnp.allclose(z, z_r, rtol=2e-2, atol=2e-3))

    print("KERNEL_OK")
</pallas_src>

<mosaic_0001>
module attributes {stable_mosaic.version = 11 : i64} {
  func.func @_pct_vae_kernel(%arg0: i32, %arg1: memref<34x2xf32, #tpu.memory_space<vmem>>, %arg2: memref<34x1xf32, #tpu.memory_space<vmem>>, %arg3: memref<2x16xf32, #tpu.memory_space<vmem>>, %arg4: memref<32x128xf32, #tpu.memory_space<vmem>>, %arg5: memref<128x8xf32, #tpu.memory_space<vmem>>, %arg6: memref<2x32xf32, #tpu.memory_space<vmem>>, %arg7: memref<4x128x34xf32, #tpu.memory_space<vmem>>, %arg8: memref<4x34x128xf32, #tpu.memory_space<vmem>>, %arg9: memref<4x32x64xf32, #tpu.memory_space<vmem>>, %arg10: memref<4x64x32xf32, #tpu.memory_space<vmem>>, %arg11: memref<32x544xf32, #tpu.memory_space<vmem>>, %arg12: memref<16x544xf32, #tpu.memory_space<vmem>>, %arg13: memref<34x32xf32, #tpu.memory_space<vmem>>, %arg14: memref<32x2xf32, #tpu.memory_space<vmem>>, %arg15: memref<34x2xf32, #tpu.memory_space<vmem>>, %arg16: memref<2x34xf32, #tpu.memory_space<vmem>>, %arg17: memref<34x544xf32, #tpu.memory_space<vmem>>, %arg18: memref<544x32xf32, #tpu.memory_space<vmem>>, %arg19: memref<34x2xf32, #tpu.memory_space<vmem>>, %arg20: memref<2x48xf32, #tpu.memory_space<vmem>>) attributes {dimension_semantics = [#tpu.dimension_semantics<arbitrary>], iteration_bounds = array<i64: 1>, scalar_prefetch = 0 : i64, scratch_operands = 0 : i64, tpu.core_type = #tpu.core_type<tc>, window_params = [{pipeline_mode = #tpu.pipeline_mode<synchronous>, transform_indices = @transform_0, window_bounds = array<i64: 34, 2>}, {pipeline_mode = #tpu.pipeline_mode<synchronous>, transform_indices = @transform_1, window_bounds = array<i64: 34, 1>}, {pipeline_mode = #tpu.pipeline_mode<synchronous>, transform_indices = @transform_2, window_bounds = array<i64: 2, 16>}, {pipeline_mode = #tpu.pipeline_mode<synchronous>, transform_indices = @transform_3, window_bounds = array<i64: 32, 128>}, {pipeline_mode = #tpu.pipeline_mode<synchronous>, transform_indices = @transform_4, window_bounds = array<i64: 128, 8>}, {pipeline_mode = #tpu.pipeline_mode<synchronous>, transform_indices = @transform_5, window_bounds = array<i64: 2, 32>}, {pipeline_mode = #tpu.pipeline_mode<synchronous>, transform_indices = @transform_6, window_bounds = array<i64: 4, 128, 34>}, {pipeline_mode = #tpu.pipeline_mode<synchronous>, transform_indices = @transform_7, window_bounds = array<i64: 4, 34, 128>}, {pipeline_mode = #tpu.pipeline_mode<synchronous>, transform_indices = @transform_8, window_bounds = array<i64: 4, 32, 64>}, {pipeline_mode = #tpu.pipeline_mode<synchronous>, transform_indices = @transform_9, window_bounds = array<i64: 4, 64, 32>}, {pipeline_mode = #tpu.pipeline_mode<synchronous>, transform_indices = @transform_10, window_bounds = array<i64: 32, 544>}, {pipeline_mode = #tpu.pipeline_mode<synchronous>, transform_indices = @transform_11, window_bounds = array<i64: 16, 544>}, {pipeline_mode = #tpu.pipeline_mode<synchronous>, transform_indices = @transform_12, window_bounds = array<i64: 34, 32>}, {pipeline_mode = #tpu.pipeline_mode<synchronous>, transform_indices = @transform_13, window_bounds = array<i64: 32, 2>}, {pipeline_mode = #tpu.pipeline_mode<synchronous>, transform_indices = @transform_14, window_bounds = array<i64: 34, 2>}, {pipeline_mode = #tpu.pipeline_mode<synchronous>, transform_indices = @transform_15, window_bounds = array<i64: 2, 34>}, {pipeline_mode = #tpu.pipeline_mode<synchronous>, transform_indices = @transform_16, window_bounds = array<i64: 34, 544>}, {pipeline_mode = #tpu.pipeline_mode<synchronous>, transform_indices = @transform_17, window_bounds = array<i64: 544, 32>}, {pipeline_mode = #tpu.pipeline_mode<synchronous>, transform_indices = @transform_18, window_bounds = array<i64: 34, 2>}, {pipeline_mode = #tpu.pipeline_mode<synchronous>, transform_indices = @transform_19, window_bounds = array<i64: 2, 48>}]} {
    %c0 = arith.constant 0 : index
    %c0_0 = arith.constant 0 : index
    %0 = vector.load %arg4[%c0, %c0_0] : memref<32x128xf32, #tpu.memory_space<vmem>>, vector<32x128xf32>
    %c0_1 = arith.constant 0 : index
    %c0_2 = arith.constant 0 : index
    %1 = vector.load %arg5[%c0_1, %c0_2] : memref<128x8xf32, #tpu.memory_space<vmem>>, vector<128x8xf32>
    %c0_3 = arith.constant 0 : index
    %c0_4 = arith.constant 0 : index
    %2 = vector.load %arg17[%c0_3, %c0_4] : memref<34x544xf32, #tpu.memory_space<vmem>>, vector<34x544xf32>
    %c0_5 = arith.constant 0 : index
    %c0_6 = arith.constant 0 : index
    %3 = vector.load %arg18[%c0_5, %c0_6] : memref<544x32xf32, #tpu.memory_space<vmem>>, vector<544x32xf32>
    %c0_7 = arith.constant 0 : index
    %c0_8 = arith.constant 0 : index
    %4 = vector.load %arg1[%c0_7, %c0_8] : memref<34x2xf32, #tpu.memory_space<vmem>>, vector<34x2xf32>
    %c0_9 = arith.constant 0 : index
    %c0_10 = arith.constant 0 : index
    %5 = vector.load %arg6[%c0_9, %c0_10] : memref<2x32xf32, #tpu.memory_space<vmem>>, vector<2x32xf32>
    %cst = arith.constant dense<0.000000e+00> : vector<34x32xf32>
    %6 = tpu.matmul %4, %5, %cst {dimension_numbers = #tpu.dot_dimension_numbers<[1], [0], [0], [1], [0, 0, 1, 1], [], []>} : vector<34x2xf32>, vector<2x32xf32>, vector<34x32xf32> -> vector<34x32xf32>
    %7 = vector.extract_strided_slice %0 {offsets = [0, 0], sizes = [1, 32], strides = [1, 1]} : vector<32x128xf32> to vector<1x32xf32>
    %8 = vector.broadcast %7 : vector<1x32xf32> to vector<34x32xf32>
    %9 = arith.addf %6, %8 : vector<34x32xf32>
    %c0_11 = arith.constant 0 : index
    %c0_12 = arith.constant 0 : index
    %10 = vector.load %arg2[%c0_11, %c0_12] : memref<34x1xf32, #tpu.memory_space<vmem>>, vector<34x1xf32>
    %11 = vector.broadcast %10 : vector<34x1xf32> to vector<34x32xf32>
    %12 = arith.mulf %9, %11 : vector<34x32xf32>
    %13 = vector.extract_strided_slice %0 {offsets = [1, 0], sizes = [1, 32], strides = [1, 1]} : vector<32x128xf32> to vector<1x32xf32>
    %cst_13 = arith.constant 1.000000e+00 : f32
    %14 = vector.broadcast %cst_13 : f32 to vector<34x1xf32>
    %15 = arith.subf %14, %10 : vector<34x1xf32>
    %16 = vector.broadcast %13 : vector<1x32xf32> to vector<34x32xf32>
    %17 = vector.broadcast %15 : vector<34x1xf32> to vector<34x32xf32>
    %18 = arith.mulf %16, %17 : vector<34x32xf32>
    %19 = arith.addf %12, %18 : vector<34x32xf32>
    %20 = vector.extract_strided_slice %0 {offsets = [8, 0], sizes = [1, 32], strides = [1, 1]} : vector<32x128xf32> to vector<1x32xf32>
    %21 = vector.extract_strided_slice %0 {offsets = [9, 0], sizes = [1, 32], strides = [1, 1]} : vector<32x128xf32> to vector<1x32xf32>
    %cst_14 = arith.constant dense<0.000000e+00> : vector<34xf32>
    %22 = vector.multi_reduction <add>, %19, %cst_14 [1] : vector<34x32xf32> to vector<34xf32>
    %23 = vector.shape_cast %22 : vector<34xf32> to vector<34x1xf32>
    %cst_15 = arith.constant 3.200000e+01 : f32
    %24 = vector.broadcast %cst_15 : f32 to vector<34x1xf32>
    %25 = arith.divf %23, %24 : vector<34x1xf32>
    %26 = arith.mulf %19, %19 : vector<34x32xf32>
    %cst_16 = arith.constant dense<0.000000e+00> : vector<34xf32>
    %27 = vector.multi_reduction <add>, %26, %cst_16 [1] : vector<34x32xf32> to vector<34xf32>
    %28 = vector.shape_cast %27 : vector<34xf32> to vector<34x1xf32>
    %cst_17 = arith.constant 3.200000e+01 : f32
    %29 = vector.broadcast %cst_17 : f32 to vector<34x1xf32>
    %30 = arith.divf %28, %29 : vector<34x1xf32>
    %31 = arith.mulf %25, %25 : vector<34x1xf32>
    %32 = arith.subf %30, %31 : vector<34x1xf32>
    %cst_18 = arith.constant 9.99999974E-6 : f32
    %33 = vector.broadcast %cst_18 : f32 to vector<34x1xf32>
    %34 = arith.addf %32, %33 : vector<34x1xf32>
    %35 = math.rsqrt %34 : vector<34x1xf32>
    %36 = vector.broadcast %25 : vector<34x1xf32> to vector<34x32xf32>
    %37 = arith.subf %19, %36 : vector<34x32xf32>
    %38 = vector.broadcast %35 : vector<34x1xf32> to vector<34x32xf32>
    %39 = arith.mulf %37, %38 : vector<34x32xf32>
    %40 = vector.broadcast %20 : vector<1x32xf32> to vector<34x32xf32>
    %41 = arith.mulf %39, %40 : vector<34x32xf32>
    %42 = vector.broadcast %21 : vector<1x32xf32> to vector<34x32xf32>
    %43 = arith.addf %41, %42 : vector<34x32xf32>
    %c0_19 = arith.constant 0 : index
    %c0_20 = arith.constant 0 : index
    %c0_21 = arith.constant 0 : index
    %44 = vector.load %arg7[%c0_19, %c0_20, %c0_21] : memref<4x128x34xf32, #tpu.memory_space<vmem>>, vector<1x128x34xf32>
    %45 = vector.shape_cast %44 : vector<1x128x34xf32> to vector<128x34xf32>
    %cst_22 = arith.constant dense<0.000000e+00> : vector<128x32xf32>
    %46 = tpu.matmul %45, %43, %cst_22 {dimension_numbers = #tpu.dot_dimension_numbers<[1], [0], [0], [1], [0, 0, 1, 1], [], []>} : vector<128x34xf32>, vector<34x32xf32>, vector<128x32xf32> -> vector<128x32xf32>
    %47 = vector.extract_strided_slice %1 {offsets = [0, 0], sizes = [128, 1], strides = [1, 1]} : vector<128x8xf32> to vector<128x1xf32>
    %48 = vector.broadcast %47 : vector<128x1xf32> to vector<128x32xf32>
    %49 = arith.addf %46, %48 : vector<128x32xf32>
    %50 = arith.mulf %49, %49 : vector<128x32xf32>
    %51 = arith.mulf %49, %50 : vector<128x32xf32>
    %cst_23 = arith.constant 4.471500e-02 : f32
    %52 = vector.broadcast %cst_23 : f32 to vector<128x32xf32>
    %53 = arith.mulf %52, %51 : vector<128x32xf32>
    %54 = arith.addf %49, %53 : vector<128x32xf32>
    %cst_24 = arith.constant 0.797884583 : f32
    %55 = vector.broadcast %cst_24 : f32 to vector<128x32xf32>
    %56 = arith.mulf %55, %54 : vector<128x32xf32>
    %57 = math.tanh %56 : vector<128x32xf32>
    %cst_25 = arith.constant 1.000000e+00 : f32
    %58 = vector.broadcast %cst_25 : f32 to vector<128x32xf32>
    %59 = arith.addf %58, %57 : vector<128x32xf32>
    %cst_26 = arith.constant 5.000000e-01 : f32
    %60 = vector.broadcast %cst_26 : f32 to vector<128x32xf32>
    %61 = arith.mulf %60, %59 : vector<128x32xf32>
    %62 = arith.mulf %49, %61 : vector<128x32xf32>
    %c0_27 = arith.constant 0 : index
    %c0_28 = arith.constant 0 : index
    %c0_29 = arith.constant 0 : index
    %63 = vector.load %arg8[%c0_27, %c0_28, %c0_29] : memref<4x34x128xf32, #tpu.memory_space<vmem>>, vector<1x34x128xf32>
    %64 = vector.shape_cast %63 : vector<1x34x128xf32> to vector<34x128xf32>
    %cst_30 = arith.constant dense<0.000000e+00> : vector<34x32xf32>
    %65 = tpu.matmul %64, %62, %cst_30 {dimension_numbers = #tpu.dot_dimension_numbers<[1], [0], [0], [1], [0, 0, 1, 1], [], []>} : vector<34x128xf32>, vector<128x32xf32>, vector<34x32xf32> -> vector<34x32xf32>
    %66 = vector.extract_strided_slice %1 {offsets = [0, 1], sizes = [34, 1], strides = [1, 1]} : vector<128x8xf32> to vector<34x1xf32>
    %67 = vector.broadcast %66 : vector<34x1xf32> to vector<34x32xf32>
    %68 = arith.addf %65, %67 : vector<34x32xf32>
    %69 = arith.addf %19, %68 : vector<34x32xf32>
    %70 = vector.extract_strided_slice %0 {offsets = [10, 0], sizes = [1, 32], strides = [1, 1]} : vector<32x128xf32> to vector<1x32xf32>
    %71 = vector.extract_strided_slice %0 {offsets = [11, 0], sizes = [1, 32], strides = [1, 1]} : vector<32x128xf32> to vector<1x32xf32>
    %cst_31 = arith.constant dense<0.000000e+00> : vector<34xf32>
    %72 = vector.multi_reduction <add>, %69, %cst_31 [1] : vector<34x32xf32> to vector<34xf32>
    %73 = vector.shape_cast %72 : vector<34xf32> to vector<34x1xf32>
    %cst_32 = arith.constant 3.200000e+01 : f32
    %74 = vector.broadcast %cst_32 : f32 to vector<34x1xf32>
    %75 = arith.divf %73, %74 : vector<34x1xf32>
    %76 = arith.mulf %69, %69 : vector<34x32xf32>
    %cst_33 = arith.constant dense<0.000000e+00> : vector<34xf32>
    %77 = vector.multi_reduction <add>, %76, %cst_33 [1] : vector<34x32xf32> to vector<34xf32>
    %78 = vector.shape_cast %77 : vector<34xf32> to vector<34x1xf32>
    %cst_34 = arith.constant 3.200000e+01 : f32
    %79 = vector.broadcast %cst_34 : f32 to vector<34x1xf32>
    %80 = arith.divf %78, %79 : vector<34x1xf32>
    %81 = arith.mulf %75, %75 : vector<34x1xf32>
    %82 = arith.subf %80, %81 : vector<34x1xf32>
    %cst_35 = arith.constant 9.99999974E-6 : f32
    %83 = vector.broadcast %cst_35 : f32 to vector<34x1xf32>
    %84 = arith.addf %82, %83 : vector<34x1xf32>
    %85 = math.rsqrt %84 : vector<34x1xf32>
    %86 = vector.broadcast %75 : vector<34x1xf32> to vector<34x32xf32>
    %87 = arith.subf %69, %86 : vector<34x32xf32>
    %88 = vector.broadcast %85 : vector<34x1xf32> to vector<34x32xf32>
    %89 = arith.mulf %87, %88 : vector<34x32xf32>
    %90 = vector.broadcast %70 : vector<1x32xf32> to vector<34x32xf32>
    %91 = arith.mulf %89, %90 : vector<34x32xf32>
    %92 = vector.broadcast %71 : vector<1x32xf32> to vector<34x32xf32>
    %93 = arith.addf %91, %92 : vector<34x32xf32>
    %c0_36 = arith.constant 0 : index
    %c0_37 = arith.constant 0 : index
    %c0_38 = arith.constant 0 : index
    %94 = vector.load %arg9[%c0_36, %c0_37, %c0_38] : memref<4x32x64xf32, #tpu.memory_space<vmem>>, vector<1x32x64xf32>
    %95 = vector.shape_cast %94 : vector<1x32x64xf32> to vector<32x64xf32>
    %cst_39 = arith.constant dense<0.000000e+00> : vector<34x64xf32>
    %96 = tpu.matmul %93, %95, %cst_39 {dimension_numbers = #tpu.dot_dimension_numbers<[1], [0], [0], [1], [0, 0, 1, 1], [], []>} : vector<34x32xf32>, vector<32x64xf32>, vector<34x64xf32> -> vector<34x64xf32>
    %97 = vector.extract_strided_slice %0 {offsets = [12, 0], sizes = [1, 64], strides = [1, 1]} : vector<32x128xf32> to vector<1x64xf32>
    %98 = vector.broadcast %97 : vector<1x64xf32> to vector<34x64xf32>
    %99 = arith.addf %96, %98 : vector<34x64xf32>
    %100 = arith.mulf %99, %99 : vector<34x64xf32>
    %101 = arith.mulf %99, %100 : vector<34x64xf32>
    %cst_40 = arith.constant 4.471500e-02 : f32
    %102 = vector.broadcast %cst_40 : f32 to vector<34x64xf32>
    %103 = arith.mulf %102, %101 : vector<34x64xf32>
    %104 = arith.addf %99, %103 : vector<34x64xf32>
    %cst_41 = arith.constant 0.797884583 : f32
    %105 = vector.broadcast %cst_41 : f32 to vector<34x64xf32>
    %106 = arith.mulf %105, %104 : vector<34x64xf32>
    %107 = math.tanh %106 : vector<34x64xf32>
    %cst_42 = arith.constant 1.000000e+00 : f32
    %108 = vector.broadcast %cst_42 : f32 to vector<34x64xf32>
    %109 = arith.addf %108, %107 : vector<34x64xf32>
    %cst_43 = arith.constant 5.000000e-01 : f32
    %110 = vector.broadcast %cst_43 : f32 to vector<34x64xf32>
    %111 = arith.mulf %110, %109 : vector<34x64xf32>
    %112 = arith.mulf %99, %111 : vector<34x64xf32>
    %c0_44 = arith.constant 0 : index
    %c0_45 = arith.constant 0 : index
    %c0_46 = arith.constant 0 : index
    %113 = vector.load %arg10[%c0_44, %c0_45, %c0_46] : memref<4x64x32xf32, #tpu.memory_space<vmem>>, vector<1x64x32xf32>
    %114 = vector.shape_cast %113 : vector<1x64x32xf32> to vector<64x32xf32>
    %cst_47 = arith.constant dense<0.000000e+00> : vector<34x32xf32>
    %115 = tpu.matmul %112, %114, %cst_47 {dimension_numbers = #tpu.dot_dimension_numbers<[1], [0], [0], [1], [0, 0, 1, 1], [], []>} : vector<34x64xf32>, vector<64x32xf32>, vector<34x32xf32> -> vector<34x32xf32>
    %116 = vector.extract_strided_slice %0 {offsets = [13, 0], sizes = [1, 32], strides = [1, 1]} : vector<32x128xf32> to vector<1x32xf32>
    %117 = vector.broadcast %116 : vector<1x32xf32> to vector<34x32xf32>
    %118 = arith.addf %115, %117 : vector<34x32xf32>
    %119 = arith.addf %69, %118 : vector<34x32xf32>
    %120 = vector.extract_strided_slice %0 {offsets = [14, 0], sizes = [1, 32], strides = [1, 1]} : vector<32x128xf32> to vector<1x32xf32>
    %121 = vector.extract_strided_slice %0 {offsets = [15, 0], sizes = [1, 32], strides = [1, 1]} : vector<32x128xf32> to vector<1x32xf32>
    %cst_48 = arith.constant dense<0.000000e+00> : vector<34xf32>
    %122 = vector.multi_reduction <add>, %119, %cst_48 [1] : vector<34x32xf32> to vector<34xf32>
    %123 = vector.shape_cast %122 : vector<34xf32> to vector<34x1xf32>
    %cst_49 = arith.constant 3.200000e+01 : f32
    %124 = vector.broadcast %cst_49 : f32 to vector<34x1xf32>
    %125 = arith.divf %123, %124 : vector<34x1xf32>
    %126 = arith.mulf %119, %119 : vector<34x32xf32>
    %cst_50 = arith.constant dense<0.000000e+00> : vector<34xf32>
    %127 = vector.multi_reduction <add>, %126, %cst_50 [1] : vector<34x32xf32> to vector<34xf32>
    %128 = vector.shape_cast %127 : vector<34xf32> to vector<34x1xf32>
    %cst_51 = arith.constant 3.200000e+01 : f32
    %129 = vector.broadcast %cst_51 : f32 to vector<34x1xf32>
    %130 = arith.divf %128, %129 : vector<34x1xf32>
    %131 = arith.mulf %125, %125 : vector<34x1xf32>
    %132 = arith.subf %130, %131 : vector<34x1xf32>
    %cst_52 = arith.constant 9.99999974E-6 : f32
    %133 = vector.broadcast %cst_52 : f32 to vector<34x1xf32>
    %134 = arith.addf %132, %133 : vector<34x1xf32>
    %135 = math.rsqrt %134 : vector<34x1xf32>
    %136 = vector.broadcast %125 : vector<34x1xf32> to vector<34x32xf32>
    %137 = arith.subf %119, %136 : vector<34x32xf32>
    %138 = vector.broadcast %135 : vector<34x1xf32> to vector<34x32xf32>
    %139 = arith.mulf %137, %138 : vector<34x32xf32>
    %140 = vector.broadcast %120 : vector<1x32xf32> to vector<34x32xf32>
    %141 = arith.mulf %139, %140 : vector<34x32xf32>
    %142 = vector.broadcast %121 : vector<1x32xf32> to vector<34x32xf32>
    %143 = arith.addf %141, %142 : vector<34x32xf32>
    %c1 = arith.constant 1 : index
    %c0_53 = arith.constant 0 : index
    %c0_54 = arith.constant 0 : index
    %144 = vector.load %arg7[%c1, %c0_53, %c0_54] : memref<4x128x34xf32, #tpu.memory_space<vmem>>, vector<1x128x34xf32>
    %145 = vector.shape_cast %144 : vector<1x128x34xf32> to vector<128x34xf32>
    %cst_55 = arith.constant dense<0.000000e+00> : vector<128x32xf32>
    %146 = tpu.matmul %145, %143, %cst_55 {dimension_numbers = #tpu.dot_dimension_numbers<[1], [0], [0], [1], [0, 0, 1, 1], [], []>} : vector<128x34xf32>, vector<34x32xf32>, vector<128x32xf32> -> vector<128x32xf32>
    %147 = vector.extract_strided_slice %1 {offsets = [0, 2], sizes = [128, 1], strides = [1, 1]} : vector<128x8xf32> to vector<128x1xf32>
    %148 = vector.broadcast %147 : vector<128x1xf32> to vector<128x32xf32>
    %149 = arith.addf %146, %148 : vector<128x32xf32>
    %150 = arith.mulf %149, %149 : vector<128x32xf32>
    %151 = arith.mulf %149, %150 : vector<128x32xf32>
    %cst_56 = arith.constant 4.471500e-02 : f32
    %152 = vector.broadcast %cst_56 : f32 to vector<128x32xf32>
    %153 = arith.mulf %152, %151 : vector<128x32xf32>
    %154 = arith.addf %149, %153 : vector<128x32xf32>
    %cst_57 = arith.constant 0.797884583 : f32
    %155 = vector.broadcast %cst_57 : f32 to vector<128x32xf32>
    %156 = arith.mulf %155, %154 : vector<128x32xf32>
    %157 = math.tanh %156 : vector<128x32xf32>
    %cst_58 = arith.constant 1.000000e+00 : f32
    %158 = vector.broadcast %cst_58 : f32 to vector<128x32xf32>
    %159 = arith.addf %158, %157 : vector<128x32xf32>
    %cst_59 = arith.constant 5.000000e-01 : f32
    %160 = vector.broadcast %cst_59 : f32 to vector<128x32xf32>
    %161 = arith.mulf %160, %159 : vector<128x32xf32>
    %162 = arith.mulf %149, %161 : vector<128x32xf32>
    %c1_60 = arith.constant 1 : index
    %c0_61 = arith.constant 0 : index
    %c0_62 = arith.constant 0 : index
    %163 = vector.load %arg8[%c1_60, %c0_61, %c0_62] : memref<4x34x128xf32, #tpu.memory_space<vmem>>, vector<1x34x128xf32>
    %164 = vector.shape_cast %163 : vector<1x34x128xf32> to vector<34x128xf32>
    %cst_63 = arith.constant dense<0.000000e+00> : vector<34x32xf32>
    %165 = tpu.matmul %164, %162, %cst_63 {dimension_numbers = #tpu.dot_dimension_numbers<[1], [0], [0], [1], [0, 0, 1, 1], [], []>} : vector<34x128xf32>, vector<128x32xf32>, vector<34x32xf32> -> vector<34x32xf32>
    %166 = vector.extract_strided_slice %1 {offsets = [0, 3], sizes = [34, 1], strides = [1, 1]} : vector<128x8xf32> to vector<34x1xf32>
    %167 = vector.broadcast %166 : vector<34x1xf32> to vector<34x32xf32>
    %168 = arith.addf %165, %167 : vector<34x32xf32>
    %169 = arith.addf %119, %168 : vector<34x32xf32>
    %170 = vector.extract_strided_slice %0 {offsets = [16, 0], sizes = [1, 32], strides = [1, 1]} : vector<32x128xf32> to vector<1x32xf32>
    %171 = vector.extract_strided_slice %0 {offsets = [17, 0], sizes = [1, 32], strides = [1, 1]} : vector<32x128xf32> to vector<1x32xf32>
    %cst_64 = arith.constant dense<0.000000e+00> : vector<34xf32>
    %172 = vector.multi_reduction <add>, %169, %cst_64 [1] : vector<34x32xf32> to vector<34xf32>
    %173 = vector.shape_cast %172 : vector<34xf32> to vector<34x1xf32>
    %cst_65 = arith.constant 3.200000e+01 : f32
    %174 = vector.broadcast %cst_65 : f32 to vector<34x1xf32>
    %175 = arith.divf %173, %174 : vector<34x1xf32>
    %176 = arith.mulf %169, %169 : vector<34x32xf32>
    %cst_66 = arith.constant dense<0.000000e+00> : vector<34xf32>
    %177 = vector.multi_reduction <add>, %176, %cst_66 [1] : vector<34x32xf32> to vector<34xf32>
    %178 = vector.shape_cast %177 : vector<34xf32> to vector<34x1xf32>
    %cst_67 = arith.constant 3.200000e+01 : f32
    %179 = vector.broadcast %cst_67 : f32 to vector<34x1xf32>
    %180 = arith.divf %178, %179 : vector<34x1xf32>
    %181 = arith.mulf %175, %175 : vector<34x1xf32>
    %182 = arith.subf %180, %181 : vector<34x1xf32>
    %cst_68 = arith.constant 9.99999974E-6 : f32
    %183 = vector.broadcast %cst_68 : f32 to vector<34x1xf32>
    %184 = arith.addf %182, %183 : vector<34x1xf32>
    %185 = math.rsqrt %184 : vector<34x1xf32>
    %186 = vector.broadcast %175 : vector<34x1xf32> to vector<34x32xf32>
    %187 = arith.subf %169, %186 : vector<34x32xf32>
    %188 = vector.broadcast %185 : vector<34x1xf32> to vector<34x32xf32>
    %189 = arith.mulf %187, %188 : vector<34x32xf32>
    %190 = vector.broadcast %170 : vector<1x32xf32> to vector<34x32xf32>
    %191 = arith.mulf %189, %190 : vector<34x32xf32>
    %192 = vector.broadcast %171 : vector<1x32xf32> to vector<34x32xf32>
    %193 = arith.addf %191, %192 : vector<34x32xf32>
    %c1_69 = arith.constant 1 : index
    %c0_70 = arith.constant 0 : index
    %c0_71 = arith.constant 0 : index
    %194 = vector.load %arg9[%c1_69, %c0_70, %c0_71] : memref<4x32x64xf32, #tpu.memory_space<vmem>>, vector<1x32x64xf32>
    %195 = vector.shape_cast %194 : vector<1x32x64xf32> to vector<32x64xf32>
    %cst_72 = arith.constant dense<0.000000e+00> : vector<34x64xf32>
    %196 = tpu.matmul %193, %195, %cst_72 {dimension_numbers = #tpu.dot_dimension_numbers<[1], [0], [0], [1], [0, 0, 1, 1], [], []>} : vector<34x32xf32>, vector<32x64xf32>, vector<34x64xf32> -> vector<34x64xf32>
    %197 = vector.extract_strided_slice %0 {offsets = [18, 0], sizes = [1, 64], strides = [1, 1]} : vector<32x128xf32> to vector<1x64xf32>
    %198 = vector.broadcast %197 : vector<1x64xf32> to vector<34x64xf32>
    %199 = arith.addf %196, %198 : vector<34x64xf32>
    %200 = arith.mulf %199, %199 : vector<34x64xf32>
    %201 = arith.mulf %199, %200 : vector<34x64xf32>
    %cst_73 = arith.constant 4.471500e-02 : f32
    %202 = vector.broadcast %cst_73 : f32 to vector<34x64xf32>
    %203 = arith.mulf %202, %201 : vector<34x64xf32>
    %204 = arith.addf %199, %203 : vector<34x64xf32>
    %cst_74 = arith.constant 0.797884583 : f32
    %205 = vector.broadcast %cst_74 : f32 to vector<34x64xf32>
    %206 = arith.mulf %205, %204 : vector<34x64xf32>
    %207 = math.tanh %206 : vector<34x64xf32>
    %cst_75 = arith.constant 1.000000e+00 : f32
    %208 = vector.broadcast %cst_75 : f32 to vector<34x64xf32>
    %209 = arith.addf %208, %207 : vector<34x64xf32>
    %cst_76 = arith.constant 5.000000e-01 : f32
    %210 = vector.broadcast %cst_76 : f32 to vector<34x64xf32>
    %211 = arith.mulf %210, %209 : vector<34x64xf32>
    %212 = arith.mulf %199, %211 : vector<34x64xf32>
    %c1_77 = arith.constant 1 : index
    %c0_78 = arith.constant 0 : index
    %c0_79 = arith.constant 0 : index
    %213 = vector.load %arg10[%c1_77, %c0_78, %c0_79] : memref<4x64x32xf32, #tpu.memory_space<vmem>>, vector<1x64x32xf32>
    %214 = vector.shape_cast %213 : vector<1x64x32xf32> to vector<64x32xf32>
    %cst_80 = arith.constant dense<0.000000e+00> : vector<34x32xf32>
    %215 = tpu.matmul %212, %214, %cst_80 {dimension_numbers = #tpu.dot_dimension_numbers<[1], [0], [0], [1], [0, 0, 1, 1], [], []>} : vector<34x64xf32>, vector<64x32xf32>, vector<34x32xf32> -> vector<34x32xf32>
    %216 = vector.extract_strided_slice %0 {offsets = [19, 0], sizes = [1, 32], strides = [1, 1]} : vector<32x128xf32> to vector<1x32xf32>
    %217 = vector.broadcast %216 : vector<1x32xf32> to vector<34x32xf32>
    %218 = arith.addf %215, %217 : vector<34x32xf32>
    %219 = arith.addf %169, %218 : vector<34x32xf32>
    %220 = vector.extract_strided_slice %0 {offsets = [2, 0], sizes = [1, 32], strides = [1, 1]} : vector<32x128xf32> to vector<1x32xf32>
    %221 = vector.extract_strided_slice %0 {offsets = [3, 0], sizes = [1, 32], strides = [1, 1]} : vector<32x128xf32> to vector<1x32xf32>
    %cst_81 = arith.constant dense<0.000000e+00> : vector<34xf32>
    %222 = vector.multi_reduction <add>, %219, %cst_81 [1] : vector<34x32xf32> to vector<34xf32>
    %223 = vector.shape_cast %222 : vector<34xf32> to vector<34x1xf32>
    %cst_82 = arith.constant 3.200000e+01 : f32
    %224 = vector.broadcast %cst_82 : f32 to vector<34x1xf32>
    %225 = arith.divf %223, %224 : vector<34x1xf32>
    %226 = arith.mulf %219, %219 : vector<34x32xf32>
    %cst_83 = arith.constant dense<0.000000e+00> : vector<34xf32>
    %227 = vector.multi_reduction <add>, %226, %cst_83 [1] : vector<34x32xf32> to vector<34xf32>
    %228 = vector.shape_cast %227 : vector<34xf32> to vector<34x1xf32>
    %cst_84 = arith.constant 3.200000e+01 : f32
    %229 = vector.broadcast %cst_84 : f32 to vector<34x1xf32>
    %230 = arith.divf %228, %229 : vector<34x1xf32>
    %231 = arith.mulf %225, %225 : vector<34x1xf32>
    %232 = arith.subf %230, %231 : vector<34x1xf32>
    %cst_85 = arith.constant 9.99999974E-6 : f32
    %233 = vector.broadcast %cst_85 : f32 to vector<34x1xf32>
    %234 = arith.addf %232, %233 : vector<34x1xf32>
    %235 = math.rsqrt %234 : vector<34x1xf32>
    %236 = vector.broadcast %225 : vector<34x1xf32> to vector<34x32xf32>
    %237 = arith.subf %219, %236 : vector<34x32xf32>
    %238 = vector.broadcast %235 : vector<34x1xf32> to vector<34x32xf32>
    %239 = arith.mulf %237, %238 : vector<34x32xf32>
    %240 = vector.broadcast %220 : vector<1x32xf32> to vector<34x32xf32>
    %241 = arith.mulf %239, %240 : vector<34x32xf32>
    %242 = vector.broadcast %221 : vector<1x32xf32> to vector<34x32xf32>
    %243 = arith.addf %241, %242 : vector<34x32xf32>
    %c0_86 = arith.constant 0 : index
    %c0_87 = arith.constant 0 : index
    %244 = vector.load %arg11[%c0_86, %c0_87] : memref<32x544xf32, #tpu.memory_space<vmem>>, vector<32x544xf32>
    %cst_88 = arith.constant dense<0.000000e+00> : vector<34x544xf32>
    %245 = tpu.matmul %243, %244, %cst_88 {dimension_numbers = #tpu.dot_dimension_numbers<[1], [0], [0], [1], [0, 0, 1, 1], [], []>} : vector<34x32xf32>, vector<32x544xf32>, vector<34x544xf32> -> vector<34x544xf32>
    %c0_89 = arith.constant 0 : index
    %c0_90 = arith.constant 0 : index
    %246 = vector.load %arg16[%c0_89, %c0_90] : memref<2x34xf32, #tpu.memory_space<vmem>>, vector<2x34xf32>
    %247 = arith.mulf %245, %2 : vector<34x544xf32>
    %cst_91 = arith.constant dense<0.000000e+00> : vector<2x544xf32>
    %248 = tpu.matmul %246, %247, %cst_91 {dimension_numbers = #tpu.dot_dimension_numbers<[1], [0], [0], [1], [0, 0, 1, 1], [], []>} : vector<2x34xf32>, vector<34x544xf32>, vector<2x544xf32> -> vector<2x544xf32>
    %cst_92 = arith.constant dense<0.000000e+00> : vector<2x32xf32>
    %249 = tpu.matmul %248, %3, %cst_92 {dimension_numbers = #tpu.dot_dimension_numbers<[1], [0], [0], [1], [0, 0, 1, 1], [], []>} : vector<2x544xf32>, vector<544x32xf32>, vector<2x32xf32> -> vector<2x32xf32>
    %250 = vector.extract_strided_slice %0 {offsets = [4, 0], sizes = [1, 32], strides = [1, 1]} : vector<32x128xf32> to vector<1x32xf32>
    %251 = vector.broadcast %250 : vector<1x32xf32> to vector<2x32xf32>
    %252 = arith.addf %249, %251 : vector<2x32xf32>
    %253 = vector.extract_strided_slice %252 {offsets = [0, 0], sizes = [2, 16], strides = [1, 1]} : vector<2x32xf32> to vector<2x16xf32>
    %254 = vector.extract_strided_slice %252 {offsets = [0, 16], sizes = [2, 16], strides = [1, 1]} : vector<2x32xf32> to vector<2x16xf32>
    %cst_93 = arith.constant 5.000000e-01 : f32
    %255 = vector.broadcast %cst_93 : f32 to vector<2x16xf32>
    %256 = arith.mulf %255, %254 : vector<2x16xf32>
    %257 = math.exp %256 : vector<2x16xf32>
    %c0_94 = arith.constant 0 : index
    %c0_95 = arith.constant 0 : index
    %258 = vector.load %arg3[%c0_94, %c0_95] : memref<2x16xf32, #tpu.memory_space<vmem>>, vector<2x16xf32>
    %259 = arith.mulf %258, %257 : vector<2x16xf32>
    %260 = arith.addf %259, %253 : vector<2x16xf32>
    %261 = tpu.concatenate %252, %260 in 1 : vector<2x32xf32>, vector<2x16xf32> -> vector<2x48xf32>
    %c0_96 = arith.constant 0 : index
    %c0_97 = arith.constant 0 : index
    %262 = vector.load %arg20[%c0_96, %c0_97] : memref<2x48xf32, #tpu.memory_space<vmem>>, vector<2x48xf32>
    tpu.vector_store %arg20[%c0_96, %c0_97], %261 {strides = array<i32>} : memref<2x48xf32, #tpu.memory_space<vmem>>, vector<2x48xf32>,
    %c0_98 = arith.constant 0 : index
    %c0_99 = arith.constant 0 : index
    %263 = vector.load %arg15[%c0_98, %c0_99] : memref<34x2xf32, #tpu.memory_space<vmem>>, vector<34x2xf32>
    %cst_100 = arith.constant dense<0.000000e+00> : vector<34x16xf32>
    %264 = tpu.matmul %263, %260, %cst_100 {dimension_numbers = #tpu.dot_dimension_numbers<[1], [0], [0], [1], [0, 0, 1, 1], [], []>} : vector<34x2xf32>, vector<2x16xf32>, vector<34x16xf32> -> vector<34x16xf32>
    %c0_101 = arith.constant 0 : index
    %c0_102 = arith.constant 0 : index
    %265 = vector.load %arg12[%c0_101, %c0_102] : memref<16x544xf32, #tpu.memory_space<vmem>>, vector<16x544xf32>
    %cst_103 = arith.constant dense<0.000000e+00> : vector<34x544xf32>
    %266 = tpu.matmul %264, %265, %cst_103 {dimension_numbers = #tpu.dot_dimension_numbers<[1], [0], [0], [1], [0, 0, 1, 1], [], []>} : vector<34x16xf32>, vector<16x544xf32>, vector<34x544xf32> -> vector<34x544xf32>
    %267 = arith.mulf %266, %2 : vector<34x544xf32>
    %cst_104 = arith.constant dense<0.000000e+00> : vector<34x32xf32>
    %268 = tpu.matmul %267, %3, %cst_104 {dimension_numbers = #tpu.dot_dimension_numbers<[1], [0], [0], [1], [0, 0, 1, 1], [], []>} : vector<34x544xf32>, vector<544x32xf32>, vector<34x32xf32> -> vector<34x32xf32>
    %c0_105 = arith.constant 0 : index
    %c0_106 = arith.constant 0 : index
    %269 = vector.load %arg13[%c0_105, %c0_106] : memref<34x32xf32, #tpu.memory_space<vmem>>, vector<34x32xf32>
    %270 = arith.addf %268, %269 : vector<34x32xf32>
    %271 = vector.extract_strided_slice %0 {offsets = [20, 0], sizes = [1, 32], strides = [1, 1]} : vector<32x128xf32> to vector<1x32xf32>
    %272 = vector.extract_strided_slice %0 {offsets = [21, 0], sizes = [1, 32], strides = [1, 1]} : vector<32x128xf32> to vector<1x32xf32>
    %cst_107 = arith.constant dense<0.000000e+00> : vector<34xf32>
    %273 = vector.multi_reduction <add>, %270, %cst_107 [1] : vector<34x32xf32> to vector<34xf32>
    %274 = vector.shape_cast %273 : vector<34xf32> to vector<34x1xf32>
    %cst_108 = arith.constant 3.200000e+01 : f32
    %275 = vector.broadcast %cst_108 : f32 to vector<34x1xf32>
    %276 = arith.divf %274, %275 : vector<34x1xf32>
    %277 = arith.mulf %270, %270 : vector<34x32xf32>
    %cst_109 = arith.constant dense<0.000000e+00> : vector<34xf32>
    %278 = vector.multi_reduction <add>, %277, %cst_109 [1] : vector<34x32xf32> to vector<34xf32>
    %279 = vector.shape_cast %278 : vector<34xf32> to vector<34x1xf32>
    %cst_110 = arith.constant 3.200000e+01 : f32
    %280 = vector.broadcast %cst_110 : f32 to vector<34x1xf32>
    %281 = arith.divf %279, %280 : vector<34x1xf32>
    %282 = arith.mulf %276, %276 : vector<34x1xf32>
    %283 = arith.subf %281, %282 : vector<34x1xf32>
    %cst_111 = arith.constant 9.99999974E-6 : f32
    %284 = vector.broadcast %cst_111 : f32 to vector<34x1xf32>
    %285 = arith.addf %283, %284 : vector<34x1xf32>
    %286 = math.rsqrt %285 : vector<34x1xf32>
    %287 = vector.broadcast %276 : vector<34x1xf32> to vector<34x32xf32>
    %288 = arith.subf %270, %287 : vector<34x32xf32>
    %289 = vector.broadcast %286 : vector<34x1xf32> to vector<34x32xf32>
    %290 = arith.mulf %288, %289 : vector<34x32xf32>
    %291 = vector.broadcast %271 : vector<1x32xf32> to vector<34x32xf32>
    %292 = arith.mulf %290, %291 : vector<34x32xf32>
    %293 = vector.broadcast %272 : vector<1x32xf32> to vector<34x32xf32>
    %294 = arith.addf %292, %293 : vector<34x32xf32>
    %c2 = arith.constant 2 : index
    %c0_112 = arith.constant 0 : index
    %c0_113 = arith.constant 0 : index
    %295 = vector.load %arg7[%c2, %c0_112, %c0_113] : memref<4x128x34xf32, #tpu.memory_space<vmem>>, vector<1x128x34xf32>
    %296 = vector.shape_cast %295 : vector<1x128x34xf32> to vector<128x34xf32>
    %cst_114 = arith.constant dense<0.000000e+00> : vector<128x32xf32>
    %297 = tpu.matmul %296, %294, %cst_114 {dimension_numbers = #tpu.dot_dimension_numbers<[1], [0], [0], [1], [0, 0, 1, 1], [], []>} : vector<128x34xf32>, vector<34x32xf32>, vector<128x32xf32> -> vector<128x32xf32>
    %298 = vector.extract_strided_slice %1 {offsets = [0, 4], sizes = [128, 1], strides = [1, 1]} : vector<128x8xf32> to vector<128x1xf32>
    %299 = vector.broadcast %298 : vector<128x1xf32> to vector<128x32xf32>
    %300 = arith.addf %297, %299 : vector<128x32xf32>
    %301 = arith.mulf %300, %300 : vector<128x32xf32>
    %302 = arith.mulf %300, %301 : vector<128x32xf32>
    %cst_115 = arith.constant 4.471500e-02 : f32
    %303 = vector.broadcast %cst_115 : f32 to vector<128x32xf32>
    %304 = arith.mulf %303, %302 : vector<128x32xf32>
    %305 = arith.addf %300, %304 : vector<128x32xf32>
    %cst_116 = arith.constant 0.797884583 : f32
    %306 = vector.broadcast %cst_116 : f32 to vector<128x32xf32>
    %307 = arith.mulf %306, %305 : vector<128x32xf32>
    %308 = math.tanh %307 : vector<128x32xf32>
    %cst_117 = arith.constant 1.000000e+00 : f32
    %309 = vector.broadcast %cst_117 : f32 to vector<128x32xf32>
    %310 = arith.addf %309, %308 : vector<128x32xf32>
    %cst_118 = arith.constant 5.000000e-01 : f32
    %311 = vector.broadcast %cst_118 : f32 to vector<128x32xf32>
    %312 = arith.mulf %311, %310 : vector<128x32xf32>
    %313 = arith.mulf %300, %312 : vector<128x32xf32>
    %c2_119 = arith.constant 2 : index
    %c0_120 = arith.constant 0 : index
    %c0_121 = arith.constant 0 : index
    %314 = vector.load %arg8[%c2_119, %c0_120, %c0_121] : memref<4x34x128xf32, #tpu.memory_space<vmem>>, vector<1x34x128xf32>
    %315 = vector.shape_cast %314 : vector<1x34x128xf32> to vector<34x128xf32>
    %cst_122 = arith.constant dense<0.000000e+00> : vector<34x32xf32>
    %316 = tpu.matmul %315, %313, %cst_122 {dimension_numbers = #tpu.dot_dimension_numbers<[1], [0], [0], [1], [0, 0, 1, 1], [], []>} : vector<34x128xf32>, vector<128x32xf32>, vector<34x32xf32> -> vector<34x32xf32>
    %317 = vector.extract_strided_slice %1 {offsets = [0, 5], sizes = [34, 1], strides = [1, 1]} : vector<128x8xf32> to vector<34x1xf32>
    %318 = vector.broadcast %317 : vector<34x1xf32> to vector<34x32xf32>
    %319 = arith.addf %316, %318 : vector<34x32xf32>
    %320 = arith.addf %270, %319 : vector<34x32xf32>
    %321 = vector.extract_strided_slice %0 {offsets = [22, 0], sizes = [1, 32], strides = [1, 1]} : vector<32x128xf32> to vector<1x32xf32>
    %322 = vector.extract_strided_slice %0 {offsets = [23, 0], sizes = [1, 32], strides = [1, 1]} : vector<32x128xf32> to vector<1x32xf32>
    %cst_123 = arith.constant dense<0.000000e+00> : vector<34xf32>
    %323 = vector.multi_reduction <add>, %320, %cst_123 [1] : vector<34x32xf32> to vector<34xf32>
    %324 = vector.shape_cast %323 : vector<34xf32> to vector<34x1xf32>
    %cst_124 = arith.constant 3.200000e+01 : f32
    %325 = vector.broadcast %cst_124 : f32 to vector<34x1xf32>
    %326 = arith.divf %324, %325 : vector<34x1xf32>
    %327 = arith.mulf %320, %320 : vector<34x32xf32>
    %cst_125 = arith.constant dense<0.000000e+00> : vector<34xf32>
    %328 = vector.multi_reduction <add>, %327, %cst_125 [1] : vector<34x32xf32> to vector<34xf32>
    %329 = vector.shape_cast %328 : vector<34xf32> to vector<34x1xf32>
    %cst_126 = arith.constant 3.200000e+01 : f32
    %330 = vector.broadcast %cst_126 : f32 to vector<34x1xf32>
    %331 = arith.divf %329, %330 : vector<34x1xf32>
    %332 = arith.mulf %326, %326 : vector<34x1xf32>
    %333 = arith.subf %331, %332 : vector<34x1xf32>
    %cst_127 = arith.constant 9.99999974E-6 : f32
    %334 = vector.broadcast %cst_127 : f32 to vector<34x1xf32>
    %335 = arith.addf %333, %334 : vector<34x1xf32>
    %336 = math.rsqrt %335 : vector<34x1xf32>
    %337 = vector.broadcast %326 : vector<34x1xf32> to vector<34x32xf32>
    %338 = arith.subf %320, %337 : vector<34x32xf32>
    %339 = vector.broadcast %336 : vector<34x1xf32> to vector<34x32xf32>
    %340 = arith.mulf %338, %339 : vector<34x32xf32>
    %341 = vector.broadcast %321 : vector<1x32xf32> to vector<34x32xf32>
    %342 = arith.mulf %340, %341 : vector<34x32xf32>
    %343 = vector.broadcast %322 : vector<1x32xf32> to vector<34x32xf32>
    %344 = arith.addf %342, %343 : vector<34x32xf32>
    %c2_128 = arith.constant 2 : index
    %c0_129 = arith.constant 0 : index
    %c0_130 = arith.constant 0 : index
    %345 = vector.load %arg9[%c2_128, %c0_129, %c0_130] : memref<4x32x64xf32, #tpu.memory_space<vmem>>, vector<1x32x64xf32>
    %346 = vector.shape_cast %345 : vector<1x32x64xf32> to vector<32x64xf32>
    %cst_131 = arith.constant dense<0.000000e+00> : vector<34x64xf32>
    %347 = tpu.matmul %344, %346, %cst_131 {dimension_numbers = #tpu.dot_dimension_numbers<[1], [0], [0], [1], [0, 0, 1, 1], [], []>} : vector<34x32xf32>, vector<32x64xf32>, vector<34x64xf32> -> vector<34x64xf32>
    %348 = vector.extract_strided_slice %0 {offsets = [24, 0], sizes = [1, 64], strides = [1, 1]} : vector<32x128xf32> to vector<1x64xf32>
    %349 = vector.broadcast %348 : vector<1x64xf32> to vector<34x64xf32>
    %350 = arith.addf %347, %349 : vector<34x64xf32>
    %351 = arith.mulf %350, %350 : vector<34x64xf32>
    %352 = arith.mulf %350, %351 : vector<34x64xf32>
    %cst_132 = arith.constant 4.471500e-02 : f32
    %353 = vector.broadcast %cst_132 : f32 to vector<34x64xf32>
    %354 = arith.mulf %353, %352 : vector<34x64xf32>
    %355 = arith.addf %350, %354 : vector<34x64xf32>
    %cst_133 = arith.constant 0.797884583 : f32
    %356 = vector.broadcast %cst_133 : f32 to vector<34x64xf32>
    %357 = arith.mulf %356, %355 : vector<34x64xf32>
    %358 = math.tanh %357 : vector<34x64xf32>
    %cst_134 = arith.constant 1.000000e+00 : f32
    %359 = vector.broadcast %cst_134 : f32 to vector<34x64xf32>
    %360 = arith.addf %359, %358 : vector<34x64xf32>
    %cst_135 = arith.constant 5.000000e-01 : f32
    %361 = vector.broadcast %cst_135 : f32 to vector<34x64xf32>
    %362 = arith.mulf %361, %360 : vector<34x64xf32>
    %363 = arith.mulf %350, %362 : vector<34x64xf32>
    %c2_136 = arith.constant 2 : index
    %c0_137 = arith.constant 0 : index
    %c0_138 = arith.constant 0 : index
    %364 = vector.load %arg10[%c2_136, %c0_137, %c0_138] : memref<4x64x32xf32, #tpu.memory_space<vmem>>, vector<1x64x32xf32>
    %365 = vector.shape_cast %364 : vector<1x64x32xf32> to vector<64x32xf32>
    %cst_139 = arith.constant dense<0.000000e+00> : vector<34x32xf32>
    %366 = tpu.matmul %363, %365, %cst_139 {dimension_numbers = #tpu.dot_dimension_numbers<[1], [0], [0], [1], [0, 0, 1, 1], [], []>} : vector<34x64xf32>, vector<64x32xf32>, vector<34x32xf32> -> vector<34x32xf32>
    %367 = vector.extract_strided_slice %0 {offsets = [25, 0], sizes = [1, 32], strides = [1, 1]} : vector<32x128xf32> to vector<1x32xf32>
    %368 = vector.broadcast %367 : vector<1x32xf32> to vector<34x32xf32>
    %369 = arith.addf %366, %368 : vector<34x32xf32>
    %370 = arith.addf %320, %369 : vector<34x32xf32>
    %371 = vector.extract_strided_slice %0 {offsets = [26, 0], sizes = [1, 32], strides = [1, 1]} : vector<32x128xf32> to vector<1x32xf32>
    %372 = vector.extract_strided_slice %0 {offsets = [27, 0], sizes = [1, 32], strides = [1, 1]} : vector<32x128xf32> to vector<1x32xf32>
    %cst_140 = arith.constant dense<0.000000e+00> : vector<34xf32>
    %373 = vector.multi_reduction <add>, %370, %cst_140 [1] : vector<34x32xf32> to vector<34xf32>
    %374 = vector.shape_cast %373 : vector<34xf32> to vector<34x1xf32>
    %cst_141 = arith.constant 3.200000e+01 : f32
    %375 = vector.broadcast %cst_141 : f32 to vector<34x1xf32>
    %376 = arith.divf %374, %375 : vector<34x1xf32>
    %377 = arith.mulf %370, %370 : vector<34x32xf32>
    %cst_142 = arith.constant dense<0.000000e+00> : vector<34xf32>
    %378 = vector.multi_reduction <add>, %377, %cst_142 [1] : vector<34x32xf32> to vector<34xf32>
    %379 = vector.shape_cast %378 : vector<34xf32> to vector<34x1xf32>
    %cst_143 = arith.constant 3.200000e+01 : f32
    %380 = vector.broadcast %cst_143 : f32 to vector<34x1xf32>
    %381 = arith.divf %379, %380 : vector<34x1xf32>
    %382 = arith.mulf %376, %376 : vector<34x1xf32>
    %383 = arith.subf %381, %382 : vector<34x1xf32>
    %cst_144 = arith.constant 9.99999974E-6 : f32
    %384 = vector.broadcast %cst_144 : f32 to vector<34x1xf32>
    %385 = arith.addf %383, %384 : vector<34x1xf32>
    %386 = math.rsqrt %385 : vector<34x1xf32>
    %387 = vector.broadcast %376 : vector<34x1xf32> to vector<34x32xf32>
    %388 = arith.subf %370, %387 : vector<34x32xf32>
    %389 = vector.broadcast %386 : vector<34x1xf32> to vector<34x32xf32>
    %390 = arith.mulf %388, %389 : vector<34x32xf32>
    %391 = vector.broadcast %371 : vector<1x32xf32> to vector<34x32xf32>
    %392 = arith.mulf %390, %391 : vector<34x32xf32>
    %393 = vector.broadcast %372 : vector<1x32xf32> to vector<34x32xf32>
    %394 = arith.addf %392, %393 : vector<34x32xf32>
    %c3 = arith.constant 3 : index
    %c0_145 = arith.constant 0 : index
    %c0_146 = arith.constant 0 : index
    %395 = vector.load %arg7[%c3, %c0_145, %c0_146] : memref<4x128x34xf32, #tpu.memory_space<vmem>>, vector<1x128x34xf32>
    %396 = vector.shape_cast %395 : vector<1x128x34xf32> to vector<128x34xf32>
    %cst_147 = arith.constant dense<0.000000e+00> : vector<128x32xf32>
    %397 = tpu.matmul %396, %394, %cst_147 {dimension_numbers = #tpu.dot_dimension_numbers<[1], [0], [0], [1], [0, 0, 1, 1], [], []>} : vector<128x34xf32>, vector<34x32xf32>, vector<128x32xf32> -> vector<128x32xf32>
    %398 = vector.extract_strided_slice %1 {offsets = [0, 6], sizes = [128, 1], strides = [1, 1]} : vector<128x8xf32> to vector<128x1xf32>
    %399 = vector.broadcast %398 : vector<128x1xf32> to vector<128x32xf32>
    %400 = arith.addf %397, %399 : vector<128x32xf32>
    %401 = arith.mulf %400, %400 : vector<128x32xf32>
    %402 = arith.mulf %400, %401 : vector<128x32xf32>
    %cst_148 = arith.constant 4.471500e-02 : f32
    %403 = vector.broadcast %cst_148 : f32 to vector<128x32xf32>
    %404 = arith.mulf %403, %402 : vector<128x32xf32>
    %405 = arith.addf %400, %404 : vector<128x32xf32>
    %cst_149 = arith.constant 0.797884583 : f32
    %406 = vector.broadcast %cst_149 : f32 to vector<128x32xf32>
    %407 = arith.mulf %406, %405 : vector<128x32xf32>
    %408 = math.tanh %407 : vector<128x32xf32>
    %cst_150 = arith.constant 1.000000e+00 : f32
    %409 = vector.broadcast %cst_150 : f32 to vector<128x32xf32>
    %410 = arith.addf %409, %408 : vector<128x32xf32>
    %cst_151 = arith.constant 5.000000e-01 : f32
    %411 = vector.broadcast %cst_151 : f32 to vector<128x32xf32>
    %412 = arith.mulf %411, %410 : vector<128x32xf32>
    %413 = arith.mulf %400, %412 : vector<128x32xf32>
    %c3_152 = arith.constant 3 : index
    %c0_153 = arith.constant 0 : index
    %c0_154 = arith.constant 0 : index
    %414 = vector.load %arg8[%c3_152, %c0_153, %c0_154] : memref<4x34x128xf32, #tpu.memory_space<vmem>>, vector<1x34x128xf32>
    %415 = vector.shape_cast %414 : vector<1x34x128xf32> to vector<34x128xf32>
    %cst_155 = arith.constant dense<0.000000e+00> : vector<34x32xf32>
    %416 = tpu.matmul %415, %413, %cst_155 {dimension_numbers = #tpu.dot_dimension_numbers<[1], [0], [0], [1], [0, 0, 1, 1], [], []>} : vector<34x128xf32>, vector<128x32xf32>, vector<34x32xf32> -> vector<34x32xf32>
    %417 = vector.extract_strided_slice %1 {offsets = [0, 7], sizes = [34, 1], strides = [1, 1]} : vector<128x8xf32> to vector<34x1xf32>
    %418 = vector.broadcast %417 : vector<34x1xf32> to vector<34x32xf32>
    %419 = arith.addf %416, %418 : vector<34x32xf32>
    %420 = arith.addf %370, %419 : vector<34x32xf32>
    %421 = vector.extract_strided_slice %0 {offsets = [28, 0], sizes = [1, 32], strides = [1, 1]} : vector<32x128xf32> to vector<1x32xf32>
    %422 = vector.extract_strided_slice %0 {offsets = [29, 0], sizes = [1, 32], strides = [1, 1]} : vector<32x128xf32> to vector<1x32xf32>
    %cst_156 = arith.constant dense<0.000000e+00> : vector<34xf32>
    %423 = vector.multi_reduction <add>, %420, %cst_156 [1] : vector<34x32xf32> to vector<34xf32>
    %424 = vector.shape_cast %423 : vector<34xf32> to vector<34x1xf32>
    %cst_157 = arith.constant 3.200000e+01 : f32
    %425 = vector.broadcast %cst_157 : f32 to vector<34x1xf32>
    %426 = arith.divf %424, %425 : vector<34x1xf32>
    %427 = arith.mulf %420, %420 : vector<34x32xf32>
    %cst_158 = arith.constant dense<0.000000e+00> : vector<34xf32>
    %428 = vector.multi_reduction <add>, %427, %cst_158 [1] : vector<34x32xf32> to vector<34xf32>
    %429 = vector.shape_cast %428 : vector<34xf32> to vector<34x1xf32>
    %cst_159 = arith.constant 3.200000e+01 : f32
    %430 = vector.broadcast %cst_159 : f32 to vector<34x1xf32>
    %431 = arith.divf %429, %430 : vector<34x1xf32>
    %432 = arith.mulf %426, %426 : vector<34x1xf32>
    %433 = arith.subf %431, %432 : vector<34x1xf32>
    %cst_160 = arith.constant 9.99999974E-6 : f32
    %434 = vector.broadcast %cst_160 : f32 to vector<34x1xf32>
    %435 = arith.addf %433, %434 : vector<34x1xf32>
    %436 = math.rsqrt %435 : vector<34x1xf32>
    %437 = vector.broadcast %426 : vector<34x1xf32> to vector<34x32xf32>
    %438 = arith.subf %420, %437 : vector<34x32xf32>
    %439 = vector.broadcast %436 : vector<34x1xf32> to vector<34x32xf32>
    %440 = arith.mulf %438, %439 : vector<34x32xf32>
    %441 = vector.broadcast %421 : vector<1x32xf32> to vector<34x32xf32>
    %442 = arith.mulf %440, %441 : vector<34x32xf32>
    %443 = vector.broadcast %422 : vector<1x32xf32> to vector<34x32xf32>
    %444 = arith.addf %442, %443 : vector<34x32xf32>
    %c3_161 = arith.constant 3 : index
    %c0_162 = arith.constant 0 : index
    %c0_163 = arith.constant 0 : index
    %445 = vector.load %arg9[%c3_161, %c0_162, %c0_163] : memref<4x32x64xf32, #tpu.memory_space<vmem>>, vector<1x32x64xf32>
    %446 = vector.shape_cast %445 : vector<1x32x64xf32> to vector<32x64xf32>
    %cst_164 = arith.constant dense<0.000000e+00> : vector<34x64xf32>
    %447 = tpu.matmul %444, %446, %cst_164 {dimension_numbers = #tpu.dot_dimension_numbers<[1], [0], [0], [1], [0, 0, 1, 1], [], []>} : vector<34x32xf32>, vector<32x64xf32>, vector<34x64xf32> -> vector<34x64xf32>
    %448 = vector.extract_strided_slice %0 {offsets = [30, 0], sizes = [1, 64], strides = [1, 1]} : vector<32x128xf32> to vector<1x64xf32>
    %449 = vector.broadcast %448 : vector<1x64xf32> to vector<34x64xf32>
    %450 = arith.addf %447, %449 : vector<34x64xf32>
    %451 = arith.mulf %450, %450 : vector<34x64xf32>
    %452 = arith.mulf %450, %451 : vector<34x64xf32>
    %cst_165 = arith.constant 4.471500e-02 : f32
    %453 = vector.broadcast %cst_165 : f32 to vector<34x64xf32>
    %454 = arith.mulf %453, %452 : vector<34x64xf32>
    %455 = arith.addf %450, %454 : vector<34x64xf32>
    %cst_166 = arith.constant 0.797884583 : f32
    %456 = vector.broadcast %cst_166 : f32 to vector<34x64xf32>
    %457 = arith.mulf %456, %455 : vector<34x64xf32>
    %458 = math.tanh %457 : vector<34x64xf32>
    %cst_167 = arith.constant 1.000000e+00 : f32
    %459 = vector.broadcast %cst_167 : f32 to vector<34x64xf32>
    %460 = arith.addf %459, %458 : vector<34x64xf32>
    %cst_168 = arith.constant 5.000000e-01 : f32
    %461 = vector.broadcast %cst_168 : f32 to vector<34x64xf32>
    %462 = arith.mulf %461, %460 : vector<34x64xf32>
    %463 = arith.mulf %450, %462 : vector<34x64xf32>
    %c3_169 = arith.constant 3 : index
    %c0_170 = arith.constant 0 : index
    %c0_171 = arith.constant 0 : index
    %464 = vector.load %arg10[%c3_169, %c0_170, %c0_171] : memref<4x64x32xf32, #tpu.memory_space<vmem>>, vector<1x64x32xf32>
    %465 = vector.shape_cast %464 : vector<1x64x32xf32> to vector<64x32xf32>
    %cst_172 = arith.constant dense<0.000000e+00> : vector<34x32xf32>
    %466 = tpu.matmul %463, %465, %cst_172 {dimension_numbers = #tpu.dot_dimension_numbers<[1], [0], [0], [1], [0, 0, 1, 1], [], []>} : vector<34x64xf32>, vector<64x32xf32>, vector<34x32xf32> -> vector<34x32xf32>
    %467 = vector.extract_strided_slice %0 {offsets = [31, 0], sizes = [1, 32], strides = [1, 1]} : vector<32x128xf32> to vector<1x32xf32>
    %468 = vector.broadcast %467 : vector<1x32xf32> to vector<34x32xf32>
    %469 = arith.addf %466, %468 : vector<34x32xf32>
    %470 = arith.addf %420, %469 : vector<34x32xf32>
    %471 = vector.extract_strided_slice %0 {offsets = [5, 0], sizes = [1, 32], strides = [1, 1]} : vector<32x128xf32> to vector<1x32xf32>
    %472 = vector.extract_strided_slice %0 {offsets = [6, 0], sizes = [1, 32], strides = [1, 1]} : vector<32x128xf32> to vector<1x32xf32>
    %cst_173 = arith.constant dense<0.000000e+00> : vector<34xf32>
    %473 = vector.multi_reduction <add>, %470, %cst_173 [1] : vector<34x32xf32> to vector<34xf32>
    %474 = vector.shape_cast %473 : vector<34xf32> to vector<34x1xf32>
    %cst_174 = arith.constant 3.200000e+01 : f32
    %475 = vector.broadcast %cst_174 : f32 to vector<34x1xf32>
    %476 = arith.divf %474, %475 : vector<34x1xf32>
    %477 = arith.mulf %470, %470 : vector<34x32xf32>
    %cst_175 = arith.constant dense<0.000000e+00> : vector<34xf32>
    %478 = vector.multi_reduction <add>, %477, %cst_175 [1] : vector<34x32xf32> to vector<34xf32>
    %479 = vector.shape_cast %478 : vector<34xf32> to vector<34x1xf32>
    %cst_176 = arith.constant 3.200000e+01 : f32
    %480 = vector.broadcast %cst_176 : f32 to vector<34x1xf32>
    %481 = arith.divf %479, %480 : vector<34x1xf32>
    %482 = arith.mulf %476, %476 : vector<34x1xf32>
    %483 = arith.subf %481, %482 : vector<34x1xf32>
    %cst_177 = arith.constant 9.99999974E-6 : f32
    %484 = vector.broadcast %cst_177 : f32 to vector<34x1xf32>
    %485 = arith.addf %483, %484 : vector<34x1xf32>
    %486 = math.rsqrt %485 : vector<34x1xf32>
    %487 = vector.broadcast %476 : vector<34x1xf32> to vector<34x32xf32>
    %488 = arith.subf %470, %487 : vector<34x32xf32>
    %489 = vector.broadcast %486 : vector<34x1xf32> to vector<34x32xf32>
    %490 = arith.mulf %488, %489 : vector<34x32xf32>
    %491 = vector.broadcast %471 : vector<1x32xf32> to vector<34x32xf32>
    %492 = arith.mulf %490, %491 : vector<34x32xf32>
    %493 = vector.broadcast %472 : vector<1x32xf32> to vector<34x32xf32>
    %494 = arith.addf %492, %493 : vector<34x32xf32>
    %c0_178 = arith.constant 0 : index
    %c0_179 = arith.constant 0 : index
    %495 = vector.load %arg14[%c0_178, %c0_179] : memref<32x2xf32, #tpu.memory_space<vmem>>, vector<32x2xf32>
    %cst_180 = arith.constant dense<0.000000e+00> : vector<34x2xf32>
    %496 = tpu.matmul %494, %495, %cst_180 {dimension_numbers = #tpu.dot_dimension_numbers<[1], [0], [0], [1], [0, 0, 1, 1], [], []>} : vector<34x32xf32>, vector<32x2xf32>, vector<34x2xf32> -> vector<34x2xf32>
    %497 = vector.extract_strided_slice %0 {offsets = [7, 0], sizes = [1, 2], strides = [1, 1]} : vector<32x128xf32> to vector<1x2xf32>
    %498 = vector.broadcast %497 : vector<1x2xf32> to vector<34x2xf32>
    %499 = arith.addf %496, %498 : vector<34x2xf32>
    %c0_181 = arith.constant 0 : index
    %c0_182 = arith.constant 0 : index
    %500 = vector.load %arg19[%c0_181, %c0_182] : memref<34x2xf32, #tpu.memory_space<vmem>>, vector<34x2xf32>
    tpu.vector_store %arg19[%c0_181, %c0_182], %499 {strides = array<i32>} : memref<34x2xf32, #tpu.memory_space<vmem>>, vector<34x2xf32>,
    return
  }
  func.func @transform_0(%arg0: i32) -> (i32, i32) {
    %c0_i32 = arith.constant 0 : i32
    %c0_i32_0 = arith.constant 0 : i32
    %c0_i32_1 = arith.constant 0 : i32
    return %c0_i32, %c0_i32_0 : i32, i32
  }
  func.func @transform_1(%arg0: i32) -> (i32, i32) {
    %c0_i32 = arith.constant 0 : i32
    %c0_i32_0 = arith.constant 0 : i32
    %c0_i32_1 = arith.constant 0 : i32
    return %c0_i32, %c0_i32_0 : i32, i32
  }
  func.func @transform_2(%arg0: i32) -> (i32, i32) {
    %c0_i32 = arith.constant 0 : i32
    %c0_i32_0 = arith.constant 0 : i32
    %c0_i32_1 = arith.constant 0 : i32
    return %c0_i32, %c0_i32_0 : i32, i32
  }
  func.func @transform_3(%arg0: i32) -> (i32, i32) {
    %c0_i32 = arith.constant 0 : i32
    %c0_i32_0 = arith.constant 0 : i32
    %c0_i32_1 = arith.constant 0 : i32
    return %c0_i32, %c0_i32_0 : i32, i32
  }
  func.func @transform_4(%arg0: i32) -> (i32, i32) {
    %c0_i32 = arith.constant 0 : i32
    %c0_i32_0 = arith.constant 0 : i32
    %c0_i32_1 = arith.constant 0 : i32
    return %c0_i32, %c0_i32_0 : i32, i32
  }
  func.func @transform_5(%arg0: i32) -> (i32, i32) {
    %c0_i32 = arith.constant 0 : i32
    %c0_i32_0 = arith.constant 0 : i32
    %c0_i32_1 = arith.constant 0 : i32
    return %c0_i32, %c0_i32_0 : i32, i32
  }
  func.func @transform_6(%arg0: i32) -> (i32, i32, i32) {
    %c0_i32 = arith.constant 0 : i32
    %c0_i32_0 = arith.constant 0 : i32
    %c0_i32_1 = arith.constant 0 : i32
    %c0_i32_2 = arith.constant 0 : i32
    return %c0_i32, %c0_i32_0, %c0_i32_1 : i32, i32, i32
  }
  func.func @transform_7(%arg0: i32) -> (i32, i32, i32) {
    %c0_i32 = arith.constant 0 : i32
    %c0_i32_0 = arith.constant 0 : i32
    %c0_i32_1 = arith.constant 0 : i32
    %c0_i32_2 = arith.constant 0 : i32
    return %c0_i32, %c0_i32_0, %c0_i32_1 : i32, i32, i32
  }
  func.func @transform_8(%arg0: i32) -> (i32, i32, i32) {
    %c0_i32 = arith.constant 0 : i32
    %c0_i32_0 = arith.constant 0 : i32
    %c0_i32_1 = arith.constant 0 : i32
    %c0_i32_2 = arith.constant 0 : i32
    return %c0_i32, %c0_i32_0, %c0_i32_1 : i32, i32, i32
  }
  func.func @transform_9(%arg0: i32) -> (i32, i32, i32) {
    %c0_i32 = arith.constant 0 : i32
    %c0_i32_0 = arith.constant 0 : i32
    %c0_i32_1 = arith.constant 0 : i32
    %c0_i32_2 = arith.constant 0 : i32
    return %c0_i32, %c0_i32_0, %c0_i32_1 : i32, i32, i32
  }
  func.func @transform_10(%arg0: i32) -> (i32, i32) {
    %c0_i32 = arith.constant 0 : i32
    %c0_i32_0 = arith.constant 0 : i32
    %c0_i32_1 = arith.constant 0 : i32
    return %c0_i32, %c0_i32_0 : i32, i32
  }
  func.func @transform_11(%arg0: i32) -> (i32, i32) {
    %c0_i32 = arith.constant 0 : i32
    %c0_i32_0 = arith.constant 0 : i32
    %c0_i32_1 = arith.constant 0 : i32
    return %c0_i32, %c0_i32_0 : i32, i32
  }
  func.func @transform_12(%arg0: i32) -> (i32, i32) {
    %c0_i32 = arith.constant 0 : i32
    %c0_i32_0 = arith.constant 0 : i32
    %c0_i32_1 = arith.constant 0 : i32
    return %c0_i32, %c0_i32_0 : i32, i32
  }
  func.func @transform_13(%arg0: i32) -> (i32, i32) {
    %c0_i32 = arith.constant 0 : i32
    %c0_i32_0 = arith.constant 0 : i32
    %c0_i32_1 = arith.constant 0 : i32
    return %c0_i32, %c0_i32_0 : i32, i32
  }
  func.func @transform_14(%arg0: i32) -> (i32, i32) {
    %c0_i32 = arith.constant 0 : i32
    %c0_i32_0 = arith.constant 0 : i32
    %c0_i32_1 = arith.constant 0 : i32
    return %c0_i32, %c0_i32_0 : i32, i32
  }
  func.func @transform_15(%arg0: i32) -> (i32, i32) {
    %c0_i32 = arith.constant 0 : i32
    %c0_i32_0 = arith.constant 0 : i32
    %c0_i32_1 = arith.constant 0 : i32
    return %c0_i32, %c0_i32_0 : i32, i32
  }
  func.func @transform_16(%arg0: i32) -> (i32, i32) {
    %c0_i32 = arith.constant 0 : i32
    %c0_i32_0 = arith.constant 0 : i32
    %c0_i32_1 = arith.constant 0 : i32
    return %c0_i32, %c0_i32_0 : i32, i32
  }
  func.func @transform_17(%arg0: i32) -> (i32, i32) {
    %c0_i32 = arith.constant 0 : i32
    %c0_i32_0 = arith.constant 0 : i32
    %c0_i32_1 = arith.constant 0 : i32
    return %c0_i32, %c0_i32_0 : i32, i32
  }
  func.func @transform_18(%arg0: i32) -> (i32, i32) {
    %c0_i32 = arith.constant 0 : i32
    %c0_i32_0 = arith.constant 0 : i32
    %c0_i32_1 = arith.constant 0 : i32
    return %c0_i32, %c0_i32_0 : i32, i32
  }
  func.func @transform_19(%arg0: i32) -> (i32, i32) {
    %c0_i32 = arith.constant 0 : i32
    %c0_i32_0 = arith.constant 0 : i32
    %c0_i32_1 = arith.constant 0 : i32
    return %c0_i32, %c0_i32_0 : i32, i32
  }
}

</mosaic_0001>

<llo_original>
// kernel: tpu_custom_call.1
$region0: #{tpu_custom_call.1}
  #allocation0 [shape = 'u32[]', space=smem, size = 0x4, offset = 0x4, fixed_abs, tag = 'smem constant byte address 0x4 - core index']
  #allocation1 [shape = 'u32[144,128]{1,0:T(1,128)}', space=vmem, size = 0x12000, scoped, tag = 'internal scratch']
  %s0 = inlined_call_operand.vmem [shape: f32[34,2], index: 0, kind: input, shape index: {}]
  %s1 = inlined_call_operand.vmem [shape: f32[34,1], index: 1, kind: input, shape index: {}]
  %s2 = inlined_call_operand.vmem [shape: f32[2,16], index: 2, kind: input, shape index: {}]
  %s3 = inlined_call_operand.vmem [shape: f32[32,128], index: 3, kind: input, shape index: {}]
  %s4 = inlined_call_operand.vmem [shape: f32[128,8], index: 4, kind: input, shape index: {}]
  %s5 = inlined_call_operand.vmem [shape: f32[2,32], index: 5, kind: input, shape index: {}]
  %s6 = inlined_call_operand.vmem [shape: f32[4,128,34], index: 6, kind: input, shape index: {}]
  %s7 = inlined_call_operand.vmem [shape: f32[4,34,128], index: 7, kind: input, shape index: {}]
  %s8 = inlined_call_operand.vmem [shape: f32[4,32,64], index: 8, kind: input, shape index: {}]
  %s9 = inlined_call_operand.vmem [shape: f32[4,64,32], index: 9, kind: input, shape index: {}]
  %s10 = inlined_call_operand.vmem [shape: f32[32,544], index: 10, kind: input, shape index: {}]
  %s11 = inlined_call_operand.vmem [shape: f32[16,544], index: 11, kind: input, shape index: {}]
  %s12 = inlined_call_operand.vmem [shape: f32[34,32], index: 12, kind: input, shape index: {}]
  %s13 = inlined_call_operand.vmem [shape: f32[32,2], index: 13, kind: input, shape index: {}]
  %s14 = inlined_call_operand.vmem [shape: f32[34,2], index: 14, kind: input, shape index: {}]
  %s15 = inlined_call_operand.vmem [shape: f32[2,34], index: 15, kind: input, shape index: {}]
  %s16 = inlined_call_operand.vmem [shape: f32[34,544], index: 16, kind: input, shape index: {}]
  %s17 = inlined_call_operand.vmem [shape: f32[544,32], index: 17, kind: input, shape index: {}]
  %s18 = inlined_call_operand.vmem [shape: f32[34,2], index: 18, kind: output, shape index: {0}]
  %s19 = inlined_call_operand.hbm [shape: f32[2,48], index: 19, kind: output, shape index: {1}]
  %20 = xla_tuple %s18, %s19
  %s21 = sld [smem:[#allocation0]]
  $region90: #{tpu_custom_call.1} parent=0
    _
  %s23 = ssub.s32 1, %s21
  %s24 = scalar_select 0, %s23, %s21
  $region1: #{tpu_custom_call.1} parent=0
    #allocation2 [shape = 'u8[1024]{0}', space=vmem, size = 0x400, scoped, tag = 'output window, operand 1, single buffered']
    #allocation3 [shape = 's32[1]{0}', space=sflag, size = 0x4, scoped, tag = 'scoped memory for tpu_custom_call.1']
    %25 = vsyncpa [#allocation3], 0
    // Predicated region
    $region2: #{tpu_custom_call.1} parent=1 // pred_check
      _
    $region3: #{tpu_custom_call.1} parent=1 // pred_check_branch
      %27 = sbr.rel (0) target = $region5
    $region4: #{tpu_custom_call.1} parent=1 // pred_region
      _
    $region5: #{tpu_custom_call.1} parent=1 // pred_fallthru
      _
    // Predicated region
    $region6: #{tpu_custom_call.1} parent=1 // pred_check
      _
    $region7: #{tpu_custom_call.1} parent=1 // pred_check_branch
      %29 = sbr.rel (0) target = $region9
    $region8: #{tpu_custom_call.1} parent=1 // pred_region
      _
    $region9: #{tpu_custom_call.1} parent=1 // pred_fallthru
      _
    // Predicated region
    $region10: #{tpu_custom_call.1} parent=1 // pred_check
      _
    $region11: #{tpu_custom_call.1} parent=1 // pred_check_branch
      %31 = sbr.rel (0) target = $region13
    $region12: #{tpu_custom_call.1} parent=1 // pred_region
      _
    $region13: #{tpu_custom_call.1} parent=1 // pred_fallthru
      _
    // Predicated region
    $region14: #{tpu_custom_call.1} parent=1 // pred_check
      _
    $region15: #{tpu_custom_call.1} parent=1 // pred_check_branch
      %33 = sbr.rel (0) target = $region17
    $region16: #{tpu_custom_call.1} parent=1 // pred_region
      _
    $region17: #{tpu_custom_call.1} parent=1 // pred_fallthru
      _
    // Predicated region
    $region18: #{tpu_custom_call.1} parent=1 // pred_check
      _
    $region19: #{tpu_custom_call.1} parent=1 // pred_check_branch
      %35 = sbr.rel (0) target = $region21
    $region20: #{tpu_custom_call.1} parent=1 // pred_region
      _
    $region21: #{tpu_custom_call.1} parent=1 // pred_fallthru
      _
    // Predicated region
    $region22: #{tpu_custom_call.1} parent=1 // pred_check
      _
    $region23: #{tpu_custom_call.1} parent=1 // pred_check_branch
      %37 = sbr.rel (0) target = $region25
    $region24: #{tpu_custom_call.1} parent=1 // pred_region
      _
    $region25: #{tpu_custom_call.1} parent=1 // pred_fallthru
      _
    // Predicated region
    $region26: #{tpu_custom_call.1} parent=1 // pred_check
      _
    $region27: #{tpu_custom_call.1} parent=1 // pred_check_branch
      %39 = sbr.rel (0) target = $region29
    $region28: #{tpu_custom_call.1} parent=1 // pred_region
      _
    $region29: #{tpu_custom_call.1} parent=1 // pred_fallthru
      _
    // Predicated region
    $region30: #{tpu_custom_call.1} parent=1 // pred_check
      _
    $region31: #{tpu_custom_call.1} parent=1 // pred_check_branch
      %41 = sbr.rel (0) target = $region33
    $region32: #{tpu_custom_call.1} parent=1 // pred_region
      _
    $region33: #{tpu_custom_call.1} parent=1 // pred_fallthru
      _
    // Predicated region
    $region34: #{tpu_custom_call.1} parent=1 // pred_check
      _
    $region35: #{tpu_custom_call.1} parent=1 // pred_check_branch
      %43 = sbr.rel (0) target = $region37
    $region36: #{tpu_custom_call.1} parent=1 // pred_region
      _
    $region37: #{tpu_custom_call.1} parent=1 // pred_fallthru
      _
    // Predicated region
    $region38: #{tpu_custom_call.1} parent=1 // pred_check
      _
    $region39: #{tpu_custom_call.1} parent=1 // pred_check_branch
      %45 = sbr.rel (0) target = $region41
    $region40: #{tpu_custom_call.1} parent=1 // pred_region
      _
    $region41: #{tpu_custom_call.1} parent=1 // pred_fallthru
      _
    // Predicated region
    $region42: #{tpu_custom_call.1} parent=1 // pred_check
      _
    $region43: #{tpu_custom_call.1} parent=1 // pred_check_branch
      %47 = sbr.rel (0) target = $region45
    $region44: #{tpu_custom_call.1} parent=1 // pred_region
      _
    $region45: #{tpu_custom_call.1} parent=1 // pred_fallthru
      _
    // Predicated region
    $region46: #{tpu_custom_call.1} parent=1 // pred_check
      _
    $region47: #{tpu_custom_call.1} parent=1 // pred_check_branch
      %49 = sbr.rel (0) target = $region49
    $region48: #{tpu_custom_call.1} parent=1 // pred_region
      _
    $region49: #{tpu_custom_call.1} parent=1 // pred_fallthru
      _
    // Predicated region
    $region50: #{tpu_custom_call.1} parent=1 // pred_check
      _
    $region51: #{tpu_custom_call.1} parent=1 // pred_check_branch
      %51 = sbr.rel (0) target = $region53
    $region52: #{tpu_custom_call.1} parent=1 // pred_region
      _
    $region53: #{tpu_custom_call.1} parent=1 // pred_fallthru
      _
    // Predicated region
    $region54: #{tpu_custom_call.1} parent=1 // pred_check
      _
    $region55: #{tpu_custom_call.1} parent=1 // pred_check_branch
      %53 = sbr.rel (0) target = $region57
    $region56: #{tpu_custom_call.1} parent=1 // pred_region
      _
    $region57: #{tpu_custom_call.1} parent=1 // pred_fallthru
      _
    // Predicated region
    $region58: #{tpu_custom_call.1} parent=1 // pred_check
      _
    $region59: #{tpu_custom_call.1} parent=1 // pred_check_branch
      %55 = sbr.rel (0) target = $region61
    $region60: #{tpu_custom_call.1} parent=1 // pred_region
      _
    $region61: #{tpu_custom_call.1} parent=1 // pred_fallthru
      _
    // Predicated region
    $region62: #{tpu_custom_call.1} parent=1 // pred_check
      _
    $region63: #{tpu_custom_call.1} parent=1 // pred_check_branch
      %57 = sbr.rel (0) target = $region65
    $region64: #{tpu_custom_call.1} parent=1 // pred_region
      _
    $region65: #{tpu_custom_call.1} parent=1 // pred_fallthru
      _
    // Predicated region
    $region66: #{tpu_custom_call.1} parent=1 // pred_check
      _
    $region67: #{tpu_custom_call.1} parent=1 // pred_check_branch
      %59 = sbr.rel (0) target = $region69
    $region68: #{tpu_custom_call.1} parent=1 // pred_region
      _
    $region69: #{tpu_custom_call.1} parent=1 // pred_fallthru
      _
    // Predicated region
    $region70: #{tpu_custom_call.1} parent=1 // pred_check
      _
    $region71: #{tpu_custom_call.1} parent=1 // pred_check_branch
      %61 = sbr.rel (0) target = $region73
    $region72: #{tpu_custom_call.1} parent=1 // pred_region
      _
    $region73: #{tpu_custom_call.1} parent=1 // pred_fallthru
      _
    %v62 = vld [vmem:[%s3] sm:$0xff]
    %v63 = vld [vmem:[%s3 + $0x8] sm:$0xff]
    %v64 = vld [vmem:[%s3 + $0x10] sm:$0xff]
    %v65 = vld [vmem:[%s3 + $0x18] sm:$0xff]
    %v66 = vld [vmem:[%s4] sm:$0xff]
    %v67 = vld [vmem:[%s4 + $0x8] sm:$0xff]
    %v68 = vld [vmem:[%s4 + $0x10] sm:$0xff]
    %v69 = vld [vmem:[%s4 + $0x18] sm:$0xff]
    %v70 = vld [vmem:[%s4 + $0x20] sm:$0xff]
    %v71 = vld [vmem:[%s4 + $0x28] sm:$0xff]
    %v72 = vld [vmem:[%s4 + $0x30] sm:$0xff]
    %v73 = vld [vmem:[%s4 + $0x38] sm:$0xff]
    %v74 = vld [vmem:[%s4 + $0x40] sm:$0xff]
    %v75 = vld [vmem:[%s4 + $0x48] sm:$0xff]
    %v76 = vld [vmem:[%s4 + $0x50] sm:$0xff]
    %v77 = vld [vmem:[%s4 + $0x58] sm:$0xff]
    %v78 = vld [vmem:[%s4 + $0x60] sm:$0xff]
    %v79 = vld [vmem:[%s4 + $0x68] sm:$0xff]
    %v80 = vld [vmem:[%s4 + $0x70] sm:$0xff]
    %v81 = vld [vmem:[%s4 + $0x78] sm:$0xff]
    %v82 = vld [vmem:[%s16] sm:$0xff]
    %v83 = vld [vmem:[%s16 + $0x8] sm:$0xff]
    %v84 = vld [vmem:[%s16 + $0x10] sm:$0xff]
    %v85 = vld [vmem:[%s16 + $0x18] sm:$0xff]
    %v86 = vld [vmem:[%s16 + $0x20] sm:$0xff]
    %v87 = vld [vmem:[%s16 + $0x28] sm:$0xff]
    %v88 = vld [vmem:[%s16 + $0x30] sm:$0xff]
    %v89 = vld [vmem:[%s16 + $0x38] sm:$0xff]
    %v90 = vld [vmem:[%s16 + $0x40] sm:$0xff]
    %v91 = vld [vmem:[%s16 + $0x48] sm:$0xff]
    %v92 = vld [vmem:[%s16 + $0x50] sm:$0xff]
    %v93 = vld [vmem:[%s16 + $0x58] sm:$0xff]
    %v94 = vld [vmem:[%s16 + $0x60] sm:$0xff]
    %v95 = vld [vmem:[%s16 + $0x68] sm:$0xff]
    %v96 = vld [vmem:[%s16 + $0x70] sm:$0xff]
    %v97 = vld [vmem:[%s16 + $0x78] sm:$0xff]
    %v98 = vld [vmem:[%s16 + $0x80] sm:$0xff]
    %v99 = vld [vmem:[%s16 + $0x88] sm:$0xff]
    %v100 = vld [vmem:[%s16 + $0x90] sm:$0xff]
    %v101 = vld [vmem:[%s16 + $0x98] sm:$0xff]
    %v102 = vld [vmem:[%s16 + $0xa0] sm:$0x3]
    %v103 = vld [vmem:[%s16 + $0xa8] sm:$0x3]
    %v104 = vld [vmem:[%s16 + $0xb0] sm:$0x3]
    %v105 = vld [vmem:[%s16 + $0xb8] sm:$0x3]
    %v106 = vld [vmem:[%s16 + $0xc0] sm:$0x3]
    %v107 = vld [vmem:[%s17] sm:$0xff]
    %v108 = vld [vmem:[%s17 + $0x8] sm:$0xff]
    %v109 = vld [vmem:[%s17 + $0x10] sm:$0xff]
    %v110 = vld [vmem:[%s17 + $0x18] sm:$0xff]
    %v111 = vld [vmem:[%s17 + $0x20] sm:$0xff]
    %v112 = vld [vmem:[%s17 + $0x28] sm:$0xff]
    %v113 = vld [vmem:[%s17 + $0x30] sm:$0xff]
    %v114 = vld [vmem:[%s17 + $0x38] sm:$0xff]
    %v115 = vld [vmem:[%s17 + $0x40] sm:$0xff]
    %v116 = vld [vmem:[%s17 + $0x48] sm:$0xff]
    %v117 = vld [vmem:[%s17 + $0x50] sm:$0xff]
    %v118 = vld [vmem:[%s17 + $0x58] sm:$0xff]
    %v119 = vld [vmem:[%s17 + $0x60] sm:$0xff]
    %v120 = vld [vmem:[%s17 + $0x68] sm:$0xff]
    %v121 = vld [vmem:[%s17 + $0x70] sm:$0xff]
    %v122 = vld [vmem:[%s17 + $0x78] sm:$0xff]
    %v123 = vld [vmem:[%s17 + $0x80] sm:$0xff]
    %v124 = vld [vmem:[%s17 + $0x88] sm:$0xff]
    %v125 = vld [vmem:[%s17 + $0x90] sm:$0xff]
    %v126 = vld [vmem:[%s17 + $0x98] sm:$0xff]
    %v127 = vld [vmem:[%s17 + $0xa0] sm:$0xff]
    %v128 = vld [vmem:[%s17 + $0xa8] sm:$0xff]
    %v129 = vld [vmem:[%s17 + $0xb0] sm:$0xff]
    %v130 = vld [vmem:[%s17 + $0xb8] sm:$0xff]
    %v131 = vld [vmem:[%s17 + $0xc0] sm:$0xff]
    %v132 = vld [vmem:[%s17 + $0xc8] sm:$0xff]
    %v133 = vld [vmem:[%s17 + $0xd0] sm:$0xff]
    %v134 = vld [vmem:[%s17 + $0xd8] sm:$0xff]
    %v135 = vld [vmem:[%s17 + $0xe0] sm:$0xff]
    %v136 = vld [vmem:[%s17 + $0xe8] sm:$0xff]
    %v137 = vld [vmem:[%s17 + $0xf0] sm:$0xff]
    %v138 = vld [vmem:[%s17 + $0xf8] sm:$0xff]
    %v139 = vld [vmem:[%s17 + $0x100] sm:$0xff]
    %v140 = vld [vmem:[%s17 + $0x108] sm:$0xff]
    %v141 = vld [vmem:[%s17 + $0x110] sm:$0xff]
    %v142 = vld [vmem:[%s17 + $0x118] sm:$0xff]
    %v143 = vld [vmem:[%s17 + $0x120] sm:$0xff]
    %v144 = vld [vmem:[%s17 + $0x128] sm:$0xff]
    %v145 = vld [vmem:[%s17 + $0x130] sm:$0xff]
    %v146 = vld [vmem:[%s17 + $0x138] sm:$0xff]
    %v147 = vld [vmem:[%s17 + $0x140] sm:$0xff]
    %v148 = vld [vmem:[%s17 + $0x148] sm:$0xff]
    %v149 = vld [vmem:[%s17 + $0x150] sm:$0xff]
    %v150 = vld [vmem:[%s17 + $0x158] sm:$0xff]
    %v151 = vld [vmem:[%s17 + $0x160] sm:$0xff]
    %v152 = vld [vmem:[%s17 + $0x168] sm:$0xff]
    %v153 = vld [vmem:[%s17 + $0x170] sm:$0xff]
    %v154 = vld [vmem:[%s17 + $0x178] sm:$0xff]
    %v155 = vld [vmem:[%s17 + $0x180] sm:$0xff]
    %v156 = vld [vmem:[%s17 + $0x188] sm:$0xff]
    %v157 = vld [vmem:[%s17 + $0x190] sm:$0xff]
    %v158 = vld [vmem:[%s17 + $0x198] sm:$0xff]
    %v159 = vld [vmem:[%s17 + $0x1a0] sm:$0xff]
    %v160 = vld [vmem:[%s17 + $0x1a8] sm:$0xff]
    %v161 = vld [vmem:[%s17 + $0x1b0] sm:$0xff]
    %v162 = vld [vmem:[%s17 + $0x1b8] sm:$0xff]
    %v163 = vld [vmem:[%s17 + $0x1c0] sm:$0xff]
    %v164 = vld [vmem:[%s17 + $0x1c8] sm:$0xff]
    %v165 = vld [vmem:[%s17 + $0x1d0] sm:$0xff]
    %v166 = vld [vmem:[%s17 + $0x1d8] sm:$0xff]
    %v167 = vld [vmem:[%s17 + $0x1e0] sm:$0xff]
    %v168 = vld [vmem:[%s17 + $0x1e8] sm:$0xff]
    %v169 = vld [vmem:[%s17 + $0x1f0] sm:$0xff]
    %v170 = vld [vmem:[%s17 + $0x1f8] sm:$0xff]
    %v171 = vld [vmem:[%s17 + $0x200] sm:$0xff]
    %v172 = vld [vmem:[%s17 + $0x208] sm:$0xff]
    %v173 = vld [vmem:[%s17 + $0x210] sm:$0xff]
    %v174 = vld [vmem:[%s17 + $0x218] sm:$0xff]
    %v175 = vld [vmem:[%s0] sm:$0xff]
    %v176 = vld [vmem:[%s0 + $0x8] sm:$0xff]
    %v177 = vld [vmem:[%s0 + $0x10] sm:$0xff]
    %v178 = vld [vmem:[%s0 + $0x18] sm:$0xff]
    %v179 = vld [vmem:[%s0 + $0x20] sm:$0x3]
    %v180 = vld [vmem:[%s5] sm:$0x3]
    %v181 = vlaneseq
    %v182 = vshrl.u32 %v181, 7
    %v183 = vsub.s32 0, %v182
    %v184 = vrot.slane %v62, %v183
    %vm185 = vcmask 15360
    %v187 = vsel %vm185, %v175, 0
    %v190 = vsel %vm185, %v176, 0
    %v193 = vsel %vm185, %v177, 0
    %v196 = vsel %vm185, %v178, 0
    %v199 = vsel %vm185, %v179, 0
    %vm201 = vcmask 1041408
    %v203 = vsel %vm201, %v180, 0
    %205 = vmatprep.subr.mxu0 0.0
    %206 = vmatpush1.msra.mxu0 %v203
    %207 = vmatprep.subr.mxu0 0.0
    %208 = vmatpush1.msra.mxu0 0.0
    %209 = vmatprep.subr.mxu0 0.0
    %210 = vmatpush1.msra.mxu0 0.0
    %211 = vmatprep.subr.mxu0 0.0
    %212 = vmatpush1.msra.mxu0 0.0
    %213 = vmatprep.subr.mxu0 0.0
    %214 = vmatpush1.msra.mxu0 0.0
    %215 = vmatprep.subr.mxu0 0.0
    %216 = vmatpush1.msra.mxu0 0.0
    %217 = vmatprep.subr.mxu0 0.0
    %218 = vmatpush1.msra.mxu0 0.0
    %219 = vmatprep.subr.mxu0 0.0
    %220 = vmatpush1.msra.mxu0 0.0
    %221 = vmatprep.subr.mxu0 0.0
    %222 = vmatpush1.msra.mxu0 0.0
    %223 = vmatprep.subr.mxu0 0.0
    %224 = vmatpush1.msra.mxu0 0.0
    %225 = vmatprep.subr.mxu0 0.0
    %226 = vmatpush1.msra.mxu0 0.0
    %227 = vmatprep.subr.mxu0 0.0
    %228 = vmatpush1.msra.mxu0 0.0
    %229 = vmatprep.subr.mxu0 0.0
    %230 = vmatpush1.msra.mxu0 0.0
    %231 = vmatprep.subr.mxu0 0.0
    %232 = vmatpush1.msra.mxu0 0.0
    %233 = vmatprep.subr.mxu0 0.0
    %234 = vmatpush1.msra.mxu0 0.0
    %235 = vmatprep.subr.mxu0 0.0
    %236 = vmatpush1.msra.mxu0 0.0
    %237 = vmatprep.subr.mxu0 0.0
    %238 = vmatpush1.msra.mxu0 0.0
    %239 = vmatprep.subr.mxu0 0.0
    %240 = vmatpush1.msra.mxu0 0.0
    %241 = vmatprep.subr.mxu0 0.0
    %242 = vmatpush1.msra.mxu0 0.0
    %243 = vmatprep.subr.mxu0 0.0
    %244 = vmatpush1.msra.mxu0 0.0
    %245 = vmatprep.subr.mxu0 0.0
    %246 = vmatpush1.msra.mxu0 0.0
    %247 = vmatprep.subr.mxu0 0.0
    %248 = vmatpush1.msra.mxu0 0.0
    %249 = vmatprep.subr.mxu0 0.0
    %250 = vmatpush1.msra.mxu0 0.0
    %251 = vmatprep.subr.mxu0 0.0
    %252 = vmatpush1.msra.mxu0 0.0
    %253 = vmatprep.subr.mxu0 0.0
    %254 = vmatpush1.msra.mxu0 0.0
    %255 = vmatprep.subr.mxu0 0.0
    %256 = vmatpush1.msra.mxu0 0.0
    %257 = vmatprep.subr.mxu0 0.0
    %258 = vmatpush1.msra.mxu0 0.0
    %259 = vmatprep.subr.mxu0 0.0
    %260 = vmatpush1.msra.mxu0 0.0
    %261 = vmatprep.subr.mxu0 0.0
    %262 = vmatpush1.msra.mxu0 0.0
    %263 = vmatprep.subr.mxu0 0.0
    %264 = vmatpush1.msra.mxu0 0.0
    %265 = vmatprep.subr.mxu0 0.0
    %266 = vmatpush1.msra.mxu0 0.0
    %267 = vmatprep.subr.mxu0 0.0
    %268 = vmatpush1.msra.mxu0 0.0
    %269 = vmatprep.mubr.f32.mxu0 0.0
    %270 = vmatmul.mubr.f32.gmra.mrb[0].mxu0 %v187
    %v271 = vpop.f32.mrb[0].mxu0
    %v272 = vadd.f32 %v184, %v271
    %v273 = vpop.f32.mrb[0].mxu0
    %274 = vmatprep.mubr.f32.mxu0 0.0
    %275 = vmatmul.mubr.f32.gmra.mrb[0].mxu0 %v190
    %v276 = vpop.f32.mrb[0].mxu0
    %v277 = vadd.f32 %v184, %v276
    %v278 = vpop.f32.mrb[0].mxu0
    %279 = vmatprep.mubr.f32.mxu0 0.0
    %280 = vmatmul.mubr.f32.gmra.mrb[0].mxu0 %v193
    %v281 = vpop.f32.mrb[0].mxu0
    %v282 = vadd.f32 %v184, %v281
    %v283 = vpop.f32.mrb[0].mxu0
    %284 = vmatprep.mubr.f32.mxu0 0.0
    %285 = vmatmul.mubr.f32.gmra.mrb[0].mxu0 %v196
    %v286 = vpop.f32.mrb[0].mxu0
    %v287 = vadd.f32 %v184, %v286
    %v288 = vpop.f32.mrb[0].mxu0
    %289 = vmatprep.mubr.f32.mxu0 0.0
    %290 = vmatmul.mubr.f32.gmra.mrb[0].mxu0 %v199
    %v291 = vpop.f32.mrb[0].mxu0
    %v292 = vadd.f32 %v184, %v291
    %v293 = vpop.f32.mrb[0].mxu0
    %294 = vdwg.mxu0
    %v295 = vld [vmem:[%s1] sm:$0xff]
    %v296 = vld [vmem:[%s1 + $0x8] sm:$0xff]
    %v297 = vld [vmem:[%s1 + $0x10] sm:$0xff]
    %v298 = vld [vmem:[%s1 + $0x18] sm:$0xff]
    %v299 = vld [vmem:[%s1 + $0x20] sm:$0x3]
    %301 = vset.pattern.permute.xlu0 0
    %302 = vperm.xlu0 %301, %v295
    %v303 = vpop.permute.xlu0 %302
    %306 = vset.pattern.permute.xlu0 0
    %307 = vperm.xlu0 %306, %v296
    %v308 = vpop.permute.xlu0 %307
    %311 = vset.pattern.permute.xlu0 0
    %312 = vperm.xlu0 %311, %v297
    %v313 = vpop.permute.xlu0 %312
    %316 = vset.pattern.permute.xlu0 0
    %317 = vperm.xlu0 %316, %v298
    %v318 = vpop.permute.xlu0 %317
    %321 = vset.pattern.permute.xlu0 0
    %322 = vperm.xlu0 %321, %v299
    %v323 = vpop.permute.xlu0 %322
    %v325 = vmul.f32 %v272, %v303
    %v326 = vmul.f32 %v277, %v308
    %v327 = vmul.f32 %v282, %v313
    %v328 = vmul.f32 %v287, %v318
    %v329 = vmul.f32 %v292, %v323
    %v330 = vsub.f32 1.0, %v295
    %v331 = vsub.f32 1.0, %v296
    %v332 = vsub.f32 1.0, %v297
    %v333 = vsub.f32 1.0, %v298
    %v334 = vsub.f32 1.0, %v299
    %v335 = vlaneseq
    %v336 = vshrl.u32 %v335, 7
    %v337 = vsub.s32 1, %v336
    %v338 = vrot.slane %v62, %v337
    %340 = vset.pattern.permute.xlu0 0
    %341 = vperm.xlu0 %340, %v330
    %v342 = vpop.permute.xlu0 %341
    %345 = vset.pattern.permute.xlu0 0
    %346 = vperm.xlu0 %345, %v331
    %v347 = vpop.permute.xlu0 %346
    %350 = vset.pattern.permute.xlu0 0
    %351 = vperm.xlu0 %350, %v332
    %v352 = vpop.permute.xlu0 %351
    %355 = vset.pattern.permute.xlu0 0
    %356 = vperm.xlu0 %355, %v333
    %v357 = vpop.permute.xlu0 %356
    %360 = vset.pattern.permute.xlu0 0
    %361 = vperm.xlu0 %360, %v334
    %v362 = vpop.permute.xlu0 %361
    %v364 = vmul.f32 %v338, %v342
    %v365 = vmul.f32 %v338, %v347
    %v366 = vmul.f32 %v338, %v352
    %v367 = vmul.f32 %v338, %v357
    %v368 = vmul.f32 %v338, %v362
    %v369 = vadd.f32 %v325, %v364
    %v370 = vadd.f32 %v326, %v365
    %v371 = vadd.f32 %v327, %v366
    %v372 = vadd.f32 %v328, %v367
    %v373 = vadd.f32 %v329, %v368
    %vm374 = vcmask 261120
    %v375 = vsel %vm374, %v369, 0.0
    %376 = vadd.xlane.f32.xlu0 %v375
    %v377 = vpop.xlane.xlu0 %376
    %v378 = vsel %vm374, %v370, 0.0
    %379 = vadd.xlane.f32.xlu0 %v378
    %v380 = vpop.xlane.xlu0 %379
    %v381 = vsel %vm374, %v371, 0.0
    %382 = vadd.xlane.f32.xlu0 %v381
    %v383 = vpop.xlane.xlu0 %382
    %v384 = vsel %vm374, %v372, 0.0
    %385 = vadd.xlane.f32.xlu0 %v384
    %v386 = vpop.xlane.xlu0 %385
    %vm387 = vcmask 254976
    %v388 = vsel %vm387, %v373, 0.0
    %389 = vadd.xlane.f32.xlu0 %v388
    %v390 = vpop.xlane.xlu0 %389
    %v391 = vrcp.pop 32.0
    %v392 = vmul.f32 %v377, %v391
    %v393 = vmul.f32 %v380, %v391
    %v394 = vmul.f32 %v383, %v391
    %v395 = vmul.f32 %v386, %v391
    %v396 = vmul.f32 %v390, %v391
    %v397 = vmul.f32 %v369, %v369
    %v398 = vmul.f32 %v370, %v370
    %v399 = vmul.f32 %v371, %v371
    %v400 = vmul.f32 %v372, %v372
    %v401 = vmul.f32 %v373, %v373
    %v402 = vsel %vm374, %v397, 0.0
    %403 = vadd.xlane.f32.xlu0 %v402
    %v404 = vpop.xlane.xlu0 %403
    %v405 = vsel %vm374, %v398, 0.0
    %406 = vadd.xlane.f32.xlu0 %v405
    %v407 = vpop.xlane.xlu0 %406
    %v408 = vsel %vm374, %v399, 0.0
    %409 = vadd.xlane.f32.xlu0 %v408
    %v410 = vpop.xlane.xlu0 %409
    %v411 = vsel %vm374, %v400, 0.0
    %412 = vadd.xlane.f32.xlu0 %v411
    %v413 = vpop.xlane.xlu0 %412
    %v414 = vsel %vm387, %v401, 0.0
    %415 = vadd.xlane.f32.xlu0 %v414
    %v416 = vpop.xlane.xlu0 %415
    %v417 = vmul.f32 %v404, %v391
    %v418 = vmul.f32 %v407, %v391
    %v419 = vmul.f32 %v410, %v391
    %v420 = vmul.f32 %v413, %v391
    %v421 = vmul.f32 %v416, %v391
    %v422 = vmul.f32 %v392, %v392
    %v423 = vmul.f32 %v393, %v393
    %v424 = vmul.f32 %v394, %v394
    %v425 = vmul.f32 %v395, %v395
    %v426 = vmul.f32 %v396, %v396
    %v427 = vsub.f32 %v417, %v422
    %v428 = vsub.f32 %v418, %v423
    %v429 = vsub.f32 %v419, %v424
    %v430 = vsub.f32 %v420, %v425
    %v431 = vsub.f32 %v421, %v426
    %v432 = vadd.f32 %v427, 1e-05
    %v433 = vadd.f32 %v428, 1e-05
    %v434 = vadd.f32 %v429, 1e-05
    %v435 = vadd.f32 %v430, 1e-05
    %v436 = vadd.f32 %v431, 1e-05
    %v437 = vrsqrt.pop %v432
    %v438 = vrsqrt.pop %v433
    %v439 = vrsqrt.pop %v434
    %v440 = vrsqrt.pop %v435
    %v441 = vrsqrt.pop %v436
    %v442 = vsub.f32 %v369, %v392
    %v443 = vsub.f32 %v370, %v393
    %v444 = vsub.f32 %v371, %v394
    %v445 = vsub.f32 %v372, %v395
    %v446 = vsub.f32 %v373, %v396
    %v447 = vmul.f32 %v442, %v437
    %v448 = vmul.f32 %v443, %v438
    %v449 = vmul.f32 %v444, %v439
    %v450 = vmul.f32 %v445, %v440
    %v451 = vmul.f32 %v446, %v441
    %v452 = vlaneseq
    %v453 = vshrl.u32 %v452, 7
    %v454 = vsub.s32 0, %v453
    %v455 = vrot.slane %v63, %v454
    %v456 = vmul.f32 %v447, %v455
    %v457 = vmul.f32 %v448, %v455
    %v458 = vmul.f32 %v449, %v455
    %v459 = vmul.f32 %v450, %v455
    %v460 = vmul.f32 %v451, %v455
    %v461 = vlaneseq
    %v462 = vshrl.u32 %v461, 7
    %v463 = vsub.s32 1, %v462
    %v464 = vrot.slane %v63, %v463
    %v465 = vadd.f32 %v456, %v464
    %v466 = vadd.f32 %v457, %v464
    %v467 = vadd.f32 %v458, %v464
    %v468 = vadd.f32 %v459, %v464
    %v469 = vadd.f32 %v460, %v464
    %v470 = vld [vmem:[%s6] sm:$0xff]
    %v471 = vld [vmem:[%s6 + $0x8] sm:$0xff]
    %v472 = vld [vmem:[%s6 + $0x10] sm:$0xff]
    %v473 = vld [vmem:[%s6 + $0x18] sm:$0xff]
    %v474 = vld [vmem:[%s6 + $0x20] sm:$0xff]
    %v475 = vld [vmem:[%s6 + $0x28] sm:$0xff]
    %v476 = vld [vmem:[%s6 + $0x30] sm:$0xff]
    %v477 = vld [vmem:[%s6 + $0x38] sm:$0xff]
    %v478 = vld [vmem:[%s6 + $0x40] sm:$0xff]
    %v479 = vld [vmem:[%s6 + $0x48] sm:$0xff]
    %v480 = vld [vmem:[%s6 + $0x50] sm:$0xff]
    %v481 = vld [vmem:[%s6 + $0x58] sm:$0xff]
    %v482 = vld [vmem:[%s6 + $0x60] sm:$0xff]
    %v483 = vld [vmem:[%s6 + $0x68] sm:$0xff]
    %v484 = vld [vmem:[%s6 + $0x70] sm:$0xff]
    %v485 = vld [vmem:[%s6 + $0x78] sm:$0xff]
    %487 = vset.pattern.permute.xlu0 0
    %488 = vperm.xlu0 %487, %v66
    %v489 = vpop.permute.xlu0 %488
    %492 = vset.pattern.permute.xlu0 0
    %493 = vperm.xlu0 %492, %v67
    %v494 = vpop.permute.xlu0 %493
    %497 = vset.pattern.permute.xlu0 0
    %498 = vperm.xlu0 %497, %v68
    %v499 = vpop.permute.xlu0 %498
    %502 = vset.pattern.permute.xlu0 0
    %503 = vperm.xlu0 %502, %v69
    %v504 = vpop.permute.xlu0 %503
    %507 = vset.pattern.permute.xlu0 0
    %508 = vperm.xlu0 %507, %v70
    %v509 = vpop.permute.xlu0 %508
    %512 = vset.pattern.permute.xlu0 0
    %513 = vperm.xlu0 %512, %v71
    %v514 = vpop.permute.xlu0 %513
    %517 = vset.pattern.permute.xlu0 0
    %518 = vperm.xlu0 %517, %v72
    %v519 = vpop.permute.xlu0 %518
    %522 = vset.pattern.permute.xlu0 0
    %523 = vperm.xlu0 %522, %v73
    %v524 = vpop.permute.xlu0 %523
    %527 = vset.pattern.permute.xlu0 0
    %528 = vperm.xlu0 %527, %v74
    %v529 = vpop.permute.xlu0 %528
    %532 = vset.pattern.permute.xlu0 0
    %533 = vperm.xlu0 %532, %v75
    %v534 = vpop.permute.xlu0 %533
    %537 = vset.pattern.permute.xlu0 0
    %538 = vperm.xlu0 %537, %v76
    %v539 = vpop.permute.xlu0 %538
    %542 = vset.pattern.permute.xlu0 0
    %543 = vperm.xlu0 %542, %v77
    %v544 = vpop.permute.xlu0 %543
    %547 = vset.pattern.permute.xlu0 0
    %548 = vperm.xlu0 %547, %v78
    %v549 = vpop.permute.xlu0 %548
    %552 = vset.pattern.permute.xlu0 0
    %553 = vperm.xlu0 %552, %v79
    %v554 = vpop.permute.xlu0 %553
    %557 = vset.pattern.permute.xlu0 0
    %558 = vperm.xlu0 %557, %v80
    %v559 = vpop.permute.xlu0 %558
    %562 = vset.pattern.permute.xlu0 0
    %563 = vperm.xlu0 %562, %v81
    %v564 = vpop.permute.xlu0 %563
    %vm566 = vcmask 277504
    %v568 = vsel %vm566, %v470, 0
    %v571 = vsel %vm566, %v471, 0
    %v574 = vsel %vm566, %v472, 0
    %v577 = vsel %vm566, %v473, 0
    %v580 = vsel %vm566, %v474, 0
    %v583 = vsel %vm566, %v475, 0
    %v586 = vsel %vm566, %v476, 0
    %v589 = vsel %vm566, %v477, 0
    %v592 = vsel %vm566, %v478, 0
    %v595 = vsel %vm566, %v479, 0
    %v598 = vsel %vm566, %v480, 0
    %v601 = vsel %vm566, %v481, 0
    %v604 = vsel %vm566, %v482, 0
    %v607 = vsel %vm566, %v483, 0
    %v610 = vsel %vm566, %v484, 0
    %v613 = vsel %vm566, %v485, 0
    %v616 = vsel %vm201, %v469, 0
    %618 = vmatprep.subr.mxu0 0.0
    %619 = vmatpush1.msra.mxu0 %v465
    %620 = vmatprep.subr.mxu0 0.0
    %621 = vmatpush1.msra.mxu0 %v466
    %622 = vmatprep.subr.mxu0 0.0
    %623 = vmatpush1.msra.mxu0 %v467
    %624 = vmatprep.subr.mxu0 0.0
    %625 = vmatpush1.msra.mxu0 %v468
    %626 = vmatprep.subr.mxu0 0.0
    %627 = vmatpush1.msra.mxu0 %v616
    %628 = vmatprep.subr.mxu0 0.0
    %629 = vmatpush1.msra.mxu0 0.0
    %630 = vmatprep.subr.mxu0 0.0
    %631 = vmatpush1.msra.mxu0 0.0
    %632 = vmatprep.subr.mxu0 0.0
    %633 = vmatpush1.msra.mxu0 0.0
    %634 = vmatprep.subr.mxu0 0.0
    %635 = vmatpush1.msra.mxu0 0.0
    %636 = vmatprep.subr.mxu0 0.0
    %637 = vmatpush1.msra.mxu0 0.0
    %638 = vmatprep.subr.mxu0 0.0
    %639 = vmatpush1.msra.mxu0 0.0
    %640 = vmatprep.subr.mxu0 0.0
    %641 = vmatpush1.msra.mxu0 0.0
    %642 = vmatprep.subr.mxu0 0.0
    %643 = vmatpush1.msra.mxu0 0.0
    %644 = vmatprep.subr.mxu0 0.0
    %645 = vmatpush1.msra.mxu0 0.0
    %646 = vmatprep.subr.mxu0 0.0
    %647 = vmatpush1.msra.mxu0 0.0
    %648 = vmatprep.subr.mxu0 0.0
    %649 = vmatpush1.msra.mxu0 0.0
    %650 = vmatprep.subr.mxu0 0.0
    %651 = vmatpush1.msra.mxu0 0.0
    %652 = vmatprep.subr.mxu0 0.0
    %653 = vmatpush1.msra.mxu0 0.0
    %654 = vmatprep.subr.mxu0 0.0
    %655 = vmatpush1.msra.mxu0 0.0
    %656 = vmatprep.subr.mxu0 0.0
    %657 = vmatpush1.msra.mxu0 0.0
    %658 = vmatprep.subr.mxu0 0.0
    %659 = vmatpush1.msra.mxu0 0.0
    %660 = vmatprep.subr.mxu0 0.0
    %661 = vmatpush1.msra.mxu0 0.0
    %662 = vmatprep.subr.mxu0 0.0
    %663 = vmatpush1.msra.mxu0 0.0
    %664 = vmatprep.subr.mxu0 0.0
    %665 = vmatpush1.msra.mxu0 0.0
    %666 = vmatprep.subr.mxu0 0.0
    %667 = vmatpush1.msra.mxu0 0.0
    %668 = vmatprep.subr.mxu0 0.0
    %669 = vmatpush1.msra.mxu0 0.0
    %670 = vmatprep.subr.mxu0 0.0
    %671 = vmatpush1.msra.mxu0 0.0
    %672 = vmatprep.subr.mxu0 0.0
    %673 = vmatpush1.msra.mxu0 0.0
    %674 = vmatprep.subr.mxu0 0.0
    %675 = vmatpush1.msra.mxu0 0.0
    %676 = vmatprep.subr.mxu0 0.0
    %677 = vmatpush1.msra.mxu0 0.0
    %678 = vmatprep.subr.mxu0 0.0
    %679 = vmatpush1.msra.mxu0 0.0
    %680 = vmatprep.subr.mxu0 0.0
    %681 = vmatpush1.msra.mxu0 0.0
    %682 = vmatprep.mubr.f32.mxu0 0.0
    %683 = vmatmul.mubr.f32.gmra.mrb[0].mxu0 %v568
    %v684 = vpop.f32.mrb[0].mxu0
    %v685 = vadd.f32 %v489, %v684
    %v686 = vpop.f32.mrb[0].mxu0
    %687 = vmatprep.mubr.f32.mxu0 0.0
    %688 = vmatmul.mubr.f32.gmra.mrb[0].mxu0 %v571
    %v689 = vpop.f32.mrb[0].mxu0
    %v690 = vadd.f32 %v494, %v689
    %v691 = vpop.f32.mrb[0].mxu0
    %692 = vmatprep.mubr.f32.mxu0 0.0
    %693 = vmatmul.mubr.f32.gmra.mrb[0].mxu0 %v574
    %v694 = vpop.f32.mrb[0].mxu0
    %v695 = vadd.f32 %v499, %v694
    %v696 = vpop.f32.mrb[0].mxu0
    %697 = vmatprep.mubr.f32.mxu0 0.0
    %698 = vmatmul.mubr.f32.gmra.mrb[0].mxu0 %v577
    %v699 = vpop.f32.mrb[0].mxu0
    %v700 = vadd.f32 %v504, %v699
    %v701 = vpop.f32.mrb[0].mxu0
    %702 = vmatprep.mubr.f32.mxu0 0.0
    %703 = vmatmul.mubr.f32.gmra.mrb[0].mxu0 %v580
    %v704 = vpop.f32.mrb[0].mxu0
    %v705 = vadd.f32 %v509, %v704
    %v706 = vpop.f32.mrb[0].mxu0
    %707 = vmatprep.mubr.f32.mxu0 0.0
    %708 = vmatmul.mubr.f32.gmra.mrb[0].mxu0 %v583
    %v709 = vpop.f32.mrb[0].mxu0
    %v710 = vadd.f32 %v514, %v709
    %v711 = vpop.f32.mrb[0].mxu0
    %712 = vmatprep.mubr.f32.mxu0 0.0
    %713 = vmatmul.mubr.f32.gmra.mrb[0].mxu0 %v586
    %v714 = vpop.f32.mrb[0].mxu0
    %v715 = vadd.f32 %v519, %v714
    %v716 = vpop.f32.mrb[0].mxu0
    %717 = vmatprep.mubr.f32.mxu0 0.0
    %718 = vmatmul.mubr.f32.gmra.mrb[0].mxu0 %v589
    %v719 = vpop.f32.mrb[0].mxu0
    %v720 = vadd.f32 %v524, %v719
    %v721 = vpop.f32.mrb[0].mxu0
    %722 = vmatprep.mubr.f32.mxu0 0.0
    %723 = vmatmul.mubr.f32.gmra.mrb[0].mxu0 %v592
    %v724 = vpop.f32.mrb[0].mxu0
    %v725 = vadd.f32 %v529, %v724
    %v726 = vpop.f32.mrb[0].mxu0
    %727 = vmatprep.mubr.f32.mxu0 0.0
    %728 = vmatmul.mubr.f32.gmra.mrb[0].mxu0 %v595
    %v729 = vpop.f32.mrb[0].mxu0
    %v730 = vadd.f32 %v534, %v729
    %v731 = vpop.f32.mrb[0].mxu0
    %732 = vmatprep.mubr.f32.mxu0 0.0
    %733 = vmatmul.mubr.f32.gmra.mrb[0].mxu0 %v598
    %v734 = vpop.f32.mrb[0].mxu0
    %v735 = vadd.f32 %v539, %v734
    %v736 = vpop.f32.mrb[0].mxu0
    %737 = vmatprep.mubr.f32.mxu0 0.0
    %738 = vmatmul.mubr.f32.gmra.mrb[0].mxu0 %v601
    %v739 = vpop.f32.mrb[0].mxu0
    %v740 = vadd.f32 %v544, %v739
    %v741 = vpop.f32.mrb[0].mxu0
    %742 = vmatprep.mubr.f32.mxu0 0.0
    %743 = vmatmul.mubr.f32.gmra.mrb[0].mxu0 %v604
    %v744 = vpop.f32.mrb[0].mxu0
    %v745 = vadd.f32 %v549, %v744
    %v746 = vpop.f32.mrb[0].mxu0
    %747 = vmatprep.mubr.f32.mxu0 0.0
    %748 = vmatmul.mubr.f32.gmra.mrb[0].mxu0 %v607
    %v749 = vpop.f32.mrb[0].mxu0
    %v750 = vadd.f32 %v554, %v749
    %v751 = vpop.f32.mrb[0].mxu0
    %752 = vmatprep.mubr.f32.mxu0 0.0
    %753 = vmatmul.mubr.f32.gmra.mrb[0].mxu0 %v610
    %v754 = vpop.f32.mrb[0].mxu0
    %v755 = vadd.f32 %v559, %v754
    %v756 = vpop.f32.mrb[0].mxu0
    %757 = vmatprep.mubr.f32.mxu0 0.0
    %758 = vmatmul.mubr.f32.gmra.mrb[0].mxu0 %v613
    %v759 = vpop.f32.mrb[0].mxu0
    %v760 = vadd.f32 %v564, %v759
    %v761 = vpop.f32.mrb[0].mxu0
    %762 = vdwg.mxu0
    %v763 = vmul.f32 %v685, %v685
    %v764 = vmul.f32 %v690, %v690
    %v765 = vmul.f32 %v695, %v695
    %v766 = vmul.f32 %v700, %v700
    %v767 = vmul.f32 %v705, %v705
    %v768 = vmul.f32 %v710, %v710
    %v769 = vmul.f32 %v715, %v715
    %v770 = vmul.f32 %v720, %v720
    %v771 = vmul.f32 %v725, %v725
    %v772 = vmul.f32 %v730, %v730
    %v773 = vmul.f32 %v735, %v735
    %v774 = vmul.f32 %v740, %v740
    %v775 = vmul.f32 %v745, %v745
    %v776 = vmul.f32 %v750, %v750
    %v777 = vmul.f32 %v755, %v755
    %v778 = vmul.f32 %v760, %v760
    %v779 = vmul.f32 %v685, %v763
    %v780 = vmul.f32 %v690, %v764
    %v781 = vmul.f32 %v695, %v765
    %v782 = vmul.f32 %v700, %v766
    %v783 = vmul.f32 %v705, %v767
    %v784 = vmul.f32 %v710, %v768
    %v785 = vmul.f32 %v715, %v769
    %v786 = vmul.f32 %v720, %v770
    %v787 = vmul.f32 %v725, %v771
    %v788 = vmul.f32 %v730, %v772
    %v789 = vmul.f32 %v735, %v773
    %v790 = vmul.f32 %v740, %v774
    %v791 = vmul.f32 %v745, %v775
    %v792 = vmul.f32 %v750, %v776
    %v793 = vmul.f32 %v755, %v777
    %v794 = vmul.f32 %v760, %v778
    %v795 = vmul.f32 %v779, 0.044715
    %v796 = vmul.f32 %v780, 0.044715
    %v797 = vmul.f32 %v781, 0.044715
    %v798 = vmul.f32 %v782, 0.044715
    %v799 = vmul.f32 %v783, 0.044715
    %v800 = vmul.f32 %v784, 0.044715
    %v801 = vmul.f32 %v785, 0.044715
    %v802 = vmul.f32 %v786, 0.044715
    %v803 = vmul.f32 %v787, 0.044715
    %v804 = vmul.f32 %v788, 0.044715
    %v805 = vmul.f32 %v789, 0.044715
    %v806 = vmul.f32 %v790, 0.044715
    %v807 = vmul.f32 %v791, 0.044715
    %v808 = vmul.f32 %v792, 0.044715
    %v809 = vmul.f32 %v793, 0.044715
    %v810 = vmul.f32 %v794, 0.044715
    %v811 = vadd.f32 %v685, %v795
    %v812 = vadd.f32 %v690, %v796
    %v813 = vadd.f32 %v695, %v797
    %v814 = vadd.f32 %v700, %v798
    %v815 = vadd.f32 %v705, %v799
    %v816 = vadd.f32 %v710, %v800
    %v817 = vadd.f32 %v715, %v801
    %v818 = vadd.f32 %v720, %v802
    %v819 = vadd.f32 %v725, %v803
    %v820 = vadd.f32 %v730, %v804
    %v821 = vadd.f32 %v735, %v805
    %v822 = vadd.f32 %v740, %v806
    %v823 = vadd.f32 %v745, %v807
    %v824 = vadd.f32 %v750, %v808
    %v825 = vadd.f32 %v755, %v809
    %v826 = vadd.f32 %v760, %v810
    %v827 = vmul.f32 %v811, 0.7978846
    %v828 = vmul.f32 %v812, 0.7978846
    %v829 = vmul.f32 %v813, 0.7978846
    %v830 = vmul.f32 %v814, 0.7978846
    %v831 = vmul.f32 %v815, 0.7978846
    %v832 = vmul.f32 %v816, 0.7978846
    %v833 = vmul.f32 %v817, 0.7978846
    %v834 = vmul.f32 %v818, 0.7978846
    %v835 = vmul.f32 %v819, 0.7978846
    %v836 = vmul.f32 %v820, 0.7978846
    %v837 = vmul.f32 %v821, 0.7978846
    %v838 = vmul.f32 %v822, 0.7978846
    %v839 = vmul.f32 %v823, 0.7978846
    %v840 = vmul.f32 %v824, 0.7978846
    %v841 = vmul.f32 %v825, 0.7978846
    %v842 = vmul.f32 %v826, 0.7978846
    %v843 = vtanh.pop %v827
    %v844 = vtanh.pop %v828
    %v845 = vtanh.pop %v829
    %v846 = vtanh.pop %v830
    %v847 = vtanh.pop %v831
    %v848 = vtanh.pop %v832
    %v849 = vtanh.pop %v833
    %v850 = vtanh.pop %v834
    %v851 = vtanh.pop %v835
    %v852 = vtanh.pop %v836
    %v853 = vtanh.pop %v837
    %v854 = vtanh.pop %v838
    %v855 = vtanh.pop %v839
    %v856 = vtanh.pop %v840
    %v857 = vtanh.pop %v841
    %v858 = vtanh.pop %v842
    %v859 = vadd.f32 %v843, 1.0
    %v860 = vadd.f32 %v844, 1.0
    %v861 = vadd.f32 %v845, 1.0
    %v862 = vadd.f32 %v846, 1.0
    %v863 = vadd.f32 %v847, 1.0
    %v864 = vadd.f32 %v848, 1.0
    %v865 = vadd.f32 %v849, 1.0
    %v866 = vadd.f32 %v850, 1.0
    %v867 = vadd.f32 %v851, 1.0
    %v868 = vadd.f32 %v852, 1.0
    %v869 = vadd.f32 %v853, 1.0
    %v870 = vadd.f32 %v854, 1.0
    %v871 = vadd.f32 %v855, 1.0
    %v872 = vadd.f32 %v856, 1.0
    %v873 = vadd.f32 %v857, 1.0
    %v874 = vadd.f32 %v858, 1.0
    %v875 = vmul.f32 %v859, 0.5
    %v876 = vmul.f32 %v860, 0.5
    %v877 = vmul.f32 %v861, 0.5
    %v878 = vmul.f32 %v862, 0.5
    %v879 = vmul.f32 %v863, 0.5
    %v880 = vmul.f32 %v864, 0.5
    %v881 = vmul.f32 %v865, 0.5
    %v882 = vmul.f32 %v866, 0.5
    %v883 = vmul.f32 %v867, 0.5
    %v884 = vmul.f32 %v868, 0.5
    %v885 = vmul.f32 %v869, 0.5
    %v886 = vmul.f32 %v870, 0.5
    %v887 = vmul.f32 %v871, 0.5
    %v888 = vmul.f32 %v872, 0.5
    %v889 = vmul.f32 %v873, 0.5
    %v890 = vmul.f32 %v874, 0.5
    %v891 = vmul.f32 %v685, %v875
    %v892 = vmul.f32 %v690, %v876
    %v893 = vmul.f32 %v695, %v877
    %v894 = vmul.f32 %v700, %v878
    %v895 = vmul.f32 %v705, %v879
    %v896 = vmul.f32 %v710, %v880
    %v897 = vmul.f32 %v715, %v881
    %v898 = vmul.f32 %v720, %v882
    %v899 = vmul.f32 %v725, %v883
    %v900 = vmul.f32 %v730, %v884
    %v901 = vmul.f32 %v735, %v885
    %v902 = vmul.f32 %v740, %v886
    %v903 = vmul.f32 %v745, %v887
    %v904 = vmul.f32 %v750, %v888
    %v905 = vmul.f32 %v755, %v889
    %v906 = vmul.f32 %v760, %v890
    %v907 = vld [vmem:[%s7] sm:$0xff]
    %v908 = vld [vmem:[%s7 + $0x8] sm:$0xff]
    %v909 = vld [vmem:[%s7 + $0x10] sm:$0xff]
    %v910 = vld [vmem:[%s7 + $0x18] sm:$0xff]
    %v911 = vld [vmem:[%s7 + $0x20] sm:$0x3]
    %912 = vset.pattern.permute.xlu0 1
    %913 = vperm.xlu0 %912, %v66
    %v914 = vpop.permute.xlu0 %913
    %916 = vset.pattern.permute.xlu0 1
    %917 = vperm.xlu0 %916, %v67
    %v918 = vpop.permute.xlu0 %917
    %920 = vset.pattern.permute.xlu0 1
    %921 = vperm.xlu0 %920, %v68
    %v922 = vpop.permute.xlu0 %921
    %924 = vset.pattern.permute.xlu0 1
    %925 = vperm.xlu0 %924, %v69
    %v926 = vpop.permute.xlu0 %925
    %928 = vset.pattern.permute.xlu0 1
    %929 = vperm.xlu0 %928, %v70
    %v930 = vpop.permute.xlu0 %929
    %932 = vmatprep.subr.mxu0 0.0
    %933 = vmatpush1.msra.mxu0 %v891
    %934 = vmatprep.subr.mxu0 0.0
    %935 = vmatpush1.msra.mxu0 %v892
    %936 = vmatprep.subr.mxu0 0.0
    %937 = vmatpush1.msra.mxu0 %v893
    %938 = vmatprep.subr.mxu0 0.0
    %939 = vmatpush1.msra.mxu0 %v894
    %940 = vmatprep.subr.mxu0 0.0
    %941 = vmatpush1.msra.mxu0 %v895
    %942 = vmatprep.subr.mxu0 0.0
    %943 = vmatpush1.msra.mxu0 %v896
    %944 = vmatprep.subr.mxu0 0.0
    %945 = vmatpush1.msra.mxu0 %v897
    %946 = vmatprep.subr.mxu0 0.0
    %947 = vmatpush1.msra.mxu0 %v898
    %948 = vmatprep.subr.mxu0 0.0
    %949 = vmatpush1.msra.mxu0 %v899
    %950 = vmatprep.subr.mxu0 0.0
    %951 = vmatpush1.msra.mxu0 %v900
    %952 = vmatprep.subr.mxu0 0.0
    %953 = vmatpush1.msra.mxu0 %v901
    %954 = vmatprep.subr.mxu0 0.0
    %955 = vmatpush1.msra.mxu0 %v902
    %956 = vmatprep.subr.mxu0 0.0
    %957 = vmatpush1.msra.mxu0 %v903
    %958 = vmatprep.subr.mxu0 0.0
    %959 = vmatpush1.msra.mxu0 %v904
    %960 = vmatprep.subr.mxu0 0.0
    %961 = vmatpush1.msra.mxu0 %v905
    %962 = vmatprep.subr.mxu0 0.0
    %963 = vmatpush1.msra.mxu0 %v906
    %964 = vmatprep.subr.mxu0 0.0
    %965 = vmatpush1.msra.mxu0 0.0
    %966 = vmatprep.subr.mxu0 0.0
    %967 = vmatpush1.msra.mxu0 0.0
    %968 = vmatprep.subr.mxu0 0.0
    %969 = vmatpush1.msra.mxu0 0.0
    %970 = vmatprep.subr.mxu0 0.0
    %971 = vmatpush1.msra.mxu0 0.0
    %972 = vmatprep.subr.mxu0 0.0
    %973 = vmatpush1.msra.mxu0 0.0
    %974 = vmatprep.subr.mxu0 0.0
    %975 = vmatpush1.msra.mxu0 0.0
    %976 = vmatprep.subr.mxu0 0.0
    %977 = vmatpush1.msra.mxu0 0.0
    %978 = vmatprep.subr.mxu0 0.0
    %979 = vmatpush1.msra.mxu0 0.0
    %980 = vmatprep.subr.mxu0 0.0
    %981 = vmatpush1.msra.mxu0 0.0
    %982 = vmatprep.subr.mxu0 0.0
    %983 = vmatpush1.msra.mxu0 0.0
    %984 = vmatprep.subr.mxu0 0.0
    %985 = vmatpush1.msra.mxu0 0.0
    %986 = vmatprep.subr.mxu0 0.0
    %987 = vmatpush1.msra.mxu0 0.0
    %988 = vmatprep.subr.mxu0 0.0
    %989 = vmatpush1.msra.mxu0 0.0
    %990 = vmatprep.subr.mxu0 0.0
    %991 = vmatpush1.msra.mxu0 0.0
    %992 = vmatprep.subr.mxu0 0.0
    %993 = vmatpush1.msra.mxu0 0.0
    %994 = vmatprep.subr.mxu0 0.0
    %995 = vmatpush1.msra.mxu0 0.0
    %996 = vmatprep.mubr.f32.mxu0 0.0
    %997 = vmatmul.mubr.f32.gmra.mrb[0].mxu0 %v907
    %v998 = vpop.f32.mrb[0].mxu0
    %v999 = vadd.f32 %v914, %v998
    %v1000 = vpop.f32.mrb[0].mxu0
    %1001 = vmatprep.mubr.f32.mxu0 0.0
    %1002 = vmatmul.mubr.f32.gmra.mrb[0].mxu0 %v908
    %v1003 = vpop.f32.mrb[0].mxu0
    %v1004 = vadd.f32 %v918, %v1003
    %v1005 = vpop.f32.mrb[0].mxu0
    %1006 = vmatprep.mubr.f32.mxu0 0.0
    %1007 = vmatmul.mubr.f32.gmra.mrb[0].mxu0 %v909
    %v1008 = vpop.f32.mrb[0].mxu0
    %v1009 = vadd.f32 %v922, %v1008
    %v1010 = vpop.f32.mrb[0].mxu0
    %1011 = vmatprep.mubr.f32.mxu0 0.0
    %1012 = vmatmul.mubr.f32.gmra.mrb[0].mxu0 %v910
    %v1013 = vpop.f32.mrb[0].mxu0
    %v1014 = vadd.f32 %v926, %v1013
    %v1015 = vpop.f32.mrb[0].mxu0
    %1016 = vmatprep.mubr.f32.mxu0 0.0
    %1017 = vmatmul.mubr.f32.gmra.mrb[0].mxu0 %v911
    %v1018 = vpop.f32.mrb[0].mxu0
    %v1019 = vadd.f32 %v930, %v1018
    %v1020 = vpop.f32.mrb[0].mxu0
    %1021 = vdwg.mxu0
    %v1022 = vadd.f32 %v369, %v999
    %v1023 = vadd.f32 %v370, %v1004
    %v1024 = vadd.f32 %v371, %v1009
    %v1025 = vadd.f32 %v372, %v1014
    %v1026 = vadd.f32 %v373, %v1019
    %v1027 = vsel %vm374, %v1022, 0.0
    %1028 = vadd.xlane.f32.xlu0 %v1027
    %v1029 = vpop.xlane.xlu0 %1028
    %v1030 = vsel %vm374, %v1023, 0.0
    %1031 = vadd.xlane.f32.xlu0 %v1030
    %v1032 = vpop.xlane.xlu0 %1031
    %v1033 = vsel %vm374, %v1024, 0.0
    %1034 = vadd.xlane.f32.xlu0 %v1033
    %v1035 = vpop.xlane.xlu0 %1034
    %v1036 = vsel %vm374, %v1025, 0.0
    %1037 = vadd.xlane.f32.xlu0 %v1036
    %v1038 = vpop.xlane.xlu0 %1037
    %v1039 = vsel %vm387, %v1026, 0.0
    %1040 = vadd.xlane.f32.xlu0 %v1039
    %v1041 = vpop.xlane.xlu0 %1040
    %v1042 = vmul.f32 %v1029, %v391
    %v1043 = vmul.f32 %v1032, %v391
    %v1044 = vmul.f32 %v1035, %v391
    %v1045 = vmul.f32 %v1038, %v391
    %v1046 = vmul.f32 %v1041, %v391
    %v1047 = vmul.f32 %v1022, %v1022
    %v1048 = vmul.f32 %v1023, %v1023
    %v1049 = vmul.f32 %v1024, %v1024
    %v1050 = vmul.f32 %v1025, %v1025
    %v1051 = vmul.f32 %v1026, %v1026
    %v1052 = vsel %vm374, %v1047, 0.0
    %1053 = vadd.xlane.f32.xlu0 %v1052
    %v1054 = vpop.xlane.xlu0 %1053
    %v1055 = vsel %vm374, %v1048, 0.0
    %1056 = vadd.xlane.f32.xlu0 %v1055
    %v1057 = vpop.xlane.xlu0 %1056
    %v1058 = vsel %vm374, %v1049, 0.0
    %1059 = vadd.xlane.f32.xlu0 %v1058
    %v1060 = vpop.xlane.xlu0 %1059
    %v1061 = vsel %vm374, %v1050, 0.0
    %1062 = vadd.xlane.f32.xlu0 %v1061
    %v1063 = vpop.xlane.xlu0 %1062
    %v1064 = vsel %vm387, %v1051, 0.0
    %1065 = vadd.xlane.f32.xlu0 %v1064
    %v1066 = vpop.xlane.xlu0 %1065
    %v1067 = vmul.f32 %v1054, %v391
    %v1068 = vmul.f32 %v1057, %v391
    %v1069 = vmul.f32 %v1060, %v391
    %v1070 = vmul.f32 %v1063, %v391
    %v1071 = vmul.f32 %v1066, %v391
    %v1072 = vmul.f32 %v1042, %v1042
    %v1073 = vmul.f32 %v1043, %v1043
    %v1074 = vmul.f32 %v1044, %v1044
    %v1075 = vmul.f32 %v1045, %v1045
    %v1076 = vmul.f32 %v1046, %v1046
    %v1077 = vsub.f32 %v1067, %v1072
    %v1078 = vsub.f32 %v1068, %v1073
    %v1079 = vsub.f32 %v1069, %v1074
    %v1080 = vsub.f32 %v1070, %v1075
    %v1081 = vsub.f32 %v1071, %v1076
    %v1082 = vadd.f32 %v1077, 1e-05
    %v1083 = vadd.f32 %v1078, 1e-05
    %v1084 = vadd.f32 %v1079, 1e-05
    %v1085 = vadd.f32 %v1080, 1e-05
    %v1086 = vadd.f32 %v1081, 1e-05
    %v1087 = vrsqrt.pop %v1082
    %v1088 = vrsqrt.pop %v1083
    %v1089 = vrsqrt.pop %v1084
    %v1090 = vrsqrt.pop %v1085
    %v1091 = vrsqrt.pop %v1086
    %v1092 = vsub.f32 %v1022, %v1042
    %v1093 = vsub.f32 %v1023, %v1043
    %v1094 = vsub.f32 %v1024, %v1044
    %v1095 = vsub.f32 %v1025, %v1045
    %v1096 = vsub.f32 %v1026, %v1046
    %v1097 = vmul.f32 %v1092, %v1087
    %v1098 = vmul.f32 %v1093, %v1088
    %v1099 = vmul.f32 %v1094, %v1089
    %v1100 = vmul.f32 %v1095, %v1090
    %v1101 = vmul.f32 %v1096, %v1091
    %v1102 = vlaneseq
    %v1103 = vshrl.u32 %v1102, 7
    %v1104 = vsub.s32 2, %v1103
    %v1105 = vrot.slane %v63, %v1104
    %v1106 = vmul.f32 %v1097, %v1105
    %v1107 = vmul.f32 %v1098, %v1105
    %v1108 = vmul.f32 %v1099, %v1105
    %v1109 = vmul.f32 %v1100, %v1105
    %v1110 = vmul.f32 %v1101, %v1105
    %v1111 = vlaneseq
    %v1112 = vshrl.u32 %v1111, 7
    %v1113 = vsub.s32 3, %v1112
    %v1114 = vrot.slane %v63, %v1113
    %v1115 = vadd.f32 %v1106, %v1114
    %v1116 = vadd.f32 %v1107, %v1114
    %v1117 = vadd.f32 %v1108, %v1114
    %v1118 = vadd.f32 %v1109, %v1114
    %v1119 = vadd.f32 %v1110, %v1114
    %v1120 = vld [vmem:[%s8] sm:$0xff]
    %v1121 = vld [vmem:[%s8 + $0x8] sm:$0xff]
    %v1122 = vld [vmem:[%s8 + $0x10] sm:$0xff]
    %v1123 = vld [vmem:[%s8 + $0x18] sm:$0xff]
    %v1124 = vlaneseq
    %v1125 = vshrl.u32 %v1124, 7
    %v1126 = vsub.s32 4, %v1125
    %v1127 = vrot.slane %v63, %v1126
    %v1129 = vsel %vm374, %v1115, 0
    %v1132 = vsel %vm374, %v1116, 0
    %v1135 = vsel %vm374, %v1117, 0
    %v1138 = vsel %vm374, %v1118, 0
    %v1141 = vsel %vm374, %v1119, 0
    %1143 = vmatprep.subr.mxu0 0.0
    %1144 = vmatpush1.msra.mxu0 %v1120
    %1145 = vmatprep.subr.mxu0 0.0
    %1146 = vmatpush1.msra.mxu0 %v1121
    %1147 = vmatprep.subr.mxu0 0.0
    %1148 = vmatpush1.msra.mxu0 %v1122
    %1149 = vmatprep.subr.mxu0 0.0
    %1150 = vmatpush1.msra.mxu0 %v1123
    %1151 = vmatprep.subr.mxu0 0.0
    %1152 = vmatpush1.msra.mxu0 0.0
    %1153 = vmatprep.subr.mxu0 0.0
    %1154 = vmatpush1.msra.mxu0 0.0
    %1155 = vmatprep.subr.mxu0 0.0
    %1156 = vmatpush1.msra.mxu0 0.0
    %1157 = vmatprep.subr.mxu0 0.0
    %1158 = vmatpush1.msra.mxu0 0.0
    %1159 = vmatprep.subr.mxu0 0.0
    %1160 = vmatpush1.msra.mxu0 0.0
    %1161 = vmatprep.subr.mxu0 0.0
    %1162 = vmatpush1.msra.mxu0 0.0
    %1163 = vmatprep.subr.mxu0 0.0
    %1164 = vmatpush1.msra.mxu0 0.0
    %1165 = vmatprep.subr.mxu0 0.0
    %1166 = vmatpush1.msra.mxu0 0.0
    %1167 = vmatprep.subr.mxu0 0.0
    %1168 = vmatpush1.msra.mxu0 0.0
    %1169 = vmatprep.subr.mxu0 0.0
    %1170 = vmatpush1.msra.mxu0 0.0
    %1171 = vmatprep.subr.mxu0 0.0
    %1172 = vmatpush1.msra.mxu0 0.0
    %1173 = vmatprep.subr.mxu0 0.0
    %1174 = vmatpush1.msra.mxu0 0.0
    %1175 = vmatprep.subr.mxu0 0.0
    %1176 = vmatpush1.msra.mxu0 0.0
    %1177 = vmatprep.subr.mxu0 0.0
    %1178 = vmatpush1.msra.mxu0 0.0
    %1179 = vmatprep.subr.mxu0 0.0
    %1180 = vmatpush1.msra.mxu0 0.0
    %1181 = vmatprep.subr.mxu0 0.0
    %1182 = vmatpush1.msra.mxu0 0.0
    %1183 = vmatprep.subr.mxu0 0.0
    %1184 = vmatpush1.msra.mxu0 0.0
    %1185 = vmatprep.subr.mxu0 0.0
    %1186 = vmatpush1.msra.mxu0 0.0
    %1187 = vmatprep.subr.mxu0 0.0
    %1188 = vmatpush1.msra.mxu0 0.0
    %1189 = vmatprep.subr.mxu0 0.0
    %1190 = vmatpush1.msra.mxu0 0.0
    %1191 = vmatprep.subr.mxu0 0.0
    %1192 = vmatpush1.msra.mxu0 0.0
    %1193 = vmatprep.subr.mxu0 0.0
    %1194 = vmatpush1.msra.mxu0 0.0
    %1195 = vmatprep.subr.mxu0 0.0
    %1196 = vmatpush1.msra.mxu0 0.0
    %1197 = vmatprep.subr.mxu0 0.0
    %1198 = vmatpush1.msra.mxu0 0.0
    %1199 = vmatprep.subr.mxu0 0.0
    %1200 = vmatpush1.msra.mxu0 0.0
    %1201 = vmatprep.subr.mxu0 0.0
    %1202 = vmatpush1.msra.mxu0 0.0
    %1203 = vmatprep.subr.mxu0 0.0
    %1204 = vmatpush1.msra.mxu0 0.0
    %1205 = vmatprep.subr.mxu0 0.0
    %1206 = vmatpush1.msra.mxu0 0.0
    %1207 = vmatprep.mubr.f32.mxu0 0.0
    %1208 = vmatmul.mubr.f32.gmra.mrb[0].mxu0 %v1129
    %v1209 = vpop.f32.mrb[0].mxu0
    %v1210 = vadd.f32 %v1127, %v1209
    %v1211 = vpop.f32.mrb[0].mxu0
    %1212 = vmatprep.mubr.f32.mxu0 0.0
    %1213 = vmatmul.mubr.f32.gmra.mrb[0].mxu0 %v1132
    %v1214 = vpop.f32.mrb[0].mxu0
    %v1215 = vadd.f32 %v1127, %v1214
    %v1216 = vpop.f32.mrb[0].mxu0
    %1217 = vmatprep.mubr.f32.mxu0 0.0
    %1218 = vmatmul.mubr.f32.gmra.mrb[0].mxu0 %v1135
    %v1219 = vpop.f32.mrb[0].mxu0
    %v1220 = vadd.f32 %v1127, %v1219
    %v1221 = vpop.f32.mrb[0].mxu0
    %1222 = vmatprep.mubr.f32.mxu0 0.0
    %1223 = vmatmul.mubr.f32.gmra.mrb[0].mxu0 %v1138
    %v1224 = vpop.f32.mrb[0].mxu0
    %v1225 = vadd.f32 %v1127, %v1224
    %v1226 = vpop.f32.mrb[0].mxu0
    %1227 = vmatprep.mubr.f32.mxu0 0.0
    %1228 = vmatmul.mubr.f32.gmra.mrb[0].mxu0 %v1141
    %v1229 = vpop.f32.mrb[0].mxu0
    %v1230 = vadd.f32 %v1127, %v1229
    %v1231 = vpop.f32.mrb[0].mxu0
    %1232 = vdwg.mxu0
    %v1233 = vmul.f32 %v1210, %v1210
    %v1234 = vmul.f32 %v1215, %v1215
    %v1235 = vmul.f32 %v1220, %v1220
    %v1236 = vmul.f32 %v1225, %v1225
    %v1237 = vmul.f32 %v1230, %v1230
    %v1238 = vmul.f32 %v1210, %v1233
    %v1239 = vmul.f32 %v1215, %v1234
    %v1240 = vmul.f32 %v1220, %v1235
    %v1241 = vmul.f32 %v1225, %v1236
    %v1242 = vmul.f32 %v1230, %v1237
    %v1243 = vmul.f32 %v1238, 0.044715
    %v1244 = vmul.f32 %v1239, 0.044715
    %v1245 = vmul.f32 %v1240, 0.044715
    %v1246 = vmul.f32 %v1241, 0.044715
    %v1247 = vmul.f32 %v1242, 0.044715
    %v1248 = vadd.f32 %v1210, %v1243
    %v1249 = vadd.f32 %v1215, %v1244
    %v1250 = vadd.f32 %v1220, %v1245
    %v1251 = vadd.f32 %v1225, %v1246
    %v1252 = vadd.f32 %v1230, %v1247
    %v1253 = vmul.f32 %v1248, 0.7978846
    %v1254 = vmul.f32 %v1249, 0.7978846
    %v1255 = vmul.f32 %v1250, 0.7978846
    %v1256 = vmul.f32 %v1251, 0.7978846
    %v1257 = vmul.f32 %v1252, 0.7978846
    %v1258 = vtanh.pop %v1253
    %v1259 = vtanh.pop %v1254
    %v1260 = vtanh.pop %v1255
    %v1261 = vtanh.pop %v1256
    %v1262 = vtanh.pop %v1257
    %v1263 = vadd.f32 %v1258, 1.0
    %v1264 = vadd.f32 %v1259, 1.0
    %v1265 = vadd.f32 %v1260, 1.0
    %v1266 = vadd.f32 %v1261, 1.0
    %v1267 = vadd.f32 %v1262, 1.0
    %v1268 = vmul.f32 %v1263, 0.5
    %v1269 = vmul.f32 %v1264, 0.5
    %v1270 = vmul.f32 %v1265, 0.5
    %v1271 = vmul.f32 %v1266, 0.5
    %v1272 = vmul.f32 %v1267, 0.5
    %v1273 = vmul.f32 %v1210, %v1268
    %v1274 = vmul.f32 %v1215, %v1269
    %v1275 = vmul.f32 %v1220, %v1270
    %v1276 = vmul.f32 %v1225, %v1271
    %v1277 = vmul.f32 %v1230, %v1272
    %v1278 = vld [vmem:[%s9] sm:$0xff]
    %v1279 = vld [vmem:[%s9 + $0x8] sm:$0xff]
    %v1280 = vld [vmem:[%s9 + $0x10] sm:$0xff]
    %v1281 = vld [vmem:[%s9 + $0x18] sm:$0xff]
    %v1282 = vld [vmem:[%s9 + $0x20] sm:$0xff]
    %v1283 = vld [vmem:[%s9 + $0x28] sm:$0xff]
    %v1284 = vld [vmem:[%s9 + $0x30] sm:$0xff]
    %v1285 = vld [vmem:[%s9 + $0x38] sm:$0xff]
    %v1286 = vlaneseq
    %v1287 = vshrl.u32 %v1286, 7
    %v1288 = vsub.s32 5, %v1287
    %v1289 = vrot.slane %v63, %v1288
    %vm1290 = vcmask 523264
    %v1292 = vsel %vm1290, %v1273, 0
    %v1295 = vsel %vm1290, %v1274, 0
    %v1298 = vsel %vm1290, %v1275, 0
    %v1301 = vsel %vm1290, %v1276, 0
    %v1304 = vsel %vm1290, %v1277, 0
    %1306 = vmatprep.subr.mxu0 0.0
    %1307 = vmatpush1.msra.mxu0 %v1278
    %1308 = vmatprep.subr.mxu0 0.0
    %1309 = vmatpush1.msra.mxu0 %v1279
    %1310 = vmatprep.subr.mxu0 0.0
    %1311 = vmatpush1.msra.mxu0 %v1280
    %1312 = vmatprep.subr.mxu0 0.0
    %1313 = vmatpush1.msra.mxu0 %v1281
    %1314 = vmatprep.subr.mxu0 0.0
    %1315 = vmatpush1.msra.mxu0 %v1282
    %1316 = vmatprep.subr.mxu0 0.0
    %1317 = vmatpush1.msra.mxu0 %v1283
    %1318 = vmatprep.subr.mxu0 0.0
    %1319 = vmatpush1.msra.mxu0 %v1284
    %1320 = vmatprep.subr.mxu0 0.0
    %1321 = vmatpush1.msra.mxu0 %v1285
    %1322 = vmatprep.subr.mxu0 0.0
    %1323 = vmatpush1.msra.mxu0 0.0
    %1324 = vmatprep.subr.mxu0 0.0
    %1325 = vmatpush1.msra.mxu0 0.0
    %1326 = vmatprep.subr.mxu0 0.0
    %1327 = vmatpush1.msra.mxu0 0.0
    %1328 = vmatprep.subr.mxu0 0.0
    %1329 = vmatpush1.msra.mxu0 0.0
    %1330 = vmatprep.subr.mxu0 0.0
    %1331 = vmatpush1.msra.mxu0 0.0
    %1332 = vmatprep.subr.mxu0 0.0
    %1333 = vmatpush1.msra.mxu0 0.0
    %1334 = vmatprep.subr.mxu0 0.0
    %1335 = vmatpush1.msra.mxu0 0.0
    %1336 = vmatprep.subr.mxu0 0.0
    %1337 = vmatpush1.msra.mxu0 0.0
    %1338 = vmatprep.subr.mxu0 0.0
    %1339 = vmatpush1.msra.mxu0 0.0
    %1340 = vmatprep.subr.mxu0 0.0
    %1341 = vmatpush1.msra.mxu0 0.0
    %1342 = vmatprep.subr.mxu0 0.0
    %1343 = vmatpush1.msra.mxu0 0.0
    %1344 = vmatprep.subr.mxu0 0.0
    %1345 = vmatpush1.msra.mxu0 0.0
    %1346 = vmatprep.subr.mxu0 0.0
    %1347 = vmatpush1.msra.mxu0 0.0
    %1348 = vmatprep.subr.mxu0 0.0
    %1349 = vmatpush1.msra.mxu0 0.0
    %1350 = vmatprep.subr.mxu0 0.0
    %1351 = vmatpush1.msra.mxu0 0.0
    %1352 = vmatprep.subr.mxu0 0.0
    %1353 = vmatpush1.msra.mxu0 0.0
    %1354 = vmatprep.subr.mxu0 0.0
    %1355 = vmatpush1.msra.mxu0 0.0
    %1356 = vmatprep.subr.mxu0 0.0
    %1357 = vmatpush1.msra.mxu0 0.0
    %1358 = vmatprep.subr.mxu0 0.0
    %1359 = vmatpush1.msra.mxu0 0.0
    %1360 = vmatprep.subr.mxu0 0.0
    %1361 = vmatpush1.msra.mxu0 0.0
    %1362 = vmatprep.subr.mxu0 0.0
    %1363 = vmatpush1.msra.mxu0 0.0
    %1364 = vmatprep.subr.mxu0 0.0
    %1365 = vmatpush1.msra.mxu0 0.0
    %1366 = vmatprep.subr.mxu0 0.0
    %1367 = vmatpush1.msra.mxu0 0.0
    %1368 = vmatprep.subr.mxu0 0.0
    %1369 = vmatpush1.msra.mxu0 0.0
    %1370 = vmatprep.mubr.f32.mxu0 0.0
    %1371 = vmatmul.mubr.f32.gmra.mrb[0].mxu0 %v1292
    %v1372 = vpop.f32.mrb[0].mxu0
    %v1373 = vadd.f32 %v1289, %v1372
    %v1374 = vpop.f32.mrb[0].mxu0
    %1375 = vmatprep.mubr.f32.mxu0 0.0
    %1376 = vmatmul.mubr.f32.gmra.mrb[0].mxu0 %v1295
    %v1377 = vpop.f32.mrb[0].mxu0
    %v1378 = vadd.f32 %v1289, %v1377
    %v1379 = vpop.f32.mrb[0].mxu0
    %1380 = vmatprep.mubr.f32.mxu0 0.0
    %1381 = vmatmul.mubr.f32.gmra.mrb[0].mxu0 %v1298
    %v1382 = vpop.f32.mrb[0].mxu0
    %v1383 = vadd.f32 %v1289, %v1382
    %v1384 = vpop.f32.mrb[0].mxu0
    %1385 = vmatprep.mubr.f32.mxu0 0.0
    %1386 = vmatmul.mubr.f32.gmra.mrb[0].mxu0 %v1301
    %v1387 = vpop.f32.mrb[0].mxu0
    %v1388 = vadd.f32 %v1289, %v1387
    %v1389 = vpop.f32.mrb[0].mxu0
    %1390 = vmatprep.mubr.f32.mxu0 0.0
    %1391 = vmatmul.mubr.f32.gmra.mrb[0].mxu0 %v1304
    %v1392 = vpop.f32.mrb[0].mxu0
    %v1393 = vadd.f32 %v1289, %v1392
    %v1394 = vpop.f32.mrb[0].mxu0
    %1395 = vdwg.mxu0
    %v1396 = vadd.f32 %v1022, %v1373
    %v1397 = vadd.f32 %v1023, %v1378
    %v1398 = vadd.f32 %v1024, %v1383
    %v1399 = vadd.f32 %v1025, %v1388
    %v1400 = vadd.f32 %v1026, %v1393
    %v1401 = vsel %vm374, %v1396, 0.0
    %1402 = vadd.xlane.f32.xlu0 %v1401
    %v1403 = vpop.xlane.xlu0 %1402
    %v1404 = vsel %vm374, %v1397, 0.0
    %1405 = vadd.xlane.f32.xlu0 %v1404
    %v1406 = vpop.xlane.xlu0 %1405
    %v1407 = vsel %vm374, %v1398, 0.0
    %1408 = vadd.xlane.f32.xlu0 %v1407
    %v1409 = vpop.xlane.xlu0 %1408
    %v1410 = vsel %vm374, %v1399, 0.0
    %1411 = vadd.xlane.f32.xlu0 %v1410
    %v1412 = vpop.xlane.xlu0 %1411
    %v1413 = vsel %vm387, %v1400, 0.0
    %1414 = vadd.xlane.f32.xlu0 %v1413
    %v1415 = vpop.xlane.xlu0 %1414
    %v1416 = vmul.f32 %v1403, %v391
    %v1417 = vmul.f32 %v1406, %v391
    %v1418 = vmul.f32 %v1409, %v391
    %v1419 = vmul.f32 %v1412, %v391
    %v1420 = vmul.f32 %v1415, %v391
    %v1421 = vmul.f32 %v1396, %v1396
    %v1422 = vmul.f32 %v1397, %v1397
    %v1423 = vmul.f32 %v1398, %v1398
    %v1424 = vmul.f32 %v1399, %v1399
    %v1425 = vmul.f32 %v1400, %v1400
    %v1426 = vsel %vm374, %v1421, 0.0
    %1427 = vadd.xlane.f32.xlu0 %v1426
    %v1428 = vpop.xlane.xlu0 %1427
    %v1429 = vsel %vm374, %v1422, 0.0
    %1430 = vadd.xlane.f32.xlu0 %v1429
    %v1431 = vpop.xlane.xlu0 %1430
    %v1432 = vsel %vm374, %v1423, 0.0
    %1433 = vadd.xlane.f32.xlu0 %v1432
    %v1434 = vpop.xlane.xlu0 %1433
    %v1435 = vsel %vm374, %v1424, 0.0
    %1436 = vadd.xlane.f32.xlu0 %v1435
    %v1437 = vpop.xlane.xlu0 %1436
    %v1438 = vsel %vm387, %v1425, 0.0
    %1439 = vadd.xlane.f32.xlu0 %v1438
    %v1440 = vpop.xlane.xlu0 %1439
    %v1441 = vmul.f32 %v1428, %v391
    %v1442 = vmul.f32 %v1431, %v391
    %v1443 = vmul.f32 %v1434, %v391
    %v1444 = vmul.f32 %v1437, %v391
    %v1445 = vmul.f32 %v1440, %v391
    %v1446 = vmul.f32 %v1416, %v1416
    %v1447 = vmul.f32 %v1417, %v1417
    %v1448 = vmul.f32 %v1418, %v1418
    %v1449 = vmul.f32 %v1419, %v1419
    %v1450 = vmul.f32 %v1420, %v1420
    %v1451 = vsub.f32 %v1441, %v1446
    %v1452 = vsub.f32 %v1442, %v1447
    %v1453 = vsub.f32 %v1443, %v1448
    %v1454 = vsub.f32 %v1444, %v1449
    %v1455 = vsub.f32 %v1445, %v1450
    %v1456 = vadd.f32 %v1451, 1e-05
    %v1457 = vadd.f32 %v1452, 1e-05
    %v1458 = vadd.f32 %v1453, 1e-05
    %v1459 = vadd.f32 %v1454, 1e-05
    %v1460 = vadd.f32 %v1455, 1e-05
    %v1461 = vrsqrt.pop %v1456
    %v1462 = vrsqrt.pop %v1457
    %v1463 = vrsqrt.pop %v1458
    %v1464 = vrsqrt.pop %v1459
    %v1465 = vrsqrt.pop %v1460
    %v1466 = vsub.f32 %v1396, %v1416
    %v1467 = vsub.f32 %v1397, %v1417
    %v1468 = vsub.f32 %v1398, %v1418
    %v1469 = vsub.f32 %v1399, %v1419
    %v1470 = vsub.f32 %v1400, %v1420
    %v1471 = vmul.f32 %v1466, %v1461
    %v1472 = vmul.f32 %v1467, %v1462
    %v1473 = vmul.f32 %v1468, %v1463
    %v1474 = vmul.f32 %v1469, %v1464
    %v1475 = vmul.f32 %v1470, %v1465
    %v1476 = vlaneseq
    %v1477 = vshrl.u32 %v1476, 7
    %v1478 = vsub.s32 6, %v1477
    %v1479 = vrot.slane %v63, %v1478
    %v1480 = vmul.f32 %v1471, %v1479
    %v1481 = vmul.f32 %v1472, %v1479
    %v1482 = vmul.f32 %v1473, %v1479
    %v1483 = vmul.f32 %v1474, %v1479
    %v1484 = vmul.f32 %v1475, %v1479
    %v1485 = vlaneseq
    %v1486 = vshrl.u32 %v1485, 7
    %v1487 = vsub.s32 7, %v1486
    %v1488 = vrot.slane %v63, %v1487
    %v1489 = vadd.f32 %v1480, %v1488
    %v1490 = vadd.f32 %v1481, %v1488
    %v1491 = vadd.f32 %v1482, %v1488
    %v1492 = vadd.f32 %v1483, %v1488
    %v1493 = vadd.f32 %v1484, %v1488
    %s1494 = scalar_lea.vmem %s6, 128
    %v1495 = vld [vmem:[%s1494] sm:$0xff]
    %v1496 = vld [vmem:[%s1494 + $0x8] sm:$0xff]
    %v1497 = vld [vmem:[%s1494 + $0x10] sm:$0xff]
    %v1498 = vld [vmem:[%s1494 + $0x18] sm:$0xff]
    %v1499 = vld [vmem:[%s1494 + $0x20] sm:$0xff]
    %v1500 = vld [vmem:[%s1494 + $0x28] sm:$0xff]
    %v1501 = vld [vmem:[%s1494 + $0x30] sm:$0xff]
    %v1502 = vld [vmem:[%s1494 + $0x38] sm:$0xff]
    %v1503 = vld [vmem:[%s1494 + $0x40] sm:$0xff]
    %v1504 = vld [vmem:[%s1494 + $0x48] sm:$0xff]
    %v1505 = vld [vmem:[%s1494 + $0x50] sm:$0xff]
    %v1506 = vld [vmem:[%s1494 + $0x58] sm:$0xff]
    %v1507 = vld [vmem:[%s1494 + $0x60] sm:$0xff]
    %v1508 = vld [vmem:[%s1494 + $0x68] sm:$0xff]
    %v1509 = vld [vmem:[%s1494 + $0x70] sm:$0xff]
    %v1510 = vld [vmem:[%s1494 + $0x78] sm:$0xff]
    %1511 = vset.pattern.permute.xlu0 2
    %1512 = vperm.xlu0 %1511, %v66
    %v1513 = vpop.permute.xlu0 %1512
    %1515 = vset.pattern.permute.xlu0 2
    %1516 = vperm.xlu0 %1515, %v67
    %v1517 = vpop.permute.xlu0 %1516
    %1519 = vset.pattern.permute.xlu0 2
    %1520 = vperm.xlu0 %1519, %v68
    %v1521 = vpop.permute.xlu0 %1520
    %1523 = vset.pattern.permute.xlu0 2
    %1524 = vperm.xlu0 %1523, %v69
    %v1525 = vpop.permute.xlu0 %1524
    %1527 = vset.pattern.permute.xlu0 2
    %1528 = vperm.xlu0 %1527, %v70
    %v1529 = vpop.permute.xlu0 %1528
    %1531 = vset.pattern.permute.xlu0 2
    %1532 = vperm.xlu0 %1531, %v71
    %v1533 = vpop.permute.xlu0 %1532
    %1535 = vset.pattern.permute.xlu0 2
    %1536 = vperm.xlu0 %1535, %v72
    %v1537 = vpop.permute.xlu0 %1536
    %1539 = vset.pattern.permute.xlu0 2
    %1540 = vperm.xlu0 %1539, %v73
    %v1541 = vpop.permute.xlu0 %1540
    %1543 = vset.pattern.permute.xlu0 2
    %1544 = vperm.xlu0 %1543, %v74
    %v1545 = vpop.permute.xlu0 %1544
    %1547 = vset.pattern.permute.xlu0 2
    %1548 = vperm.xlu0 %1547, %v75
    %v1549 = vpop.permute.xlu0 %1548
    %1551 = vset.pattern.permute.xlu0 2
    %1552 = vperm.xlu0 %1551, %v76
    %v1553 = vpop.permute.xlu0 %1552
    %1555 = vset.pattern.permute.xlu0 2
    %1556 = vperm.xlu0 %1555, %v77
    %v1557 = vpop.permute.xlu0 %1556
    %1559 = vset.pattern.permute.xlu0 2
    %1560 = vperm.xlu0 %1559, %v78
    %v1561 = vpop.permute.xlu0 %1560
    %1563 = vset.pattern.permute.xlu0 2
    %1564 = vperm.xlu0 %1563, %v79
    %v1565 = vpop.permute.xlu0 %1564
    %1567 = vset.pattern.permute.xlu0 2
    %1568 = vperm.xlu0 %1567, %v80
    %v1569 = vpop.permute.xlu0 %1568
    %1571 = vset.pattern.permute.xlu0 2
    %1572 = vperm.xlu0 %1571, %v81
    %v1573 = vpop.permute.xlu0 %1572
    %v1576 = vsel %vm566, %v1495, 0
    %v1579 = vsel %vm566, %v1496, 0
    %v1582 = vsel %vm566, %v1497, 0
    %v1585 = vsel %vm566, %v1498, 0
    %v1588 = vsel %vm566, %v1499, 0
    %v1591 = vsel %vm566, %v1500, 0
    %v1594 = vsel %vm566, %v1501, 0
    %v1597 = vsel %vm566, %v1502, 0
    %v1600 = vsel %vm566, %v1503, 0
    %v1603 = vsel %vm566, %v1504, 0
    %v1606 = vsel %vm566, %v1505, 0
    %v1609 = vsel %vm566, %v1506, 0
    %v1612 = vsel %vm566, %v1507, 0
    %v1615 = vsel %vm566, %v1508, 0
    %v1618 = vsel %vm566, %v1509, 0
    %v1621 = vsel %vm566, %v1510, 0
    %v1624 = vsel %vm201, %v1493, 0
    %1626 = vmatprep.subr.mxu0 0.0
    %1627 = vmatpush1.msra.mxu0 %v1489
    %1628 = vmatprep.subr.mxu0 0.0
    %1629 = vmatpush1.msra.mxu0 %v1490
    %1630 = vmatprep.subr.mxu0 0.0
    %1631 = vmatpush1.msra.mxu0 %v1491
    %1632 = vmatprep.subr.mxu0 0.0
    %1633 = vmatpush1.msra.mxu0 %v1492
    %1634 = vmatprep.subr.mxu0 0.0
    %1635 = vmatpush1.msra.mxu0 %v1624
    %1636 = vmatprep.subr.mxu0 0.0
    %1637 = vmatpush1.msra.mxu0 0.0
    %1638 = vmatprep.subr.mxu0 0.0
    %1639 = vmatpush1.msra.mxu0 0.0
    %1640 = vmatprep.subr.mxu0 0.0
    %1641 = vmatpush1.msra.mxu0 0.0
    %1642 = vmatprep.subr.mxu0 0.0
    %1643 = vmatpush1.msra.mxu0 0.0
    %1644 = vmatprep.subr.mxu0 0.0
    %1645 = vmatpush1.msra.mxu0 0.0
    %1646 = vmatprep.subr.mxu0 0.0
    %1647 = vmatpush1.msra.mxu0 0.0
    %1648 = vmatprep.subr.mxu0 0.0
    %1649 = vmatpush1.msra.mxu0 0.0
    %1650 = vmatprep.subr.mxu0 0.0
    %1651 = vmatpush1.msra.mxu0 0.0
    %1652 = vmatprep.subr.mxu0 0.0
    %1653 = vmatpush1.msra.mxu0 0.0
    %1654 = vmatprep.subr.mxu0 0.0
    %1655 = vmatpush1.msra.mxu0 0.0
    %1656 = vmatprep.subr.mxu0 0.0
    %1657 = vmatpush1.msra.mxu0 0.0
    %1658 = vmatprep.subr.mxu0 0.0
    %1659 = vmatpush1.msra.mxu0 0.0
    %1660 = vmatprep.subr.mxu0 0.0
    %1661 = vmatpush1.msra.mxu0 0.0
    %1662 = vmatprep.subr.mxu0 0.0
    %1663 = vmatpush1.msra.mxu0 0.0
    %1664 = vmatprep.subr.mxu0 0.0
    %1665 = vmatpush1.msra.mxu0 0.0
    %1666 = vmatprep.subr.mxu0 0.0
    %1667 = vmatpush1.msra.mxu0 0.0
    %1668 = vmatprep.subr.mxu0 0.0
    %1669 = vmatpush1.msra.mxu0 0.0
    %1670 = vmatprep.subr.mxu0 0.0
    %1671 = vmatpush1.msra.mxu0 0.0
    %1672 = vmatprep.subr.mxu0 0.0
    %1673 = vmatpush1.msra.mxu0 0.0
    %1674 = vmatprep.subr.mxu0 0.0
    %1675 = vmatpush1.msra.mxu0 0.0
    %1676 = vmatprep.subr.mxu0 0.0
    %1677 = vmatpush1.msra.mxu0 0.0
    %1678 = vmatprep.subr.mxu0 0.0
    %1679 = vmatpush1.msra.mxu0 0.0
    %1680 = vmatprep.subr.mxu0 0.0
    %1681 = vmatpush1.msra.mxu0 0.0
    %1682 = vmatprep.subr.mxu0 0.0
    %1683 = vmatpush1.msra.mxu0 0.0
    %1684 = vmatprep.subr.mxu0 0.0
    %1685 = vmatpush1.msra.mxu0 0.0
    %1686 = vmatprep.subr.mxu0 0.0
    %1687 = vmatpush1.msra.mxu0 0.0
    %1688 = vmatprep.subr.mxu0 0.0
    %1689 = vmatpush1.msra.mxu0 0.0
    %1690 = vmatprep.mubr.f32.mxu0 0.0
    %1691 = vmatmul.mubr.f32.gmra.mrb[0].mxu0 %v1576
    %v1692 = vpop.f32.mrb[0].mxu0
    %v1693 = vadd.f32 %v1513, %v1692
    %v1694 = vpop.f32.mrb[0].mxu0
    %1695 = vmatprep.mubr.f32.mxu0 0.0
    %1696 = vmatmul.mubr.f32.gmra.mrb[0].mxu0 %v1579
    %v1697 = vpop.f32.mrb[0].mxu0
    %v1698 = vadd.f32 %v1517, %v1697
    %v1699 = vpop.f32.mrb[0].mxu0
    %1700 = vmatprep.mubr.f32.mxu0 0.0
    %1701 = vmatmul.mubr.f32.gmra.mrb[0].mxu0 %v1582
    %v1702 = vpop.f32.mrb[0].mxu0
    %v1703 = vadd.f32 %v1521, %v1702
    %v1704 = vpop.f32.mrb[0].mxu0
    %1705 = vmatprep.mubr.f32.mxu0 0.0
    %1706 = vmatmul.mubr.f32.gmra.mrb[0].mxu0 %v1585
    %v1707 = vpop.f32.mrb[0].mxu0
    %v1708 = vadd.f32 %v1525, %v1707
    %v1709 = vpop.f32.mrb[0].mxu0
    %1710 = vmatprep.mubr.f32.mxu0 0.0
    %1711 = vmatmul.mubr.f32.gmra.mrb[0].mxu0 %v1588
    %v1712 = vpop.f32.mrb[0].mxu0
    %v1713 = vadd.f32 %v1529, %v1712
    %v1714 = vpop.f32.mrb[0].mxu0
    %1715 = vmatprep.mubr.f32.mxu0 0.0
    %1716 = vmatmul.mubr.f32.gmra.mrb[0].mxu0 %v1591
    %v1717 = vpop.f32.mrb[0].mxu0
    %v1718 = vadd.f32 %v1533, %v1717
    %v1719 = vpop.f32.mrb[0].mxu0
    %1720 = vmatprep.mubr.f32.mxu0 0.0
    %1721 = vmatmul.mubr.f32.gmra.mrb[0].mxu0 %v1594
    %v1722 = vpop.f32.mrb[0].mxu0
    %v1723 = vadd.f32 %v1537, %v1722
    %v1724 = vpop.f32.mrb[0].mxu0
    %1725 = vmatprep.mubr.f32.mxu0 0.0
    %1726 = vmatmul.mubr.f32.gmra.mrb[0].mxu0 %v1597
    %v1727 = vpop.f32.mrb[0].mxu0
    %v1728 = vadd.f32 %v1541, %v1727
    %v1729 = vpop.f32.mrb[0].mxu0
    %1730 = vmatprep.mubr.f32.mxu0 0.0
    %1731 = vmatmul.mubr.f32.gmra.mrb[0].mxu0 %v1600
    %v1732 = vpop.f32.mrb[0].mxu0
    %v1733 = vadd.f32 %v1545, %v1732
    %v1734 = vpop.f32.mrb[0].mxu0
    %1735 = vmatprep.mubr.f32.mxu0 0.0
    %1736 = vmatmul.mubr.f32.gmra.mrb[0].mxu0 %v1603
    %v1737 = vpop.f32.mrb[0].mxu0
    %v1738 = vadd.f32 %v1549, %v1737
    %v1739 = vpop.f32.mrb[0].mxu0
    %1740 = vmatprep.mubr.f32.mxu0 0.0
    %1741 = vmatmul.mubr.f32.gmra.mrb[0].mxu0 %v1606
    %v1742 = vpop.f32.mrb[0].mxu0
    %v1743 = vadd.f32 %v1553, %v1742
    %v1744 = vpop.f32.mrb[0].mxu0
    %1745 = vmatprep.mubr.f32.mxu0 0.0
    %1746 = vmatmul.mubr.f32.gmra.mrb[0].mxu0 %v1609
    %v1747 = vpop.f32.mrb[0].mxu0
    %v1748 = vadd.f32 %v1557, %v1747
    %v1749 = vpop.f32.mrb[0].mxu0
    %1750 = vmatprep.mubr.f32.mxu0 0.0
    %1751 = vmatmul.mubr.f32.gmra.mrb[0].mxu0 %v1612
    %v1752 = vpop.f32.mrb[0].mxu0
    %v1753 = vadd.f32 %v1561, %v1752
    %v1754 = vpop.f32.mrb[0].mxu0
    %1755 = vmatprep.mubr.f32.mxu0 0.0
    %1756 = vmatmul.mubr.f32.gmra.mrb[0].mxu0 %v1615
    %v1757 = vpop.f32.mrb[0].mxu0
    %v1758 = vadd.f32 %v1565, %v1757
    %v1759 = vpop.f32.mrb[0].mxu0
    %1760 = vmatprep.mubr.f32.mxu0 0.0
    %1761 = vmatmul.mubr.f32.gmra.mrb[0].mxu0 %v1618
    %v1762 = vpop.f32.mrb[0].mxu0
    %v1763 = vadd.f32 %v1569, %v1762
    %v1764 = vpop.f32.mrb[0].mxu0
    %1765 = vmatprep.mubr.f32.mxu0 0.0
    %1766 = vmatmul.mubr.f32.gmra.mrb[0].mxu0 %v1621
    %v1767 = vpop.f32.mrb[0].mxu0
    %v1768 = vadd.f32 %v1573, %v1767
    %v1769 = vpop.f32.mrb[0].mxu0
    %1770 = vdwg.mxu0
    %v1771 = vmul.f32 %v1693, %v1693
    %v1772 = vmul.f32 %v1698, %v1698
    %v1773 = vmul.f32 %v1703, %v1703
    %v1774 = vmul.f32 %v1708, %v1708
    %v1775 = vmul.f32 %v1713, %v1713
    %v1776 = vmul.f32 %v1718, %v1718
    %v1777 = vmul.f32 %v1723, %v1723
    %v1778 = vmul.f32 %v1728, %v1728
    %v1779 = vmul.f32 %v1733, %v1733
    %v1780 = vmul.f32 %v1738, %v1738
    %v1781 = vmul.f32 %v1743, %v1743
    %v1782 = vmul.f32 %v1748, %v1748
    %v1783 = vmul.f32 %v1753, %v1753
    %v1784 = vmul.f32 %v1758, %v1758
    %v1785 = vmul.f32 %v1763, %v1763
    %v1786 = vmul.f32 %v1768, %v1768
    %v1787 = vmul.f32 %v1693, %v1771
    %v1788 = vmul.f32 %v1698, %v1772
    %v1789 = vmul.f32 %v1703, %v1773
    %v1790 = vmul.f32 %v1708, %v1774
    %v1791 = vmul.f32 %v1713, %v1775
    %v1792 = vmul.f32 %v1718, %v1776
    %v1793 = vmul.f32 %v1723, %v1777
    %v1794 = vmul.f32 %v1728, %v1778
    %v1795 = vmul.f32 %v1733, %v1779
    %v1796 = vmul.f32 %v1738, %v1780
    %v1797 = vmul.f32 %v1743, %v1781
    %v1798 = vmul.f32 %v1748, %v1782
    %v1799 = vmul.f32 %v1753, %v1783
    %v1800 = vmul.f32 %v1758, %v1784
    %v1801 = vmul.f32 %v1763, %v1785
    %v1802 = vmul.f32 %v1768, %v1786
    %v1803 = vmul.f32 %v1787, 0.044715
    %v1804 = vmul.f32 %v1788, 0.044715
    %v1805 = vmul.f32 %v1789, 0.044715
    %v1806 = vmul.f32 %v1790, 0.044715
    %v1807 = vmul.f32 %v1791, 0.044715
    %v1808 = vmul.f32 %v1792, 0.044715
    %v1809 = vmul.f32 %v1793, 0.044715
    %v1810 = vmul.f32 %v1794, 0.044715
    %v1811 = vmul.f32 %v1795, 0.044715
    %v1812 = vmul.f32 %v1796, 0.044715
    %v1813 = vmul.f32 %v1797, 0.044715
    %v1814 = vmul.f32 %v1798, 0.044715
    %v1815 = vmul.f32 %v1799, 0.044715
    %v1816 = vmul.f32 %v1800, 0.044715
    %v1817 = vmul.f32 %v1801, 0.044715
    %v1818 = vmul.f32 %v1802, 0.044715
    %v1819 = vadd.f32 %v1693, %v1803
    %v1820 = vadd.f32 %v1698, %v1804
    %v1821 = vadd.f32 %v1703, %v1805
    %v1822 = vadd.f32 %v1708, %v1806
    %v1823 = vadd.f32 %v1713, %v1807
    %v1824 = vadd.f32 %v1718, %v1808
    %v1825 = vadd.f32 %v1723, %v1809
    %v1826 = vadd.f32 %v1728, %v1810
    %v1827 = vadd.f32 %v1733, %v1811
    %v1828 = vadd.f32 %v1738, %v1812
    %v1829 = vadd.f32 %v1743, %v1813
    %v1830 = vadd.f32 %v1748, %v1814
    %v1831 = vadd.f32 %v1753, %v1815
    %v1832 = vadd.f32 %v1758, %v1816
    %v1833 = vadd.f32 %v1763, %v1817
    %v1834 = vadd.f32 %v1768, %v1818
    %v1835 = vmul.f32 %v1819, 0.7978846
    %v1836 = vmul.f32 %v1820, 0.7978846
    %v1837 = vmul.f32 %v1821, 0.7978846
    %v1838 = vmul.f32 %v1822, 0.7978846
    %v1839 = vmul.f32 %v1823, 0.7978846
    %v1840 = vmul.f32 %v1824, 0.7978846
    %v1841 = vmul.f32 %v1825, 0.7978846
    %v1842 = vmul.f32 %v1826, 0.7978846
    %v1843 = vmul.f32 %v1827, 0.7978846
    %v1844 = vmul.f32 %v1828, 0.7978846
    %v1845 = vmul.f32 %v1829, 0.7978846
    %v1846 = vmul.f32 %v1830, 0.7978846
    %v1847 = vmul.f32 %v1831, 0.7978846
    %v1848 = vmul.f32 %v1832, 0.7978846
    %v1849 = vmul.f32 %v1833, 0.7978846
    %v1850 = vmul.f32 %v1834, 0.7978846
    %v1851 = vtanh.pop %v1835
    %v1852 = vtanh.pop %v1836
    %v1853 = vtanh.pop %v1837
    %v1854 = vtanh.pop %v1838
    %v1855 = vtanh.pop %v1839
    %v1856 = vtanh.pop %v1840
    %v1857 = vtanh.pop %v1841
    %v1858 = vtanh.pop %v1842
    %v1859 = vtanh.pop %v1843
    %v1860 = vtanh.pop %v1844
    %v1861 = vtanh.pop %v1845
    %v1862 = vtanh.pop %v1846
    %v1863 = vtanh.pop %v1847
    %v1864 = vtanh.pop %v1848
    %v1865 = vtanh.pop %v1849
    %v1866 = vtanh.pop %v1850
    %v1867 = vadd.f32 %v1851, 1.0
    %v1868 = vadd.f32 %v1852, 1.0
    %v1869 = vadd.f32 %v1853, 1.0
    %v1870 = vadd.f32 %v1854, 1.0
    %v1871 = vadd.f32 %v1855, 1.0
    %v1872 = vadd.f32 %v1856, 1.0
    %v1873 = vadd.f32 %v1857, 1.0
    %v1874 = vadd.f32 %v1858, 1.0
    %v1875 = vadd.f32 %v1859, 1.0
    %v1876 = vadd.f32 %v1860, 1.0
    %v1877 = vadd.f32 %v1861, 1.0
    %v1878 = vadd.f32 %v1862, 1.0
    %v1879 = vadd.f32 %v1863, 1.0
    %v1880 = vadd.f32 %v1864, 1.0
    %v1881 = vadd.f32 %v1865, 1.0
    %v1882 = vadd.f32 %v1866, 1.0
    %v1883 = vmul.f32 %v1867, 0.5
    %v1884 = vmul.f32 %v1868, 0.5
    %v1885 = vmul.f32 %v1869, 0.5
    %v1886 = vmul.f32 %v1870, 0.5
    %v1887 = vmul.f32 %v1871, 0.5
    %v1888 = vmul.f32 %v1872, 0.5
    %v1889 = vmul.f32 %v1873, 0.5
    %v1890 = vmul.f32 %v1874, 0.5
    %v1891 = vmul.f32 %v1875, 0.5
    %v1892 = vmul.f32 %v1876, 0.5
    %v1893 = vmul.f32 %v1877, 0.5
    %v1894 = vmul.f32 %v1878, 0.5
    %v1895 = vmul.f32 %v1879, 0.5
    %v1896 = vmul.f32 %v1880, 0.5
    %v1897 = vmul.f32 %v1881, 0.5
    %v1898 = vmul.f32 %v1882, 0.5
    %v1899 = vmul.f32 %v1693, %v1883
    %v1900 = vmul.f32 %v1698, %v1884
    %v1901 = vmul.f32 %v1703, %v1885
    %v1902 = vmul.f32 %v1708, %v1886
    %v1903 = vmul.f32 %v1713, %v1887
    %v1904 = vmul.f32 %v1718, %v1888
    %v1905 = vmul.f32 %v1723, %v1889
    %v1906 = vmul.f32 %v1728, %v1890
    %v1907 = vmul.f32 %v1733, %v1891
    %v1908 = vmul.f32 %v1738, %v1892
    %v1909 = vmul.f32 %v1743, %v1893
    %v1910 = vmul.f32 %v1748, %v1894
    %v1911 = vmul.f32 %v1753, %v1895
    %v1912 = vmul.f32 %v1758, %v1896
    %v1913 = vmul.f32 %v1763, %v1897
    %v1914 = vmul.f32 %v1768, %v1898
    %s1915 = scalar_lea.vmem %s7, 40
    %v1916 = vld [vmem:[%s1915] sm:$0xff]
    %v1917 = vld [vmem:[%s1915 + $0x8] sm:$0xff]
    %v1918 = vld [vmem:[%s1915 + $0x10] sm:$0xff]
    %v1919 = vld [vmem:[%s1915 + $0x18] sm:$0xff]
    %v1920 = vld [vmem:[%s1915 + $0x20] sm:$0x3]
    %1921 = vset.pattern.permute.xlu0 3
    %1922 = vperm.xlu0 %1921, %v66
    %v1923 = vpop.permute.xlu0 %1922
    %1925 = vset.pattern.permute.xlu0 3
    %1926 = vperm.xlu0 %1925, %v67
    %v1927 = vpop.permute.xlu0 %1926
    %1929 = vset.pattern.permute.xlu0 3
    %1930 = vperm.xlu0 %1929, %v68
    %v1931 = vpop.permute.xlu0 %1930
    %1933 = vset.pattern.permute.xlu0 3
    %1934 = vperm.xlu0 %1933, %v69
    %v1935 = vpop.permute.xlu0 %1934
    %1937 = vset.pattern.permute.xlu0 3
    %1938 = vperm.xlu0 %1937, %v70
    %v1939 = vpop.permute.xlu0 %1938
    %1941 = vmatprep.subr.mxu0 0.0
    %1942 = vmatpush1.msra.mxu0 %v1899
    %1943 = vmatprep.subr.mxu0 0.0
    %1944 = vmatpush1.msra.mxu0 %v1900
    %1945 = vmatprep.subr.mxu0 0.0
    %1946 = vmatpush1.msra.mxu0 %v1901
    %1947 = vmatprep.subr.mxu0 0.0
    %1948 = vmatpush1.msra.mxu0 %v1902
    %1949 = vmatprep.subr.mxu0 0.0
    %1950 = vmatpush1.msra.mxu0 %v1903
    %1951 = vmatprep.subr.mxu0 0.0
    %1952 = vmatpush1.msra.mxu0 %v1904
    %1953 = vmatprep.subr.mxu0 0.0
    %1954 = vmatpush1.msra.mxu0 %v1905
    %1955 = vmatprep.subr.mxu0 0.0
    %1956 = vmatpush1.msra.mxu0 %v1906
    %1957 = vmatprep.subr.mxu0 0.0
    %1958 = vmatpush1.msra.mxu0 %v1907
    %1959 = vmatprep.subr.mxu0 0.0
    %1960 = vmatpush1.msra.mxu0 %v1908
    %1961 = vmatprep.subr.mxu0 0.0
    %1962 = vmatpush1.msra.mxu0 %v1909
    %1963 = vmatprep.subr.mxu0 0.0
    %1964 = vmatpush1.msra.mxu0 %v1910
    %1965 = vmatprep.subr.mxu0 0.0
    %1966 = vmatpush1.msra.mxu0 %v1911
    %1967 = vmatprep.subr.mxu0 0.0
    %1968 = vmatpush1.msra.mxu0 %v1912
    %1969 = vmatprep.subr.mxu0 0.0
    %1970 = vmatpush1.msra.mxu0 %v1913
    %1971 = vmatprep.subr.mxu0 0.0
    %1972 = vmatpush1.msra.mxu0 %v1914
    %1973 = vmatprep.subr.mxu0 0.0
    %1974 = vmatpush1.msra.mxu0 0.0
    %1975 = vmatprep.subr.mxu0 0.0
    %1976 = vmatpush1.msra.mxu0 0.0
    %1977 = vmatprep.subr.mxu0 0.0
    %1978 = vmatpush1.msra.mxu0 0.0
    %1979 = vmatprep.subr.mxu0 0.0
    %1980 = vmatpush1.msra.mxu0 0.0
    %1981 = vmatprep.subr.mxu0 0.0
    %1982 = vmatpush1.msra.mxu0 0.0
    %1983 = vmatprep.subr.mxu0 0.0
    %1984 = vmatpush1.msra.mxu0 0.0
    %1985 = vmatprep.subr.mxu0 0.0
    %1986 = vmatpush1.msra.mxu0 0.0
    %1987 = vmatprep.subr.mxu0 0.0
    %1988 = vmatpush1.msra.mxu0 0.0
    %1989 = vmatprep.subr.mxu0 0.0
    %1990 = vmatpush1.msra.mxu0 0.0
    %1991 = vmatprep.subr.mxu0 0.0
    %1992 = vmatpush1.msra.mxu0 0.0
    %1993 = vmatprep.subr.mxu0 0.0
    %1994 = vmatpush1.msra.mxu0 0.0
    %1995 = vmatprep.subr.mxu0 0.0
    %1996 = vmatpush1.msra.mxu0 0.0
    %1997 = vmatprep.subr.mxu0 0.0
    %1998 = vmatpush1.msra.mxu0 0.0
    %1999 = vmatprep.subr.mxu0 0.0
    %2000 = vmatpush1.msra.mxu0 0.0
    %2001 = vmatprep.subr.mxu0 0.0
    %2002 = vmatpush1.msra.mxu0 0.0
    %2003 = vmatprep.subr.mxu0 0.0
    %2004 = vmatpush1.msra.mxu0 0.0
    %2005 = vmatprep.mubr.f32.mxu0 0.0
    %2006 = vmatmul.mubr.f32.gmra.mrb[0].mxu0 %v1916
    %v2007 = vpop.f32.mrb[0].mxu0
    %v2008 = vadd.f32 %v1923, %v2007
    %v2009 = vpop.f32.mrb[0].mxu0
    %2010 = vmatprep.mubr.f32.mxu0 0.0
    %2011 = vmatmul.mubr.f32.gmra.mrb[0].mxu0 %v1917
    %v2012 = vpop.f32.mrb[0].mxu0
    %v2013 = vadd.f32 %v1927, %v2012
    %v2014 = vpop.f32.mrb[0].mxu0
    %2015 = vmatprep.mubr.f32.mxu0 0.0
    %2016 = vmatmul.mubr.f32.gmra.mrb[0].mxu0 %v1918
    %v2017 = vpop.f32.mrb[0].mxu0
    %v2018 = vadd.f32 %v1931, %v2017
    %v2019 = vpop.f32.mrb[0].mxu0
    %2020 = vmatprep.mubr.f32.mxu0 0.0
    %2021 = vmatmul.mubr.f32.gmra.mrb[0].mxu0 %v1919
    %v2022 = vpop.f32.mrb[0].mxu0
    %v2023 = vadd.f32 %v1935, %v2022
    %v2024 = vpop.f32.mrb[0].mxu0
    %2025 = vmatprep.mubr.f32.mxu0 0.0
    %2026 = vmatmul.mubr.f32.gmra.mrb[0].mxu0 %v1920
    %v2027 = vpop.f32.mrb[0].mxu0
    %v2028 = vadd.f32 %v1939, %v2027
    %v2029 = vpop.f32.mrb[0].mxu0
    %2030 = vdwg.mxu0
    %v2031 = vadd.f32 %v1396, %v2008
    %v2032 = vadd.f32 %v1397, %v2013
    %v2033 = vadd.f32 %v1398, %v2018
    %v2034 = vadd.f32 %v1399, %v2023
    %v2035 = vadd.f32 %v1400, %v2028
    %v2036 = vsel %vm374, %v2031, 0.0
    %2037 = vadd.xlane.f32.xlu0 %v2036
    %v2038 = vpop.xlane.xlu0 %2037
    %v2039 = vsel %vm374, %v2032, 0.0
    %2040 = vadd.xlane.f32.xlu0 %v2039
    %v2041 = vpop.xlane.xlu0 %2040
    %v2042 = vsel %vm374, %v2033, 0.0
    %2043 = vadd.xlane.f32.xlu0 %v2042
    %v2044 = vpop.xlane.xlu0 %2043
    %v2045 = vsel %vm374, %v2034, 0.0
    %2046 = vadd.xlane.f32.xlu0 %v2045
    %v2047 = vpop.xlane.xlu0 %2046
    %v2048 = vsel %vm387, %v2035, 0.0
    %2049 = vadd.xlane.f32.xlu0 %v2048
    %v2050 = vpop.xlane.xlu0 %2049
    %v2051 = vmul.f32 %v2038, %v391
    %v2052 = vmul.f32 %v2041, %v391
    %v2053 = vmul.f32 %v2044, %v391
    %v2054 = vmul.f32 %v2047, %v391
    %v2055 = vmul.f32 %v2050, %v391
    %v2056 = vmul.f32 %v2031, %v2031
    %v2057 = vmul.f32 %v2032, %v2032
    %v2058 = vmul.f32 %v2033, %v2033
    %v2059 = vmul.f32 %v2034, %v2034
    %v2060 = vmul.f32 %v2035, %v2035
    %v2061 = vsel %vm374, %v2056, 0.0
    %2062 = vadd.xlane.f32.xlu0 %v2061
    %v2063 = vpop.xlane.xlu0 %2062
    %v2064 = vsel %vm374, %v2057, 0.0
    %2065 = vadd.xlane.f32.xlu0 %v2064
    %v2066 = vpop.xlane.xlu0 %2065
    %v2067 = vsel %vm374, %v2058, 0.0
    %2068 = vadd.xlane.f32.xlu0 %v2067
    %v2069 = vpop.xlane.xlu0 %2068
    %v2070 = vsel %vm374, %v2059, 0.0
    %2071 = vadd.xlane.f32.xlu0 %v2070
    %v2072 = vpop.xlane.xlu0 %2071
    %v2073 = vsel %vm387, %v2060, 0.0
    %2074 = vadd.xlane.f32.xlu0 %v2073
    %v2075 = vpop.xlane.xlu0 %2074
    %v2076 = vmul.f32 %v2063, %v391
    %v2077 = vmul.f32 %v2066, %v391
    %v2078 = vmul.f32 %v2069, %v391
    %v2079 = vmul.f32 %v2072, %v391
    %v2080 = vmul.f32 %v2075, %v391
    %v2081 = vmul.f32 %v2051, %v2051
    %v2082 = vmul.f32 %v2052, %v2052
    %v2083 = vmul.f32 %v2053, %v2053
    %v2084 = vmul.f32 %v2054, %v2054
    %v2085 = vmul.f32 %v2055, %v2055
    %v2086 = vsub.f32 %v2076, %v2081
    %v2087 = vsub.f32 %v2077, %v2082
    %v2088 = vsub.f32 %v2078, %v2083
    %v2089 = vsub.f32 %v2079, %v2084
    %v2090 = vsub.f32 %v2080, %v2085
    %v2091 = vadd.f32 %v2086, 1e-05
    %v2092 = vadd.f32 %v2087, 1e-05
    %v2093 = vadd.f32 %v2088, 1e-05
    %v2094 = vadd.f32 %v2089, 1e-05
    %v2095 = vadd.f32 %v2090, 1e-05
    %v2096 = vrsqrt.pop %v2091
    %v2097 = vrsqrt.pop %v2092
    %v2098 = vrsqrt.pop %v2093
    %v2099 = vrsqrt.pop %v2094
    %v2100 = vrsqrt.pop %v2095
    %v2101 = vsub.f32 %v2031, %v2051
    %v2102 = vsub.f32 %v2032, %v2052
    %v2103 = vsub.f32 %v2033, %v2053
    %v2104 = vsub.f32 %v2034, %v2054
    %v2105 = vsub.f32 %v2035, %v2055
    %v2106 = vmul.f32 %v2101, %v2096
    %v2107 = vmul.f32 %v2102, %v2097
    %v2108 = vmul.f32 %v2103, %v2098
    %v2109 = vmul.f32 %v2104, %v2099
    %v2110 = vmul.f32 %v2105, %v2100
    %v2111 = vlaneseq
    %v2112 = vshrl.u32 %v2111, 7
    %v2113 = vsub.s32 0, %v2112
    %v2114 = vrot.slane %v64, %v2113
    %v2115 = vmul.f32 %v2106, %v2114
    %v2116 = vmul.f32 %v2107, %v2114
    %v2117 = vmul.f32 %v2108, %v2114
    %v2118 = vmul.f32 %v2109, %v2114
    %v2119 = vmul.f32 %v2110, %v2114
    %v2120 = vlaneseq
    %v2121 = vshrl.u32 %v2120, 7
    %v2122 = vsub.s32 1, %v2121
    %v2123 = vrot.slane %v64, %v2122
    %v2124 = vadd.f32 %v2115, %v2123
    %v2125 = vadd.f32 %v2116, %v2123
    %v2126 = vadd.f32 %v2117, %v2123
    %v2127 = vadd.f32 %v2118, %v2123
    %v2128 = vadd.f32 %v2119, %v2123
    %s2129 = scalar_lea.vmem %s8, 32
    %v2130 = vld [vmem:[%s2129] sm:$0xff]
    %v2131 = vld [vmem:[%s2129 + $0x8] sm:$0xff]
    %v2132 = vld [vmem:[%s2129 + $0x10] sm:$0xff]
    %v2133 = vld [vmem:[%s2129 + $0x18] sm:$0xff]
    %v2134 = vlaneseq
    %v2135 = vshrl.u32 %v2134, 7
    %v2136 = vsub.s32 2, %v2135
    %v2137 = vrot.slane %v64, %v2136
    %v2139 = vsel %vm374, %v2124, 0
    %v2142 = vsel %vm374, %v2125, 0
    %v2145 = vsel %vm374, %v2126, 0
    %v2148 = vsel %vm374, %v2127, 0
    %v2151 = vsel %vm374, %v2128, 0
    %2153 = vmatprep.subr.mxu0 0.0
    %2154 = vmatpush1.msra.mxu0 %v2130
    %2155 = vmatprep.subr.mxu0 0.0
    %2156 = vmatpush1.msra.mxu0 %v2131
    %2157 = vmatprep.subr.mxu0 0.0
    %2158 = vmatpush1.msra.mxu0 %v2132
    %2159 = vmatprep.subr.mxu0 0.0
    %2160 = vmatpush1.msra.mxu0 %v2133
    %2161 = vmatprep.subr.mxu0 0.0
    %2162 = vmatpush1.msra.mxu0 0.0
    %2163 = vmatprep.subr.mxu0 0.0
    %2164 = vmatpush1.msra.mxu0 0.0
    %2165 = vmatprep.subr.mxu0 0.0
    %2166 = vmatpush1.msra.mxu0 0.0
    %2167 = vmatprep.subr.mxu0 0.0
    %2168 = vmatpush1.msra.mxu0 0.0
    %2169 = vmatprep.subr.mxu0 0.0
    %2170 = vmatpush1.msra.mxu0 0.0
    %2171 = vmatprep.subr.mxu0 0.0
    %2172 = vmatpush1.msra.mxu0 0.0
    %2173 = vmatprep.subr.mxu0 0.0
    %2174 = vmatpush1.msra.mxu0 0.0
    %2175 = vmatprep.subr.mxu0 0.0
    %2176 = vmatpush1.msra.mxu0 0.0
    %2177 = vmatprep.subr.mxu0 0.0
    %2178 = vmatpush1.msra.mxu0 0.0
    %2179 = vmatprep.subr.mxu0 0.0
    %2180 = vmatpush1.msra.mxu0 0.0
    %2181 = vmatprep.subr.mxu0 0.0
    %2182 = vmatpush1.msra.mxu0 0.0
    %2183 = vmatprep.subr.mxu0 0.0
    %2184 = vmatpush1.msra.mxu0 0.0
    %2185 = vmatprep.subr.mxu0 0.0
    %2186 = vmatpush1.msra.mxu0 0.0
    %2187 = vmatprep.subr.mxu0 0.0
    %2188 = vmatpush1.msra.mxu0 0.0
    %2189 = vmatprep.subr.mxu0 0.0
    %2190 = vmatpush1.msra.mxu0 0.0
    %2191 = vmatprep.subr.mxu0 0.0
    %2192 = vmatpush1.msra.mxu0 0.0
    %2193 = vmatprep.subr.mxu0 0.0
    %2194 = vmatpush1.msra.mxu0 0.0
    %2195 = vmatprep.subr.mxu0 0.0
    %2196 = vmatpush1.msra.mxu0 0.0
    %2197 = vmatprep.subr.mxu0 0.0
    %2198 = vmatpush1.msra.mxu0 0.0
    %2199 = vmatprep.subr.mxu0 0.0
    %2200 = vmatpush1.msra.mxu0 0.0
    %2201 = vmatprep.subr.mxu0 0.0
    %2202 = vmatpush1.msra.mxu0 0.0
    %2203 = vmatprep.subr.mxu0 0.0
    %2204 = vmatpush1.msra.mxu0 0.0
    %2205 = vmatprep.subr.mxu0 0.0
    %2206 = vmatpush1.msra.mxu0 0.0
    %2207 = vmatprep.subr.mxu0 0.0
    %2208 = vmatpush1.msra.mxu0 0.0
    %2209 = vmatprep.subr.mxu0 0.0
    %2210 = vmatpush1.msra.mxu0 0.0
    %2211 = vmatprep.subr.mxu0 0.0
    %2212 = vmatpush1.msra.mxu0 0.0
    %2213 = vmatprep.subr.mxu0 0.0
    %2214 = vmatpush1.msra.mxu0 0.0
    %2215 = vmatprep.subr.mxu0 0.0
    %2216 = vmatpush1.msra.mxu0 0.0
    %2217 = vmatprep.mubr.f32.mxu0 0.0
    %2218 = vmatmul.mubr.f32.gmra.mrb[0].mxu0 %v2139
    %v2219 = vpop.f32.mrb[0].mxu0
    %v2220 = vadd.f32 %v2137, %v2219
    %v2221 = vpop.f32.mrb[0].mxu0
    %2222 = vmatprep.mubr.f32.mxu0 0.0
    %2223 = vmatmul.mubr.f32.gmra.mrb[0].mxu0 %v2142
    %v2224 = vpop.f32.mrb[0].mxu0
    %v2225 = vadd.f32 %v2137, %v2224
    %v2226 = vpop.f32.mrb[0].mxu0
    %2227 = vmatprep.mubr.f32.mxu0 0.0
    %2228 = vmatmul.mubr.f32.gmra.mrb[0].mxu0 %v2145
    %v2229 = vpop.f32.mrb[0].mxu0
    %v2230 = vadd.f32 %v2137, %v2229
    %v2231 = vpop.f32.mrb[0].mxu0
    %2232 = vmatprep.mubr.f32.mxu0 0.0
    %2233 = vmatmul.mubr.f32.gmra.mrb[0].mxu0 %v2148
    %v2234 = vpop.f32.mrb[0].mxu0
    %v2235 = vadd.f32 %v2137, %v2234
    %v2236 = vpop.f32.mrb[0].mxu0
    %2237 = vmatprep.mubr.f32.mxu0 0.0
    %2238 = vmatmul.mubr.f32.gmra.mrb[0].mxu0 %v2151
    %v2239 = vpop.f32.mrb[0].mxu0
    %v2240 = vadd.f32 %v2137, %v2239
    %v2241 = vpop.f32.mrb[0].mxu0
    %2242 = vdwg.mxu0
    %v2243 = vmul.f32 %v2220, %v2220
    %v2244 = vmul.f32 %v2225, %v2225
    %v2245 = vmul.f32 %v2230, %v2230
    %v2246 = vmul.f32 %v2235, %v2235
    %v2247 = vmul.f32 %v2240, %v2240
    %v2248 = vmul.f32 %v2220, %v2243
    %v2249 = vmul.f32 %v2225, %v2244
    %v2250 = vmul.f32 %v2230, %v2245
    %v2251 = vmul.f32 %v2235, %v2246
    %v2252 = vmul.f32 %v2240, %v2247
    %v2253 = vmul.f32 %v2248, 0.044715
    %v2254 = vmul.f32 %v2249, 0.044715
    %v2255 = vmul.f32 %v2250, 0.044715
    %v2256 = vmul.f32 %v2251, 0.044715
    %v2257 = vmul.f32 %v2252, 0.044715
    %v2258 = vadd.f32 %v2220, %v2253
    %v2259 = vadd.f32 %v2225, %v2254
    %v2260 = vadd.f32 %v2230, %v2255
    %v2261 = vadd.f32 %v2235, %v2256
    %v2262 = vadd.f32 %v2240, %v2257
    %v2263 = vmul.f32 %v2258, 0.7978846
    %v2264 = vmul.f32 %v2259, 0.7978846
    %v2265 = vmul.f32 %v2260, 0.7978846
    %v2266 = vmul.f32 %v2261, 0.7978846
    %v2267 = vmul.f32 %v2262, 0.7978846
    %v2268 = vtanh.pop %v2263
    %v2269 = vtanh.pop %v2264
    %v2270 = vtanh.pop %v2265
    %v2271 = vtanh.pop %v2266
    %v2272 = vtanh.pop %v2267
    %v2273 = vadd.f32 %v2268, 1.0
    %v2274 = vadd.f32 %v2269, 1.0
    %v2275 = vadd.f32 %v2270, 1.0
    %v2276 = vadd.f32 %v2271, 1.0
    %v2277 = vadd.f32 %v2272, 1.0
    %v2278 = vmul.f32 %v2273, 0.5
    %v2279 = vmul.f32 %v2274, 0.5
    %v2280 = vmul.f32 %v2275, 0.5
    %v2281 = vmul.f32 %v2276, 0.5
    %v2282 = vmul.f32 %v2277, 0.5
    %v2283 = vmul.f32 %v2220, %v2278
    %v2284 = vmul.f32 %v2225, %v2279
    %v2285 = vmul.f32 %v2230, %v2280
    %v2286 = vmul.f32 %v2235, %v2281
    %v2287 = vmul.f32 %v2240, %v2282
    %s2288 = scalar_lea.vmem %s9, 64
    %v2289 = vld [vmem:[%s2288] sm:$0xff]
    %v2290 = vld [vmem:[%s2288 + $0x8] sm:$0xff]
    %v2291 = vld [vmem:[%s2288 + $0x10] sm:$0xff]
    %v2292 = vld [vmem:[%s2288 + $0x18] sm:$0xff]
    %v2293 = vld [vmem:[%s2288 + $0x20] sm:$0xff]
    %v2294 = vld [vmem:[%s2288 + $0x28] sm:$0xff]
    %v2295 = vld [vmem:[%s2288 + $0x30] sm:$0xff]
    %v2296 = vld [vmem:[%s2288 + $0x38] sm:$0xff]
    %v2297 = vlaneseq
    %v2298 = vshrl.u32 %v2297, 7
    %v2299 = vsub.s32 3, %v2298
    %v2300 = vrot.slane %v64, %v2299
    %v2302 = vsel %vm1290, %v2283, 0
    %v2305 = vsel %vm1290, %v2284, 0
    %v2308 = vsel %vm1290, %v2285, 0
    %v2311 = vsel %vm1290, %v2286, 0
    %v2314 = vsel %vm1290, %v2287, 0
    %2316 = vmatprep.subr.mxu0 0.0
    %2317 = vmatpush1.msra.mxu0 %v2289
    %2318 = vmatprep.subr.mxu0 0.0
    %2319 = vmatpush1.msra.mxu0 %v2290
    %2320 = vmatprep.subr.mxu0 0.0
    %2321 = vmatpush1.msra.mxu0 %v2291
    %2322 = vmatprep.subr.mxu0 0.0
    %2323 = vmatpush1.msra.mxu0 %v2292
    %2324 = vmatprep.subr.mxu0 0.0
    %2325 = vmatpush1.msra.mxu0 %v2293
    %2326 = vmatprep.subr.mxu0 0.0
    %2327 = vmatpush1.msra.mxu0 %v2294
    %2328 = vmatprep.subr.mxu0 0.0
    %2329 = vmatpush1.msra.mxu0 %v2295
    %2330 = vmatprep.subr.mxu0 0.0
    %2331 = vmatpush1.msra.mxu0 %v2296
    %2332 = vmatprep.subr.mxu0 0.0
    %2333 = vmatpush1.msra.mxu0 0.0
    %2334 = vmatprep.subr.mxu0 0.0
    %2335 = vmatpush1.msra.mxu0 0.0
    %2336 = vmatprep.subr.mxu0 0.0
    %2337 = vmatpush1.msra.mxu0 0.0
    %2338 = vmatprep.subr.mxu0 0.0
    %2339 = vmatpush1.msra.mxu0 0.0
    %2340 = vmatprep.subr.mxu0 0.0
    %2341 = vmatpush1.msra.mxu0 0.0
    %2342 = vmatprep.subr.mxu0 0.0
    %2343 = vmatpush1.msra.mxu0 0.0
    %2344 = vmatprep.subr.mxu0 0.0
    %2345 = vmatpush1.msra.mxu0 0.0
    %2346 = vmatprep.subr.mxu0 0.0
    %2347 = vmatpush1.msra.mxu0 0.0
    %2348 = vmatprep.subr.mxu0 0.0
    %2349 = vmatpush1.msra.mxu0 0.0
    %2350 = vmatprep.subr.mxu0 0.0
    %2351 = vmatpush1.msra.mxu0 0.0
    %2352 = vmatprep.subr.mxu0 0.0
    %2353 = vmatpush1.msra.mxu0 0.0
    %2354 = vmatprep.subr.mxu0 0.0
    %2355 = vmatpush1.msra.mxu0 0.0
    %2356 = vmatprep.subr.mxu0 0.0
    %2357 = vmatpush1.msra.mxu0 0.0
    %2358 = vmatprep.subr.mxu0 0.0
    %2359 = vmatpush1.msra.mxu0 0.0
    %2360 = vmatprep.subr.mxu0 0.0
    %2361 = vmatpush1.msra.mxu0 0.0
    %2362 = vmatprep.subr.mxu0 0.0
    %2363 = vmatpush1.msra.mxu0 0.0
    %2364 = vmatprep.subr.mxu0 0.0
    %2365 = vmatpush1.msra.mxu0 0.0
    %2366 = vmatprep.subr.mxu0 0.0
    %2367 = vmatpush1.msra.mxu0 0.0
    %2368 = vmatprep.subr.mxu0 0.0
    %2369 = vmatpush1.msra.mxu0 0.0
    %2370 = vmatprep.subr.mxu0 0.0
    %2371 = vmatpush1.msra.mxu0 0.0
    %2372 = vmatprep.subr.mxu0 0.0
    %2373 = vmatpush1.msra.mxu0 0.0
    %2374 = vmatprep.subr.mxu0 0.0
    %2375 = vmatpush1.msra.mxu0 0.0
    %2376 = vmatprep.subr.mxu0 0.0
    %2377 = vmatpush1.msra.mxu0 0.0
    %2378 = vmatprep.subr.mxu0 0.0
    %2379 = vmatpush1.msra.mxu0 0.0
    %2380 = vmatprep.mubr.f32.mxu0 0.0
    %2381 = vmatmul.mubr.f32.gmra.mrb[0].mxu0 %v2302
    %v2382 = vpop.f32.mrb[0].mxu0
    %v2383 = vadd.f32 %v2300, %v2382
    %v2384 = vpop.f32.mrb[0].mxu0
    %2385 = vmatprep.mubr.f32.mxu0 0.0
    %2386 = vmatmul.mubr.f32.gmra.mrb[0].mxu0 %v2305
    %v2387 = vpop.f32.mrb[0].mxu0
    %v2388 = vadd.f32 %v2300, %v2387
    %v2389 = vpop.f32.mrb[0].mxu0
    %2390 = vmatprep.mubr.f32.mxu0 0.0
    %2391 = vmatmul.mubr.f32.gmra.mrb[0].mxu0 %v2308
    %v2392 = vpop.f32.mrb[0].mxu0
    %v2393 = vadd.f32 %v2300, %v2392
    %v2394 = vpop.f32.mrb[0].mxu0
    %2395 = vmatprep.mubr.f32.mxu0 0.0
    %2396 = vmatmul.mubr.f32.gmra.mrb[0].mxu0 %v2311
    %v2397 = vpop.f32.mrb[0].mxu0
    %v2398 = vadd.f32 %v2300, %v2397
    %v2399 = vpop.f32.mrb[0].mxu0
    %2400 = vmatprep.mubr.f32.mxu0 0.0
    %2401 = vmatmul.mubr.f32.gmra.mrb[0].mxu0 %v2314
    %v2402 = vpop.f32.mrb[0].mxu0
    %v2403 = vadd.f32 %v2300, %v2402
    %v2404 = vpop.f32.mrb[0].mxu0
    %2405 = vdwg.mxu0
    %v2406 = vadd.f32 %v2031, %v2383
    %v2407 = vadd.f32 %v2032, %v2388
    %v2408 = vadd.f32 %v2033, %v2393
    %v2409 = vadd.f32 %v2034, %v2398
    %v2410 = vadd.f32 %v2035, %v2403
    %v2411 = vsel %vm374, %v2406, 0.0
    %2412 = vadd.xlane.f32.xlu0 %v2411
    %v2413 = vpop.xlane.xlu0 %2412
    %v2414 = vsel %vm374, %v2407, 0.0
    %2415 = vadd.xlane.f32.xlu0 %v2414
    %v2416 = vpop.xlane.xlu0 %2415
    %v2417 = vsel %vm374, %v2408, 0.0
    %2418 = vadd.xlane.f32.xlu0 %v2417
    %v2419 = vpop.xlane.xlu0 %2418
    %v2420 = vsel %vm374, %v2409, 0.0
    %2421 = vadd.xlane.f32.xlu0 %v2420
    %v2422 = vpop.xlane.xlu0 %2421
    %v2423 = vsel %vm387, %v2410, 0.0
    %2424 = vadd.xlane.f32.xlu0 %v2423
    %v2425 = vpop.xlane.xlu0 %2424
    %v2426 = vmul.f32 %v2413, %v391
    %v2427 = vmul.f32 %v2416, %v391
    %v2428 = vmul.f32 %v2419, %v391
    %v2429 = vmul.f32 %v2422, %v391
    %v2430 = vmul.f32 %v2425, %v391
    %v2431 = vmul.f32 %v2406, %v2406
    %v2432 = vmul.f32 %v2407, %v2407
    %v2433 = vmul.f32 %v2408, %v2408
    %v2434 = vmul.f32 %v2409, %v2409
    %v2435 = vmul.f32 %v2410, %v2410
    %v2436 = vsel %vm374, %v2431, 0.0
    %2437 = vadd.xlane.f32.xlu0 %v2436
    %v2438 = vpop.xlane.xlu0 %2437
    %v2439 = vsel %vm374, %v2432, 0.0
    %2440 = vadd.xlane.f32.xlu0 %v2439
    %v2441 = vpop.xlane.xlu0 %2440
    %v2442 = vsel %vm374, %v2433, 0.0
    %2443 = vadd.xlane.f32.xlu0 %v2442
    %v2444 = vpop.xlane.xlu0 %2443
    %v2445 = vsel %vm374, %v2434, 0.0
    %2446 = vadd.xlane.f32.xlu0 %v2445
    %v2447 = vpop.xlane.xlu0 %2446
    %v2448 = vsel %vm387, %v2435, 0.0
    %2449 = vadd.xlane.f32.xlu0 %v2448
    %v2450 = vpop.xlane.xlu0 %2449
    %v2451 = vmul.f32 %v2438, %v391
    %v2452 = vmul.f32 %v2441, %v391
    %v2453 = vmul.f32 %v2444, %v391
    %v2454 = vmul.f32 %v2447, %v391
    %v2455 = vmul.f32 %v2450, %v391
    %v2456 = vmul.f32 %v2426, %v2426
    %v2457 = vmul.f32 %v2427, %v2427
    %v2458 = vmul.f32 %v2428, %v2428
    %v2459 = vmul.f32 %v2429, %v2429
    %v2460 = vmul.f32 %v2430, %v2430
    %v2461 = vsub.f32 %v2451, %v2456
    %v2462 = vsub.f32 %v2452, %v2457
    %v2463 = vsub.f32 %v2453, %v2458
    %v2464 = vsub.f32 %v2454, %v2459
    %v2465 = vsub.f32 %v2455, %v2460
    %v2466 = vadd.f32 %v2461, 1e-05
    %v2467 = vadd.f32 %v2462, 1e-05
    %v2468 = vadd.f32 %v2463, 1e-05
    %v2469 = vadd.f32 %v2464, 1e-05
    %v2470 = vadd.f32 %v2465, 1e-05
    %v2471 = vrsqrt.pop %v2466
    %v2472 = vrsqrt.pop %v2467
    %v2473 = vrsqrt.pop %v2468
    %v2474 = vrsqrt.pop %v2469
    %v2475 = vrsqrt.pop %v2470
    %v2476 = vsub.f32 %v2406, %v2426
    %v2477 = vsub.f32 %v2407, %v2427
    %v2478 = vsub.f32 %v2408, %v2428
    %v2479 = vsub.f32 %v2409, %v2429
    %v2480 = vsub.f32 %v2410, %v2430
    %v2481 = vmul.f32 %v2476, %v2471
    %v2482 = vmul.f32 %v2477, %v2472
    %v2483 = vmul.f32 %v2478, %v2473
    %v2484 = vmul.f32 %v2479, %v2474
    %v2485 = vmul.f32 %v2480, %v2475
    %v2486 = vlaneseq
    %v2487 = vshrl.u32 %v2486, 7
    %v2488 = vsub.s32 2, %v2487
    %v2489 = vrot.slane %v62, %v2488
    %v2490 = vmul.f32 %v2481, %v2489
    %v2491 = vmul.f32 %v2482, %v2489
    %v2492 = vmul.f32 %v2483, %v2489
    %v2493 = vmul.f32 %v2484, %v2489
    %v2494 = vmul.f32 %v2485, %v2489
    %v2495 = vlaneseq
    %v2496 = vshrl.u32 %v2495, 7
    %v2497 = vsub.s32 3, %v2496
    %v2498 = vrot.slane %v62, %v2497
    %v2499 = vadd.f32 %v2490, %v2498
    %v2500 = vadd.f32 %v2491, %v2498
    %v2501 = vadd.f32 %v2492, %v2498
    %v2502 = vadd.f32 %v2493, %v2498
    %v2503 = vadd.f32 %v2494, %v2498
    %v2504 = vld [vmem:[%s10] sm:$0xff]
    %v2505 = vld [vmem:[%s10 + $0x8] sm:$0xff]
    %v2506 = vld [vmem:[%s10 + $0x10] sm:$0xff]
    %v2507 = vld [vmem:[%s10 + $0x18] sm:$0xff]
    %v2508 = vld [vmem:[%s10 + $0x20] sm:$0xff]
    %v2509 = vld [vmem:[%s10 + $0x28] sm:$0xff]
    %v2510 = vld [vmem:[%s10 + $0x30] sm:$0xff]
    %v2511 = vld [vmem:[%s10 + $0x38] sm:$0xff]
    %v2512 = vld [vmem:[%s10 + $0x40] sm:$0xff]
    %v2513 = vld [vmem:[%s10 + $0x48] sm:$0xff]
    %v2514 = vld [vmem:[%s10 + $0x50] sm:$0xff]
    %v2515 = vld [vmem:[%s10 + $0x58] sm:$0xff]
    %v2516 = vld [vmem:[%s10 + $0x60] sm:$0xff]
    %v2517 = vld [vmem:[%s10 + $0x68] sm:$0xff]
    %v2518 = vld [vmem:[%s10 + $0x70] sm:$0xff]
    %v2519 = vld [vmem:[%s10 + $0x78] sm:$0xff]
    %v2520 = vld [vmem:[%s10 + $0x80] sm:$0xff]
    %v2521 = vld [vmem:[%s10 + $0x88] sm:$0xff]
    %v2522 = vld [vmem:[%s10 + $0x90] sm:$0xff]
    %v2523 = vld [vmem:[%s10 + $0x98] sm:$0xff]
    %v2525 = vsel %vm374, %v2499, 0
    %v2528 = vsel %vm374, %v2500, 0
    %v2531 = vsel %vm374, %v2501, 0
    %v2534 = vsel %vm374, %v2502, 0
    %v2537 = vsel %vm374, %v2503, 0
    %2539 = vmatprep.subr.mxu0 %v2505
    %2540 = vmatpush1.msra.mxu0 %v2504
    %2541 = vmatprep.subr.mxu0 %v2510
    %2542 = vmatpush1.msra.mxu0 %v2509
    %2543 = vmatprep.subr.mxu0 %v2515
    %2544 = vmatpush1.msra.mxu0 %v2514
    %2545 = vmatprep.subr.mxu0 %v2520
    %2546 = vmatpush1.msra.mxu0 %v2519
    %2547 = vmatprep.subr.mxu0 0.0
    %2548 = vmatpush1.msra.mxu0 0.0
    %2549 = vmatprep.subr.mxu0 0.0
    %2550 = vmatpush1.msra.mxu0 0.0
    %2551 = vmatprep.subr.mxu0 0.0
    %2552 = vmatpush1.msra.mxu0 0.0
    %2553 = vmatprep.subr.mxu0 0.0
    %2554 = vmatpush1.msra.mxu0 0.0
    %2555 = vmatprep.subr.mxu0 0.0
    %2556 = vmatpush1.msra.mxu0 0.0
    %2557 = vmatprep.subr.mxu0 0.0
    %2558 = vmatpush1.msra.mxu0 0.0
    %2559 = vmatprep.subr.mxu0 0.0
    %2560 = vmatpush1.msra.mxu0 0.0
    %2561 = vmatprep.subr.mxu0 0.0
    %2562 = vmatpush1.msra.mxu0 0.0
    %2563 = vmatprep.subr.mxu0 0.0
    %2564 = vmatpush1.msra.mxu0 0.0
    %2565 = vmatprep.subr.mxu0 0.0
    %2566 = vmatpush1.msra.mxu0 0.0
    %2567 = vmatprep.subr.mxu0 0.0
    %2568 = vmatpush1.msra.mxu0 0.0
    %2569 = vmatprep.subr.mxu0 0.0
    %2570 = vmatpush1.msra.mxu0 0.0
    %2571 = vmatprep.subr.mxu0 0.0
    %2572 = vmatpush1.msra.mxu0 0.0
    %2573 = vmatprep.subr.mxu0 0.0
    %2574 = vmatpush1.msra.mxu0 0.0
    %2575 = vmatprep.subr.mxu0 0.0
    %2576 = vmatpush1.msra.mxu0 0.0
    %2577 = vmatprep.subr.mxu0 0.0
    %2578 = vmatpush1.msra.mxu0 0.0
    %2579 = vmatprep.subr.mxu0 0.0
    %2580 = vmatpush1.msra.mxu0 0.0
    %2581 = vmatprep.subr.mxu0 0.0
    %2582 = vmatpush1.msra.mxu0 0.0
    %2583 = vmatprep.subr.mxu0 0.0
    %2584 = vmatpush1.msra.mxu0 0.0
    %2585 = vmatprep.subr.mxu0 0.0
    %2586 = vmatpush1.msra.mxu0 0.0
    %2587 = vmatprep.subr.mxu0 0.0
    %2588 = vmatpush1.msra.mxu0 0.0
    %2589 = vmatprep.subr.mxu0 0.0
    %2590 = vmatpush1.msra.mxu0 0.0
    %2591 = vmatprep.subr.mxu0 0.0
    %2592 = vmatpush1.msra.mxu0 0.0
    %2593 = vmatprep.subr.mxu0 0.0
    %2594 = vmatpush1.msra.mxu0 0.0
    %2595 = vmatprep.subr.mxu0 0.0
    %2596 = vmatpush1.msra.mxu0 0.0
    %2597 = vmatprep.subr.mxu0 0.0
    %2598 = vmatpush1.msra.mxu0 0.0
    %2599 = vmatprep.subr.mxu0 0.0
    %2600 = vmatpush1.msra.mxu0 0.0
    %2601 = vmatprep.subr.mxu0 0.0
    %2602 = vmatpush1.msra.mxu0 0.0
    %2603 = vmatprep.mubr.f32.mxu0 0.0
    %2604 = vmatmul.mubr.f32.gmra.mrb[0].mxu0 %v2525
    %v2605 = vpop.f32.mrb[0].mxu0
    %v2606 = vadd.f32 0.0, %v2605
    %v2607 = vpop.f32.mrb[0].mxu0
    %v2608 = vadd.f32 0.0, %v2607
    %2609 = vmatprep.mubr.f32.mxu0 0.0
    %2610 = vmatmul.mubr.f32.gmra.mrb[0].mxu0 %v2528
    %v2611 = vpop.f32.mrb[0].mxu0
    %v2612 = vadd.f32 0.0, %v2611
    %v2613 = vpop.f32.mrb[0].mxu0
    %v2614 = vadd.f32 0.0, %v2613
    %2615 = vmatprep.mubr.f32.mxu0 0.0
    %2616 = vmatmul.mubr.f32.gmra.mrb[0].mxu0 %v2531
    %v2617 = vpop.f32.mrb[0].mxu0
    %v2618 = vadd.f32 0.0, %v2617
    %v2619 = vpop.f32.mrb[0].mxu0
    %v2620 = vadd.f32 0.0, %v2619
    %2621 = vmatprep.mubr.f32.mxu0 0.0
    %2622 = vmatmul.mubr.f32.gmra.mrb[0].mxu0 %v2534
    %v2623 = vpop.f32.mrb[0].mxu0
    %v2624 = vadd.f32 0.0, %v2623
    %v2625 = vpop.f32.mrb[0].mxu0
    %v2626 = vadd.f32 0.0, %v2625
    %2627 = vmatprep.mubr.f32.mxu0 0.0
    %2628 = vmatmul.mubr.f32.gmra.mrb[0].mxu0 %v2537
    %v2629 = vpop.f32.mrb[0].mxu0
    %v2630 = vadd.f32 0.0, %v2629
    %v2631 = vpop.f32.mrb[0].mxu0
    %v2632 = vadd.f32 0.0, %v2631
    %2633 = vdwg.mxu0
    %2634 = vmatprep.subr.mxu0 %v2507
    %2635 = vmatpush1.msra.mxu0 %v2506
    %2636 = vmatprep.subr.mxu0 %v2512
    %2637 = vmatpush1.msra.mxu0 %v2511
    %2638 = vmatprep.subr.mxu0 %v2517
    %2639 = vmatpush1.msra.mxu0 %v2516
    %2640 = vmatprep.subr.mxu0 %v2522
    %2641 = vmatpush1.msra.mxu0 %v2521
    %2642 = vmatprep.subr.mxu0 0.0
    %2643 = vmatpush1.msra.mxu0 0.0
    %2644 = vmatprep.subr.mxu0 0.0
    %2645 = vmatpush1.msra.mxu0 0.0
    %2646 = vmatprep.subr.mxu0 0.0
    %2647 = vmatpush1.msra.mxu0 0.0
    %2648 = vmatprep.subr.mxu0 0.0
    %2649 = vmatpush1.msra.mxu0 0.0
    %2650 = vmatprep.subr.mxu0 0.0
    %2651 = vmatpush1.msra.mxu0 0.0
    %2652 = vmatprep.subr.mxu0 0.0
    %2653 = vmatpush1.msra.mxu0 0.0
    %2654 = vmatprep.subr.mxu0 0.0
    %2655 = vmatpush1.msra.mxu0 0.0
    %2656 = vmatprep.subr.mxu0 0.0
    %2657 = vmatpush1.msra.mxu0 0.0
    %2658 = vmatprep.subr.mxu0 0.0
    %2659 = vmatpush1.msra.mxu0 0.0
    %2660 = vmatprep.subr.mxu0 0.0
    %2661 = vmatpush1.msra.mxu0 0.0
    %2662 = vmatprep.subr.mxu0 0.0
    %2663 = vmatpush1.msra.mxu0 0.0
    %2664 = vmatprep.subr.mxu0 0.0
    %2665 = vmatpush1.msra.mxu0 0.0
    %2666 = vmatprep.subr.mxu0 0.0
    %2667 = vmatpush1.msra.mxu0 0.0
    %2668 = vmatprep.subr.mxu0 0.0
    %2669 = vmatpush1.msra.mxu0 0.0
    %2670 = vmatprep.subr.mxu0 0.0
    %2671 = vmatpush1.msra.mxu0 0.0
    %2672 = vmatprep.subr.mxu0 0.0
    %2673 = vmatpush1.msra.mxu0 0.0
    %2674 = vmatprep.subr.mxu0 0.0
    %2675 = vmatpush1.msra.mxu0 0.0
    %2676 = vmatprep.subr.mxu0 0.0
    %2677 = vmatpush1.msra.mxu0 0.0
    %2678 = vmatprep.subr.mxu0 0.0
    %2679 = vmatpush1.msra.mxu0 0.0
    %2680 = vmatprep.subr.mxu0 0.0
    %2681 = vmatpush1.msra.mxu0 0.0
    %2682 = vmatprep.subr.mxu0 0.0
    %2683 = vmatpush1.msra.mxu0 0.0
    %2684 = vmatprep.subr.mxu0 0.0
    %2685 = vmatpush1.msra.mxu0 0.0
    %2686 = vmatprep.subr.mxu0 0.0
    %2687 = vmatpush1.msra.mxu0 0.0
    %2688 = vmatprep.subr.mxu0 0.0
    %2689 = vmatpush1.msra.mxu0 0.0
    %2690 = vmatprep.subr.mxu0 0.0
    %2691 = vmatpush1.msra.mxu0 0.0
    %2692 = vmatprep.subr.mxu0 0.0
    %2693 = vmatpush1.msra.mxu0 0.0
    %2694 = vmatprep.subr.mxu0 0.0
    %2695 = vmatpush1.msra.mxu0 0.0
    %2696 = vmatprep.subr.mxu0 0.0
    %2697 = vmatpush1.msra.mxu0 0.0
    %2698 = vmatprep.mubr.f32.mxu0 0.0
    %2699 = vmatmul.mubr.f32.gmra.mrb[0].mxu0 %v2525
    %v2700 = vpop.f32.mrb[0].mxu0
    %v2701 = vadd.f32 0.0, %v2700
    %v2702 = vpop.f32.mrb[0].mxu0
    %v2703 = vadd.f32 0.0, %v2702
    %2704 = vmatprep.mubr.f32.mxu0 0.0
    %2705 = vmatmul.mubr.f32.gmra.mrb[0].mxu0 %v2528
    %v2706 = vpop.f32.mrb[0].mxu0
    %v2707 = vadd.f32 0.0, %v2706
    %v2708 = vpop.f32.mrb[0].mxu0
    %v2709 = vadd.f32 0.0, %v2708
    %2710 = vmatprep.mubr.f32.mxu0 0.0
    %2711 = vmatmul.mubr.f32.gmra.mrb[0].mxu0 %v2531
    %v2712 = vpop.f32.mrb[0].mxu0
    %v2713 = vadd.f32 0.0, %v2712
    %v2714 = vpop.f32.mrb[0].mxu0
    %v2715 = vadd.f32 0.0, %v2714
    %2716 = vmatprep.mubr.f32.mxu0 0.0
    %2717 = vmatmul.mubr.f32.gmra.mrb[0].mxu0 %v2534
    %v2718 = vpop.f32.mrb[0].mxu0
    %v2719 = vadd.f32 0.0, %v2718
    %v2720 = vpop.f32.mrb[0].mxu0
    %v2721 = vadd.f32 0.0, %v2720
    %2722 = vmatprep.mubr.f32.mxu0 0.0
    %2723 = vmatmul.mubr.f32.gmra.mrb[0].mxu0 %v2537
    %v2724 = vpop.f32.mrb[0].mxu0
    %v2725 = vadd.f32 0.0, %v2724
    %v2726 = vpop.f32.mrb[0].mxu0
    %v2727 = vadd.f32 0.0, %v2726
    %2728 = vdwg.mxu0
    %2729 = vmatprep.subr.mxu0 0.0
    %2730 = vmatpush1.msra.mxu0 %v2508
    %2731 = vmatprep.subr.mxu0 0.0
    %2732 = vmatpush1.msra.mxu0 %v2513
    %2733 = vmatprep.subr.mxu0 0.0
    %2734 = vmatpush1.msra.mxu0 %v2518
    %2735 = vmatprep.subr.mxu0 0.0
    %2736 = vmatpush1.msra.mxu0 %v2523
    %2737 = vmatprep.subr.mxu0 0.0
    %2738 = vmatpush1.msra.mxu0 0.0
    %2739 = vmatprep.subr.mxu0 0.0
    %2740 = vmatpush1.msra.mxu0 0.0
    %2741 = vmatprep.subr.mxu0 0.0
    %2742 = vmatpush1.msra.mxu0 0.0
    %2743 = vmatprep.subr.mxu0 0.0
    %2744 = vmatpush1.msra.mxu0 0.0
    %2745 = vmatprep.subr.mxu0 0.0
    %2746 = vmatpush1.msra.mxu0 0.0
    %2747 = vmatprep.subr.mxu0 0.0
    %2748 = vmatpush1.msra.mxu0 0.0
    %2749 = vmatprep.subr.mxu0 0.0
    %2750 = vmatpush1.msra.mxu0 0.0
    %2751 = vmatprep.subr.mxu0 0.0
    %2752 = vmatpush1.msra.mxu0 0.0
    %2753 = vmatprep.subr.mxu0 0.0
    %2754 = vmatpush1.msra.mxu0 0.0
    %2755 = vmatprep.subr.mxu0 0.0
    %2756 = vmatpush1.msra.mxu0 0.0
    %2757 = vmatprep.subr.mxu0 0.0
    %2758 = vmatpush1.msra.mxu0 0.0
    %2759 = vmatprep.subr.mxu0 0.0
    %2760 = vmatpush1.msra.mxu0 0.0
    %2761 = vmatprep.subr.mxu0 0.0
    %2762 = vmatpush1.msra.mxu0 0.0
    %2763 = vmatprep.subr.mxu0 0.0
    %2764 = vmatpush1.msra.mxu0 0.0
    %2765 = vmatprep.subr.mxu0 0.0
    %2766 = vmatpush1.msra.mxu0 0.0
    %2767 = vmatprep.subr.mxu0 0.0
    %2768 = vmatpush1.msra.mxu0 0.0
    %2769 = vmatprep.subr.mxu0 0.0
    %2770 = vmatpush1.msra.mxu0 0.0
    %2771 = vmatprep.subr.mxu0 0.0
    %2772 = vmatpush1.msra.mxu0 0.0
    %2773 = vmatprep.subr.mxu0 0.0
    %2774 = vmatpush1.msra.mxu0 0.0
    %2775 = vmatprep.subr.mxu0 0.0
    %2776 = vmatpush1.msra.mxu0 0.0
    %2777 = vmatprep.subr.mxu0 0.0
    %2778 = vmatpush1.msra.mxu0 0.0
    %2779 = vmatprep.subr.mxu0 0.0
    %2780 = vmatpush1.msra.mxu0 0.0
    %2781 = vmatprep.subr.mxu0 0.0
    %2782 = vmatpush1.msra.mxu0 0.0
    %2783 = vmatprep.subr.mxu0 0.0
    %2784 = vmatpush1.msra.mxu0 0.0
    %2785 = vmatprep.subr.mxu0 0.0
    %2786 = vmatpush1.msra.mxu0 0.0
    %2787 = vmatprep.subr.mxu0 0.0
    %2788 = vmatpush1.msra.mxu0 0.0
    %2789 = vmatprep.subr.mxu0 0.0
    %2790 = vmatpush1.msra.mxu0 0.0
    %2791 = vmatprep.subr.mxu0 0.0
    %2792 = vmatpush1.msra.mxu0 0.0
    %2793 = vmatprep.mubr.f32.mxu0 0.0
    %2794 = vmatmul.mubr.f32.gmra.mrb[0].mxu0 %v2525
    %v2795 = vpop.f32.mrb[0].mxu0
    %v2796 = vadd.f32 0.0, %v2795
    %v2797 = vpop.f32.mrb[0].mxu0
    %2798 = vmatprep.mubr.f32.mxu0 0.0
    %2799 = vmatmul.mubr.f32.gmra.mrb[0].mxu0 %v2528
    %v2800 = vpop.f32.mrb[0].mxu0
    %v2801 = vadd.f32 0.0, %v2800
    %v2802 = vpop.f32.mrb[0].mxu0
    %2803 = vmatprep.mubr.f32.mxu0 0.0
    %2804 = vmatmul.mubr.f32.gmra.mrb[0].mxu0 %v2531
    %v2805 = vpop.f32.mrb[0].mxu0
    %v2806 = vadd.f32 0.0, %v2805
    %v2807 = vpop.f32.mrb[0].mxu0
    %2808 = vmatprep.mubr.f32.mxu0 0.0
    %2809 = vmatmul.mubr.f32.gmra.mrb[0].mxu0 %v2534
    %v2810 = vpop.f32.mrb[0].mxu0
    %v2811 = vadd.f32 0.0, %v2810
    %v2812 = vpop.f32.mrb[0].mxu0
    %2813 = vmatprep.mubr.f32.mxu0 0.0
    %2814 = vmatmul.mubr.f32.gmra.mrb[0].mxu0 %v2537
    %v2815 = vpop.f32.mrb[0].mxu0
    %v2816 = vadd.f32 0.0, %v2815
    %v2817 = vpop.f32.mrb[0].mxu0
    %2818 = vdwg.mxu0
    %v2819 = vld [vmem:[%s15] sm:$0x3]
    %v2820 = vmul.f32 %v2606, %v82
    %v2821 = vmul.f32 %v2608, %v83
    %v2822 = vmul.f32 %v2701, %v84
    %v2823 = vmul.f32 %v2703, %v85
    %v2824 = vmul.f32 %v2796, %v86
    %v2825 = vmul.f32 %v2612, %v87
    %v2826 = vmul.f32 %v2614, %v88
    %v2827 = vmul.f32 %v2707, %v89
    %v2828 = vmul.f32 %v2709, %v90
    %v2829 = vmul.f32 %v2801, %v91
    %v2830 = vmul.f32 %v2618, %v92
    %v2831 = vmul.f32 %v2620, %v93
    %v2832 = vmul.f32 %v2713, %v94
    %v2833 = vmul.f32 %v2715, %v95
    %v2834 = vmul.f32 %v2806, %v96
    %v2835 = vmul.f32 %v2624, %v97
    %v2836 = vmul.f32 %v2626, %v98
    %v2837 = vmul.f32 %v2719, %v99
    %v2838 = vmul.f32 %v2721, %v100
    %v2839 = vmul.f32 %v2811, %v101
    %v2840 = vmul.f32 %v2630, %v102
    %v2841 = vmul.f32 %v2632, %v103
    %v2842 = vmul.f32 %v2725, %v104
    %v2843 = vmul.f32 %v2727, %v105
    %v2844 = vmul.f32 %v2816, %v106
    %v2846 = vsel %vm566, %v2819, 0
    %v2849 = vsel %vm201, %v2840, 0
    %v2852 = vsel %vm201, %v2841, 0
    %v2855 = vsel %vm201, %v2842, 0
    %v2858 = vsel %vm201, %v2843, 0
    %v2861 = vsel %vm201, %v2844, 0
    %2863 = vmatprep.subr.mxu0 %v2821
    %2864 = vmatpush1.msra.mxu0 %v2820
    %2865 = vmatprep.subr.mxu0 %v2826
    %2866 = vmatpush1.msra.mxu0 %v2825
    %2867 = vmatprep.subr.mxu0 %v2831
    %2868 = vmatpush1.msra.mxu0 %v2830
    %2869 = vmatprep.subr.mxu0 %v2836
    %2870 = vmatpush1.msra.mxu0 %v2835
    %2871 = vmatprep.subr.mxu0 %v2852
    %2872 = vmatpush1.msra.mxu0 %v2849
    %2873 = vmatprep.subr.mxu0 0.0
    %2874 = vmatpush1.msra.mxu0 0.0
    %2875 = vmatprep.subr.mxu0 0.0
    %2876 = vmatpush1.msra.mxu0 0.0
    %2877 = vmatprep.subr.mxu0 0.0
    %2878 = vmatpush1.msra.mxu0 0.0
    %2879 = vmatprep.subr.mxu0 0.0
    %2880 = vmatpush1.msra.mxu0 0.0
    %2881 = vmatprep.subr.mxu0 0.0
    %2882 = vmatpush1.msra.mxu0 0.0
    %2883 = vmatprep.subr.mxu0 0.0
    %2884 = vmatpush1.msra.mxu0 0.0
    %2885 = vmatprep.subr.mxu0 0.0
    %2886 = vmatpush1.msra.mxu0 0.0
    %2887 = vmatprep.subr.mxu0 0.0
    %2888 = vmatpush1.msra.mxu0 0.0
    %2889 = vmatprep.subr.mxu0 0.0
    %2890 = vmatpush1.msra.mxu0 0.0
    %2891 = vmatprep.subr.mxu0 0.0
    %2892 = vmatpush1.msra.mxu0 0.0
    %2893 = vmatprep.subr.mxu0 0.0
    %2894 = vmatpush1.msra.mxu0 0.0
    %2895 = vmatprep.subr.mxu0 0.0
    %2896 = vmatpush1.msra.mxu0 0.0
    %2897 = vmatprep.subr.mxu0 0.0
    %2898 = vmatpush1.msra.mxu0 0.0
    %2899 = vmatprep.subr.mxu0 0.0
    %2900 = vmatpush1.msra.mxu0 0.0
    %2901 = vmatprep.subr.mxu0 0.0
    %2902 = vmatpush1.msra.mxu0 0.0
    %2903 = vmatprep.subr.mxu0 0.0
    %2904 = vmatpush1.msra.mxu0 0.0
    %2905 = vmatprep.subr.mxu0 0.0
    %2906 = vmatpush1.msra.mxu0 0.0
    %2907 = vmatprep.subr.mxu0 0.0
    %2908 = vmatpush1.msra.mxu0 0.0
    %2909 = vmatprep.subr.mxu0 0.0
    %2910 = vmatpush1.msra.mxu0 0.0
    %2911 = vmatprep.subr.mxu0 0.0
    %2912 = vmatpush1.msra.mxu0 0.0
    %2913 = vmatprep.subr.mxu0 0.0
    %2914 = vmatpush1.msra.mxu0 0.0
    %2915 = vmatprep.subr.mxu0 0.0
    %2916 = vmatpush1.msra.mxu0 0.0
    %2917 = vmatprep.subr.mxu0 0.0
    %2918 = vmatpush1.msra.mxu0 0.0
    %2919 = vmatprep.subr.mxu0 0.0
    %2920 = vmatpush1.msra.mxu0 0.0
    %2921 = vmatprep.subr.mxu0 0.0
    %2922 = vmatpush1.msra.mxu0 0.0
    %2923 = vmatprep.subr.mxu0 0.0
    %2924 = vmatpush1.msra.mxu0 0.0
    %2925 = vmatprep.subr.mxu0 0.0
    %2926 = vmatpush1.msra.mxu0 0.0
    %2927 = vmatprep.mubr.f32.mxu0 0.0
    %2928 = vmatmul.mubr.f32.gmra.mrb[0].mxu0 %v2846
    %v2929 = vpop.f32.mrb[0].mxu0
    %v2930 = vadd.f32 0.0, %v2929
    %v2931 = vpop.f32.mrb[0].mxu0
    %v2932 = vadd.f32 0.0, %v2931
    %2933 = vdwg.mxu0
    %2934 = vmatprep.subr.mxu0 %v2823
    %2935 = vmatpush1.msra.mxu0 %v2822
    %2936 = vmatprep.subr.mxu0 %v2828
    %2937 = vmatpush1.msra.mxu0 %v2827
    %2938 = vmatprep.subr.mxu0 %v2833
    %2939 = vmatpush1.msra.mxu0 %v2832
    %2940 = vmatprep.subr.mxu0 %v2838
    %2941 = vmatpush1.msra.mxu0 %v2837
    %2942 = vmatprep.subr.mxu0 %v2858
    %2943 = vmatpush1.msra.mxu0 %v2855
    %2944 = vmatprep.subr.mxu0 0.0
    %2945 = vmatpush1.msra.mxu0 0.0
    %2946 = vmatprep.subr.mxu0 0.0
    %2947 = vmatpush1.msra.mxu0 0.0
    %2948 = vmatprep.subr.mxu0 0.0
    %2949 = vmatpush1.msra.mxu0 0.0
    %2950 = vmatprep.subr.mxu0 0.0
    %2951 = vmatpush1.msra.mxu0 0.0
    %2952 = vmatprep.subr.mxu0 0.0
    %2953 = vmatpush1.msra.mxu0 0.0
    %2954 = vmatprep.subr.mxu0 0.0
    %2955 = vmatpush1.msra.mxu0 0.0
    %2956 = vmatprep.subr.mxu0 0.0
    %2957 = vmatpush1.msra.mxu0 0.0
    %2958 = vmatprep.subr.mxu0 0.0
    %2959 = vmatpush1.msra.mxu0 0.0
    %2960 = vmatprep.subr.mxu0 0.0
    %2961 = vmatpush1.msra.mxu0 0.0
    %2962 = vmatprep.subr.mxu0 0.0
    %2963 = vmatpush1.msra.mxu0 0.0
    %2964 = vmatprep.subr.mxu0 0.0
    %2965 = vmatpush1.msra.mxu0 0.0
    %2966 = vmatprep.subr.mxu0 0.0
    %2967 = vmatpush1.msra.mxu0 0.0
    %2968 = vmatprep.subr.mxu0 0.0
    %2969 = vmatpush1.msra.mxu0 0.0
    %2970 = vmatprep.subr.mxu0 0.0
    %2971 = vmatpush1.msra.mxu0 0.0
    %2972 = vmatprep.subr.mxu0 0.0
    %2973 = vmatpush1.msra.mxu0 0.0
    %2974 = vmatprep.subr.mxu0 0.0
    %2975 = vmatpush1.msra.mxu0 0.0
    %2976 = vmatprep.subr.mxu0 0.0
    %2977 = vmatpush1.msra.mxu0 0.0
    %2978 = vmatprep.subr.mxu0 0.0
    %2979 = vmatpush1.msra.mxu0 0.0
    %2980 = vmatprep.subr.mxu0 0.0
    %2981 = vmatpush1.msra.mxu0 0.0
    %2982 = vmatprep.subr.mxu0 0.0
    %2983 = vmatpush1.msra.mxu0 0.0
    %2984 = vmatprep.subr.mxu0 0.0
    %2985 = vmatpush1.msra.mxu0 0.0
    %2986 = vmatprep.subr.mxu0 0.0
    %2987 = vmatpush1.msra.mxu0 0.0
    %2988 = vmatprep.subr.mxu0 0.0
    %2989 = vmatpush1.msra.mxu0 0.0
    %2990 = vmatprep.subr.mxu0 0.0
    %2991 = vmatpush1.msra.mxu0 0.0
    %2992 = vmatprep.subr.mxu0 0.0
    %2993 = vmatpush1.msra.mxu0 0.0
    %2994 = vmatprep.subr.mxu0 0.0
    %2995 = vmatpush1.msra.mxu0 0.0
    %2996 = vmatprep.subr.mxu0 0.0
    %2997 = vmatpush1.msra.mxu0 0.0
    %2998 = vmatprep.mubr.f32.mxu0 0.0
    %2999 = vmatmul.mubr.f32.gmra.mrb[0].mxu0 %v2846
    %v3000 = vpop.f32.mrb[0].mxu0
    %v3001 = vadd.f32 0.0, %v3000
    %v3002 = vpop.f32.mrb[0].mxu0
    %v3003 = vadd.f32 0.0, %v3002
    %3004 = vdwg.mxu0
    %3005 = vmatprep.subr.mxu0 0.0
    %3006 = vmatpush1.msra.mxu0 %v2824
    %3007 = vmatprep.subr.mxu0 0.0
    %3008 = vmatpush1.msra.mxu0 %v2829
    %3009 = vmatprep.subr.mxu0 0.0
    %3010 = vmatpush1.msra.mxu0 %v2834
    %3011 = vmatprep.subr.mxu0 0.0
    %3012 = vmatpush1.msra.mxu0 %v2839
    %3013 = vmatprep.subr.mxu0 0.0
    %3014 = vmatpush1.msra.mxu0 %v2861
    %3015 = vmatprep.subr.mxu0 0.0
    %3016 = vmatpush1.msra.mxu0 0.0
    %3017 = vmatprep.subr.mxu0 0.0
    %3018 = vmatpush1.msra.mxu0 0.0
    %3019 = vmatprep.subr.mxu0 0.0
    %3020 = vmatpush1.msra.mxu0 0.0
    %3021 = vmatprep.subr.mxu0 0.0
    %3022 = vmatpush1.msra.mxu0 0.0
    %3023 = vmatprep.subr.mxu0 0.0
    %3024 = vmatpush1.msra.mxu0 0.0
    %3025 = vmatprep.subr.mxu0 0.0
    %3026 = vmatpush1.msra.mxu0 0.0
    %3027 = vmatprep.subr.mxu0 0.0
    %3028 = vmatpush1.msra.mxu0 0.0
    %3029 = vmatprep.subr.mxu0 0.0
    %3030 = vmatpush1.msra.mxu0 0.0
    %3031 = vmatprep.subr.mxu0 0.0
    %3032 = vmatpush1.msra.mxu0 0.0
    %3033 = vmatprep.subr.mxu0 0.0
    %3034 = vmatpush1.msra.mxu0 0.0
    %3035 = vmatprep.subr.mxu0 0.0
    %3036 = vmatpush1.msra.mxu0 0.0
    %3037 = vmatprep.subr.mxu0 0.0
    %3038 = vmatpush1.msra.mxu0 0.0
    %3039 = vmatprep.subr.mxu0 0.0
    %3040 = vmatpush1.msra.mxu0 0.0
    %3041 = vmatprep.subr.mxu0 0.0
    %3042 = vmatpush1.msra.mxu0 0.0
    %3043 = vmatprep.subr.mxu0 0.0
    %3044 = vmatpush1.msra.mxu0 0.0
    %3045 = vmatprep.subr.mxu0 0.0
    %3046 = vmatpush1.msra.mxu0 0.0
    %3047 = vmatprep.subr.mxu0 0.0
    %3048 = vmatpush1.msra.mxu0 0.0
    %3049 = vmatprep.subr.mxu0 0.0
    %3050 = vmatpush1.msra.mxu0 0.0
    %3051 = vmatprep.subr.mxu0 0.0
    %3052 = vmatpush1.msra.mxu0 0.0
    %3053 = vmatprep.subr.mxu0 0.0
    %3054 = vmatpush1.msra.mxu0 0.0
    %3055 = vmatprep.subr.mxu0 0.0
    %3056 = vmatpush1.msra.mxu0 0.0
    %3057 = vmatprep.subr.mxu0 0.0
    %3058 = vmatpush1.msra.mxu0 0.0
    %3059 = vmatprep.subr.mxu0 0.0
    %3060 = vmatpush1.msra.mxu0 0.0
    %3061 = vmatprep.subr.mxu0 0.0
    %3062 = vmatpush1.msra.mxu0 0.0
    %3063 = vmatprep.subr.mxu0 0.0
    %3064 = vmatpush1.msra.mxu0 0.0
    %3065 = vmatprep.subr.mxu0 0.0
    %3066 = vmatpush1.msra.mxu0 0.0
    %3067 = vmatprep.subr.mxu0 0.0
    %3068 = vmatpush1.msra.mxu0 0.0
    %3069 = vmatprep.mubr.f32.mxu0 0.0
    %3070 = vmatmul.mubr.f32.gmra.mrb[0].mxu0 %v2846
    %v3071 = vpop.f32.mrb[0].mxu0
    %v3072 = vadd.f32 0.0, %v3071
    %v3073 = vpop.f32.mrb[0].mxu0
    %3074 = vdwg.mxu0
    %v3075 = vlaneseq
    %v3076 = vshrl.u32 %v3075, 7
    %v3077 = vsub.s32 4, %v3076
    %v3078 = vrot.slane %v62, %v3077
    %v3080 = vsel %vm374, %v3072, 0
    %3082 = vmatprep.subr.mxu0 0.0
    %3083 = vmatpush1.msra.mxu0 %v107
    %3084 = vmatprep.subr.mxu0 0.0
    %3085 = vmatpush1.msra.mxu0 %v108
    %3086 = vmatprep.subr.mxu0 0.0
    %3087 = vmatpush1.msra.mxu0 %v109
    %3088 = vmatprep.subr.mxu0 0.0
    %3089 = vmatpush1.msra.mxu0 %v110
    %3090 = vmatprep.subr.mxu0 0.0
    %3091 = vmatpush1.msra.mxu0 %v111
    %3092 = vmatprep.subr.mxu0 0.0
    %3093 = vmatpush1.msra.mxu0 %v112
    %3094 = vmatprep.subr.mxu0 0.0
    %3095 = vmatpush1.msra.mxu0 %v113
    %3096 = vmatprep.subr.mxu0 0.0
    %3097 = vmatpush1.msra.mxu0 %v114
    %3098 = vmatprep.subr.mxu0 0.0
    %3099 = vmatpush1.msra.mxu0 %v115
    %3100 = vmatprep.subr.mxu0 0.0
    %3101 = vmatpush1.msra.mxu0 %v116
    %3102 = vmatprep.subr.mxu0 0.0
    %3103 = vmatpush1.msra.mxu0 %v117
    %3104 = vmatprep.subr.mxu0 0.0
    %3105 = vmatpush1.msra.mxu0 %v118
    %3106 = vmatprep.subr.mxu0 0.0
    %3107 = vmatpush1.msra.mxu0 %v119
    %3108 = vmatprep.subr.mxu0 0.0
    %3109 = vmatpush1.msra.mxu0 %v120
    %3110 = vmatprep.subr.mxu0 0.0
    %3111 = vmatpush1.msra.mxu0 %v121
    %3112 = vmatprep.subr.mxu0 0.0
    %3113 = vmatpush1.msra.mxu0 %v122
    %3114 = vmatprep.subr.mxu0 0.0
    %3115 = vmatpush1.msra.mxu0 %v123
    %3116 = vmatprep.subr.mxu0 0.0
    %3117 = vmatpush1.msra.mxu0 %v124
    %3118 = vmatprep.subr.mxu0 0.0
    %3119 = vmatpush1.msra.mxu0 %v125
    %3120 = vmatprep.subr.mxu0 0.0
    %3121 = vmatpush1.msra.mxu0 %v126
    %3122 = vmatprep.subr.mxu0 0.0
    %3123 = vmatpush1.msra.mxu0 %v127
    %3124 = vmatprep.subr.mxu0 0.0
    %3125 = vmatpush1.msra.mxu0 %v128
    %3126 = vmatprep.subr.mxu0 0.0
    %3127 = vmatpush1.msra.mxu0 %v129
    %3128 = vmatprep.subr.mxu0 0.0
    %3129 = vmatpush1.msra.mxu0 %v130
    %3130 = vmatprep.subr.mxu0 0.0
    %3131 = vmatpush1.msra.mxu0 %v131
    %3132 = vmatprep.subr.mxu0 0.0
    %3133 = vmatpush1.msra.mxu0 %v132
    %3134 = vmatprep.subr.mxu0 0.0
    %3135 = vmatpush1.msra.mxu0 %v133
    %3136 = vmatprep.subr.mxu0 0.0
    %3137 = vmatpush1.msra.mxu0 %v134
    %3138 = vmatprep.subr.mxu0 0.0
    %3139 = vmatpush1.msra.mxu0 %v135
    %3140 = vmatprep.subr.mxu0 0.0
    %3141 = vmatpush1.msra.mxu0 %v136
    %3142 = vmatprep.subr.mxu0 0.0
    %3143 = vmatpush1.msra.mxu0 %v137
    %3144 = vmatprep.subr.mxu0 0.0
    %3145 = vmatpush1.msra.mxu0 %v138
    %3146 = vmatprep.mubr.f32.mxu0 %v2932
    %3147 = vmatmul.mubr.f32.gmra.mrb[0].mxu0 %v2930
    %v3148 = vpop.f32.mrb[0].mxu0
    %v3149 = vadd.f32 %v3078, %v3148
    %v3150 = vpop.f32.mrb[0].mxu0
    %3151 = vdwg.mxu0
    %3152 = vmatprep.subr.mxu0 0.0
    %3153 = vmatpush1.msra.mxu0 %v139
    %3154 = vmatprep.subr.mxu0 0.0
    %3155 = vmatpush1.msra.mxu0 %v140
    %3156 = vmatprep.subr.mxu0 0.0
    %3157 = vmatpush1.msra.mxu0 %v141
    %3158 = vmatprep.subr.mxu0 0.0
    %3159 = vmatpush1.msra.mxu0 %v142
    %3160 = vmatprep.subr.mxu0 0.0
    %3161 = vmatpush1.msra.mxu0 %v143
    %3162 = vmatprep.subr.mxu0 0.0
    %3163 = vmatpush1.msra.mxu0 %v144
    %3164 = vmatprep.subr.mxu0 0.0
    %3165 = vmatpush1.msra.mxu0 %v145
    %3166 = vmatprep.subr.mxu0 0.0
    %3167 = vmatpush1.msra.mxu0 %v146
    %3168 = vmatprep.subr.mxu0 0.0
    %3169 = vmatpush1.msra.mxu0 %v147
    %3170 = vmatprep.subr.mxu0 0.0
    %3171 = vmatpush1.msra.mxu0 %v148
    %3172 = vmatprep.subr.mxu0 0.0
    %3173 = vmatpush1.msra.mxu0 %v149
    %3174 = vmatprep.subr.mxu0 0.0
    %3175 = vmatpush1.msra.mxu0 %v150
    %3176 = vmatprep.subr.mxu0 0.0
    %3177 = vmatpush1.msra.mxu0 %v151
    %3178 = vmatprep.subr.mxu0 0.0
    %3179 = vmatpush1.msra.mxu0 %v152
    %3180 = vmatprep.subr.mxu0 0.0
    %3181 = vmatpush1.msra.mxu0 %v153
    %3182 = vmatprep.subr.mxu0 0.0
    %3183 = vmatpush1.msra.mxu0 %v154
    %3184 = vmatprep.subr.mxu0 0.0
    %3185 = vmatpush1.msra.mxu0 %v155
    %3186 = vmatprep.subr.mxu0 0.0
    %3187 = vmatpush1.msra.mxu0 %v156
    %3188 = vmatprep.subr.mxu0 0.0
    %3189 = vmatpush1.msra.mxu0 %v157
    %3190 = vmatprep.subr.mxu0 0.0
    %3191 = vmatpush1.msra.mxu0 %v158
    %3192 = vmatprep.subr.mxu0 0.0
    %3193 = vmatpush1.msra.mxu0 %v159
    %3194 = vmatprep.subr.mxu0 0.0
    %3195 = vmatpush1.msra.mxu0 %v160
    %3196 = vmatprep.subr.mxu0 0.0
    %3197 = vmatpush1.msra.mxu0 %v161
    %3198 = vmatprep.subr.mxu0 0.0
    %3199 = vmatpush1.msra.mxu0 %v162
    %3200 = vmatprep.subr.mxu0 0.0
    %3201 = vmatpush1.msra.mxu0 %v163
    %3202 = vmatprep.subr.mxu0 0.0
    %3203 = vmatpush1.msra.mxu0 %v164
    %3204 = vmatprep.subr.mxu0 0.0
    %3205 = vmatpush1.msra.mxu0 %v165
    %3206 = vmatprep.subr.mxu0 0.0
    %3207 = vmatpush1.msra.mxu0 %v166
    %3208 = vmatprep.subr.mxu0 0.0
    %3209 = vmatpush1.msra.mxu0 %v167
    %3210 = vmatprep.subr.mxu0 0.0
    %3211 = vmatpush1.msra.mxu0 %v168
    %3212 = vmatprep.subr.mxu0 0.0
    %3213 = vmatpush1.msra.mxu0 %v169
    %3214 = vmatprep.subr.mxu0 0.0
    %3215 = vmatpush1.msra.mxu0 %v170
    %3216 = vmatprep.mubr.f32.mxu0 %v3003
    %3217 = vmatmul.mubr.f32.gmra.mrb[0].mxu0 %v3001
    %v3218 = vpop.f32.mrb[0].mxu0
    %v3219 = vadd.f32 %v3149, %v3218
    %v3220 = vpop.f32.mrb[0].mxu0
    %3221 = vdwg.mxu0
    %3222 = vmatprep.subr.mxu0 0.0
    %3223 = vmatpush1.msra.mxu0 %v171
    %3224 = vmatprep.subr.mxu0 0.0
    %3225 = vmatpush1.msra.mxu0 %v172
    %3226 = vmatprep.subr.mxu0 0.0
    %3227 = vmatpush1.msra.mxu0 %v173
    %3228 = vmatprep.subr.mxu0 0.0
    %3229 = vmatpush1.msra.mxu0 %v174
    %3230 = vmatprep.subr.mxu0 0.0
    %3231 = vmatpush1.msra.mxu0 0.0
    %3232 = vmatprep.subr.mxu0 0.0
    %3233 = vmatpush1.msra.mxu0 0.0
    %3234 = vmatprep.subr.mxu0 0.0
    %3235 = vmatpush1.msra.mxu0 0.0
    %3236 = vmatprep.subr.mxu0 0.0
    %3237 = vmatpush1.msra.mxu0 0.0
    %3238 = vmatprep.subr.mxu0 0.0
    %3239 = vmatpush1.msra.mxu0 0.0
    %3240 = vmatprep.subr.mxu0 0.0
    %3241 = vmatpush1.msra.mxu0 0.0
    %3242 = vmatprep.subr.mxu0 0.0
    %3243 = vmatpush1.msra.mxu0 0.0
    %3244 = vmatprep.subr.mxu0 0.0
    %3245 = vmatpush1.msra.mxu0 0.0
    %3246 = vmatprep.subr.mxu0 0.0
    %3247 = vmatpush1.msra.mxu0 0.0
    %3248 = vmatprep.subr.mxu0 0.0
    %3249 = vmatpush1.msra.mxu0 0.0
    %3250 = vmatprep.subr.mxu0 0.0
    %3251 = vmatpush1.msra.mxu0 0.0
    %3252 = vmatprep.subr.mxu0 0.0
    %3253 = vmatpush1.msra.mxu0 0.0
    %3254 = vmatprep.subr.mxu0 0.0
    %3255 = vmatpush1.msra.mxu0 0.0
    %3256 = vmatprep.subr.mxu0 0.0
    %3257 = vmatpush1.msra.mxu0 0.0
    %3258 = vmatprep.subr.mxu0 0.0
    %3259 = vmatpush1.msra.mxu0 0.0
    %3260 = vmatprep.subr.mxu0 0.0
    %3261 = vmatpush1.msra.mxu0 0.0
    %3262 = vmatprep.subr.mxu0 0.0
    %3263 = vmatpush1.msra.mxu0 0.0
    %3264 = vmatprep.subr.mxu0 0.0
    %3265 = vmatpush1.msra.mxu0 0.0
    %3266 = vmatprep.subr.mxu0 0.0
    %3267 = vmatpush1.msra.mxu0 0.0
    %3268 = vmatprep.subr.mxu0 0.0
    %3269 = vmatpush1.msra.mxu0 0.0
    %3270 = vmatprep.subr.mxu0 0.0
    %3271 = vmatpush1.msra.mxu0 0.0
    %3272 = vmatprep.subr.mxu0 0.0
    %3273 = vmatpush1.msra.mxu0 0.0
    %3274 = vmatprep.subr.mxu0 0.0
    %3275 = vmatpush1.msra.mxu0 0.0
    %3276 = vmatprep.subr.mxu0 0.0
    %3277 = vmatpush1.msra.mxu0 0.0
    %3278 = vmatprep.subr.mxu0 0.0
    %3279 = vmatpush1.msra.mxu0 0.0
    %3280 = vmatprep.subr.mxu0 0.0
    %3281 = vmatpush1.msra.mxu0 0.0
    %3282 = vmatprep.subr.mxu0 0.0
    %3283 = vmatpush1.msra.mxu0 0.0
    %3284 = vmatprep.subr.mxu0 0.0
    %3285 = vmatpush1.msra.mxu0 0.0
    %3286 = vmatprep.mubr.f32.mxu0 0.0
    %3287 = vmatmul.mubr.f32.gmra.mrb[0].mxu0 %v3080
    %v3288 = vpop.f32.mrb[0].mxu0
    %v3289 = vadd.f32 %v3219, %v3288
    %v3290 = vpop.f32.mrb[0].mxu0
    %3291 = vdwg.mxu0
    %v3292 = vmul.f32 %v3289, 0.5
    %v3293 = vmul.f32 %v3292, 1.442695
    %v3294 = vpow.pop %v3293
    %v3295 = vld [vmem:[%s2] sm:$0x3]
    %3297 = vrot.lane.b32.xlu0 %v3294, 112
    %v3298 = vpop.permute.xlu0 %3297
    %v3300 = vmul.f32 %v3295, %v3298
    %v3301 = vadd.f32 %v3300, %v3289
    %3303 = vrot.lane.b32.xlu0 %v3301, 32
    %v3304 = vpop.permute.xlu0 %3303
    %v3306 = vsel %vm374, %v3289, %v3304
    %vm3307 = vcmask 386048
    %3308 = vst.msk [vmem:[#allocation2] sm:$0x3] %vm3307, %v3306
    %v3309 = vld [vmem:[%s14] sm:$0xff]
    %v3310 = vld [vmem:[%s14 + $0x8] sm:$0xff]
    %v3311 = vld [vmem:[%s14 + $0x10] sm:$0xff]
    %v3312 = vld [vmem:[%s14 + $0x18] sm:$0xff]
    %v3313 = vld [vmem:[%s14 + $0x20] sm:$0x3]
    %v3315 = vsel %vm185, %v3309, 0
    %v3318 = vsel %vm185, %v3310, 0
    %v3321 = vsel %vm185, %v3311, 0
    %v3324 = vsel %vm185, %v3312, 0
    %v3327 = vsel %vm185, %v3313, 0
    %v3329 = vsel %vm201, %v3301, 0
    %3331 = vmatprep.subr.mxu0 0.0
    %3332 = vmatpush1.msra.mxu0 %v3329
    %3333 = vmatprep.subr.mxu0 0.0
    %3334 = vmatpush1.msra.mxu0 0.0
    %3335 = vmatprep.subr.mxu0 0.0
    %3336 = vmatpush1.msra.mxu0 0.0
    %3337 = vmatprep.subr.mxu0 0.0
    %3338 = vmatpush1.msra.mxu0 0.0
    %3339 = vmatprep.subr.mxu0 0.0
    %3340 = vmatpush1.msra.mxu0 0.0
    %3341 = vmatprep.subr.mxu0 0.0
    %3342 = vmatpush1.msra.mxu0 0.0
    %3343 = vmatprep.subr.mxu0 0.0
    %3344 = vmatpush1.msra.mxu0 0.0
    %3345 = vmatprep.subr.mxu0 0.0
    %3346 = vmatpush1.msra.mxu0 0.0
    %3347 = vmatprep.subr.mxu0 0.0
    %3348 = vmatpush1.msra.mxu0 0.0
    %3349 = vmatprep.subr.mxu0 0.0
    %3350 = vmatpush1.msra.mxu0 0.0
    %3351 = vmatprep.subr.mxu0 0.0
    %3352 = vmatpush1.msra.mxu0 0.0
    %3353 = vmatprep.subr.mxu0 0.0
    %3354 = vmatpush1.msra.mxu0 0.0
    %3355 = vmatprep.subr.mxu0 0.0
    %3356 = vmatpush1.msra.mxu0 0.0
    %3357 = vmatprep.subr.mxu0 0.0
    %3358 = vmatpush1.msra.mxu0 0.0
    %3359 = vmatprep.subr.mxu0 0.0
    %3360 = vmatpush1.msra.mxu0 0.0
    %3361 = vmatprep.subr.mxu0 0.0
    %3362 = vmatpush1.msra.mxu0 0.0
    %3363 = vmatprep.subr.mxu0 0.0
    %3364 = vmatpush1.msra.mxu0 0.0
    %3365 = vmatprep.subr.mxu0 0.0
    %3366 = vmatpush1.msra.mxu0 0.0
    %3367 = vmatprep.subr.mxu0 0.0
    %3368 = vmatpush1.msra.mxu0 0.0
    %3369 = vmatprep.subr.mxu0 0.0
    %3370 = vmatpush1.msra.mxu0 0.0
    %3371 = vmatprep.subr.mxu0 0.0
    %3372 = vmatpush1.msra.mxu0 0.0
    %3373 = vmatprep.subr.mxu0 0.0
    %3374 = vmatpush1.msra.mxu0 0.0
    %3375 = vmatprep.subr.mxu0 0.0
    %3376 = vmatpush1.msra.mxu0 0.0
    %3377 = vmatprep.subr.mxu0 0.0
    %3378 = vmatpush1.msra.mxu0 0.0
    %3379 = vmatprep.subr.mxu0 0.0
    %3380 = vmatpush1.msra.mxu0 0.0
    %3381 = vmatprep.subr.mxu0 0.0
    %3382 = vmatpush1.msra.mxu0 0.0
    %3383 = vmatprep.subr.mxu0 0.0
    %3384 = vmatpush1.msra.mxu0 0.0
    %3385 = vmatprep.subr.mxu0 0.0
    %3386 = vmatpush1.msra.mxu0 0.0
    %3387 = vmatprep.subr.mxu0 0.0
    %3388 = vmatpush1.msra.mxu0 0.0
    %3389 = vmatprep.subr.mxu0 0.0
    %3390 = vmatpush1.msra.mxu0 0.0
    %3391 = vmatprep.subr.mxu0 0.0
    %3392 = vmatpush1.msra.mxu0 0.0
    %3393 = vmatprep.subr.mxu0 0.0
    %3394 = vmatpush1.msra.mxu0 0.0
    %3395 = vmatprep.mubr.f32.mxu0 0.0
    %3396 = vmatmul.mubr.f32.gmra.mrb[0].mxu0 %v3315
    %v3397 = vpop.f32.mrb[0].mxu0
    %v3398 = vadd.f32 0.0, %v3397
    %v3399 = vpop.f32.mrb[0].mxu0
    %3400 = vmatprep.mubr.f32.mxu0 0.0
    %3401 = vmatmul.mubr.f32.gmra.mrb[0].mxu0 %v3318
    %v3402 = vpop.f32.mrb[0].mxu0
    %v3403 = vadd.f32 0.0, %v3402
    %v3404 = vpop.f32.mrb[0].mxu0
    %3405 = vmatprep.mubr.f32.mxu0 0.0
    %3406 = vmatmul.mubr.f32.gmra.mrb[0].mxu0 %v3321
    %v3407 = vpop.f32.mrb[0].mxu0
    %v3408 = vadd.f32 0.0, %v3407
    %v3409 = vpop.f32.mrb[0].mxu0
    %3410 = vmatprep.mubr.f32.mxu0 0.0
    %3411 = vmatmul.mubr.f32.gmra.mrb[0].mxu0 %v3324
    %v3412 = vpop.f32.mrb[0].mxu0
    %v3413 = vadd.f32 0.0, %v3412
    %v3414 = vpop.f32.mrb[0].mxu0
    %3415 = vmatprep.mubr.f32.mxu0 0.0
    %3416 = vmatmul.mubr.f32.gmra.mrb[0].mxu0 %v3327
    %v3417 = vpop.f32.mrb[0].mxu0
    %v3418 = vadd.f32 0.0, %v3417
    %v3419 = vpop.f32.mrb[0].mxu0
    %3420 = vdwg.mxu0
    %v3421 = vld [vmem:[%s11] sm:$0xff]
    %v3422 = vld [vmem:[%s11 + $0x8] sm:$0xff]
    %v3423 = vld [vmem:[%s11 + $0x10] sm:$0xff]
    %v3424 = vld [vmem:[%s11 + $0x18] sm:$0xff]
    %v3425 = vld [vmem:[%s11 + $0x20] sm:$0xff]
    %v3426 = vld [vmem:[%s11 + $0x28] sm:$0xff]
    %v3427 = vld [vmem:[%s11 + $0x30] sm:$0xff]
    %v3428 = vld [vmem:[%s11 + $0x38] sm:$0xff]
    %v3429 = vld [vmem:[%s11 + $0x40] sm:$0xff]
    %v3430 = vld [vmem:[%s11 + $0x48] sm:$0xff]
    %vm3431 = vcmask 130048
    %v3433 = vsel %vm3431, %v3398, 0
    %v3436 = vsel %vm3431, %v3403, 0
    %v3439 = vsel %vm3431, %v3408, 0
    %v3442 = vsel %vm3431, %v3413, 0
    %v3445 = vsel %vm3431, %v3418, 0
    %3447 = vmatprep.subr.mxu0 %v3422
    %3448 = vmatpush1.msra.mxu0 %v3421
    %3449 = vmatprep.subr.mxu0 %v3427
    %3450 = vmatpush1.msra.mxu0 %v3426
    %3451 = vmatprep.subr.mxu0 0.0
    %3452 = vmatpush1.msra.mxu0 0.0
    %3453 = vmatprep.subr.mxu0 0.0
    %3454 = vmatpush1.msra.mxu0 0.0
    %3455 = vmatprep.subr.mxu0 0.0
    %3456 = vmatpush1.msra.mxu0 0.0
    %3457 = vmatprep.subr.mxu0 0.0
    %3458 = vmatpush1.msra.mxu0 0.0
    %3459 = vmatprep.subr.mxu0 0.0
    %3460 = vmatpush1.msra.mxu0 0.0
    %3461 = vmatprep.subr.mxu0 0.0
    %3462 = vmatpush1.msra.mxu0 0.0
    %3463 = vmatprep.subr.mxu0 0.0
    %3464 = vmatpush1.msra.mxu0 0.0
    %3465 = vmatprep.subr.mxu0 0.0
    %3466 = vmatpush1.msra.mxu0 0.0
    %3467 = vmatprep.subr.mxu0 0.0
    %3468 = vmatpush1.msra.mxu0 0.0
    %3469 = vmatprep.subr.mxu0 0.0
    %3470 = vmatpush1.msra.mxu0 0.0
    %3471 = vmatprep.subr.mxu0 0.0
    %3472 = vmatpush1.msra.mxu0 0.0
    %3473 = vmatprep.subr.mxu0 0.0
    %3474 = vmatpush1.msra.mxu0 0.0
    %3475 = vmatprep.subr.mxu0 0.0
    %3476 = vmatpush1.msra.mxu0 0.0
    %3477 = vmatprep.subr.mxu0 0.0
    %3478 = vmatpush1.msra.mxu0 0.0
    %3479 = vmatprep.subr.mxu0 0.0
    %3480 = vmatpush1.msra.mxu0 0.0
    %3481 = vmatprep.subr.mxu0 0.0
    %3482 = vmatpush1.msra.mxu0 0.0
    %3483 = vmatprep.subr.mxu0 0.0
    %3484 = vmatpush1.msra.mxu0 0.0
    %3485 = vmatprep.subr.mxu0 0.0
    %3486 = vmatpush1.msra.mxu0 0.0
    %3487 = vmatprep.subr.mxu0 0.0
    %3488 = vmatpush1.msra.mxu0 0.0
    %3489 = vmatprep.subr.mxu0 0.0
    %3490 = vmatpush1.msra.mxu0 0.0
    %3491 = vmatprep.subr.mxu0 0.0
    %3492 = vmatpush1.msra.mxu0 0.0
    %3493 = vmatprep.subr.mxu0 0.0
    %3494 = vmatpush1.msra.mxu0 0.0
    %3495 = vmatprep.subr.mxu0 0.0
    %3496 = vmatpush1.msra.mxu0 0.0
    %3497 = vmatprep.subr.mxu0 0.0
    %3498 = vmatpush1.msra.mxu0 0.0
    %3499 = vmatprep.subr.mxu0 0.0
    %3500 = vmatpush1.msra.mxu0 0.0
    %3501 = vmatprep.subr.mxu0 0.0
    %3502 = vmatpush1.msra.mxu0 0.0
    %3503 = vmatprep.subr.mxu0 0.0
    %3504 = vmatpush1.msra.mxu0 0.0
    %3505 = vmatprep.subr.mxu0 0.0
    %3506 = vmatpush1.msra.mxu0 0.0
    %3507 = vmatprep.subr.mxu0 0.0
    %3508 = vmatpush1.msra.mxu0 0.0
    %3509 = vmatprep.subr.mxu0 0.0
    %3510 = vmatpush1.msra.mxu0 0.0
    %3511 = vmatprep.mubr.f32.mxu0 0.0
    %3512 = vmatmul.mubr.f32.gmra.mrb[0].mxu0 %v3433
    %v3513 = vpop.f32.mrb[0].mxu0
    %v3514 = vadd.f32 0.0, %v3513
    %v3515 = vpop.f32.mrb[0].mxu0
    %v3516 = vadd.f32 0.0, %v3515
    %3517 = vmatprep.mubr.f32.mxu0 0.0
    %3518 = vmatmul.mubr.f32.gmra.mrb[0].mxu0 %v3436
    %v3519 = vpop.f32.mrb[0].mxu0
    %v3520 = vadd.f32 0.0, %v3519
    %v3521 = vpop.f32.mrb[0].mxu0
    %v3522 = vadd.f32 0.0, %v3521
    %3523 = vmatprep.mubr.f32.mxu0 0.0
    %3524 = vmatmul.mubr.f32.gmra.mrb[0].mxu0 %v3439
    %v3525 = vpop.f32.mrb[0].mxu0
    %v3526 = vadd.f32 0.0, %v3525
    %v3527 = vpop.f32.mrb[0].mxu0
    %v3528 = vadd.f32 0.0, %v3527
    %3529 = vmatprep.mubr.f32.mxu0 0.0
    %3530 = vmatmul.mubr.f32.gmra.mrb[0].mxu0 %v3442
    %v3531 = vpop.f32.mrb[0].mxu0
    %v3532 = vadd.f32 0.0, %v3531
    %v3533 = vpop.f32.mrb[0].mxu0
    %v3534 = vadd.f32 0.0, %v3533
    %3535 = vmatprep.mubr.f32.mxu0 0.0
    %3536 = vmatmul.mubr.f32.gmra.mrb[0].mxu0 %v3445
    %v3537 = vpop.f32.mrb[0].mxu0
    %v3538 = vadd.f32 0.0, %v3537
    %v3539 = vpop.f32.mrb[0].mxu0
    %v3540 = vadd.f32 0.0, %v3539
    %3541 = vdwg.mxu0
    %3542 = vmatprep.subr.mxu0 %v3424
    %3543 = vmatpush1.msra.mxu0 %v3423
    %3544 = vmatprep.subr.mxu0 %v3429
    %3545 = vmatpush1.msra.mxu0 %v3428
    %3546 = vmatprep.subr.mxu0 0.0
    %3547 = vmatpush1.msra.mxu0 0.0
    %3548 = vmatprep.subr.mxu0 0.0
    %3549 = vmatpush1.msra.mxu0 0.0
    %3550 = vmatprep.subr.mxu0 0.0
    %3551 = vmatpush1.msra.mxu0 0.0
    %3552 = vmatprep.subr.mxu0 0.0
    %3553 = vmatpush1.msra.mxu0 0.0
    %3554 = vmatprep.subr.mxu0 0.0
    %3555 = vmatpush1.msra.mxu0 0.0
    %3556 = vmatprep.subr.mxu0 0.0
    %3557 = vmatpush1.msra.mxu0 0.0
    %3558 = vmatprep.subr.mxu0 0.0
    %3559 = vmatpush1.msra.mxu0 0.0
    %3560 = vmatprep.subr.mxu0 0.0
    %3561 = vmatpush1.msra.mxu0 0.0
    %3562 = vmatprep.subr.mxu0 0.0
    %3563 = vmatpush1.msra.mxu0 0.0
    %3564 = vmatprep.subr.mxu0 0.0
    %3565 = vmatpush1.msra.mxu0 0.0
    %3566 = vmatprep.subr.mxu0 0.0
    %3567 = vmatpush1.msra.mxu0 0.0
    %3568 = vmatprep.subr.mxu0 0.0
    %3569 = vmatpush1.msra.mxu0 0.0
    %3570 = vmatprep.subr.mxu0 0.0
    %3571 = vmatpush1.msra.mxu0 0.0
    %3572 = vmatprep.subr.mxu0 0.0
    %3573 = vmatpush1.msra.mxu0 0.0
    %3574 = vmatprep.subr.mxu0 0.0
    %3575 = vmatpush1.msra.mxu0 0.0
    %3576 = vmatprep.subr.mxu0 0.0
    %3577 = vmatpush1.msra.mxu0 0.0
    %3578 = vmatprep.subr.mxu0 0.0
    %3579 = vmatpush1.msra.mxu0 0.0
    %3580 = vmatprep.subr.mxu0 0.0
    %3581 = vmatpush1.msra.mxu0 0.0
    %3582 = vmatprep.subr.mxu0 0.0
    %3583 = vmatpush1.msra.mxu0 0.0
    %3584 = vmatprep.subr.mxu0 0.0
    %3585 = vmatpush1.msra.mxu0 0.0
    %3586 = vmatprep.subr.mxu0 0.0
    %3587 = vmatpush1.msra.mxu0 0.0
    %3588 = vmatprep.subr.mxu0 0.0
    %3589 = vmatpush1.msra.mxu0 0.0
    %3590 = vmatprep.subr.mxu0 0.0
    %3591 = vmatpush1.msra.mxu0 0.0
    %3592 = vmatprep.subr.mxu0 0.0
    %3593 = vmatpush1.msra.mxu0 0.0
    %3594 = vmatprep.subr.mxu0 0.0
    %3595 = vmatpush1.msra.mxu0 0.0
    %3596 = vmatprep.subr.mxu0 0.0
    %3597 = vmatpush1.msra.mxu0 0.0
    %3598 = vmatprep.subr.mxu0 0.0
    %3599 = vmatpush1.msra.mxu0 0.0
    %3600 = vmatprep.subr.mxu0 0.0
    %3601 = vmatpush1.msra.mxu0 0.0
    %3602 = vmatprep.subr.mxu0 0.0
    %3603 = vmatpush1.msra.mxu0 0.0
    %3604 = vmatprep.subr.mxu0 0.0
    %3605 = vmatpush1.msra.mxu0 0.0
    %3606 = vmatprep.mubr.f32.mxu0 0.0
    %3607 = vmatmul.mubr.f32.gmra.mrb[0].mxu0 %v3433
    %v3608 = vpop.f32.mrb[0].mxu0
    %v3609 = vadd.f32 0.0, %v3608
    %v3610 = vpop.f32.mrb[0].mxu0
    %v3611 = vadd.f32 0.0, %v3610
    %3612 = vmatprep.mubr.f32.mxu0 0.0
    %3613 = vmatmul.mubr.f32.gmra.mrb[0].mxu0 %v3436
    %v3614 = vpop.f32.mrb[0].mxu0
    %v3615 = vadd.f32 0.0, %v3614
    %v3616 = vpop.f32.mrb[0].mxu0
    %v3617 = vadd.f32 0.0, %v3616
    %3618 = vmatprep.mubr.f32.mxu0 0.0
    %3619 = vmatmul.mubr.f32.gmra.mrb[0].mxu0 %v3439
    %v3620 = vpop.f32.mrb[0].mxu0
    %v3621 = vadd.f32 0.0, %v3620
    %v3622 = vpop.f32.mrb[0].mxu0
    %v3623 = vadd.f32 0.0, %v3622
    %3624 = vmatprep.mubr.f32.mxu0 0.0
    %3625 = vmatmul.mubr.f32.gmra.mrb[0].mxu0 %v3442
    %v3626 = vpop.f32.mrb[0].mxu0
    %v3627 = vadd.f32 0.0, %v3626
    %v3628 = vpop.f32.mrb[0].mxu0
    %v3629 = vadd.f32 0.0, %v3628
    %3630 = vmatprep.mubr.f32.mxu0 0.0
    %3631 = vmatmul.mubr.f32.gmra.mrb[0].mxu0 %v3445
    %v3632 = vpop.f32.mrb[0].mxu0
    %v3633 = vadd.f32 0.0, %v3632
    %v3634 = vpop.f32.mrb[0].mxu0
    %v3635 = vadd.f32 0.0, %v3634
    %3636 = vdwg.mxu0
    %3637 = vmatprep.subr.mxu0 0.0
    %3638 = vmatpush1.msra.mxu0 %v3425
    %3639 = vmatprep.subr.mxu0 0.0
    %3640 = vmatpush1.msra.mxu0 %v3430
    %3641 = vmatprep.subr.mxu0 0.0
    %3642 = vmatpush1.msra.mxu0 0.0
    %3643 = vmatprep.subr.mxu0 0.0
    %3644 = vmatpush1.msra.mxu0 0.0
    %3645 = vmatprep.subr.mxu0 0.0
    %3646 = vmatpush1.msra.mxu0 0.0
    %3647 = vmatprep.subr.mxu0 0.0
    %3648 = vmatpush1.msra.mxu0 0.0
    %3649 = vmatprep.subr.mxu0 0.0
    %3650 = vmatpush1.msra.mxu0 0.0
    %3651 = vmatprep.subr.mxu0 0.0
    %3652 = vmatpush1.msra.mxu0 0.0
    %3653 = vmatprep.subr.mxu0 0.0
    %3654 = vmatpush1.msra.mxu0 0.0
    %3655 = vmatprep.subr.mxu0 0.0
    %3656 = vmatpush1.msra.mxu0 0.0
    %3657 = vmatprep.subr.mxu0 0.0
    %3658 = vmatpush1.msra.mxu0 0.0
    %3659 = vmatprep.subr.mxu0 0.0
    %3660 = vmatpush1.msra.mxu0 0.0
    %3661 = vmatprep.subr.mxu0 0.0
    %3662 = vmatpush1.msra.mxu0 0.0
    %3663 = vmatprep.subr.mxu0 0.0
    %3664 = vmatpush1.msra.mxu0 0.0
    %3665 = vmatprep.subr.mxu0 0.0
    %3666 = vmatpush1.msra.mxu0 0.0
    %3667 = vmatprep.subr.mxu0 0.0
    %3668 = vmatpush1.msra.mxu0 0.0
    %3669 = vmatprep.subr.mxu0 0.0
    %3670 = vmatpush1.msra.mxu0 0.0
    %3671 = vmatprep.subr.mxu0 0.0
    %3672 = vmatpush1.msra.mxu0 0.0
    %3673 = vmatprep.subr.mxu0 0.0
    %3674 = vmatpush1.msra.mxu0 0.0
    %3675 = vmatprep.subr.mxu0 0.0
    %3676 = vmatpush1.msra.mxu0 0.0
    %3677 = vmatprep.subr.mxu0 0.0
    %3678 = vmatpush1.msra.mxu0 0.0
    %3679 = vmatprep.subr.mxu0 0.0
    %3680 = vmatpush1.msra.mxu0 0.0
    %3681 = vmatprep.subr.mxu0 0.0
    %3682 = vmatpush1.msra.mxu0 0.0
    %3683 = vmatprep.subr.mxu0 0.0
    %3684 = vmatpush1.msra.mxu0 0.0
    %3685 = vmatprep.subr.mxu0 0.0
    %3686 = vmatpush1.msra.mxu0 0.0
    %3687 = vmatprep.subr.mxu0 0.0
    %3688 = vmatpush1.msra.mxu0 0.0
    %3689 = vmatprep.subr.mxu0 0.0
    %3690 = vmatpush1.msra.mxu0 0.0
    %3691 = vmatprep.subr.mxu0 0.0
    %3692 = vmatpush1.msra.mxu0 0.0
    %3693 = vmatprep.subr.mxu0 0.0
    %3694 = vmatpush1.msra.mxu0 0.0
    %3695 = vmatprep.subr.mxu0 0.0
    %3696 = vmatpush1.msra.mxu0 0.0
    %3697 = vmatprep.subr.mxu0 0.0
    %3698 = vmatpush1.msra.mxu0 0.0
    %3699 = vmatprep.subr.mxu0 0.0
    %3700 = vmatpush1.msra.mxu0 0.0
    %3701 = vmatprep.mubr.f32.mxu0 0.0
    %3702 = vmatmul.mubr.f32.gmra.mrb[0].mxu0 %v3433
    %v3703 = vpop.f32.mrb[0].mxu0
    %v3704 = vadd.f32 0.0, %v3703
    %v3705 = vpop.f32.mrb[0].mxu0
    %3706 = vmatprep.mubr.f32.mxu0 0.0
    %3707 = vmatmul.mubr.f32.gmra.mrb[0].mxu0 %v3436
    %v3708 = vpop.f32.mrb[0].mxu0
    %v3709 = vadd.f32 0.0, %v3708
    %v3710 = vpop.f32.mrb[0].mxu0
    %3711 = vmatprep.mubr.f32.mxu0 0.0
    %3712 = vmatmul.mubr.f32.gmra.mrb[0].mxu0 %v3439
    %v3713 = vpop.f32.mrb[0].mxu0
    %v3714 = vadd.f32 0.0, %v3713
    %v3715 = vpop.f32.mrb[0].mxu0
    %3716 = vmatprep.mubr.f32.mxu0 0.0
    %3717 = vmatmul.mubr.f32.gmra.mrb[0].mxu0 %v3442
    %v3718 = vpop.f32.mrb[0].mxu0
    %v3719 = vadd.f32 0.0, %v3718
    %v3720 = vpop.f32.mrb[0].mxu0
    %3721 = vmatprep.mubr.f32.mxu0 0.0
    %3722 = vmatmul.mubr.f32.gmra.mrb[0].mxu0 %v3445
    %v3723 = vpop.f32.mrb[0].mxu0
    %v3724 = vadd.f32 0.0, %v3723
    %v3725 = vpop.f32.mrb[0].mxu0
    %3726 = vdwg.mxu0
    %v3727 = vmul.f32 %v3514, %v82
    %v3728 = vmul.f32 %v3516, %v83
    %v3729 = vmul.f32 %v3609, %v84
    %v3730 = vmul.f32 %v3611, %v85
    %v3731 = vmul.f32 %v3704, %v86
    %v3732 = vmul.f32 %v3520, %v87
    %v3733 = vmul.f32 %v3522, %v88
    %v3734 = vmul.f32 %v3615, %v89
    %v3735 = vmul.f32 %v3617, %v90
    %v3736 = vmul.f32 %v3709, %v91
    %v3737 = vmul.f32 %v3526, %v92
    %v3738 = vmul.f32 %v3528, %v93
    %v3739 = vmul.f32 %v3621, %v94
    %v3740 = vmul.f32 %v3623, %v95
    %v3741 = vmul.f32 %v3714, %v96
    %v3742 = vmul.f32 %v3532, %v97
    %v3743 = vmul.f32 %v3534, %v98
    %v3744 = vmul.f32 %v3627, %v99
    %v3745 = vmul.f32 %v3629, %v100
    %v3746 = vmul.f32 %v3719, %v101
    %v3747 = vmul.f32 %v3538, %v102
    %v3748 = vmul.f32 %v3540, %v103
    %v3749 = vmul.f32 %v3633, %v104
    %v3750 = vmul.f32 %v3635, %v105
    %v3751 = vmul.f32 %v3724, %v106
    %v3752 = vld [vmem:[%s12] sm:$0xff]
    %v3753 = vld [vmem:[%s12 + $0x8] sm:$0xff]
    %v3754 = vld [vmem:[%s12 + $0x10] sm:$0xff]
    %v3755 = vld [vmem:[%s12 + $0x18] sm:$0xff]
    %v3756 = vld [vmem:[%s12 + $0x20] sm:$0x3]
    %v3758 = vsel %vm374, %v3731, 0
    %v3761 = vsel %vm374, %v3736, 0
    %v3764 = vsel %vm374, %v3741, 0
    %v3767 = vsel %vm374, %v3746, 0
    %v3770 = vsel %vm374, %v3751, 0
    %3772 = vmatprep.subr.mxu0 0.0
    %3773 = vmatpush1.msra.mxu0 %v107
    %3774 = vmatprep.subr.mxu0 0.0
    %3775 = vmatpush1.msra.mxu0 %v108
    %3776 = vmatprep.subr.mxu0 0.0
    %3777 = vmatpush1.msra.mxu0 %v109
    %3778 = vmatprep.subr.mxu0 0.0
    %3779 = vmatpush1.msra.mxu0 %v110
    %3780 = vmatprep.subr.mxu0 0.0
    %3781 = vmatpush1.msra.mxu0 %v111
    %3782 = vmatprep.subr.mxu0 0.0
    %3783 = vmatpush1.msra.mxu0 %v112
    %3784 = vmatprep.subr.mxu0 0.0
    %3785 = vmatpush1.msra.mxu0 %v113
    %3786 = vmatprep.subr.mxu0 0.0
    %3787 = vmatpush1.msra.mxu0 %v114
    %3788 = vmatprep.subr.mxu0 0.0
    %3789 = vmatpush1.msra.mxu0 %v115
    %3790 = vmatprep.subr.mxu0 0.0
    %3791 = vmatpush1.msra.mxu0 %v116
    %3792 = vmatprep.subr.mxu0 0.0
    %3793 = vmatpush1.msra.mxu0 %v117
    %3794 = vmatprep.subr.mxu0 0.0
    %3795 = vmatpush1.msra.mxu0 %v118
    %3796 = vmatprep.subr.mxu0 0.0
    %3797 = vmatpush1.msra.mxu0 %v119
    %3798 = vmatprep.subr.mxu0 0.0
    %3799 = vmatpush1.msra.mxu0 %v120
    %3800 = vmatprep.subr.mxu0 0.0
    %3801 = vmatpush1.msra.mxu0 %v121
    %3802 = vmatprep.subr.mxu0 0.0
    %3803 = vmatpush1.msra.mxu0 %v122
    %3804 = vmatprep.subr.mxu0 0.0
    %3805 = vmatpush1.msra.mxu0 %v123
    %3806 = vmatprep.subr.mxu0 0.0
    %3807 = vmatpush1.msra.mxu0 %v124
    %3808 = vmatprep.subr.mxu0 0.0
    %3809 = vmatpush1.msra.mxu0 %v125
    %3810 = vmatprep.subr.mxu0 0.0
    %3811 = vmatpush1.msra.mxu0 %v126
    %3812 = vmatprep.subr.mxu0 0.0
    %3813 = vmatpush1.msra.mxu0 %v127
    %3814 = vmatprep.subr.mxu0 0.0
    %3815 = vmatpush1.msra.mxu0 %v128
    %3816 = vmatprep.subr.mxu0 0.0
    %3817 = vmatpush1.msra.mxu0 %v129
    %3818 = vmatprep.subr.mxu0 0.0
    %3819 = vmatpush1.msra.mxu0 %v130
    %3820 = vmatprep.subr.mxu0 0.0
    %3821 = vmatpush1.msra.mxu0 %v131
    %3822 = vmatprep.subr.mxu0 0.0
    %3823 = vmatpush1.msra.mxu0 %v132
    %3824 = vmatprep.subr.mxu0 0.0
    %3825 = vmatpush1.msra.mxu0 %v133
    %3826 = vmatprep.subr.mxu0 0.0
    %3827 = vmatpush1.msra.mxu0 %v134
    %3828 = vmatprep.subr.mxu0 0.0
    %3829 = vmatpush1.msra.mxu0 %v135
    %3830 = vmatprep.subr.mxu0 0.0
    %3831 = vmatpush1.msra.mxu0 %v136
    %3832 = vmatprep.subr.mxu0 0.0
    %3833 = vmatpush1.msra.mxu0 %v137
    %3834 = vmatprep.subr.mxu0 0.0
    %3835 = vmatpush1.msra.mxu0 %v138
    %3836 = vmatprep.mubr.f32.mxu0 %v3728
    %3837 = vmatmul.mubr.f32.gmra.mrb[0].mxu0 %v3727
    %v3838 = vpop.f32.mrb[0].mxu0
    %v3839 = vadd.f32 %v3752, %v3838
    %v3840 = vpop.f32.mrb[0].mxu0
    %3841 = vmatprep.mubr.f32.mxu0 %v3733
    %3842 = vmatmul.mubr.f32.gmra.mrb[0].mxu0 %v3732
    %v3843 = vpop.f32.mrb[0].mxu0
    %v3844 = vadd.f32 %v3753, %v3843
    %v3845 = vpop.f32.mrb[0].mxu0
    %3846 = vmatprep.mubr.f32.mxu0 %v3738
    %3847 = vmatmul.mubr.f32.gmra.mrb[0].mxu0 %v3737
    %v3848 = vpop.f32.mrb[0].mxu0
    %v3849 = vadd.f32 %v3754, %v3848
    %v3850 = vpop.f32.mrb[0].mxu0
    %3851 = vmatprep.mubr.f32.mxu0 %v3743
    %3852 = vmatmul.mubr.f32.gmra.mrb[0].mxu0 %v3742
    %v3853 = vpop.f32.mrb[0].mxu0
    %v3854 = vadd.f32 %v3755, %v3853
    %v3855 = vpop.f32.mrb[0].mxu0
    %3856 = vmatprep.mubr.f32.mxu0 %v3748
    %3857 = vmatmul.mubr.f32.gmra.mrb[0].mxu0 %v3747
    %v3858 = vpop.f32.mrb[0].mxu0
    %v3859 = vadd.f32 %v3756, %v3858
    %v3860 = vpop.f32.mrb[0].mxu0
    %3861 = vdwg.mxu0
    %3862 = vmatprep.subr.mxu0 0.0
    %3863 = vmatpush1.msra.mxu0 %v139
    %3864 = vmatprep.subr.mxu0 0.0
    %3865 = vmatpush1.msra.mxu0 %v140
    %3866 = vmatprep.subr.mxu0 0.0
    %3867 = vmatpush1.msra.mxu0 %v141
    %3868 = vmatprep.subr.mxu0 0.0
    %3869 = vmatpush1.msra.mxu0 %v142
    %3870 = vmatprep.subr.mxu0 0.0
    %3871 = vmatpush1.msra.mxu0 %v143
    %3872 = vmatprep.subr.mxu0 0.0
    %3873 = vmatpush1.msra.mxu0 %v144
    %3874 = vmatprep.subr.mxu0 0.0
    %3875 = vmatpush1.msra.mxu0 %v145
    %3876 = vmatprep.subr.mxu0 0.0
    %3877 = vmatpush1.msra.mxu0 %v146
    %3878 = vmatprep.subr.mxu0 0.0
    %3879 = vmatpush1.msra.mxu0 %v147
    %3880 = vmatprep.subr.mxu0 0.0
    %3881 = vmatpush1.msra.mxu0 %v148
    %3882 = vmatprep.subr.mxu0 0.0
    %3883 = vmatpush1.msra.mxu0 %v149
    %3884 = vmatprep.subr.mxu0 0.0
    %3885 = vmatpush1.msra.mxu0 %v150
    %3886 = vmatprep.subr.mxu0 0.0
    %3887 = vmatpush1.msra.mxu0 %v151
    %3888 = vmatprep.subr.mxu0 0.0
    %3889 = vmatpush1.msra.mxu0 %v152
    %3890 = vmatprep.subr.mxu0 0.0
    %3891 = vmatpush1.msra.mxu0 %v153
    %3892 = vmatprep.subr.mxu0 0.0
    %3893 = vmatpush1.msra.mxu0 %v154
    %3894 = vmatprep.subr.mxu0 0.0
    %3895 = vmatpush1.msra.mxu0 %v155
    %3896 = vmatprep.subr.mxu0 0.0
    %3897 = vmatpush1.msra.mxu0 %v156
    %3898 = vmatprep.subr.mxu0 0.0
    %3899 = vmatpush1.msra.mxu0 %v157
    %3900 = vmatprep.subr.mxu0 0.0
    %3901 = vmatpush1.msra.mxu0 %v158
    %3902 = vmatprep.subr.mxu0 0.0
    %3903 = vmatpush1.msra.mxu0 %v159
    %3904 = vmatprep.subr.mxu0 0.0
    %3905 = vmatpush1.msra.mxu0 %v160
    %3906 = vmatprep.subr.mxu0 0.0
    %3907 = vmatpush1.msra.mxu0 %v161
    %3908 = vmatprep.subr.mxu0 0.0
    %3909 = vmatpush1.msra.mxu0 %v162
    %3910 = vmatprep.subr.mxu0 0.0
    %3911 = vmatpush1.msra.mxu0 %v163
    %3912 = vmatprep.subr.mxu0 0.0
    %3913 = vmatpush1.msra.mxu0 %v164
    %3914 = vmatprep.subr.mxu0 0.0
    %3915 = vmatpush1.msra.mxu0 %v165
    %3916 = vmatprep.subr.mxu0 0.0
    %3917 = vmatpush1.msra.mxu0 %v166
    %3918 = vmatprep.subr.mxu0 0.0
    %3919 = vmatpush1.msra.mxu0 %v167
    %3920 = vmatprep.subr.mxu0 0.0
    %3921 = vmatpush1.msra.mxu0 %v168
    %3922 = vmatprep.subr.mxu0 0.0
    %3923 = vmatpush1.msra.mxu0 %v169
    %3924 = vmatprep.subr.mxu0 0.0
    %3925 = vmatpush1.msra.mxu0 %v170
    %3926 = vmatprep.mubr.f32.mxu0 %v3730
    %3927 = vmatmul.mubr.f32.gmra.mrb[0].mxu0 %v3729
    %v3928 = vpop.f32.mrb[0].mxu0
    %v3929 = vadd.f32 %v3839, %v3928
    %v3930 = vpop.f32.mrb[0].mxu0
    %3931 = vmatprep.mubr.f32.mxu0 %v3735
    %3932 = vmatmul.mubr.f32.gmra.mrb[0].mxu0 %v3734
    %v3933 = vpop.f32.mrb[0].mxu0
    %v3934 = vadd.f32 %v3844, %v3933
    %v3935 = vpop.f32.mrb[0].mxu0
    %3936 = vmatprep.mubr.f32.mxu0 %v3740
    %3937 = vmatmul.mubr.f32.gmra.mrb[0].mxu0 %v3739
    %v3938 = vpop.f32.mrb[0].mxu0
    %v3939 = vadd.f32 %v3849, %v3938
    %v3940 = vpop.f32.mrb[0].mxu0
    %3941 = vmatprep.mubr.f32.mxu0 %v3745
    %3942 = vmatmul.mubr.f32.gmra.mrb[0].mxu0 %v3744
    %v3943 = vpop.f32.mrb[0].mxu0
    %v3944 = vadd.f32 %v3854, %v3943
    %v3945 = vpop.f32.mrb[0].mxu0
    %3946 = vmatprep.mubr.f32.mxu0 %v3750
    %3947 = vmatmul.mubr.f32.gmra.mrb[0].mxu0 %v3749
    %v3948 = vpop.f32.mrb[0].mxu0
    %v3949 = vadd.f32 %v3859, %v3948
    %v3950 = vpop.f32.mrb[0].mxu0
    %3951 = vdwg.mxu0
    %3952 = vmatprep.subr.mxu0 0.0
    %3953 = vmatpush1.msra.mxu0 %v171
    %3954 = vmatprep.subr.mxu0 0.0
    %3955 = vmatpush1.msra.mxu0 %v172
    %3956 = vmatprep.subr.mxu0 0.0
    %3957 = vmatpush1.msra.mxu0 %v173
    %3958 = vmatprep.subr.mxu0 0.0
    %3959 = vmatpush1.msra.mxu0 %v174
    %3960 = vmatprep.subr.mxu0 0.0
    %3961 = vmatpush1.msra.mxu0 0.0
    %3962 = vmatprep.subr.mxu0 0.0
    %3963 = vmatpush1.msra.mxu0 0.0
    %3964 = vmatprep.subr.mxu0 0.0
    %3965 = vmatpush1.msra.mxu0 0.0
    %3966 = vmatprep.subr.mxu0 0.0
    %3967 = vmatpush1.msra.mxu0 0.0
    %3968 = vmatprep.subr.mxu0 0.0
    %3969 = vmatpush1.msra.mxu0 0.0
    %3970 = vmatprep.subr.mxu0 0.0
    %3971 = vmatpush1.msra.mxu0 0.0
    %3972 = vmatprep.subr.mxu0 0.0
    %3973 = vmatpush1.msra.mxu0 0.0
    %3974 = vmatprep.subr.mxu0 0.0
    %3975 = vmatpush1.msra.mxu0 0.0
    %3976 = vmatprep.subr.mxu0 0.0
    %3977 = vmatpush1.msra.mxu0 0.0
    %3978 = vmatprep.subr.mxu0 0.0
    %3979 = vmatpush1.msra.mxu0 0.0
    %3980 = vmatprep.subr.mxu0 0.0
    %3981 = vmatpush1.msra.mxu0 0.0
    %3982 = vmatprep.subr.mxu0 0.0
    %3983 = vmatpush1.msra.mxu0 0.0
    %3984 = vmatprep.subr.mxu0 0.0
    %3985 = vmatpush1.msra.mxu0 0.0
    %3986 = vmatprep.subr.mxu0 0.0
    %3987 = vmatpush1.msra.mxu0 0.0
    %3988 = vmatprep.subr.mxu0 0.0
    %3989 = vmatpush1.msra.mxu0 0.0
    %3990 = vmatprep.subr.mxu0 0.0
    %3991 = vmatpush1.msra.mxu0 0.0
    %3992 = vmatprep.subr.mxu0 0.0
    %3993 = vmatpush1.msra.mxu0 0.0
    %3994 = vmatprep.subr.mxu0 0.0
    %3995 = vmatpush1.msra.mxu0 0.0
    %3996 = vmatprep.subr.mxu0 0.0
    %3997 = vmatpush1.msra.mxu0 0.0
    %3998 = vmatprep.subr.mxu0 0.0
    %3999 = vmatpush1.msra.mxu0 0.0
    %4000 = vmatprep.subr.mxu0 0.0
    %4001 = vmatpush1.msra.mxu0 0.0
    %4002 = vmatprep.subr.mxu0 0.0
    %4003 = vmatpush1.msra.mxu0 0.0
    %4004 = vmatprep.subr.mxu0 0.0
    %4005 = vmatpush1.msra.mxu0 0.0
    %4006 = vmatprep.subr.mxu0 0.0
    %4007 = vmatpush1.msra.mxu0 0.0
    %4008 = vmatprep.subr.mxu0 0.0
    %4009 = vmatpush1.msra.mxu0 0.0
    %4010 = vmatprep.subr.mxu0 0.0
    %4011 = vmatpush1.msra.mxu0 0.0
    %4012 = vmatprep.subr.mxu0 0.0
    %4013 = vmatpush1.msra.mxu0 0.0
    %4014 = vmatprep.subr.mxu0 0.0
    %4015 = vmatpush1.msra.mxu0 0.0
    %4016 = vmatprep.mubr.f32.mxu0 0.0
    %4017 = vmatmul.mubr.f32.gmra.mrb[0].mxu0 %v3758
    %v4018 = vpop.f32.mrb[0].mxu0
    %v4019 = vadd.f32 %v3929, %v4018
    %v4020 = vpop.f32.mrb[0].mxu0
    %4021 = vmatprep.mubr.f32.mxu0 0.0
    %4022 = vmatmul.mubr.f32.gmra.mrb[0].mxu0 %v3761
    %v4023 = vpop.f32.mrb[0].mxu0
    %v4024 = vadd.f32 %v3934, %v4023
    %v4025 = vpop.f32.mrb[0].mxu0
    %4026 = vmatprep.mubr.f32.mxu0 0.0
    %4027 = vmatmul.mubr.f32.gmra.mrb[0].mxu0 %v3764
    %v4028 = vpop.f32.mrb[0].mxu0
    %v4029 = vadd.f32 %v3939, %v4028
    %v4030 = vpop.f32.mrb[0].mxu0
    %4031 = vmatprep.mubr.f32.mxu0 0.0
    %4032 = vmatmul.mubr.f32.gmra.mrb[0].mxu0 %v3767
    %v4033 = vpop.f32.mrb[0].mxu0
    %v4034 = vadd.f32 %v3944, %v4033
    %v4035 = vpop.f32.mrb[0].mxu0
    %4036 = vmatprep.mubr.f32.mxu0 0.0
    %4037 = vmatmul.mubr.f32.gmra.mrb[0].mxu0 %v3770
    %v4038 = vpop.f32.mrb[0].mxu0
    %v4039 = vadd.f32 %v3949, %v4038
    %v4040 = vpop.f32.mrb[0].mxu0
    %4041 = vdwg.mxu0
    %v4042 = vsel %vm374, %v4019, 0.0
    %4043 = vadd.xlane.f32.xlu0 %v4042
    %v4044 = vpop.xlane.xlu0 %4043
    %v4045 = vsel %vm374, %v4024, 0.0
    %4046 = vadd.xlane.f32.xlu0 %v4045
    %v4047 = vpop.xlane.xlu0 %4046
    %v4048 = vsel %vm374, %v4029, 0.0
    %4049 = vadd.xlane.f32.xlu0 %v4048
    %v4050 = vpop.xlane.xlu0 %4049
    %v4051 = vsel %vm374, %v4034, 0.0
    %4052 = vadd.xlane.f32.xlu0 %v4051
    %v4053 = vpop.xlane.xlu0 %4052
    %v4054 = vsel %vm387, %v4039, 0.0
    %4055 = vadd.xlane.f32.xlu0 %v4054
    %v4056 = vpop.xlane.xlu0 %4055
    %v4057 = vmul.f32 %v4044, %v391
    %v4058 = vmul.f32 %v4047, %v391
    %v4059 = vmul.f32 %v4050, %v391
    %v4060 = vmul.f32 %v4053, %v391
    %v4061 = vmul.f32 %v4056, %v391
    %v4062 = vmul.f32 %v4019, %v4019
    %v4063 = vmul.f32 %v4024, %v4024
    %v4064 = vmul.f32 %v4029, %v4029
    %v4065 = vmul.f32 %v4034, %v4034
    %v4066 = vmul.f32 %v4039, %v4039
    %v4067 = vsel %vm374, %v4062, 0.0
    %4068 = vadd.xlane.f32.xlu0 %v4067
    %v4069 = vpop.xlane.xlu0 %4068
    %v4070 = vsel %vm374, %v4063, 0.0
    %4071 = vadd.xlane.f32.xlu0 %v4070
    %v4072 = vpop.xlane.xlu0 %4071
    %v4073 = vsel %vm374, %v4064, 0.0
    %4074 = vadd.xlane.f32.xlu0 %v4073
    %v4075 = vpop.xlane.xlu0 %4074
    %v4076 = vsel %vm374, %v4065, 0.0
    %4077 = vadd.xlane.f32.xlu0 %v4076
    %v4078 = vpop.xlane.xlu0 %4077
    %v4079 = vsel %vm387, %v4066, 0.0
    %4080 = vadd.xlane.f32.xlu0 %v4079
    %v4081 = vpop.xlane.xlu0 %4080
    %v4082 = vmul.f32 %v4069, %v391
    %v4083 = vmul.f32 %v4072, %v391
    %v4084 = vmul.f32 %v4075, %v391
    %v4085 = vmul.f32 %v4078, %v391
    %v4086 = vmul.f32 %v4081, %v391
    %v4087 = vmul.f32 %v4057, %v4057
    %v4088 = vmul.f32 %v4058, %v4058
    %v4089 = vmul.f32 %v4059, %v4059
    %v4090 = vmul.f32 %v4060, %v4060
    %v4091 = vmul.f32 %v4061, %v4061
    %v4092 = vsub.f32 %v4082, %v4087
    %v4093 = vsub.f32 %v4083, %v4088
    %v4094 = vsub.f32 %v4084, %v4089
    %v4095 = vsub.f32 %v4085, %v4090
    %v4096 = vsub.f32 %v4086, %v4091
    %v4097 = vadd.f32 %v4092, 1e-05
    %v4098 = vadd.f32 %v4093, 1e-05
    %v4099 = vadd.f32 %v4094, 1e-05
    %v4100 = vadd.f32 %v4095, 1e-05
    %v4101 = vadd.f32 %v4096, 1e-05
    %v4102 = vrsqrt.pop %v4097
    %v4103 = vrsqrt.pop %v4098
    %v4104 = vrsqrt.pop %v4099
    %v4105 = vrsqrt.pop %v4100
    %v4106 = vrsqrt.pop %v4101
    %v4107 = vsub.f32 %v4019, %v4057
    %v4108 = vsub.f32 %v4024, %v4058
    %v4109 = vsub.f32 %v4029, %v4059
    %v4110 = vsub.f32 %v4034, %v4060
    %v4111 = vsub.f32 %v4039, %v4061
    %v4112 = vmul.f32 %v4107, %v4102
    %v4113 = vmul.f32 %v4108, %v4103
    %v4114 = vmul.f32 %v4109, %v4104
    %v4115 = vmul.f32 %v4110, %v4105
    %v4116 = vmul.f32 %v4111, %v4106
    %v4117 = vlaneseq
    %v4118 = vshrl.u32 %v4117, 7
    %v4119 = vsub.s32 4, %v4118
    %v4120 = vrot.slane %v64, %v4119
    %v4121 = vmul.f32 %v4112, %v4120
    %v4122 = vmul.f32 %v4113, %v4120
    %v4123 = vmul.f32 %v4114, %v4120
    %v4124 = vmul.f32 %v4115, %v4120
    %v4125 = vmul.f32 %v4116, %v4120
    %v4126 = vlaneseq
    %v4127 = vshrl.u32 %v4126, 7
    %v4128 = vsub.s32 5, %v4127
    %v4129 = vrot.slane %v64, %v4128
    %v4130 = vadd.f32 %v4121, %v4129
    %v4131 = vadd.f32 %v4122, %v4129
    %v4132 = vadd.f32 %v4123, %v4129
    %v4133 = vadd.f32 %v4124, %v4129
    %v4134 = vadd.f32 %v4125, %v4129
    %s4135 = scalar_lea.vmem %s6, 256
    %v4136 = vld [vmem:[%s4135] sm:$0xff]
    %v4137 = vld [vmem:[%s4135 + $0x8] sm:$0xff]
    %v4138 = vld [vmem:[%s4135 + $0x10] sm:$0xff]
    %v4139 = vld [vmem:[%s4135 + $0x18] sm:$0xff]
    %v4140 = vld [vmem:[%s4135 + $0x20] sm:$0xff]
    %v4141 = vld [vmem:[%s4135 + $0x28] sm:$0xff]
    %v4142 = vld [vmem:[%s4135 + $0x30] sm:$0xff]
    %v4143 = vld [vmem:[%s4135 + $0x38] sm:$0xff]
    %v4144 = vld [vmem:[%s4135 + $0x40] sm:$0xff]
    %v4145 = vld [vmem:[%s4135 + $0x48] sm:$0xff]
    %v4146 = vld [vmem:[%s4135 + $0x50] sm:$0xff]
    %v4147 = vld [vmem:[%s4135 + $0x58] sm:$0xff]
    %v4148 = vld [vmem:[%s4135 + $0x60] sm:$0xff]
    %v4149 = vld [vmem:[%s4135 + $0x68] sm:$0xff]
    %v4150 = vld [vmem:[%s4135 + $0x70] sm:$0xff]
    %v4151 = vld [vmem:[%s4135 + $0x78] sm:$0xff]
    %4152 = vset.pattern.permute.xlu0 4
    %4153 = vperm.xlu0 %4152, %v66
    %v4154 = vpop.permute.xlu0 %4153
    %4156 = vset.pattern.permute.xlu0 4
    %4157 = vperm.xlu0 %4156, %v67
    %v4158 = vpop.permute.xlu0 %4157
    %4160 = vset.pattern.permute.xlu0 4
    %4161 = vperm.xlu0 %4160, %v68
    %v4162 = vpop.permute.xlu0 %4161
    %4164 = vset.pattern.permute.xlu0 4
    %4165 = vperm.xlu0 %4164, %v69
    %v4166 = vpop.permute.xlu0 %4165
    %4168 = vset.pattern.permute.xlu0 4
    %4169 = vperm.xlu0 %4168, %v70
    %v4170 = vpop.permute.xlu0 %4169
    %4172 = vset.pattern.permute.xlu0 4
    %4173 = vperm.xlu0 %4172, %v71
    %v4174 = vpop.permute.xlu0 %4173
    %4176 = vset.pattern.permute.xlu0 4
    %4177 = vperm.xlu0 %4176, %v72
    %v4178 = vpop.permute.xlu0 %4177
    %4180 = vset.pattern.permute.xlu0 4
    %4181 = vperm.xlu0 %4180, %v73
    %v4182 = vpop.permute.xlu0 %4181
    %4184 = vset.pattern.permute.xlu0 4
    %4185 = vperm.xlu0 %4184, %v74
    %v4186 = vpop.permute.xlu0 %4185
    %4188 = vset.pattern.permute.xlu0 4
    %4189 = vperm.xlu0 %4188, %v75
    %v4190 = vpop.permute.xlu0 %4189
    %4192 = vset.pattern.permute.xlu0 4
    %4193 = vperm.xlu0 %4192, %v76
    %v4194 = vpop.permute.xlu0 %4193
    %4196 = vset.pattern.permute.xlu0 4
    %4197 = vperm.xlu0 %4196, %v77
    %v4198 = vpop.permute.xlu0 %4197
    %4200 = vset.pattern.permute.xlu0 4
    %4201 = vperm.xlu0 %4200, %v78
    %v4202 = vpop.permute.xlu0 %4201
    %4204 = vset.pattern.permute.xlu0 4
    %4205 = vperm.xlu0 %4204, %v79
    %v4206 = vpop.permute.xlu0 %4205
    %4208 = vset.pattern.permute.xlu0 4
    %4209 = vperm.xlu0 %4208, %v80
    %v4210 = vpop.permute.xlu0 %4209
    %4212 = vset.pattern.permute.xlu0 4
    %4213 = vperm.xlu0 %4212, %v81
    %v4214 = vpop.permute.xlu0 %4213
    %v4217 = vsel %vm566, %v4136, 0
    %v4220 = vsel %vm566, %v4137, 0
    %v4223 = vsel %vm566, %v4138, 0
    %v4226 = vsel %vm566, %v4139, 0
    %v4229 = vsel %vm566, %v4140, 0
    %v4232 = vsel %vm566, %v4141, 0
    %v4235 = vsel %vm566, %v4142, 0
    %v4238 = vsel %vm566, %v4143, 0
    %v4241 = vsel %vm566, %v4144, 0
    %v4244 = vsel %vm566, %v4145, 0
    %v4247 = vsel %vm566, %v4146, 0
    %v4250 = vsel %vm566, %v4147, 0
    %v4253 = vsel %vm566, %v4148, 0
    %v4256 = vsel %vm566, %v4149, 0
    %v4259 = vsel %vm566, %v4150, 0
    %v4262 = vsel %vm566, %v4151, 0
    %v4265 = vsel %vm201, %v4134, 0
    %4267 = vmatprep.subr.mxu0 0.0
    %4268 = vmatpush1.msra.mxu0 %v4130
    %4269 = vmatprep.subr.mxu0 0.0
    %4270 = vmatpush1.msra.mxu0 %v4131
    %4271 = vmatprep.subr.mxu0 0.0
    %4272 = vmatpush1.msra.mxu0 %v4132
    %4273 = vmatprep.subr.mxu0 0.0
    %4274 = vmatpush1.msra.mxu0 %v4133
    %4275 = vmatprep.subr.mxu0 0.0
    %4276 = vmatpush1.msra.mxu0 %v4265
    %4277 = vmatprep.subr.mxu0 0.0
    %4278 = vmatpush1.msra.mxu0 0.0
    %4279 = vmatprep.subr.mxu0 0.0
    %4280 = vmatpush1.msra.mxu0 0.0
    %4281 = vmatprep.subr.mxu0 0.0
    %4282 = vmatpush1.msra.mxu0 0.0
    %4283 = vmatprep.subr.mxu0 0.0
    %4284 = vmatpush1.msra.mxu0 0.0
    %4285 = vmatprep.subr.mxu0 0.0
    %4286 = vmatpush1.msra.mxu0 0.0
    %4287 = vmatprep.subr.mxu0 0.0
    %4288 = vmatpush1.msra.mxu0 0.0
    %4289 = vmatprep.subr.mxu0 0.0
    %4290 = vmatpush1.msra.mxu0 0.0
    %4291 = vmatprep.subr.mxu0 0.0
    %4292 = vmatpush1.msra.mxu0 0.0
    %4293 = vmatprep.subr.mxu0 0.0
    %4294 = vmatpush1.msra.mxu0 0.0
    %4295 = vmatprep.subr.mxu0 0.0
    %4296 = vmatpush1.msra.mxu0 0.0
    %4297 = vmatprep.subr.mxu0 0.0
    %4298 = vmatpush1.msra.mxu0 0.0
    %4299 = vmatprep.subr.mxu0 0.0
    %4300 = vmatpush1.msra.mxu0 0.0
    %4301 = vmatprep.subr.mxu0 0.0
    %4302 = vmatpush1.msra.mxu0 0.0
    %4303 = vmatprep.subr.mxu0 0.0
    %4304 = vmatpush1.msra.mxu0 0.0
    %4305 = vmatprep.subr.mxu0 0.0
    %4306 = vmatpush1.msra.mxu0 0.0
    %4307 = vmatprep.subr.mxu0 0.0
    %4308 = vmatpush1.msra.mxu0 0.0
    %4309 = vmatprep.subr.mxu0 0.0
    %4310 = vmatpush1.msra.mxu0 0.0
    %4311 = vmatprep.subr.mxu0 0.0
    %4312 = vmatpush1.msra.mxu0 0.0
    %4313 = vmatprep.subr.mxu0 0.0
    %4314 = vmatpush1.msra.mxu0 0.0
    %4315 = vmatprep.subr.mxu0 0.0
    %4316 = vmatpush1.msra.mxu0 0.0
    %4317 = vmatprep.subr.mxu0 0.0
    %4318 = vmatpush1.msra.mxu0 0.0
    %4319 = vmatprep.subr.mxu0 0.0
    %4320 = vmatpush1.msra.mxu0 0.0
    %4321 = vmatprep.subr.mxu0 0.0
    %4322 = vmatpush1.msra.mxu0 0.0
    %4323 = vmatprep.subr.mxu0 0.0
    %4324 = vmatpush1.msra.mxu0 0.0
    %4325 = vmatprep.subr.mxu0 0.0
    %4326 = vmatpush1.msra.mxu0 0.0
    %4327 = vmatprep.subr.mxu0 0.0
    %4328 = vmatpush1.msra.mxu0 0.0
    %4329 = vmatprep.subr.mxu0 0.0
    %4330 = vmatpush1.msra.mxu0 0.0
    %4331 = vmatprep.mubr.f32.mxu0 0.0
    %4332 = vmatmul.mubr.f32.gmra.mrb[0].mxu0 %v4217
    %v4333 = vpop.f32.mrb[0].mxu0
    %v4334 = vadd.f32 %v4154, %v4333
    %v4335 = vpop.f32.mrb[0].mxu0
    %4336 = vmatprep.mubr.f32.mxu0 0.0
    %4337 = vmatmul.mubr.f32.gmra.mrb[0].mxu0 %v4220
    %v4338 = vpop.f32.mrb[0].mxu0
    %v4339 = vadd.f32 %v4158, %v4338
    %v4340 = vpop.f32.mrb[0].mxu0
    %4341 = vmatprep.mubr.f32.mxu0 0.0
    %4342 = vmatmul.mubr.f32.gmra.mrb[0].mxu0 %v4223
    %v4343 = vpop.f32.mrb[0].mxu0
    %v4344 = vadd.f32 %v4162, %v4343
    %v4345 = vpop.f32.mrb[0].mxu0
    %4346 = vmatprep.mubr.f32.mxu0 0.0
    %4347 = vmatmul.mubr.f32.gmra.mrb[0].mxu0 %v4226
    %v4348 = vpop.f32.mrb[0].mxu0
    %v4349 = vadd.f32 %v4166, %v4348
    %v4350 = vpop.f32.mrb[0].mxu0
    %4351 = vmatprep.mubr.f32.mxu0 0.0
    %4352 = vmatmul.mubr.f32.gmra.mrb[0].mxu0 %v4229
    %v4353 = vpop.f32.mrb[0].mxu0
    %v4354 = vadd.f32 %v4170, %v4353
    %v4355 = vpop.f32.mrb[0].mxu0
    %4356 = vmatprep.mubr.f32.mxu0 0.0
    %4357 = vmatmul.mubr.f32.gmra.mrb[0].mxu0 %v4232
    %v4358 = vpop.f32.mrb[0].mxu0
    %v4359 = vadd.f32 %v4174, %v4358
    %v4360 = vpop.f32.mrb[0].mxu0
    %4361 = vmatprep.mubr.f32.mxu0 0.0
    %4362 = vmatmul.mubr.f32.gmra.mrb[0].mxu0 %v4235
    %v4363 = vpop.f32.mrb[0].mxu0
    %v4364 = vadd.f32 %v4178, %v4363
    %v4365 = vpop.f32.mrb[0].mxu0
    %4366 = vmatprep.mubr.f32.mxu0 0.0
    %4367 = vmatmul.mubr.f32.gmra.mrb[0].mxu0 %v4238
    %v4368 = vpop.f32.mrb[0].mxu0
    %v4369 = vadd.f32 %v4182, %v4368
    %v4370 = vpop.f32.mrb[0].mxu0
    %4371 = vmatprep.mubr.f32.mxu0 0.0
    %4372 = vmatmul.mubr.f32.gmra.mrb[0].mxu0 %v4241
    %v4373 = vpop.f32.mrb[0].mxu0
    %v4374 = vadd.f32 %v4186, %v4373
    %v4375 = vpop.f32.mrb[0].mxu0
    %4376 = vmatprep.mubr.f32.mxu0 0.0
    %4377 = vmatmul.mubr.f32.gmra.mrb[0].mxu0 %v4244
    %v4378 = vpop.f32.mrb[0].mxu0
    %v4379 = vadd.f32 %v4190, %v4378
    %v4380 = vpop.f32.mrb[0].mxu0
    %4381 = vmatprep.mubr.f32.mxu0 0.0
    %4382 = vmatmul.mubr.f32.gmra.mrb[0].mxu0 %v4247
    %v4383 = vpop.f32.mrb[0].mxu0
    %v4384 = vadd.f32 %v4194, %v4383
    %v4385 = vpop.f32.mrb[0].mxu0
    %4386 = vmatprep.mubr.f32.mxu0 0.0
    %4387 = vmatmul.mubr.f32.gmra.mrb[0].mxu0 %v4250
    %v4388 = vpop.f32.mrb[0].mxu0
    %v4389 = vadd.f32 %v4198, %v4388
    %v4390 = vpop.f32.mrb[0].mxu0
    %4391 = vmatprep.mubr.f32.mxu0 0.0
    %4392 = vmatmul.mubr.f32.gmra.mrb[0].mxu0 %v4253
    %v4393 = vpop.f32.mrb[0].mxu0
    %v4394 = vadd.f32 %v4202, %v4393
    %v4395 = vpop.f32.mrb[0].mxu0
    %4396 = vmatprep.mubr.f32.mxu0 0.0
    %4397 = vmatmul.mubr.f32.gmra.mrb[0].mxu0 %v4256
    %v4398 = vpop.f32.mrb[0].mxu0
    %v4399 = vadd.f32 %v4206, %v4398
    %v4400 = vpop.f32.mrb[0].mxu0
    %4401 = vmatprep.mubr.f32.mxu0 0.0
    %4402 = vmatmul.mubr.f32.gmra.mrb[0].mxu0 %v4259
    %v4403 = vpop.f32.mrb[0].mxu0
    %v4404 = vadd.f32 %v4210, %v4403
    %v4405 = vpop.f32.mrb[0].mxu0
    %4406 = vmatprep.mubr.f32.mxu0 0.0
    %4407 = vmatmul.mubr.f32.gmra.mrb[0].mxu0 %v4262
    %v4408 = vpop.f32.mrb[0].mxu0
    %v4409 = vadd.f32 %v4214, %v4408
    %v4410 = vpop.f32.mrb[0].mxu0
    %4411 = vdwg.mxu0
    %v4412 = vmul.f32 %v4334, %v4334
    %v4413 = vmul.f32 %v4339, %v4339
    %v4414 = vmul.f32 %v4344, %v4344
    %v4415 = vmul.f32 %v4349, %v4349
    %v4416 = vmul.f32 %v4354, %v4354
    %v4417 = vmul.f32 %v4359, %v4359
    %v4418 = vmul.f32 %v4364, %v4364
    %v4419 = vmul.f32 %v4369, %v4369
    %v4420 = vmul.f32 %v4374, %v4374
    %v4421 = vmul.f32 %v4379, %v4379
    %v4422 = vmul.f32 %v4384, %v4384
    %v4423 = vmul.f32 %v4389, %v4389
    %v4424 = vmul.f32 %v4394, %v4394
    %v4425 = vmul.f32 %v4399, %v4399
    %v4426 = vmul.f32 %v4404, %v4404
    %v4427 = vmul.f32 %v4409, %v4409
    %v4428 = vmul.f32 %v4334, %v4412
    %v4429 = vmul.f32 %v4339, %v4413
    %v4430 = vmul.f32 %v4344, %v4414
    %v4431 = vmul.f32 %v4349, %v4415
    %v4432 = vmul.f32 %v4354, %v4416
    %v4433 = vmul.f32 %v4359, %v4417
    %v4434 = vmul.f32 %v4364, %v4418
    %v4435 = vmul.f32 %v4369, %v4419
    %v4436 = vmul.f32 %v4374, %v4420
    %v4437 = vmul.f32 %v4379, %v4421
    %v4438 = vmul.f32 %v4384, %v4422
    %v4439 = vmul.f32 %v4389, %v4423
    %v4440 = vmul.f32 %v4394, %v4424
    %v4441 = vmul.f32 %v4399, %v4425
    %v4442 = vmul.f32 %v4404, %v4426
    %v4443 = vmul.f32 %v4409, %v4427
    %v4444 = vmul.f32 %v4428, 0.044715
    %v4445 = vmul.f32 %v4429, 0.044715
    %v4446 = vmul.f32 %v4430, 0.044715
    %v4447 = vmul.f32 %v4431, 0.044715
    %v4448 = vmul.f32 %v4432, 0.044715
    %v4449 = vmul.f32 %v4433, 0.044715
    %v4450 = vmul.f32 %v4434, 0.044715
    %v4451 = vmul.f32 %v4435, 0.044715
    %v4452 = vmul.f32 %v4436, 0.044715
    %v4453 = vmul.f32 %v4437, 0.044715
    %v4454 = vmul.f32 %v4438, 0.044715
    %v4455 = vmul.f32 %v4439, 0.044715
    %v4456 = vmul.f32 %v4440, 0.044715
    %v4457 = vmul.f32 %v4441, 0.044715
    %v4458 = vmul.f32 %v4442, 0.044715
    %v4459 = vmul.f32 %v4443, 0.044715
    %v4460 = vadd.f32 %v4334, %v4444
    %v4461 = vadd.f32 %v4339, %v4445
    %v4462 = vadd.f32 %v4344, %v4446
    %v4463 = vadd.f32 %v4349, %v4447
    %v4464 = vadd.f32 %v4354, %v4448
    %v4465 = vadd.f32 %v4359, %v4449
    %v4466 = vadd.f32 %v4364, %v4450
    %v4467 = vadd.f32 %v4369, %v4451
    %v4468 = vadd.f32 %v4374, %v4452
    %v4469 = vadd.f32 %v4379, %v4453
    %v4470 = vadd.f32 %v4384, %v4454
    %v4471 = vadd.f32 %v4389, %v4455
    %v4472 = vadd.f32 %v4394, %v4456
    %v4473 = vadd.f32 %v4399, %v4457
    %v4474 = vadd.f32 %v4404, %v4458
    %v4475 = vadd.f32 %v4409, %v4459
    %v4476 = vmul.f32 %v4460, 0.7978846
    %v4477 = vmul.f32 %v4461, 0.7978846
    %v4478 = vmul.f32 %v4462, 0.7978846
    %v4479 = vmul.f32 %v4463, 0.7978846
    %v4480 = vmul.f32 %v4464, 0.7978846
    %v4481 = vmul.f32 %v4465, 0.7978846
    %v4482 = vmul.f32 %v4466, 0.7978846
    %v4483 = vmul.f32 %v4467, 0.7978846
    %v4484 = vmul.f32 %v4468, 0.7978846
    %v4485 = vmul.f32 %v4469, 0.7978846
    %v4486 = vmul.f32 %v4470, 0.7978846
    %v4487 = vmul.f32 %v4471, 0.7978846
    %v4488 = vmul.f32 %v4472, 0.7978846
    %v4489 = vmul.f32 %v4473, 0.7978846
    %v4490 = vmul.f32 %v4474, 0.7978846
    %v4491 = vmul.f32 %v4475, 0.7978846
    %v4492 = vtanh.pop %v4476
    %v4493 = vtanh.pop %v4477
    %v4494 = vtanh.pop %v4478
    %v4495 = vtanh.pop %v4479
    %v4496 = vtanh.pop %v4480
    %v4497 = vtanh.pop %v4481
    %v4498 = vtanh.pop %v4482
    %v4499 = vtanh.pop %v4483
    %v4500 = vtanh.pop %v4484
    %v4501 = vtanh.pop %v4485
    %v4502 = vtanh.pop %v4486
    %v4503 = vtanh.pop %v4487
    %v4504 = vtanh.pop %v4488
    %v4505 = vtanh.pop %v4489
    %v4506 = vtanh.pop %v4490
    %v4507 = vtanh.pop %v4491
    %v4508 = vadd.f32 %v4492, 1.0
    %v4509 = vadd.f32 %v4493, 1.0
    %v4510 = vadd.f32 %v4494, 1.0
    %v4511 = vadd.f32 %v4495, 1.0
    %v4512 = vadd.f32 %v4496, 1.0
    %v4513 = vadd.f32 %v4497, 1.0
    %v4514 = vadd.f32 %v4498, 1.0
    %v4515 = vadd.f32 %v4499, 1.0
    %v4516 = vadd.f32 %v4500, 1.0
    %v4517 = vadd.f32 %v4501, 1.0
    %v4518 = vadd.f32 %v4502, 1.0
    %v4519 = vadd.f32 %v4503, 1.0
    %v4520 = vadd.f32 %v4504, 1.0
    %v4521 = vadd.f32 %v4505, 1.0
    %v4522 = vadd.f32 %v4506, 1.0
    %v4523 = vadd.f32 %v4507, 1.0
    %v4524 = vmul.f32 %v4508, 0.5
    %v4525 = vmul.f32 %v4509, 0.5
    %v4526 = vmul.f32 %v4510, 0.5
    %v4527 = vmul.f32 %v4511, 0.5
    %v4528 = vmul.f32 %v4512, 0.5
    %v4529 = vmul.f32 %v4513, 0.5
    %v4530 = vmul.f32 %v4514, 0.5
    %v4531 = vmul.f32 %v4515, 0.5
    %v4532 = vmul.f32 %v4516, 0.5
    %v4533 = vmul.f32 %v4517, 0.5
    %v4534 = vmul.f32 %v4518, 0.5
    %v4535 = vmul.f32 %v4519, 0.5
    %v4536 = vmul.f32 %v4520, 0.5
    %v4537 = vmul.f32 %v4521, 0.5
    %v4538 = vmul.f32 %v4522, 0.5
    %v4539 = vmul.f32 %v4523, 0.5
    %v4540 = vmul.f32 %v4334, %v4524
    %v4541 = vmul.f32 %v4339, %v4525
    %v4542 = vmul.f32 %v4344, %v4526
    %v4543 = vmul.f32 %v4349, %v4527
    %v4544 = vmul.f32 %v4354, %v4528
    %v4545 = vmul.f32 %v4359, %v4529
    %v4546 = vmul.f32 %v4364, %v4530
    %v4547 = vmul.f32 %v4369, %v4531
    %v4548 = vmul.f32 %v4374, %v4532
    %v4549 = vmul.f32 %v4379, %v4533
    %v4550 = vmul.f32 %v4384, %v4534
    %v4551 = vmul.f32 %v4389, %v4535
    %v4552 = vmul.f32 %v4394, %v4536
    %v4553 = vmul.f32 %v4399, %v4537
    %v4554 = vmul.f32 %v4404, %v4538
    %v4555 = vmul.f32 %v4409, %v4539
    %s4556 = scalar_lea.vmem %s7, 80
    %v4557 = vld [vmem:[%s4556] sm:$0xff]
    %v4558 = vld [vmem:[%s4556 + $0x8] sm:$0xff]
    %v4559 = vld [vmem:[%s4556 + $0x10] sm:$0xff]
    %v4560 = vld [vmem:[%s4556 + $0x18] sm:$0xff]
    %v4561 = vld [vmem:[%s4556 + $0x20] sm:$0x3]
    %4562 = vset.pattern.permute.xlu0 5
    %4563 = vperm.xlu0 %4562, %v66
    %v4564 = vpop.permute.xlu0 %4563
    %4566 = vset.pattern.permute.xlu0 5
    %4567 = vperm.xlu0 %4566, %v67
    %v4568 = vpop.permute.xlu0 %4567
    %4570 = vset.pattern.permute.xlu0 5
    %4571 = vperm.xlu0 %4570, %v68
    %v4572 = vpop.permute.xlu0 %4571
    %4574 = vset.pattern.permute.xlu0 5
    %4575 = vperm.xlu0 %4574, %v69
    %v4576 = vpop.permute.xlu0 %4575
    %4578 = vset.pattern.permute.xlu0 5
    %4579 = vperm.xlu0 %4578, %v70
    %v4580 = vpop.permute.xlu0 %4579
    %4582 = vmatprep.subr.mxu0 0.0
    %4583 = vmatpush1.msra.mxu0 %v4540
    %4584 = vmatprep.subr.mxu0 0.0
    %4585 = vmatpush1.msra.mxu0 %v4541
    %4586 = vmatprep.subr.mxu0 0.0
    %4587 = vmatpush1.msra.mxu0 %v4542
    %4588 = vmatprep.subr.mxu0 0.0
    %4589 = vmatpush1.msra.mxu0 %v4543
    %4590 = vmatprep.subr.mxu0 0.0
    %4591 = vmatpush1.msra.mxu0 %v4544
    %4592 = vmatprep.subr.mxu0 0.0
    %4593 = vmatpush1.msra.mxu0 %v4545
    %4594 = vmatprep.subr.mxu0 0.0
    %4595 = vmatpush1.msra.mxu0 %v4546
    %4596 = vmatprep.subr.mxu0 0.0
    %4597 = vmatpush1.msra.mxu0 %v4547
    %4598 = vmatprep.subr.mxu0 0.0
    %4599 = vmatpush1.msra.mxu0 %v4548
    %4600 = vmatprep.subr.mxu0 0.0
    %4601 = vmatpush1.msra.mxu0 %v4549
    %4602 = vmatprep.subr.mxu0 0.0
    %4603 = vmatpush1.msra.mxu0 %v4550
    %4604 = vmatprep.subr.mxu0 0.0
    %4605 = vmatpush1.msra.mxu0 %v4551
    %4606 = vmatprep.subr.mxu0 0.0
    %4607 = vmatpush1.msra.mxu0 %v4552
    %4608 = vmatprep.subr.mxu0 0.0
    %4609 = vmatpush1.msra.mxu0 %v4553
    %4610 = vmatprep.subr.mxu0 0.0
    %4611 = vmatpush1.msra.mxu0 %v4554
    %4612 = vmatprep.subr.mxu0 0.0
    %4613 = vmatpush1.msra.mxu0 %v4555
    %4614 = vmatprep.subr.mxu0 0.0
    %4615 = vmatpush1.msra.mxu0 0.0
    %4616 = vmatprep.subr.mxu0 0.0
    %4617 = vmatpush1.msra.mxu0 0.0
    %4618 = vmatprep.subr.mxu0 0.0
    %4619 = vmatpush1.msra.mxu0 0.0
    %4620 = vmatprep.subr.mxu0 0.0
    %4621 = vmatpush1.msra.mxu0 0.0
    %4622 = vmatprep.subr.mxu0 0.0
    %4623 = vmatpush1.msra.mxu0 0.0
    %4624 = vmatprep.subr.mxu0 0.0
    %4625 = vmatpush1.msra.mxu0 0.0
    %4626 = vmatprep.subr.mxu0 0.0
    %4627 = vmatpush1.msra.mxu0 0.0
    %4628 = vmatprep.subr.mxu0 0.0
    %4629 = vmatpush1.msra.mxu0 0.0
    %4630 = vmatprep.subr.mxu0 0.0
    %4631 = vmatpush1.msra.mxu0 0.0
    %4632 = vmatprep.subr.mxu0 0.0
    %4633 = vmatpush1.msra.mxu0 0.0
    %4634 = vmatprep.subr.mxu0 0.0
    %4635 = vmatpush1.msra.mxu0 0.0
    %4636 = vmatprep.subr.mxu0 0.0
    %4637 = vmatpush1.msra.mxu0 0.0
    %4638 = vmatprep.subr.mxu0 0.0
    %4639 = vmatpush1.msra.mxu0 0.0
    %4640 = vmatprep.subr.mxu0 0.0
    %4641 = vmatpush1.msra.mxu0 0.0
    %4642 = vmatprep.subr.mxu0 0.0
    %4643 = vmatpush1.msra.mxu0 0.0
    %4644 = vmatprep.subr.mxu0 0.0
    %4645 = vmatpush1.msra.mxu0 0.0
    %4646 = vmatprep.mubr.f32.mxu0 0.0
    %4647 = vmatmul.mubr.f32.gmra.mrb[0].mxu0 %v4557
    %v4648 = vpop.f32.mrb[0].mxu0
    %v4649 = vadd.f32 %v4564, %v4648
    %v4650 = vpop.f32.mrb[0].mxu0
    %4651 = vmatprep.mubr.f32.mxu0 0.0
    %4652 = vmatmul.mubr.f32.gmra.mrb[0].mxu0 %v4558
    %v4653 = vpop.f32.mrb[0].mxu0
    %v4654 = vadd.f32 %v4568, %v4653
    %v4655 = vpop.f32.mrb[0].mxu0
    %4656 = vmatprep.mubr.f32.mxu0 0.0
    %4657 = vmatmul.mubr.f32.gmra.mrb[0].mxu0 %v4559
    %v4658 = vpop.f32.mrb[0].mxu0
    %v4659 = vadd.f32 %v4572, %v4658
    %v4660 = vpop.f32.mrb[0].mxu0
    %4661 = vmatprep.mubr.f32.mxu0 0.0
    %4662 = vmatmul.mubr.f32.gmra.mrb[0].mxu0 %v4560
    %v4663 = vpop.f32.mrb[0].mxu0
    %v4664 = vadd.f32 %v4576, %v4663
    %v4665 = vpop.f32.mrb[0].mxu0
    %4666 = vmatprep.mubr.f32.mxu0 0.0
    %4667 = vmatmul.mubr.f32.gmra.mrb[0].mxu0 %v4561
    %v4668 = vpop.f32.mrb[0].mxu0
    %v4669 = vadd.f32 %v4580, %v4668
    %v4670 = vpop.f32.mrb[0].mxu0
    %4671 = vdwg.mxu0
    %v4672 = vadd.f32 %v4019, %v4649
    %v4673 = vadd.f32 %v4024, %v4654
    %v4674 = vadd.f32 %v4029, %v4659
    %v4675 = vadd.f32 %v4034, %v4664
    %v4676 = vadd.f32 %v4039, %v4669
    %v4677 = vsel %vm374, %v4672, 0.0
    %4678 = vadd.xlane.f32.xlu0 %v4677
    %v4679 = vpop.xlane.xlu0 %4678
    %v4680 = vsel %vm374, %v4673, 0.0
    %4681 = vadd.xlane.f32.xlu0 %v4680
    %v4682 = vpop.xlane.xlu0 %4681
    %v4683 = vsel %vm374, %v4674, 0.0
    %4684 = vadd.xlane.f32.xlu0 %v4683
    %v4685 = vpop.xlane.xlu0 %4684
    %v4686 = vsel %vm374, %v4675, 0.0
    %4687 = vadd.xlane.f32.xlu0 %v4686
    %v4688 = vpop.xlane.xlu0 %4687
    %v4689 = vsel %vm387, %v4676, 0.0
    %4690 = vadd.xlane.f32.xlu0 %v4689
    %v4691 = vpop.xlane.xlu0 %4690
    %v4692 = vmul.f32 %v4679, %v391
    %v4693 = vmul.f32 %v4682, %v391
    %v4694 = vmul.f32 %v4685, %v391
    %v4695 = vmul.f32 %v4688, %v391
    %v4696 = vmul.f32 %v4691, %v391
    %v4697 = vmul.f32 %v4672, %v4672
    %v4698 = vmul.f32 %v4673, %v4673
    %v4699 = vmul.f32 %v4674, %v4674
    %v4700 = vmul.f32 %v4675, %v4675
    %v4701 = vmul.f32 %v4676, %v4676
    %v4702 = vsel %vm374, %v4697, 0.0
    %4703 = vadd.xlane.f32.xlu0 %v4702
    %v4704 = vpop.xlane.xlu0 %4703
    %v4705 = vsel %vm374, %v4698, 0.0
    %4706 = vadd.xlane.f32.xlu0 %v4705
    %v4707 = vpop.xlane.xlu0 %4706
    %v4708 = vsel %vm374, %v4699, 0.0
    %4709 = vadd.xlane.f32.xlu0 %v4708
    %v4710 = vpop.xlane.xlu0 %4709
    %v4711 = vsel %vm374, %v4700, 0.0
    %4712 = vadd.xlane.f32.xlu0 %v4711
    %v4713 = vpop.xlane.xlu0 %4712
    %v4714 = vsel %vm387, %v4701, 0.0
    %4715 = vadd.xlane.f32.xlu0 %v4714
    %v4716 = vpop.xlane.xlu0 %4715
    %v4717 = vmul.f32 %v4704, %v391
    %v4718 = vmul.f32 %v4707, %v391
    %v4719 = vmul.f32 %v4710, %v391
    %v4720 = vmul.f32 %v4713, %v391
    %v4721 = vmul.f32 %v4716, %v391
    %v4722 = vmul.f32 %v4692, %v4692
    %v4723 = vmul.f32 %v4693, %v4693
    %v4724 = vmul.f32 %v4694, %v4694
    %v4725 = vmul.f32 %v4695, %v4695
    %v4726 = vmul.f32 %v4696, %v4696
    %v4727 = vsub.f32 %v4717, %v4722
    %v4728 = vsub.f32 %v4718, %v4723
    %v4729 = vsub.f32 %v4719, %v4724
    %v4730 = vsub.f32 %v4720, %v4725
    %v4731 = vsub.f32 %v4721, %v4726
    %v4732 = vadd.f32 %v4727, 1e-05
    %v4733 = vadd.f32 %v4728, 1e-05
    %v4734 = vadd.f32 %v4729, 1e-05
    %v4735 = vadd.f32 %v4730, 1e-05
    %v4736 = vadd.f32 %v4731, 1e-05
    %v4737 = vrsqrt.pop %v4732
    %v4738 = vrsqrt.pop %v4733
    %v4739 = vrsqrt.pop %v4734
    %v4740 = vrsqrt.pop %v4735
    %v4741 = vrsqrt.pop %v4736
    %v4742 = vsub.f32 %v4672, %v4692
    %v4743 = vsub.f32 %v4673, %v4693
    %v4744 = vsub.f32 %v4674, %v4694
    %v4745 = vsub.f32 %v4675, %v4695
    %v4746 = vsub.f32 %v4676, %v4696
    %v4747 = vmul.f32 %v4742, %v4737
    %v4748 = vmul.f32 %v4743, %v4738
    %v4749 = vmul.f32 %v4744, %v4739
    %v4750 = vmul.f32 %v4745, %v4740
    %v4751 = vmul.f32 %v4746, %v4741
    %v4752 = vlaneseq
    %v4753 = vshrl.u32 %v4752, 7
    %v4754 = vsub.s32 6, %v4753
    %v4755 = vrot.slane %v64, %v4754
    %v4756 = vmul.f32 %v4747, %v4755
    %v4757 = vmul.f32 %v4748, %v4755
    %v4758 = vmul.f32 %v4749, %v4755
    %v4759 = vmul.f32 %v4750, %v4755
    %v4760 = vmul.f32 %v4751, %v4755
    %v4761 = vlaneseq
    %v4762 = vshrl.u32 %v4761, 7
    %v4763 = vsub.s32 7, %v4762
    %v4764 = vrot.slane %v64, %v4763
    %v4765 = vadd.f32 %v4756, %v4764
    %v4766 = vadd.f32 %v4757, %v4764
    %v4767 = vadd.f32 %v4758, %v4764
    %v4768 = vadd.f32 %v4759, %v4764
    %v4769 = vadd.f32 %v4760, %v4764
    %s4770 = scalar_lea.vmem %s8, 64
    %v4771 = vld [vmem:[%s4770] sm:$0xff]
    %v4772 = vld [vmem:[%s4770 + $0x8] sm:$0xff]
    %v4773 = vld [vmem:[%s4770 + $0x10] sm:$0xff]
    %v4774 = vld [vmem:[%s4770 + $0x18] sm:$0xff]
    %v4775 = vlaneseq
    %v4776 = vshrl.u32 %v4775, 7
    %v4777 = vsub.s32 0, %v4776
    %v4778 = vrot.slane %v65, %v4777
    %v4780 = vsel %vm374, %v4765, 0
    %v4783 = vsel %vm374, %v4766, 0
    %v4786 = vsel %vm374, %v4767, 0
    %v4789 = vsel %vm374, %v4768, 0
    %v4792 = vsel %vm374, %v4769, 0
    %4794 = vmatprep.subr.mxu0 0.0
    %4795 = vmatpush1.msra.mxu0 %v4771
    %4796 = vmatprep.subr.mxu0 0.0
    %4797 = vmatpush1.msra.mxu0 %v4772
    %4798 = vmatprep.subr.mxu0 0.0
    %4799 = vmatpush1.msra.mxu0 %v4773
    %4800 = vmatprep.subr.mxu0 0.0
    %4801 = vmatpush1.msra.mxu0 %v4774
    %4802 = vmatprep.subr.mxu0 0.0
    %4803 = vmatpush1.msra.mxu0 0.0
    %4804 = vmatprep.subr.mxu0 0.0
    %4805 = vmatpush1.msra.mxu0 0.0
    %4806 = vmatprep.subr.mxu0 0.0
    %4807 = vmatpush1.msra.mxu0 0.0
    %4808 = vmatprep.subr.mxu0 0.0
    %4809 = vmatpush1.msra.mxu0 0.0
    %4810 = vmatprep.subr.mxu0 0.0
    %4811 = vmatpush1.msra.mxu0 0.0
    %4812 = vmatprep.subr.mxu0 0.0
    %4813 = vmatpush1.msra.mxu0 0.0
    %4814 = vmatprep.subr.mxu0 0.0
    %4815 = vmatpush1.msra.mxu0 0.0
    %4816 = vmatprep.subr.mxu0 0.0
    %4817 = vmatpush1.msra.mxu0 0.0
    %4818 = vmatprep.subr.mxu0 0.0
    %4819 = vmatpush1.msra.mxu0 0.0
    %4820 = vmatprep.subr.mxu0 0.0
    %4821 = vmatpush1.msra.mxu0 0.0
    %4822 = vmatprep.subr.mxu0 0.0
    %4823 = vmatpush1.msra.mxu0 0.0
    %4824 = vmatprep.subr.mxu0 0.0
    %4825 = vmatpush1.msra.mxu0 0.0
    %4826 = vmatprep.subr.mxu0 0.0
    %4827 = vmatpush1.msra.mxu0 0.0
    %4828 = vmatprep.subr.mxu0 0.0
    %4829 = vmatpush1.msra.mxu0 0.0
    %4830 = vmatprep.subr.mxu0 0.0
    %4831 = vmatpush1.msra.mxu0 0.0
    %4832 = vmatprep.subr.mxu0 0.0
    %4833 = vmatpush1.msra.mxu0 0.0
    %4834 = vmatprep.subr.mxu0 0.0
    %4835 = vmatpush1.msra.mxu0 0.0
    %4836 = vmatprep.subr.mxu0 0.0
    %4837 = vmatpush1.msra.mxu0 0.0
    %4838 = vmatprep.subr.mxu0 0.0
    %4839 = vmatpush1.msra.mxu0 0.0
    %4840 = vmatprep.subr.mxu0 0.0
    %4841 = vmatpush1.msra.mxu0 0.0
    %4842 = vmatprep.subr.mxu0 0.0
    %4843 = vmatpush1.msra.mxu0 0.0
    %4844 = vmatprep.subr.mxu0 0.0
    %4845 = vmatpush1.msra.mxu0 0.0
    %4846 = vmatprep.subr.mxu0 0.0
    %4847 = vmatpush1.msra.mxu0 0.0
    %4848 = vmatprep.subr.mxu0 0.0
    %4849 = vmatpush1.msra.mxu0 0.0
    %4850 = vmatprep.subr.mxu0 0.0
    %4851 = vmatpush1.msra.mxu0 0.0
    %4852 = vmatprep.subr.mxu0 0.0
    %4853 = vmatpush1.msra.mxu0 0.0
    %4854 = vmatprep.subr.mxu0 0.0
    %4855 = vmatpush1.msra.mxu0 0.0
    %4856 = vmatprep.subr.mxu0 0.0
    %4857 = vmatpush1.msra.mxu0 0.0
    %4858 = vmatprep.mubr.f32.mxu0 0.0
    %4859 = vmatmul.mubr.f32.gmra.mrb[0].mxu0 %v4780
    %v4860 = vpop.f32.mrb[0].mxu0
    %v4861 = vadd.f32 %v4778, %v4860
    %v4862 = vpop.f32.mrb[0].mxu0
    %4863 = vmatprep.mubr.f32.mxu0 0.0
    %4864 = vmatmul.mubr.f32.gmra.mrb[0].mxu0 %v4783
    %v4865 = vpop.f32.mrb[0].mxu0
    %v4866 = vadd.f32 %v4778, %v4865
    %v4867 = vpop.f32.mrb[0].mxu0
    %4868 = vmatprep.mubr.f32.mxu0 0.0
    %4869 = vmatmul.mubr.f32.gmra.mrb[0].mxu0 %v4786
    %v4870 = vpop.f32.mrb[0].mxu0
    %v4871 = vadd.f32 %v4778, %v4870
    %v4872 = vpop.f32.mrb[0].mxu0
    %4873 = vmatprep.mubr.f32.mxu0 0.0
    %4874 = vmatmul.mubr.f32.gmra.mrb[0].mxu0 %v4789
    %v4875 = vpop.f32.mrb[0].mxu0
    %v4876 = vadd.f32 %v4778, %v4875
    %v4877 = vpop.f32.mrb[0].mxu0
    %4878 = vmatprep.mubr.f32.mxu0 0.0
    %4879 = vmatmul.mubr.f32.gmra.mrb[0].mxu0 %v4792
    %v4880 = vpop.f32.mrb[0].mxu0
    %v4881 = vadd.f32 %v4778, %v4880
    %v4882 = vpop.f32.mrb[0].mxu0
    %4883 = vdwg.mxu0
    %v4884 = vmul.f32 %v4861, %v4861
    %v4885 = vmul.f32 %v4866, %v4866
    %v4886 = vmul.f32 %v4871, %v4871
    %v4887 = vmul.f32 %v4876, %v4876
    %v4888 = vmul.f32 %v4881, %v4881
    %v4889 = vmul.f32 %v4861, %v4884
    %v4890 = vmul.f32 %v4866, %v4885
    %v4891 = vmul.f32 %v4871, %v4886
    %v4892 = vmul.f32 %v4876, %v4887
    %v4893 = vmul.f32 %v4881, %v4888
    %v4894 = vmul.f32 %v4889, 0.044715
    %v4895 = vmul.f32 %v4890, 0.044715
    %v4896 = vmul.f32 %v4891, 0.044715
    %v4897 = vmul.f32 %v4892, 0.044715
    %v4898 = vmul.f32 %v4893, 0.044715
    %v4899 = vadd.f32 %v4861, %v4894
    %v4900 = vadd.f32 %v4866, %v4895
    %v4901 = vadd.f32 %v4871, %v4896
    %v4902 = vadd.f32 %v4876, %v4897
    %v4903 = vadd.f32 %v4881, %v4898
    %v4904 = vmul.f32 %v4899, 0.7978846
    %v4905 = vmul.f32 %v4900, 0.7978846
    %v4906 = vmul.f32 %v4901, 0.7978846
    %v4907 = vmul.f32 %v4902, 0.7978846
    %v4908 = vmul.f32 %v4903, 0.7978846
    %v4909 = vtanh.pop %v4904
    %v4910 = vtanh.pop %v4905
    %v4911 = vtanh.pop %v4906
    %v4912 = vtanh.pop %v4907
    %v4913 = vtanh.pop %v4908
    %v4914 = vadd.f32 %v4909, 1.0
    %v4915 = vadd.f32 %v4910, 1.0
    %v4916 = vadd.f32 %v4911, 1.0
    %v4917 = vadd.f32 %v4912, 1.0
    %v4918 = vadd.f32 %v4913, 1.0
    %v4919 = vmul.f32 %v4914, 0.5
    %v4920 = vmul.f32 %v4915, 0.5
    %v4921 = vmul.f32 %v4916, 0.5
    %v4922 = vmul.f32 %v4917, 0.5
    %v4923 = vmul.f32 %v4918, 0.5
    %v4924 = vmul.f32 %v4861, %v4919
    %v4925 = vmul.f32 %v4866, %v4920
    %v4926 = vmul.f32 %v4871, %v4921
    %v4927 = vmul.f32 %v4876, %v4922
    %v4928 = vmul.f32 %v4881, %v4923
    %s4929 = scalar_lea.vmem %s9, 128
    %v4930 = vld [vmem:[%s4929] sm:$0xff]
    %v4931 = vld [vmem:[%s4929 + $0x8] sm:$0xff]
    %v4932 = vld [vmem:[%s4929 + $0x10] sm:$0xff]
    %v4933 = vld [vmem:[%s4929 + $0x18] sm:$0xff]
    %v4934 = vld [vmem:[%s4929 + $0x20] sm:$0xff]
    %v4935 = vld [vmem:[%s4929 + $0x28] sm:$0xff]
    %v4936 = vld [vmem:[%s4929 + $0x30] sm:$0xff]
    %v4937 = vld [vmem:[%s4929 + $0x38] sm:$0xff]
    %v4938 = vlaneseq
    %v4939 = vshrl.u32 %v4938, 7
    %v4940 = vsub.s32 1, %v4939
    %v4941 = vrot.slane %v65, %v4940
    %v4943 = vsel %vm1290, %v4924, 0
    %v4946 = vsel %vm1290, %v4925, 0
    %v4949 = vsel %vm1290, %v4926, 0
    %v4952 = vsel %vm1290, %v4927, 0
    %v4955 = vsel %vm1290, %v4928, 0
    %4957 = vmatprep.subr.mxu0 0.0
    %4958 = vmatpush1.msra.mxu0 %v4930
    %4959 = vmatprep.subr.mxu0 0.0
    %4960 = vmatpush1.msra.mxu0 %v4931
    %4961 = vmatprep.subr.mxu0 0.0
    %4962 = vmatpush1.msra.mxu0 %v4932
    %4963 = vmatprep.subr.mxu0 0.0
    %4964 = vmatpush1.msra.mxu0 %v4933
    %4965 = vmatprep.subr.mxu0 0.0
    %4966 = vmatpush1.msra.mxu0 %v4934
    %4967 = vmatprep.subr.mxu0 0.0
    %4968 = vmatpush1.msra.mxu0 %v4935
    %4969 = vmatprep.subr.mxu0 0.0
    %4970 = vmatpush1.msra.mxu0 %v4936
    %4971 = vmatprep.subr.mxu0 0.0
    %4972 = vmatpush1.msra.mxu0 %v4937
    %4973 = vmatprep.subr.mxu0 0.0
    %4974 = vmatpush1.msra.mxu0 0.0
    %4975 = vmatprep.subr.mxu0 0.0
    %4976 = vmatpush1.msra.mxu0 0.0
    %4977 = vmatprep.subr.mxu0 0.0
    %4978 = vmatpush1.msra.mxu0 0.0
    %4979 = vmatprep.subr.mxu0 0.0
    %4980 = vmatpush1.msra.mxu0 0.0
    %4981 = vmatprep.subr.mxu0 0.0
    %4982 = vmatpush1.msra.mxu0 0.0
    %4983 = vmatprep.subr.mxu0 0.0
    %4984 = vmatpush1.msra.mxu0 0.0
    %4985 = vmatprep.subr.mxu0 0.0
    %4986 = vmatpush1.msra.mxu0 0.0
    %4987 = vmatprep.subr.mxu0 0.0
    %4988 = vmatpush1.msra.mxu0 0.0
    %4989 = vmatprep.subr.mxu0 0.0
    %4990 = vmatpush1.msra.mxu0 0.0
    %4991 = vmatprep.subr.mxu0 0.0
    %4992 = vmatpush1.msra.mxu0 0.0
    %4993 = vmatprep.subr.mxu0 0.0
    %4994 = vmatpush1.msra.mxu0 0.0
    %4995 = vmatprep.subr.mxu0 0.0
    %4996 = vmatpush1.msra.mxu0 0.0
    %4997 = vmatprep.subr.mxu0 0.0
    %4998 = vmatpush1.msra.mxu0 0.0
    %4999 = vmatprep.subr.mxu0 0.0
    %5000 = vmatpush1.msra.mxu0 0.0
    %5001 = vmatprep.subr.mxu0 0.0
    %5002 = vmatpush1.msra.mxu0 0.0
    %5003 = vmatprep.subr.mxu0 0.0
    %5004 = vmatpush1.msra.mxu0 0.0
    %5005 = vmatprep.subr.mxu0 0.0
    %5006 = vmatpush1.msra.mxu0 0.0
    %5007 = vmatprep.subr.mxu0 0.0
    %5008 = vmatpush1.msra.mxu0 0.0
    %5009 = vmatprep.subr.mxu0 0.0
    %5010 = vmatpush1.msra.mxu0 0.0
    %5011 = vmatprep.subr.mxu0 0.0
    %5012 = vmatpush1.msra.mxu0 0.0
    %5013 = vmatprep.subr.mxu0 0.0
    %5014 = vmatpush1.msra.mxu0 0.0
    %5015 = vmatprep.subr.mxu0 0.0
    %5016 = vmatpush1.msra.mxu0 0.0
    %5017 = vmatprep.subr.mxu0 0.0
    %5018 = vmatpush1.msra.mxu0 0.0
    %5019 = vmatprep.subr.mxu0 0.0
    %5020 = vmatpush1.msra.mxu0 0.0
    %5021 = vmatprep.mubr.f32.mxu0 0.0
    %5022 = vmatmul.mubr.f32.gmra.mrb[0].mxu0 %v4943
    %v5023 = vpop.f32.mrb[0].mxu0
    %v5024 = vadd.f32 %v4941, %v5023
    %v5025 = vpop.f32.mrb[0].mxu0
    %5026 = vmatprep.mubr.f32.mxu0 0.0
    %5027 = vmatmul.mubr.f32.gmra.mrb[0].mxu0 %v4946
    %v5028 = vpop.f32.mrb[0].mxu0
    %v5029 = vadd.f32 %v4941, %v5028
    %v5030 = vpop.f32.mrb[0].mxu0
    %5031 = vmatprep.mubr.f32.mxu0 0.0
    %5032 = vmatmul.mubr.f32.gmra.mrb[0].mxu0 %v4949
    %v5033 = vpop.f32.mrb[0].mxu0
    %v5034 = vadd.f32 %v4941, %v5033
    %v5035 = vpop.f32.mrb[0].mxu0
    %5036 = vmatprep.mubr.f32.mxu0 0.0
    %5037 = vmatmul.mubr.f32.gmra.mrb[0].mxu0 %v4952
    %v5038 = vpop.f32.mrb[0].mxu0
    %v5039 = vadd.f32 %v4941, %v5038
    %v5040 = vpop.f32.mrb[0].mxu0
    %5041 = vmatprep.mubr.f32.mxu0 0.0
    %5042 = vmatmul.mubr.f32.gmra.mrb[0].mxu0 %v4955
    %v5043 = vpop.f32.mrb[0].mxu0
    %v5044 = vadd.f32 %v4941, %v5043
    %v5045 = vpop.f32.mrb[0].mxu0
    %5046 = vdwg.mxu0
    %v5047 = vadd.f32 %v4672, %v5024
    %v5048 = vadd.f32 %v4673, %v5029
    %v5049 = vadd.f32 %v4674, %v5034
    %v5050 = vadd.f32 %v4675, %v5039
    %v5051 = vadd.f32 %v4676, %v5044
    %v5052 = vsel %vm374, %v5047, 0.0
    %5053 = vadd.xlane.f32.xlu0 %v5052
    %v5054 = vpop.xlane.xlu0 %5053
    %v5055 = vsel %vm374, %v5048, 0.0
    %5056 = vadd.xlane.f32.xlu0 %v5055
    %v5057 = vpop.xlane.xlu0 %5056
    %v5058 = vsel %vm374, %v5049, 0.0
    %5059 = vadd.xlane.f32.xlu0 %v5058
    %v5060 = vpop.xlane.xlu0 %5059
    %v5061 = vsel %vm374, %v5050, 0.0
    %5062 = vadd.xlane.f32.xlu0 %v5061
    %v5063 = vpop.xlane.xlu0 %5062
    %v5064 = vsel %vm387, %v5051, 0.0
    %5065 = vadd.xlane.f32.xlu0 %v5064
    %v5066 = vpop.xlane.xlu0 %5065
    %v5067 = vmul.f32 %v5054, %v391
    %v5068 = vmul.f32 %v5057, %v391
    %v5069 = vmul.f32 %v5060, %v391
    %v5070 = vmul.f32 %v5063, %v391
    %v5071 = vmul.f32 %v5066, %v391
    %v5072 = vmul.f32 %v5047, %v5047
    %v5073 = vmul.f32 %v5048, %v5048
    %v5074 = vmul.f32 %v5049, %v5049
    %v5075 = vmul.f32 %v5050, %v5050
    %v5076 = vmul.f32 %v5051, %v5051
    %v5077 = vsel %vm374, %v5072, 0.0
    %5078 = vadd.xlane.f32.xlu0 %v5077
    %v5079 = vpop.xlane.xlu0 %5078
    %v5080 = vsel %vm374, %v5073, 0.0
    %5081 = vadd.xlane.f32.xlu0 %v5080
    %v5082 = vpop.xlane.xlu0 %5081
    %v5083 = vsel %vm374, %v5074, 0.0
    %5084 = vadd.xlane.f32.xlu0 %v5083
    %v5085 = vpop.xlane.xlu0 %5084
    %v5086 = vsel %vm374, %v5075, 0.0
    %5087 = vadd.xlane.f32.xlu0 %v5086
    %v5088 = vpop.xlane.xlu0 %5087
    %v5089 = vsel %vm387, %v5076, 0.0
    %5090 = vadd.xlane.f32.xlu0 %v5089
    %v5091 = vpop.xlane.xlu0 %5090
    %v5092 = vmul.f32 %v5079, %v391
    %v5093 = vmul.f32 %v5082, %v391
    %v5094 = vmul.f32 %v5085, %v391
    %v5095 = vmul.f32 %v5088, %v391
    %v5096 = vmul.f32 %v5091, %v391
    %v5097 = vmul.f32 %v5067, %v5067
    %v5098 = vmul.f32 %v5068, %v5068
    %v5099 = vmul.f32 %v5069, %v5069
    %v5100 = vmul.f32 %v5070, %v5070
    %v5101 = vmul.f32 %v5071, %v5071
    %v5102 = vsub.f32 %v5092, %v5097
    %v5103 = vsub.f32 %v5093, %v5098
    %v5104 = vsub.f32 %v5094, %v5099
    %v5105 = vsub.f32 %v5095, %v5100
    %v5106 = vsub.f32 %v5096, %v5101
    %v5107 = vadd.f32 %v5102, 1e-05
    %v5108 = vadd.f32 %v5103, 1e-05
    %v5109 = vadd.f32 %v5104, 1e-05
    %v5110 = vadd.f32 %v5105, 1e-05
    %v5111 = vadd.f32 %v5106, 1e-05
    %v5112 = vrsqrt.pop %v5107
    %v5113 = vrsqrt.pop %v5108
    %v5114 = vrsqrt.pop %v5109
    %v5115 = vrsqrt.pop %v5110
    %v5116 = vrsqrt.pop %v5111
    %v5117 = vsub.f32 %v5047, %v5067
    %v5118 = vsub.f32 %v5048, %v5068
    %v5119 = vsub.f32 %v5049, %v5069
    %v5120 = vsub.f32 %v5050, %v5070
    %v5121 = vsub.f32 %v5051, %v5071
    %v5122 = vmul.f32 %v5117, %v5112
    %v5123 = vmul.f32 %v5118, %v5113
    %v5124 = vmul.f32 %v5119, %v5114
    %v5125 = vmul.f32 %v5120, %v5115
    %v5126 = vmul.f32 %v5121, %v5116
    %v5127 = vlaneseq
    %v5128 = vshrl.u32 %v5127, 7
    %v5129 = vsub.s32 2, %v5128
    %v5130 = vrot.slane %v65, %v5129
    %v5131 = vmul.f32 %v5122, %v5130
    %v5132 = vmul.f32 %v5123, %v5130
    %v5133 = vmul.f32 %v5124, %v5130
    %v5134 = vmul.f32 %v5125, %v5130
    %v5135 = vmul.f32 %v5126, %v5130
    %v5136 = vlaneseq
    %v5137 = vshrl.u32 %v5136, 7
    %v5138 = vsub.s32 3, %v5137
    %v5139 = vrot.slane %v65, %v5138
    %v5140 = vadd.f32 %v5131, %v5139
    %v5141 = vadd.f32 %v5132, %v5139
    %v5142 = vadd.f32 %v5133, %v5139
    %v5143 = vadd.f32 %v5134, %v5139
    %v5144 = vadd.f32 %v5135, %v5139
    %s5145 = scalar_lea.vmem %s6, 384
    %v5146 = vld [vmem:[%s5145] sm:$0xff]
    %v5147 = vld [vmem:[%s5145 + $0x8] sm:$0xff]
    %v5148 = vld [vmem:[%s5145 + $0x10] sm:$0xff]
    %v5149 = vld [vmem:[%s5145 + $0x18] sm:$0xff]
    %v5150 = vld [vmem:[%s5145 + $0x20] sm:$0xff]
    %v5151 = vld [vmem:[%s5145 + $0x28] sm:$0xff]
    %v5152 = vld [vmem:[%s5145 + $0x30] sm:$0xff]
    %v5153 = vld [vmem:[%s5145 + $0x38] sm:$0xff]
    %v5154 = vld [vmem:[%s5145 + $0x40] sm:$0xff]
    %v5155 = vld [vmem:[%s5145 + $0x48] sm:$0xff]
    %v5156 = vld [vmem:[%s5145 + $0x50] sm:$0xff]
    %v5157 = vld [vmem:[%s5145 + $0x58] sm:$0xff]
    %v5158 = vld [vmem:[%s5145 + $0x60] sm:$0xff]
    %v5159 = vld [vmem:[%s5145 + $0x68] sm:$0xff]
    %v5160 = vld [vmem:[%s5145 + $0x70] sm:$0xff]
    %v5161 = vld [vmem:[%s5145 + $0x78] sm:$0xff]
    %5162 = vset.pattern.permute.xlu0 6
    %5163 = vperm.xlu0 %5162, %v66
    %v5164 = vpop.permute.xlu0 %5163
    %5166 = vset.pattern.permute.xlu0 6
    %5167 = vperm.xlu0 %5166, %v67
    %v5168 = vpop.permute.xlu0 %5167
    %5170 = vset.pattern.permute.xlu0 6
    %5171 = vperm.xlu0 %5170, %v68
    %v5172 = vpop.permute.xlu0 %5171
    %5174 = vset.pattern.permute.xlu0 6
    %5175 = vperm.xlu0 %5174, %v69
    %v5176 = vpop.permute.xlu0 %5175
    %5178 = vset.pattern.permute.xlu0 6
    %5179 = vperm.xlu0 %5178, %v70
    %v5180 = vpop.permute.xlu0 %5179
    %5182 = vset.pattern.permute.xlu0 6
    %5183 = vperm.xlu0 %5182, %v71
    %v5184 = vpop.permute.xlu0 %5183
    %5186 = vset.pattern.permute.xlu0 6
    %5187 = vperm.xlu0 %5186, %v72
    %v5188 = vpop.permute.xlu0 %5187
    %5190 = vset.pattern.permute.xlu0 6
    %5191 = vperm.xlu0 %5190, %v73
    %v5192 = vpop.permute.xlu0 %5191
    %5194 = vset.pattern.permute.xlu0 6
    %5195 = vperm.xlu0 %5194, %v74
    %v5196 = vpop.permute.xlu0 %5195
    %5198 = vset.pattern.permute.xlu0 6
    %5199 = vperm.xlu0 %5198, %v75
    %v5200 = vpop.permute.xlu0 %5199
    %5202 = vset.pattern.permute.xlu0 6
    %5203 = vperm.xlu0 %5202, %v76
    %v5204 = vpop.permute.xlu0 %5203
    %5206 = vset.pattern.permute.xlu0 6
    %5207 = vperm.xlu0 %5206, %v77
    %v5208 = vpop.permute.xlu0 %5207
    %5210 = vset.pattern.permute.xlu0 6
    %5211 = vperm.xlu0 %5210, %v78
    %v5212 = vpop.permute.xlu0 %5211
    %5214 = vset.pattern.permute.xlu0 6
    %5215 = vperm.xlu0 %5214, %v79
    %v5216 = vpop.permute.xlu0 %5215
    %5218 = vset.pattern.permute.xlu0 6
    %5219 = vperm.xlu0 %5218, %v80
    %v5220 = vpop.permute.xlu0 %5219
    %5222 = vset.pattern.permute.xlu0 6
    %5223 = vperm.xlu0 %5222, %v81
    %v5224 = vpop.permute.xlu0 %5223
    %v5227 = vsel %vm566, %v5146, 0
    %v5230 = vsel %vm566, %v5147, 0
    %v5233 = vsel %vm566, %v5148, 0
    %v5236 = vsel %vm566, %v5149, 0
    %v5239 = vsel %vm566, %v5150, 0
    %v5242 = vsel %vm566, %v5151, 0
    %v5245 = vsel %vm566, %v5152, 0
    %v5248 = vsel %vm566, %v5153, 0
    %v5251 = vsel %vm566, %v5154, 0
    %v5254 = vsel %vm566, %v5155, 0
    %v5257 = vsel %vm566, %v5156, 0
    %v5260 = vsel %vm566, %v5157, 0
    %v5263 = vsel %vm566, %v5158, 0
    %v5266 = vsel %vm566, %v5159, 0
    %v5269 = vsel %vm566, %v5160, 0
    %v5272 = vsel %vm566, %v5161, 0
    %v5275 = vsel %vm201, %v5144, 0
    %5277 = vmatprep.subr.mxu0 0.0
    %5278 = vmatpush1.msra.mxu0 %v5140
    %5279 = vmatprep.subr.mxu0 0.0
    %5280 = vmatpush1.msra.mxu0 %v5141
    %5281 = vmatprep.subr.mxu0 0.0
    %5282 = vmatpush1.msra.mxu0 %v5142
    %5283 = vmatprep.subr.mxu0 0.0
    %5284 = vmatpush1.msra.mxu0 %v5143
    %5285 = vmatprep.subr.mxu0 0.0
    %5286 = vmatpush1.msra.mxu0 %v5275
    %5287 = vmatprep.subr.mxu0 0.0
    %5288 = vmatpush1.msra.mxu0 0.0
    %5289 = vmatprep.subr.mxu0 0.0
    %5290 = vmatpush1.msra.mxu0 0.0
    %5291 = vmatprep.subr.mxu0 0.0
    %5292 = vmatpush1.msra.mxu0 0.0
    %5293 = vmatprep.subr.mxu0 0.0
    %5294 = vmatpush1.msra.mxu0 0.0
    %5295 = vmatprep.subr.mxu0 0.0
    %5296 = vmatpush1.msra.mxu0 0.0
    %5297 = vmatprep.subr.mxu0 0.0
    %5298 = vmatpush1.msra.mxu0 0.0
    %5299 = vmatprep.subr.mxu0 0.0
    %5300 = vmatpush1.msra.mxu0 0.0
    %5301 = vmatprep.subr.mxu0 0.0
    %5302 = vmatpush1.msra.mxu0 0.0
    %5303 = vmatprep.subr.mxu0 0.0
    %5304 = vmatpush1.msra.mxu0 0.0
    %5305 = vmatprep.subr.mxu0 0.0
    %5306 = vmatpush1.msra.mxu0 0.0
    %5307 = vmatprep.subr.mxu0 0.0
    %5308 = vmatpush1.msra.mxu0 0.0
    %5309 = vmatprep.subr.mxu0 0.0
    %5310 = vmatpush1.msra.mxu0 0.0
    %5311 = vmatprep.subr.mxu0 0.0
    %5312 = vmatpush1.msra.mxu0 0.0
    %5313 = vmatprep.subr.mxu0 0.0
    %5314 = vmatpush1.msra.mxu0 0.0
    %5315 = vmatprep.subr.mxu0 0.0
    %5316 = vmatpush1.msra.mxu0 0.0
    %5317 = vmatprep.subr.mxu0 0.0
    %5318 = vmatpush1.msra.mxu0 0.0
    %5319 = vmatprep.subr.mxu0 0.0
    %5320 = vmatpush1.msra.mxu0 0.0
    %5321 = vmatprep.subr.mxu0 0.0
    %5322 = vmatpush1.msra.mxu0 0.0
    %5323 = vmatprep.subr.mxu0 0.0
    %5324 = vmatpush1.msra.mxu0 0.0
    %5325 = vmatprep.subr.mxu0 0.0
    %5326 = vmatpush1.msra.mxu0 0.0
    %5327 = vmatprep.subr.mxu0 0.0
    %5328 = vmatpush1.msra.mxu0 0.0
    %5329 = vmatprep.subr.mxu0 0.0
    %5330 = vmatpush1.msra.mxu0 0.0
    %5331 = vmatprep.subr.mxu0 0.0
    %5332 = vmatpush1.msra.mxu0 0.0
    %5333 = vmatprep.subr.mxu0 0.0
    %5334 = vmatpush1.msra.mxu0 0.0
    %5335 = vmatprep.subr.mxu0 0.0
    %5336 = vmatpush1.msra.mxu0 0.0
    %5337 = vmatprep.subr.mxu0 0.0
    %5338 = vmatpush1.msra.mxu0 0.0
    %5339 = vmatprep.subr.mxu0 0.0
    %5340 = vmatpush1.msra.mxu0 0.0
    %5341 = vmatprep.mubr.f32.mxu0 0.0
    %5342 = vmatmul.mubr.f32.gmra.mrb[0].mxu0 %v5227
    %v5343 = vpop.f32.mrb[0].mxu0
    %v5344 = vadd.f32 %v5164, %v5343
    %v5345 = vpop.f32.mrb[0].mxu0
    %5346 = vmatprep.mubr.f32.mxu0 0.0
    %5347 = vmatmul.mubr.f32.gmra.mrb[0].mxu0 %v5230
    %v5348 = vpop.f32.mrb[0].mxu0
    %v5349 = vadd.f32 %v5168, %v5348
    %v5350 = vpop.f32.mrb[0].mxu0
    %5351 = vmatprep.mubr.f32.mxu0 0.0
    %5352 = vmatmul.mubr.f32.gmra.mrb[0].mxu0 %v5233
    %v5353 = vpop.f32.mrb[0].mxu0
    %v5354 = vadd.f32 %v5172, %v5353
    %v5355 = vpop.f32.mrb[0].mxu0
    %5356 = vmatprep.mubr.f32.mxu0 0.0
    %5357 = vmatmul.mubr.f32.gmra.mrb[0].mxu0 %v5236
    %v5358 = vpop.f32.mrb[0].mxu0
    %v5359 = vadd.f32 %v5176, %v5358
    %v5360 = vpop.f32.mrb[0].mxu0
    %5361 = vmatprep.mubr.f32.mxu0 0.0
    %5362 = vmatmul.mubr.f32.gmra.mrb[0].mxu0 %v5239
    %v5363 = vpop.f32.mrb[0].mxu0
    %v5364 = vadd.f32 %v5180, %v5363
    %v5365 = vpop.f32.mrb[0].mxu0
    %5366 = vmatprep.mubr.f32.mxu0 0.0
    %5367 = vmatmul.mubr.f32.gmra.mrb[0].mxu0 %v5242
    %v5368 = vpop.f32.mrb[0].mxu0
    %v5369 = vadd.f32 %v5184, %v5368
    %v5370 = vpop.f32.mrb[0].mxu0
    %5371 = vmatprep.mubr.f32.mxu0 0.0
    %5372 = vmatmul.mubr.f32.gmra.mrb[0].mxu0 %v5245
    %v5373 = vpop.f32.mrb[0].mxu0
    %v5374 = vadd.f32 %v5188, %v5373
    %v5375 = vpop.f32.mrb[0].mxu0
    %5376 = vmatprep.mubr.f32.mxu0 0.0
    %5377 = vmatmul.mubr.f32.gmra.mrb[0].mxu0 %v5248
    %v5378 = vpop.f32.mrb[0].mxu0
    %v5379 = vadd.f32 %v5192, %v5378
    %v5380 = vpop.f32.mrb[0].mxu0
    %5381 = vmatprep.mubr.f32.mxu0 0.0
    %5382 = vmatmul.mubr.f32.gmra.mrb[0].mxu0 %v5251
    %v5383 = vpop.f32.mrb[0].mxu0
    %v5384 = vadd.f32 %v5196, %v5383
    %v5385 = vpop.f32.mrb[0].mxu0
    %5386 = vmatprep.mubr.f32.mxu0 0.0
    %5387 = vmatmul.mubr.f32.gmra.mrb[0].mxu0 %v5254
    %v5388 = vpop.f32.mrb[0].mxu0
    %v5389 = vadd.f32 %v5200, %v5388
    %v5390 = vpop.f32.mrb[0].mxu0
    %5391 = vmatprep.mubr.f32.mxu0 0.0
    %5392 = vmatmul.mubr.f32.gmra.mrb[0].mxu0 %v5257
    %v5393 = vpop.f32.mrb[0].mxu0
    %v5394 = vadd.f32 %v5204, %v5393
    %v5395 = vpop.f32.mrb[0].mxu0
    %5396 = vmatprep.mubr.f32.mxu0 0.0
    %5397 = vmatmul.mubr.f32.gmra.mrb[0].mxu0 %v5260
    %v5398 = vpop.f32.mrb[0].mxu0
    %v5399 = vadd.f32 %v5208, %v5398
    %v5400 = vpop.f32.mrb[0].mxu0
    %5401 = vmatprep.mubr.f32.mxu0 0.0
    %5402 = vmatmul.mubr.f32.gmra.mrb[0].mxu0 %v5263
    %v5403 = vpop.f32.mrb[0].mxu0
    %v5404 = vadd.f32 %v5212, %v5403
    %v5405 = vpop.f32.mrb[0].mxu0
    %5406 = vmatprep.mubr.f32.mxu0 0.0
    %5407 = vmatmul.mubr.f32.gmra.mrb[0].mxu0 %v5266
    %v5408 = vpop.f32.mrb[0].mxu0
    %v5409 = vadd.f32 %v5216, %v5408
    %v5410 = vpop.f32.mrb[0].mxu0
    %5411 = vmatprep.mubr.f32.mxu0 0.0
    %5412 = vmatmul.mubr.f32.gmra.mrb[0].mxu0 %v5269
    %v5413 = vpop.f32.mrb[0].mxu0
    %v5414 = vadd.f32 %v5220, %v5413
    %v5415 = vpop.f32.mrb[0].mxu0
    %5416 = vmatprep.mubr.f32.mxu0 0.0
    %5417 = vmatmul.mubr.f32.gmra.mrb[0].mxu0 %v5272
    %v5418 = vpop.f32.mrb[0].mxu0
    %v5419 = vadd.f32 %v5224, %v5418
    %v5420 = vpop.f32.mrb[0].mxu0
    %5421 = vdwg.mxu0
    %v5422 = vmul.f32 %v5344, %v5344
    %v5423 = vmul.f32 %v5349, %v5349
    %v5424 = vmul.f32 %v5354, %v5354
    %v5425 = vmul.f32 %v5359, %v5359
    %v5426 = vmul.f32 %v5364, %v5364
    %v5427 = vmul.f32 %v5369, %v5369
    %v5428 = vmul.f32 %v5374, %v5374
    %v5429 = vmul.f32 %v5379, %v5379
    %v5430 = vmul.f32 %v5384, %v5384
    %v5431 = vmul.f32 %v5389, %v5389
    %v5432 = vmul.f32 %v5394, %v5394
    %v5433 = vmul.f32 %v5399, %v5399
    %v5434 = vmul.f32 %v5404, %v5404
    %v5435 = vmul.f32 %v5409, %v5409
    %v5436 = vmul.f32 %v5414, %v5414
    %v5437 = vmul.f32 %v5419, %v5419
    %v5438 = vmul.f32 %v5344, %v5422
    %v5439 = vmul.f32 %v5349, %v5423
    %v5440 = vmul.f32 %v5354, %v5424
    %v5441 = vmul.f32 %v5359, %v5425
    %v5442 = vmul.f32 %v5364, %v5426
    %v5443 = vmul.f32 %v5369, %v5427
    %v5444 = vmul.f32 %v5374, %v5428
    %v5445 = vmul.f32 %v5379, %v5429
    %v5446 = vmul.f32 %v5384, %v5430
    %v5447 = vmul.f32 %v5389, %v5431
    %v5448 = vmul.f32 %v5394, %v5432
    %v5449 = vmul.f32 %v5399, %v5433
    %v5450 = vmul.f32 %v5404, %v5434
    %v5451 = vmul.f32 %v5409, %v5435
    %v5452 = vmul.f32 %v5414, %v5436
    %v5453 = vmul.f32 %v5419, %v5437
    %v5454 = vmul.f32 %v5438, 0.044715
    %v5455 = vmul.f32 %v5439, 0.044715
    %v5456 = vmul.f32 %v5440, 0.044715
    %v5457 = vmul.f32 %v5441, 0.044715
    %v5458 = vmul.f32 %v5442, 0.044715
    %v5459 = vmul.f32 %v5443, 0.044715
    %v5460 = vmul.f32 %v5444, 0.044715
    %v5461 = vmul.f32 %v5445, 0.044715
    %v5462 = vmul.f32 %v5446, 0.044715
    %v5463 = vmul.f32 %v5447, 0.044715
    %v5464 = vmul.f32 %v5448, 0.044715
    %v5465 = vmul.f32 %v5449, 0.044715
    %v5466 = vmul.f32 %v5450, 0.044715
    %v5467 = vmul.f32 %v5451, 0.044715
    %v5468 = vmul.f32 %v5452, 0.044715
    %v5469 = vmul.f32 %v5453, 0.044715
    %v5470 = vadd.f32 %v5344, %v5454
    %v5471 = vadd.f32 %v5349, %v5455
    %v5472 = vadd.f32 %v5354, %v5456
    %v5473 = vadd.f32 %v5359, %v5457
    %v5474 = vadd.f32 %v5364, %v5458
    %v5475 = vadd.f32 %v5369, %v5459
    %v5476 = vadd.f32 %v5374, %v5460
    %v5477 = vadd.f32 %v5379, %v5461
    %v5478 = vadd.f32 %v5384, %v5462
    %v5479 = vadd.f32 %v5389, %v5463
    %v5480 = vadd.f32 %v5394, %v5464
    %v5481 = vadd.f32 %v5399, %v5465
    %v5482 = vadd.f32 %v5404, %v5466
    %v5483 = vadd.f32 %v5409, %v5467
    %v5484 = vadd.f32 %v5414, %v5468
    %v5485 = vadd.f32 %v5419, %v5469
    %v5486 = vmul.f32 %v5470, 0.7978846
    %v5487 = vmul.f32 %v5471, 0.7978846
    %v5488 = vmul.f32 %v5472, 0.7978846
    %v5489 = vmul.f32 %v5473, 0.7978846
    %v5490 = vmul.f32 %v5474, 0.7978846
    %v5491 = vmul.f32 %v5475, 0.7978846
    %v5492 = vmul.f32 %v5476, 0.7978846
    %v5493 = vmul.f32 %v5477, 0.7978846
    %v5494 = vmul.f32 %v5478, 0.7978846
    %v5495 = vmul.f32 %v5479, 0.7978846
    %v5496 = vmul.f32 %v5480, 0.7978846
    %v5497 = vmul.f32 %v5481, 0.7978846
    %v5498 = vmul.f32 %v5482, 0.7978846
    %v5499 = vmul.f32 %v5483, 0.7978846
    %v5500 = vmul.f32 %v5484, 0.7978846
    %v5501 = vmul.f32 %v5485, 0.7978846
    %v5502 = vtanh.pop %v5486
    %v5503 = vtanh.pop %v5487
    %v5504 = vtanh.pop %v5488
    %v5505 = vtanh.pop %v5489
    %v5506 = vtanh.pop %v5490
    %v5507 = vtanh.pop %v5491
    %v5508 = vtanh.pop %v5492
    %v5509 = vtanh.pop %v5493
    %v5510 = vtanh.pop %v5494
    %v5511 = vtanh.pop %v5495
    %v5512 = vtanh.pop %v5496
    %v5513 = vtanh.pop %v5497
    %v5514 = vtanh.pop %v5498
    %v5515 = vtanh.pop %v5499
    %v5516 = vtanh.pop %v5500
    %v5517 = vtanh.pop %v5501
    %v5518 = vadd.f32 %v5502, 1.0
    %v5519 = vadd.f32 %v5503, 1.0
    %v5520 = vadd.f32 %v5504, 1.0
    %v5521 = vadd.f32 %v5505, 1.0
    %v5522 = vadd.f32 %v5506, 1.0
    %v5523 = vadd.f32 %v5507, 1.0
    %v5524 = vadd.f32 %v5508, 1.0
    %v5525 = vadd.f32 %v5509, 1.0
    %v5526 = vadd.f32 %v5510, 1.0
    %v5527 = vadd.f32 %v5511, 1.0
    %v5528 = vadd.f32 %v5512, 1.0
    %v5529 = vadd.f32 %v5513, 1.0
    %v5530 = vadd.f32 %v5514, 1.0
    %v5531 = vadd.f32 %v5515, 1.0
    %v5532 = vadd.f32 %v5516, 1.0
    %v5533 = vadd.f32 %v5517, 1.0
    %v5534 = vmul.f32 %v5518, 0.5
    %v5535 = vmul.f32 %v5519, 0.5
    %v5536 = vmul.f32 %v5520, 0.5
    %v5537 = vmul.f32 %v5521, 0.5
    %v5538 = vmul.f32 %v5522, 0.5
    %v5539 = vmul.f32 %v5523, 0.5
    %v5540 = vmul.f32 %v5524, 0.5
    %v5541 = vmul.f32 %v5525, 0.5
    %v5542 = vmul.f32 %v5526, 0.5
    %v5543 = vmul.f32 %v5527, 0.5
    %v5544 = vmul.f32 %v5528, 0.5
    %v5545 = vmul.f32 %v5529, 0.5
    %v5546 = vmul.f32 %v5530, 0.5
    %v5547 = vmul.f32 %v5531, 0.5
    %v5548 = vmul.f32 %v5532, 0.5
    %v5549 = vmul.f32 %v5533, 0.5
    %v5550 = vmul.f32 %v5344, %v5534
    %v5551 = vmul.f32 %v5349, %v5535
    %v5552 = vmul.f32 %v5354, %v5536
    %v5553 = vmul.f32 %v5359, %v5537
    %v5554 = vmul.f32 %v5364, %v5538
    %v5555 = vmul.f32 %v5369, %v5539
    %v5556 = vmul.f32 %v5374, %v5540
    %v5557 = vmul.f32 %v5379, %v5541
    %v5558 = vmul.f32 %v5384, %v5542
    %v5559 = vmul.f32 %v5389, %v5543
    %v5560 = vmul.f32 %v5394, %v5544
    %v5561 = vmul.f32 %v5399, %v5545
    %v5562 = vmul.f32 %v5404, %v5546
    %v5563 = vmul.f32 %v5409, %v5547
    %v5564 = vmul.f32 %v5414, %v5548
    %v5565 = vmul.f32 %v5419, %v5549
    %s5566 = scalar_lea.vmem %s7, 120
    %v5567 = vld [vmem:[%s5566] sm:$0xff]
    %v5568 = vld [vmem:[%s5566 + $0x8] sm:$0xff]
    %v5569 = vld [vmem:[%s5566 + $0x10] sm:$0xff]
    %v5570 = vld [vmem:[%s5566 + $0x18] sm:$0xff]
    %v5571 = vld [vmem:[%s5566 + $0x20] sm:$0x3]
    %5572 = vset.pattern.permute.xlu0 7
    %5573 = vperm.xlu0 %5572, %v66
    %v5574 = vpop.permute.xlu0 %5573
    %5576 = vset.pattern.permute.xlu0 7
    %5577 = vperm.xlu0 %5576, %v67
    %v5578 = vpop.permute.xlu0 %5577
    %5580 = vset.pattern.permute.xlu0 7
    %5581 = vperm.xlu0 %5580, %v68
    %v5582 = vpop.permute.xlu0 %5581
    %5584 = vset.pattern.permute.xlu0 7
    %5585 = vperm.xlu0 %5584, %v69
    %v5586 = vpop.permute.xlu0 %5585
    %5588 = vset.pattern.permute.xlu0 7
    %5589 = vperm.xlu0 %5588, %v70
    %v5590 = vpop.permute.xlu0 %5589
    %5592 = vmatprep.subr.mxu0 0.0
    %5593 = vmatpush1.msra.mxu0 %v5550
    %5594 = vmatprep.subr.mxu0 0.0
    %5595 = vmatpush1.msra.mxu0 %v5551
    %5596 = vmatprep.subr.mxu0 0.0
    %5597 = vmatpush1.msra.mxu0 %v5552
    %5598 = vmatprep.subr.mxu0 0.0
    %5599 = vmatpush1.msra.mxu0 %v5553
    %5600 = vmatprep.subr.mxu0 0.0
    %5601 = vmatpush1.msra.mxu0 %v5554
    %5602 = vmatprep.subr.mxu0 0.0
    %5603 = vmatpush1.msra.mxu0 %v5555
    %5604 = vmatprep.subr.mxu0 0.0
    %5605 = vmatpush1.msra.mxu0 %v5556
    %5606 = vmatprep.subr.mxu0 0.0
    %5607 = vmatpush1.msra.mxu0 %v5557
    %5608 = vmatprep.subr.mxu0 0.0
    %5609 = vmatpush1.msra.mxu0 %v5558
    %5610 = vmatprep.subr.mxu0 0.0
    %5611 = vmatpush1.msra.mxu0 %v5559
    %5612 = vmatprep.subr.mxu0 0.0
    %5613 = vmatpush1.msra.mxu0 %v5560
    %5614 = vmatprep.subr.mxu0 0.0
    %5615 = vmatpush1.msra.mxu0 %v5561
    %5616 = vmatprep.subr.mxu0 0.0
    %5617 = vmatpush1.msra.mxu0 %v5562
    %5618 = vmatprep.subr.mxu0 0.0
    %5619 = vmatpush1.msra.mxu0 %v5563
    %5620 = vmatprep.subr.mxu0 0.0
    %5621 = vmatpush1.msra.mxu0 %v5564
    %5622 = vmatprep.subr.mxu0 0.0
    %5623 = vmatpush1.msra.mxu0 %v5565
    %5624 = vmatprep.subr.mxu0 0.0
    %5625 = vmatpush1.msra.mxu0 0.0
    %5626 = vmatprep.subr.mxu0 0.0
    %5627 = vmatpush1.msra.mxu0 0.0
    %5628 = vmatprep.subr.mxu0 0.0
    %5629 = vmatpush1.msra.mxu0 0.0
    %5630 = vmatprep.subr.mxu0 0.0
    %5631 = vmatpush1.msra.mxu0 0.0
    %5632 = vmatprep.subr.mxu0 0.0
    %5633 = vmatpush1.msra.mxu0 0.0
    %5634 = vmatprep.subr.mxu0 0.0
    %5635 = vmatpush1.msra.mxu0 0.0
    %5636 = vmatprep.subr.mxu0 0.0
    %5637 = vmatpush1.msra.mxu0 0.0
    %5638 = vmatprep.subr.mxu0 0.0
    %5639 = vmatpush1.msra.mxu0 0.0
    %5640 = vmatprep.subr.mxu0 0.0
    %5641 = vmatpush1.msra.mxu0 0.0
    %5642 = vmatprep.subr.mxu0 0.0
    %5643 = vmatpush1.msra.mxu0 0.0
    %5644 = vmatprep.subr.mxu0 0.0
    %5645 = vmatpush1.msra.mxu0 0.0
    %5646 = vmatprep.subr.mxu0 0.0
    %5647 = vmatpush1.msra.mxu0 0.0
    %5648 = vmatprep.subr.mxu0 0.0
    %5649 = vmatpush1.msra.mxu0 0.0
    %5650 = vmatprep.subr.mxu0 0.0
    %5651 = vmatpush1.msra.mxu0 0.0
    %5652 = vmatprep.subr.mxu0 0.0
    %5653 = vmatpush1.msra.mxu0 0.0
    %5654 = vmatprep.subr.mxu0 0.0
    %5655 = vmatpush1.msra.mxu0 0.0
    %5656 = vmatprep.mubr.f32.mxu0 0.0
    %5657 = vmatmul.mubr.f32.gmra.mrb[0].mxu0 %v5567
    %v5658 = vpop.f32.mrb[0].mxu0
    %v5659 = vadd.f32 %v5574, %v5658
    %v5660 = vpop.f32.mrb[0].mxu0
    %5661 = vmatprep.mubr.f32.mxu0 0.0
    %5662 = vmatmul.mubr.f32.gmra.mrb[0].mxu0 %v5568
    %v5663 = vpop.f32.mrb[0].mxu0
    %v5664 = vadd.f32 %v5578, %v5663
    %v5665 = vpop.f32.mrb[0].mxu0
    %5666 = vmatprep.mubr.f32.mxu0 0.0
    %5667 = vmatmul.mubr.f32.gmra.mrb[0].mxu0 %v5569
    %v5668 = vpop.f32.mrb[0].mxu0
    %v5669 = vadd.f32 %v5582, %v5668
    %v5670 = vpop.f32.mrb[0].mxu0
    %5671 = vmatprep.mubr.f32.mxu0 0.0
    %5672 = vmatmul.mubr.f32.gmra.mrb[0].mxu0 %v5570
    %v5673 = vpop.f32.mrb[0].mxu0
    %v5674 = vadd.f32 %v5586, %v5673
    %v5675 = vpop.f32.mrb[0].mxu0
    %5676 = vmatprep.mubr.f32.mxu0 0.0
    %5677 = vmatmul.mubr.f32.gmra.mrb[0].mxu0 %v5571
    %v5678 = vpop.f32.mrb[0].mxu0
    %v5679 = vadd.f32 %v5590, %v5678
    %v5680 = vpop.f32.mrb[0].mxu0
    %5681 = vdwg.mxu0
    %v5682 = vadd.f32 %v5047, %v5659
    %v5683 = vadd.f32 %v5048, %v5664
    %v5684 = vadd.f32 %v5049, %v5669
    %v5685 = vadd.f32 %v5050, %v5674
    %v5686 = vadd.f32 %v5051, %v5679
    %v5687 = vsel %vm374, %v5682, 0.0
    %5688 = vadd.xlane.f32.xlu0 %v5687
    %v5689 = vpop.xlane.xlu0 %5688
    %v5690 = vsel %vm374, %v5683, 0.0
    %5691 = vadd.xlane.f32.xlu0 %v5690
    %v5692 = vpop.xlane.xlu0 %5691
    %v5693 = vsel %vm374, %v5684, 0.0
    %5694 = vadd.xlane.f32.xlu0 %v5693
    %v5695 = vpop.xlane.xlu0 %5694
    %v5696 = vsel %vm374, %v5685, 0.0
    %5697 = vadd.xlane.f32.xlu0 %v5696
    %v5698 = vpop.xlane.xlu0 %5697
    %v5699 = vsel %vm387, %v5686, 0.0
    %5700 = vadd.xlane.f32.xlu0 %v5699
    %v5701 = vpop.xlane.xlu0 %5700
    %v5702 = vmul.f32 %v5689, %v391
    %v5703 = vmul.f32 %v5692, %v391
    %v5704 = vmul.f32 %v5695, %v391
    %v5705 = vmul.f32 %v5698, %v391
    %v5706 = vmul.f32 %v5701, %v391
    %v5707 = vmul.f32 %v5682, %v5682
    %v5708 = vmul.f32 %v5683, %v5683
    %v5709 = vmul.f32 %v5684, %v5684
    %v5710 = vmul.f32 %v5685, %v5685
    %v5711 = vmul.f32 %v5686, %v5686
    %v5712 = vsel %vm374, %v5707, 0.0
    %5713 = vadd.xlane.f32.xlu0 %v5712
    %v5714 = vpop.xlane.xlu0 %5713
    %v5715 = vsel %vm374, %v5708, 0.0
    %5716 = vadd.xlane.f32.xlu0 %v5715
    %v5717 = vpop.xlane.xlu0 %5716
    %v5718 = vsel %vm374, %v5709, 0.0
    %5719 = vadd.xlane.f32.xlu0 %v5718
    %v5720 = vpop.xlane.xlu0 %5719
    %v5721 = vsel %vm374, %v5710, 0.0
    %5722 = vadd.xlane.f32.xlu0 %v5721
    %v5723 = vpop.xlane.xlu0 %5722
    %v5724 = vsel %vm387, %v5711, 0.0
    %5725 = vadd.xlane.f32.xlu0 %v5724
    %v5726 = vpop.xlane.xlu0 %5725
    %v5727 = vmul.f32 %v5714, %v391
    %v5728 = vmul.f32 %v5717, %v391
    %v5729 = vmul.f32 %v5720, %v391
    %v5730 = vmul.f32 %v5723, %v391
    %v5731 = vmul.f32 %v5726, %v391
    %v5732 = vmul.f32 %v5702, %v5702
    %v5733 = vmul.f32 %v5703, %v5703
    %v5734 = vmul.f32 %v5704, %v5704
    %v5735 = vmul.f32 %v5705, %v5705
    %v5736 = vmul.f32 %v5706, %v5706
    %v5737 = vsub.f32 %v5727, %v5732
    %v5738 = vsub.f32 %v5728, %v5733
    %v5739 = vsub.f32 %v5729, %v5734
    %v5740 = vsub.f32 %v5730, %v5735
    %v5741 = vsub.f32 %v5731, %v5736
    %v5742 = vadd.f32 %v5737, 1e-05
    %v5743 = vadd.f32 %v5738, 1e-05
    %v5744 = vadd.f32 %v5739, 1e-05
    %v5745 = vadd.f32 %v5740, 1e-05
    %v5746 = vadd.f32 %v5741, 1e-05
    %v5747 = vrsqrt.pop %v5742
    %v5748 = vrsqrt.pop %v5743
    %v5749 = vrsqrt.pop %v5744
    %v5750 = vrsqrt.pop %v5745
    %v5751 = vrsqrt.pop %v5746
    %v5752 = vsub.f32 %v5682, %v5702
    %v5753 = vsub.f32 %v5683, %v5703
    %v5754 = vsub.f32 %v5684, %v5704
    %v5755 = vsub.f32 %v5685, %v5705
    %v5756 = vsub.f32 %v5686, %v5706
    %v5757 = vmul.f32 %v5752, %v5747
    %v5758 = vmul.f32 %v5753, %v5748
    %v5759 = vmul.f32 %v5754, %v5749
    %v5760 = vmul.f32 %v5755, %v5750
    %v5761 = vmul.f32 %v5756, %v5751
    %v5762 = vlaneseq
    %v5763 = vshrl.u32 %v5762, 7
    %v5764 = vsub.s32 4, %v5763
    %v5765 = vrot.slane %v65, %v5764
    %v5766 = vmul.f32 %v5757, %v5765
    %v5767 = vmul.f32 %v5758, %v5765
    %v5768 = vmul.f32 %v5759, %v5765
    %v5769 = vmul.f32 %v5760, %v5765
    %v5770 = vmul.f32 %v5761, %v5765
    %v5771 = vlaneseq
    %v5772 = vshrl.u32 %v5771, 7
    %v5773 = vsub.s32 5, %v5772
    %v5774 = vrot.slane %v65, %v5773
    %v5775 = vadd.f32 %v5766, %v5774
    %v5776 = vadd.f32 %v5767, %v5774
    %v5777 = vadd.f32 %v5768, %v5774
    %v5778 = vadd.f32 %v5769, %v5774
    %v5779 = vadd.f32 %v5770, %v5774
    %s5780 = scalar_lea.vmem %s8, 96
    %v5781 = vld [vmem:[%s5780] sm:$0xff]
    %v5782 = vld [vmem:[%s5780 + $0x8] sm:$0xff]
    %v5783 = vld [vmem:[%s5780 + $0x10] sm:$0xff]
    %v5784 = vld [vmem:[%s5780 + $0x18] sm:$0xff]
    %v5785 = vlaneseq
    %v5786 = vshrl.u32 %v5785, 7
    %v5787 = vsub.s32 6, %v5786
    %v5788 = vrot.slane %v65, %v5787
    %v5790 = vsel %vm374, %v5775, 0
    %v5793 = vsel %vm374, %v5776, 0
    %v5796 = vsel %vm374, %v5777, 0
    %v5799 = vsel %vm374, %v5778, 0
    %v5802 = vsel %vm374, %v5779, 0
    %5804 = vmatprep.subr.mxu0 0.0
    %5805 = vmatpush1.msra.mxu0 %v5781
    %5806 = vmatprep.subr.mxu0 0.0
    %5807 = vmatpush1.msra.mxu0 %v5782
    %5808 = vmatprep.subr.mxu0 0.0
    %5809 = vmatpush1.msra.mxu0 %v5783
    %5810 = vmatprep.subr.mxu0 0.0
    %5811 = vmatpush1.msra.mxu0 %v5784
    %5812 = vmatprep.subr.mxu0 0.0
    %5813 = vmatpush1.msra.mxu0 0.0
    %5814 = vmatprep.subr.mxu0 0.0
    %5815 = vmatpush1.msra.mxu0 0.0
    %5816 = vmatprep.subr.mxu0 0.0
    %5817 = vmatpush1.msra.mxu0 0.0
    %5818 = vmatprep.subr.mxu0 0.0
    %5819 = vmatpush1.msra.mxu0 0.0
    %5820 = vmatprep.subr.mxu0 0.0
    %5821 = vmatpush1.msra.mxu0 0.0
    %5822 = vmatprep.subr.mxu0 0.0
    %5823 = vmatpush1.msra.mxu0 0.0
    %5824 = vmatprep.subr.mxu0 0.0
    %5825 = vmatpush1.msra.mxu0 0.0
    %5826 = vmatprep.subr.mxu0 0.0
    %5827 = vmatpush1.msra.mxu0 0.0
    %5828 = vmatprep.subr.mxu0 0.0
    %5829 = vmatpush1.msra.mxu0 0.0
    %5830 = vmatprep.subr.mxu0 0.0
    %5831 = vmatpush1.msra.mxu0 0.0
    %5832 = vmatprep.subr.mxu0 0.0
    %5833 = vmatpush1.msra.mxu0 0.0
    %5834 = vmatprep.subr.mxu0 0.0
    %5835 = vmatpush1.msra.mxu0 0.0
    %5836 = vmatprep.subr.mxu0 0.0
    %5837 = vmatpush1.msra.mxu0 0.0
    %5838 = vmatprep.subr.mxu0 0.0
    %5839 = vmatpush1.msra.mxu0 0.0
    %5840 = vmatprep.subr.mxu0 0.0
    %5841 = vmatpush1.msra.mxu0 0.0
    %5842 = vmatprep.subr.mxu0 0.0
    %5843 = vmatpush1.msra.mxu0 0.0
    %5844 = vmatprep.subr.mxu0 0.0
    %5845 = vmatpush1.msra.mxu0 0.0
    %5846 = vmatprep.subr.mxu0 0.0
    %5847 = vmatpush1.msra.mxu0 0.0
    %5848 = vmatprep.subr.mxu0 0.0
    %5849 = vmatpush1.msra.mxu0 0.0
    %5850 = vmatprep.subr.mxu0 0.0
    %5851 = vmatpush1.msra.mxu0 0.0
    %5852 = vmatprep.subr.mxu0 0.0
    %5853 = vmatpush1.msra.mxu0 0.0
    %5854 = vmatprep.subr.mxu0 0.0
    %5855 = vmatpush1.msra.mxu0 0.0
    %5856 = vmatprep.subr.mxu0 0.0
    %5857 = vmatpush1.msra.mxu0 0.0
    %5858 = vmatprep.subr.mxu0 0.0
    %5859 = vmatpush1.msra.mxu0 0.0
    %5860 = vmatprep.subr.mxu0 0.0
    %5861 = vmatpush1.msra.mxu0 0.0
    %5862 = vmatprep.subr.mxu0 0.0
    %5863 = vmatpush1.msra.mxu0 0.0
    %5864 = vmatprep.subr.mxu0 0.0
    %5865 = vmatpush1.msra.mxu0 0.0
    %5866 = vmatprep.subr.mxu0 0.0
    %5867 = vmatpush1.msra.mxu0 0.0
    %5868 = vmatprep.mubr.f32.mxu0 0.0
    %5869 = vmatmul.mubr.f32.gmra.mrb[0].mxu0 %v5790
    %v5870 = vpop.f32.mrb[0].mxu0
    %v5871 = vadd.f32 %v5788, %v5870
    %v5872 = vpop.f32.mrb[0].mxu0
    %5873 = vmatprep.mubr.f32.mxu0 0.0
    %5874 = vmatmul.mubr.f32.gmra.mrb[0].mxu0 %v5793
    %v5875 = vpop.f32.mrb[0].mxu0
    %v5876 = vadd.f32 %v5788, %v5875
    %v5877 = vpop.f32.mrb[0].mxu0
    %5878 = vmatprep.mubr.f32.mxu0 0.0
    %5879 = vmatmul.mubr.f32.gmra.mrb[0].mxu0 %v5796
    %v5880 = vpop.f32.mrb[0].mxu0
    %v5881 = vadd.f32 %v5788, %v5880
    %v5882 = vpop.f32.mrb[0].mxu0
    %5883 = vmatprep.mubr.f32.mxu0 0.0
    %5884 = vmatmul.mubr.f32.gmra.mrb[0].mxu0 %v5799
    %v5885 = vpop.f32.mrb[0].mxu0
    %v5886 = vadd.f32 %v5788, %v5885
    %v5887 = vpop.f32.mrb[0].mxu0
    %5888 = vmatprep.mubr.f32.mxu0 0.0
    %5889 = vmatmul.mubr.f32.gmra.mrb[0].mxu0 %v5802
    %v5890 = vpop.f32.mrb[0].mxu0
    %v5891 = vadd.f32 %v5788, %v5890
    %v5892 = vpop.f32.mrb[0].mxu0
    %5893 = vdwg.mxu0
    %v5894 = vmul.f32 %v5871, %v5871
    %v5895 = vmul.f32 %v5876, %v5876
    %v5896 = vmul.f32 %v5881, %v5881
    %v5897 = vmul.f32 %v5886, %v5886
    %v5898 = vmul.f32 %v5891, %v5891
    %v5899 = vmul.f32 %v5871, %v5894
    %v5900 = vmul.f32 %v5876, %v5895
    %v5901 = vmul.f32 %v5881, %v5896
    %v5902 = vmul.f32 %v5886, %v5897
    %v5903 = vmul.f32 %v5891, %v5898
    %v5904 = vmul.f32 %v5899, 0.044715
    %v5905 = vmul.f32 %v5900, 0.044715
    %v5906 = vmul.f32 %v5901, 0.044715
    %v5907 = vmul.f32 %v5902, 0.044715
    %v5908 = vmul.f32 %v5903, 0.044715
    %v5909 = vadd.f32 %v5871, %v5904
    %v5910 = vadd.f32 %v5876, %v5905
    %v5911 = vadd.f32 %v5881, %v5906
    %v5912 = vadd.f32 %v5886, %v5907
    %v5913 = vadd.f32 %v5891, %v5908
    %v5914 = vmul.f32 %v5909, 0.7978846
    %v5915 = vmul.f32 %v5910, 0.7978846
    %v5916 = vmul.f32 %v5911, 0.7978846
    %v5917 = vmul.f32 %v5912, 0.7978846
    %v5918 = vmul.f32 %v5913, 0.7978846
    %v5919 = vtanh.pop %v5914
    %v5920 = vtanh.pop %v5915
    %v5921 = vtanh.pop %v5916
    %v5922 = vtanh.pop %v5917
    %v5923 = vtanh.pop %v5918
    %v5924 = vadd.f32 %v5919, 1.0
    %v5925 = vadd.f32 %v5920, 1.0
    %v5926 = vadd.f32 %v5921, 1.0
    %v5927 = vadd.f32 %v5922, 1.0
    %v5928 = vadd.f32 %v5923, 1.0
    %v5929 = vmul.f32 %v5924, 0.5
    %v5930 = vmul.f32 %v5925, 0.5
    %v5931 = vmul.f32 %v5926, 0.5
    %v5932 = vmul.f32 %v5927, 0.5
    %v5933 = vmul.f32 %v5928, 0.5
    %v5934 = vmul.f32 %v5871, %v5929
    %v5935 = vmul.f32 %v5876, %v5930
    %v5936 = vmul.f32 %v5881, %v5931
    %v5937 = vmul.f32 %v5886, %v5932
    %v5938 = vmul.f32 %v5891, %v5933
    %s5939 = scalar_lea.vmem %s9, 192
    %v5940 = vld [vmem:[%s5939] sm:$0xff]
    %v5941 = vld [vmem:[%s5939 + $0x8] sm:$0xff]
    %v5942 = vld [vmem:[%s5939 + $0x10] sm:$0xff]
    %v5943 = vld [vmem:[%s5939 + $0x18] sm:$0xff]
    %v5944 = vld [vmem:[%s5939 + $0x20] sm:$0xff]
    %v5945 = vld [vmem:[%s5939 + $0x28] sm:$0xff]
    %v5946 = vld [vmem:[%s5939 + $0x30] sm:$0xff]
    %v5947 = vld [vmem:[%s5939 + $0x38] sm:$0xff]
    %v5948 = vlaneseq
    %v5949 = vshrl.u32 %v5948, 7
    %v5950 = vsub.s32 7, %v5949
    %v5951 = vrot.slane %v65, %v5950
    %v5953 = vsel %vm1290, %v5934, 0
    %v5956 = vsel %vm1290, %v5935, 0
    %v5959 = vsel %vm1290, %v5936, 0
    %v5962 = vsel %vm1290, %v5937, 0
    %v5965 = vsel %vm1290, %v5938, 0
    %5967 = vmatprep.subr.mxu0 0.0
    %5968 = vmatpush1.msra.mxu0 %v5940
    %5969 = vmatprep.subr.mxu0 0.0
    %5970 = vmatpush1.msra.mxu0 %v5941
    %5971 = vmatprep.subr.mxu0 0.0
    %5972 = vmatpush1.msra.mxu0 %v5942
    %5973 = vmatprep.subr.mxu0 0.0
    %5974 = vmatpush1.msra.mxu0 %v5943
    %5975 = vmatprep.subr.mxu0 0.0
    %5976 = vmatpush1.msra.mxu0 %v5944
    %5977 = vmatprep.subr.mxu0 0.0
    %5978 = vmatpush1.msra.mxu0 %v5945
    %5979 = vmatprep.subr.mxu0 0.0
    %5980 = vmatpush1.msra.mxu0 %v5946
    %5981 = vmatprep.subr.mxu0 0.0
    %5982 = vmatpush1.msra.mxu0 %v5947
    %5983 = vmatprep.subr.mxu0 0.0
    %5984 = vmatpush1.msra.mxu0 0.0
    %5985 = vmatprep.subr.mxu0 0.0
    %5986 = vmatpush1.msra.mxu0 0.0
    %5987 = vmatprep.subr.mxu0 0.0
    %5988 = vmatpush1.msra.mxu0 0.0
    %5989 = vmatprep.subr.mxu0 0.0
    %5990 = vmatpush1.msra.mxu0 0.0
    %5991 = vmatprep.subr.mxu0 0.0
    %5992 = vmatpush1.msra.mxu0 0.0
    %5993 = vmatprep.subr.mxu0 0.0
    %5994 = vmatpush1.msra.mxu0 0.0
    %5995 = vmatprep.subr.mxu0 0.0
    %5996 = vmatpush1.msra.mxu0 0.0
    %5997 = vmatprep.subr.mxu0 0.0
    %5998 = vmatpush1.msra.mxu0 0.0
    %5999 = vmatprep.subr.mxu0 0.0
    %6000 = vmatpush1.msra.mxu0 0.0
    %6001 = vmatprep.subr.mxu0 0.0
    %6002 = vmatpush1.msra.mxu0 0.0
    %6003 = vmatprep.subr.mxu0 0.0
    %6004 = vmatpush1.msra.mxu0 0.0
    %6005 = vmatprep.subr.mxu0 0.0
    %6006 = vmatpush1.msra.mxu0 0.0
    %6007 = vmatprep.subr.mxu0 0.0
    %6008 = vmatpush1.msra.mxu0 0.0
    %6009 = vmatprep.subr.mxu0 0.0
    %6010 = vmatpush1.msra.mxu0 0.0
    %6011 = vmatprep.subr.mxu0 0.0
    %6012 = vmatpush1.msra.mxu0 0.0
    %6013 = vmatprep.subr.mxu0 0.0
    %6014 = vmatpush1.msra.mxu0 0.0
    %6015 = vmatprep.subr.mxu0 0.0
    %6016 = vmatpush1.msra.mxu0 0.0
    %6017 = vmatprep.subr.mxu0 0.0
    %6018 = vmatpush1.msra.mxu0 0.0
    %6019 = vmatprep.subr.mxu0 0.0
    %6020 = vmatpush1.msra.mxu0 0.0
    %6021 = vmatprep.subr.mxu0 0.0
    %6022 = vmatpush1.msra.mxu0 0.0
    %6023 = vmatprep.subr.mxu0 0.0
    %6024 = vmatpush1.msra.mxu0 0.0
    %6025 = vmatprep.subr.mxu0 0.0
    %6026 = vmatpush1.msra.mxu0 0.0
    %6027 = vmatprep.subr.mxu0 0.0
    %6028 = vmatpush1.msra.mxu0 0.0
    %6029 = vmatprep.subr.mxu0 0.0
    %6030 = vmatpush1.msra.mxu0 0.0
    %6031 = vmatprep.mubr.f32.mxu0 0.0
    %6032 = vmatmul.mubr.f32.gmra.mrb[0].mxu0 %v5953
    %v6033 = vpop.f32.mrb[0].mxu0
    %v6034 = vadd.f32 %v5951, %v6033
    %v6035 = vpop.f32.mrb[0].mxu0
    %6036 = vmatprep.mubr.f32.mxu0 0.0
    %6037 = vmatmul.mubr.f32.gmra.mrb[0].mxu0 %v5956
    %v6038 = vpop.f32.mrb[0].mxu0
    %v6039 = vadd.f32 %v5951, %v6038
    %v6040 = vpop.f32.mrb[0].mxu0
    %6041 = vmatprep.mubr.f32.mxu0 0.0
    %6042 = vmatmul.mubr.f32.gmra.mrb[0].mxu0 %v5959
    %v6043 = vpop.f32.mrb[0].mxu0
    %v6044 = vadd.f32 %v5951, %v6043
    %v6045 = vpop.f32.mrb[0].mxu0
    %6046 = vmatprep.mubr.f32.mxu0 0.0
    %6047 = vmatmul.mubr.f32.gmra.mrb[0].mxu0 %v5962
    %v6048 = vpop.f32.mrb[0].mxu0
    %v6049 = vadd.f32 %v5951, %v6048
    %v6050 = vpop.f32.mrb[0].mxu0
    %6051 = vmatprep.mubr.f32.mxu0 0.0
    %6052 = vmatmul.mubr.f32.gmra.mrb[0].mxu0 %v5965
    %v6053 = vpop.f32.mrb[0].mxu0
    %v6054 = vadd.f32 %v5951, %v6053
    %v6055 = vpop.f32.mrb[0].mxu0
    %6056 = vdwg.mxu0
    %v6057 = vadd.f32 %v5682, %v6034
    %v6058 = vadd.f32 %v5683, %v6039
    %v6059 = vadd.f32 %v5684, %v6044
    %v6060 = vadd.f32 %v5685, %v6049
    %v6061 = vadd.f32 %v5686, %v6054
    %v6062 = vsel %vm374, %v6057, 0.0
    %6063 = vadd.xlane.f32.xlu0 %v6062
    %v6064 = vpop.xlane.xlu0 %6063
    %v6065 = vsel %vm374, %v6058, 0.0
    %6066 = vadd.xlane.f32.xlu0 %v6065
    %v6067 = vpop.xlane.xlu0 %6066
    %v6068 = vsel %vm374, %v6059, 0.0
    %6069 = vadd.xlane.f32.xlu0 %v6068
    %v6070 = vpop.xlane.xlu0 %6069
    %v6071 = vsel %vm374, %v6060, 0.0
    %6072 = vadd.xlane.f32.xlu0 %v6071
    %v6073 = vpop.xlane.xlu0 %6072
    %v6074 = vsel %vm387, %v6061, 0.0
    %6075 = vadd.xlane.f32.xlu0 %v6074
    %v6076 = vpop.xlane.xlu0 %6075
    %v6077 = vmul.f32 %v6064, %v391
    %v6078 = vmul.f32 %v6067, %v391
    %v6079 = vmul.f32 %v6070, %v391
    %v6080 = vmul.f32 %v6073, %v391
    %v6081 = vmul.f32 %v6076, %v391
    %v6082 = vmul.f32 %v6057, %v6057
    %v6083 = vmul.f32 %v6058, %v6058
    %v6084 = vmul.f32 %v6059, %v6059
    %v6085 = vmul.f32 %v6060, %v6060
    %v6086 = vmul.f32 %v6061, %v6061
    %v6087 = vsel %vm374, %v6082, 0.0
    %6088 = vadd.xlane.f32.xlu0 %v6087
    %v6089 = vpop.xlane.xlu0 %6088
    %v6090 = vsel %vm374, %v6083, 0.0
    %6091 = vadd.xlane.f32.xlu0 %v6090
    %v6092 = vpop.xlane.xlu0 %6091
    %v6093 = vsel %vm374, %v6084, 0.0
    %6094 = vadd.xlane.f32.xlu0 %v6093
    %v6095 = vpop.xlane.xlu0 %6094
    %v6096 = vsel %vm374, %v6085, 0.0
    %6097 = vadd.xlane.f32.xlu0 %v6096
    %v6098 = vpop.xlane.xlu0 %6097
    %v6099 = vsel %vm387, %v6086, 0.0
    %6100 = vadd.xlane.f32.xlu0 %v6099
    %v6101 = vpop.xlane.xlu0 %6100
    %v6102 = vmul.f32 %v6089, %v391
    %v6103 = vmul.f32 %v6092, %v391
    %v6104 = vmul.f32 %v6095, %v391
    %v6105 = vmul.f32 %v6098, %v391
    %v6106 = vmul.f32 %v6101, %v391
    %v6107 = vmul.f32 %v6077, %v6077
    %v6108 = vmul.f32 %v6078, %v6078
    %v6109 = vmul.f32 %v6079, %v6079
    %v6110 = vmul.f32 %v6080, %v6080
    %v6111 = vmul.f32 %v6081, %v6081
    %v6112 = vsub.f32 %v6102, %v6107
    %v6113 = vsub.f32 %v6103, %v6108
    %v6114 = vsub.f32 %v6104, %v6109
    %v6115 = vsub.f32 %v6105, %v6110
    %v6116 = vsub.f32 %v6106, %v6111
    %v6117 = vadd.f32 %v6112, 1e-05
    %v6118 = vadd.f32 %v6113, 1e-05
    %v6119 = vadd.f32 %v6114, 1e-05
    %v6120 = vadd.f32 %v6115, 1e-05
    %v6121 = vadd.f32 %v6116, 1e-05
    %v6122 = vrsqrt.pop %v6117
    %v6123 = vrsqrt.pop %v6118
    %v6124 = vrsqrt.pop %v6119
    %v6125 = vrsqrt.pop %v6120
    %v6126 = vrsqrt.pop %v6121
    %v6127 = vsub.f32 %v6057, %v6077
    %v6128 = vsub.f32 %v6058, %v6078
    %v6129 = vsub.f32 %v6059, %v6079
    %v6130 = vsub.f32 %v6060, %v6080
    %v6131 = vsub.f32 %v6061, %v6081
    %v6132 = vmul.f32 %v6127, %v6122
    %v6133 = vmul.f32 %v6128, %v6123
    %v6134 = vmul.f32 %v6129, %v6124
    %v6135 = vmul.f32 %v6130, %v6125
    %v6136 = vmul.f32 %v6131, %v6126
    %v6137 = vlaneseq
    %v6138 = vshrl.u32 %v6137, 7
    %v6139 = vsub.s32 5, %v6138
    %v6140 = vrot.slane %v62, %v6139
    %v6141 = vmul.f32 %v6132, %v6140
    %v6142 = vmul.f32 %v6133, %v6140
    %v6143 = vmul.f32 %v6134, %v6140
    %v6144 = vmul.f32 %v6135, %v6140
    %v6145 = vmul.f32 %v6136, %v6140
    %v6146 = vlaneseq
    %v6147 = vshrl.u32 %v6146, 7
    %v6148 = vsub.s32 6, %v6147
    %v6149 = vrot.slane %v62, %v6148
    %v6150 = vadd.f32 %v6141, %v6149
    %v6151 = vadd.f32 %v6142, %v6149
    %v6152 = vadd.f32 %v6143, %v6149
    %v6153 = vadd.f32 %v6144, %v6149
    %v6154 = vadd.f32 %v6145, %v6149
    %v6155 = vld [vmem:[%s13] sm:$0xff]
    %v6156 = vld [vmem:[%s13 + $0x8] sm:$0xff]
    %v6157 = vld [vmem:[%s13 + $0x10] sm:$0xff]
    %v6158 = vld [vmem:[%s13 + $0x18] sm:$0xff]
    %v6159 = vlaneseq
    %v6160 = vshrl.u32 %v6159, 7
    %v6161 = vsub.s32 7, %v6160
    %v6162 = vrot.slane %v62, %v6161
    %v6164 = vsel %vm374, %v6150, 0
    %v6167 = vsel %vm374, %v6151, 0
    %v6170 = vsel %vm374, %v6152, 0
    %v6173 = vsel %vm374, %v6153, 0
    %v6176 = vsel %vm374, %v6154, 0
    %6178 = vmatprep.subr.mxu0 0.0
    %6179 = vmatpush1.msra.mxu0 %v6155
    %6180 = vmatprep.subr.mxu0 0.0
    %6181 = vmatpush1.msra.mxu0 %v6156
    %6182 = vmatprep.subr.mxu0 0.0
    %6183 = vmatpush1.msra.mxu0 %v6157
    %6184 = vmatprep.subr.mxu0 0.0
    %6185 = vmatpush1.msra.mxu0 %v6158
    %6186 = vmatprep.subr.mxu0 0.0
    %6187 = vmatpush1.msra.mxu0 0.0
    %6188 = vmatprep.subr.mxu0 0.0
    %6189 = vmatpush1.msra.mxu0 0.0
    %6190 = vmatprep.subr.mxu0 0.0
    %6191 = vmatpush1.msra.mxu0 0.0
    %6192 = vmatprep.subr.mxu0 0.0
    %6193 = vmatpush1.msra.mxu0 0.0
    %6194 = vmatprep.subr.mxu0 0.0
    %6195 = vmatpush1.msra.mxu0 0.0
    %6196 = vmatprep.subr.mxu0 0.0
    %6197 = vmatpush1.msra.mxu0 0.0
    %6198 = vmatprep.subr.mxu0 0.0
    %6199 = vmatpush1.msra.mxu0 0.0
    %6200 = vmatprep.subr.mxu0 0.0
    %6201 = vmatpush1.msra.mxu0 0.0
    %6202 = vmatprep.subr.mxu0 0.0
    %6203 = vmatpush1.msra.mxu0 0.0
    %6204 = vmatprep.subr.mxu0 0.0
    %6205 = vmatpush1.msra.mxu0 0.0
    %6206 = vmatprep.subr.mxu0 0.0
    %6207 = vmatpush1.msra.mxu0 0.0
    %6208 = vmatprep.subr.mxu0 0.0
    %6209 = vmatpush1.msra.mxu0 0.0
    %6210 = vmatprep.subr.mxu0 0.0
    %6211 = vmatpush1.msra.mxu0 0.0
    %6212 = vmatprep.subr.mxu0 0.0
    %6213 = vmatpush1.msra.mxu0 0.0
    %6214 = vmatprep.subr.mxu0 0.0
    %6215 = vmatpush1.msra.mxu0 0.0
    %6216 = vmatprep.subr.mxu0 0.0
    %6217 = vmatpush1.msra.mxu0 0.0
    %6218 = vmatprep.subr.mxu0 0.0
    %6219 = vmatpush1.msra.mxu0 0.0
    %6220 = vmatprep.subr.mxu0 0.0
    %6221 = vmatpush1.msra.mxu0 0.0
    %6222 = vmatprep.subr.mxu0 0.0
    %6223 = vmatpush1.msra.mxu0 0.0
    %6224 = vmatprep.subr.mxu0 0.0
    %6225 = vmatpush1.msra.mxu0 0.0
    %6226 = vmatprep.subr.mxu0 0.0
    %6227 = vmatpush1.msra.mxu0 0.0
    %6228 = vmatprep.subr.mxu0 0.0
    %6229 = vmatpush1.msra.mxu0 0.0
    %6230 = vmatprep.subr.mxu0 0.0
    %6231 = vmatpush1.msra.mxu0 0.0
    %6232 = vmatprep.subr.mxu0 0.0
    %6233 = vmatpush1.msra.mxu0 0.0
    %6234 = vmatprep.subr.mxu0 0.0
    %6235 = vmatpush1.msra.mxu0 0.0
    %6236 = vmatprep.subr.mxu0 0.0
    %6237 = vmatpush1.msra.mxu0 0.0
    %6238 = vmatprep.subr.mxu0 0.0
    %6239 = vmatpush1.msra.mxu0 0.0
    %6240 = vmatprep.subr.mxu0 0.0
    %6241 = vmatpush1.msra.mxu0 0.0
    %6242 = vmatprep.mubr.f32.mxu0 0.0
    %6243 = vmatmul.mubr.f32.gmra.mrb[0].mxu0 %v6164
    %v6244 = vpop.f32.mrb[0].mxu0
    %v6245 = vadd.f32 %v6162, %v6244
    %v6246 = vpop.f32.mrb[0].mxu0
    %6247 = vmatprep.mubr.f32.mxu0 0.0
    %6248 = vmatmul.mubr.f32.gmra.mrb[0].mxu0 %v6167
    %v6249 = vpop.f32.mrb[0].mxu0
    %v6250 = vadd.f32 %v6162, %v6249
    %v6251 = vpop.f32.mrb[0].mxu0
    %6252 = vmatprep.mubr.f32.mxu0 0.0
    %6253 = vmatmul.mubr.f32.gmra.mrb[0].mxu0 %v6170
    %v6254 = vpop.f32.mrb[0].mxu0
    %v6255 = vadd.f32 %v6162, %v6254
    %v6256 = vpop.f32.mrb[0].mxu0
    %6257 = vmatprep.mubr.f32.mxu0 0.0
    %6258 = vmatmul.mubr.f32.gmra.mrb[0].mxu0 %v6173
    %v6259 = vpop.f32.mrb[0].mxu0
    %v6260 = vadd.f32 %v6162, %v6259
    %v6261 = vpop.f32.mrb[0].mxu0
    %6262 = vmatprep.mubr.f32.mxu0 0.0
    %6263 = vmatmul.mubr.f32.gmra.mrb[0].mxu0 %v6176
    %v6264 = vpop.f32.mrb[0].mxu0
    %v6265 = vadd.f32 %v6162, %v6264
    %v6266 = vpop.f32.mrb[0].mxu0
    %6267 = vdwg.mxu0
    %6268 = vst.msk [vmem:[%s18] sm:$0xff] %vm185, %v6245
    %6269 = vst.msk [vmem:[%s18 + $0x8] sm:$0xff] %vm185, %v6250
    %6270 = vst.msk [vmem:[%s18 + $0x10] sm:$0xff] %vm185, %v6255
    %6271 = vst.msk [vmem:[%s18 + $0x18] sm:$0xff] %vm185, %v6260
    %vm6272 = vcmask 9216
    %6273 = vst.msk [vmem:[%s18 + $0x20] sm:$0x3] %vm6272, %v6265
    // Predicated region
    $region74: #{tpu_custom_call.1} parent=1 // pred_check
      _
    $region75: #{tpu_custom_call.1} parent=1 // pred_check_branch
      %6275 = sbr.rel (0) target = $region77
    $region76: #{tpu_custom_call.1} parent=1 // pred_region
      _
    $region77: #{tpu_custom_call.1} parent=1 // pred_fallthru
      _
    // Predicated region
    $region78: #{tpu_custom_call.1} parent=1 // pred_check
      _
    $region79: #{tpu_custom_call.1} parent=1 // pred_check_branch
      %6277 = sbr.rel (0) target = $region81
    $region80: #{tpu_custom_call.1} parent=1 // pred_region
      %s6279 = ssub.s32 32, 32
      %6280 = vsyncadd [#allocation3], %s6279
      %s6282 = sshll.u32 [#allocation2], 4
      %s6283 = int_to_ptr.vmem [resolvable:$true] %s6282
      %6285 = dma.vmem_to_hbm [thread:$0]  %s6283, 32, %s19, [#allocation3]
    $region81: #{tpu_custom_call.1} parent=1 // pred_fallthru
      _
    // Predicated region
    $region82: #{tpu_custom_call.1} parent=1 // pred_check
      _
    $region83: #{tpu_custom_call.1} parent=1 // pred_check_branch
      %6287 = sbr.rel (0) target = $region85
    $region84: #{tpu_custom_call.1} parent=1 // pred_region
      _
    $region85: #{tpu_custom_call.1} parent=1 // pred_fallthru
      _
    // Predicated region
    $region86: #{tpu_custom_call.1} parent=1 // pred_check
      _
    $region87: #{tpu_custom_call.1} parent=1 // pred_check_branch
      %6289 = sbr.rel (0) target = $region89
    $region88: #{tpu_custom_call.1} parent=1 // pred_region
      %6290 = dma.done [#allocation3], 32
    $region89: #{tpu_custom_call.1} parent=1 // pred_fallthru
      _
    %6291 = vsyncpa [#allocation3], 1

</llo_original>
